<compile_context>
chip_gen: v5e
topology: v5e:2x2
jax: 0.10.0
libtpu: 0.0.40
codegen_flags: <defaults>
</compile_context>

<pallas_src>
import functools
import math

import jax
import jax.numpy as jnp
from jax.experimental import pallas as pl
from jax.experimental.pallas import tpu as pltpu


# ----------------------------------------------------------------------------
# Kernels
# ----------------------------------------------------------------------------
def conv_bn_silu_linear_kernel(x_ref, wc_ref, scale_ref, shift_ref,
                               wl_ref, bl_ref, o_ref):
    """Fused Conv(1x1)+BN+SiLU followed by p + Linear(p), per token tile."""
    x = x_ref[...]                                                    # (TN, c1) bf16
    y = jnp.dot(x, wc_ref[...], preferred_element_type=jnp.float32)  # (TN, c2) f32
    y = y * scale_ref[...] + shift_ref[...]                           # folded BN
    t = y * jax.nn.sigmoid(y)                                         # SiLU (f32)
    e = jnp.dot(t.astype(o_ref.dtype), wl_ref[...],
                preferred_element_type=jnp.float32) + bl_ref[...]
    o_ref[...] = (t + e).astype(o_ref.dtype)


def linear_residual_kernel(x_ref, wl_ref, bl_ref, o_ref):
    """p + Linear(p) per token tile (c1 == c2 path: no Conv)."""
    x = x_ref[...]
    e = jnp.dot(x, wl_ref[...], preferred_element_type=jnp.float32) + bl_ref[...]
    o_ref[...] = (x.astype(jnp.float32) + e).astype(o_ref.dtype)


def qkv_proj_kernel(x_ref, w_ref, b_ref, q_ref, k_ref, v_ref):
    """Folded + fused q/k/v projection: one (TN, C) @ (C, 3C) matmul."""
    y = jnp.dot(x_ref[...], w_ref[...],
                preferred_element_type=jnp.float32) + b_ref[...]
    y = y.astype(q_ref.dtype)
    c = q_ref.shape[-1]
    q_ref[...] = y[:, :c]
    k_ref[...] = y[:, c:2 * c]
    v_ref[...] = y[:, 2 * c:]


def attn_ffn_kernel(q_ref, k_ref, v_ref, x_ref, wo_ref, bo_ref, wfc_ref, o_ref,
                    *, num_heads):
    """MHA + out-proj + residual + folded FFN + residual for one (batch, q-tile).

    q is pre-scaled by 1/sqrt(head_dim) (folded into the projection weights).
    """
    q = q_ref[0]                                   # (H, TQ, hd) bf16
    k = k_ref[0]                                   # (H, L,  hd) bf16
    v = v_ref[0]                                   # (H, L,  hd) bf16
    tq = q.shape[1]
    c = wo_ref.shape[-1]

    # scores + softmax in f32
    s = jnp.einsum('hqd,hkd->hqk', q, k,
                   preferred_element_type=jnp.float32)     # (H, TQ, L)
    s = s - jnp.max(s, axis=-1, keepdims=True)
    p = jnp.exp(s)
    p = p * pl.reciprocal(jnp.sum(p, axis=-1, keepdims=True), approx=True)

    ctx = jnp.einsum('hqk,hkd->hqd', p.astype(q.dtype), v,
                     preferred_element_type=jnp.float32)    # (H, TQ, hd)
    ctx = ctx.astype(q.dtype)

    # output projection accumulated per head -> no in-kernel concat/transpose
    wo = wo_ref[...]                               # (H, hd, C) bf16
    acc = jnp.zeros((tq, c), jnp.float32)
    for h in range(num_heads):                     # static, small head count
        acc = acc + jnp.dot(ctx[h], wo[h], preferred_element_type=jnp.float32)
    attn = acc + bo_ref[...]

    x = x_ref[0].astype(jnp.float32)               # (TQ, C) residual input
    x1 = attn + x
    y = jnp.dot(x1.astype(o_ref.dtype), wfc_ref[...],
                preferred_element_type=jnp.float32)         # folded fc2(fc1(.))
    o_ref[0] = (x1 + y).astype(o_ref.dtype)


# ----------------------------------------------------------------------------
# pallas_call wrappers
# ----------------------------------------------------------------------------
_POINTWISE_TILES = (1024, 512, 256, 128, 64, 32, 16)
_QUERY_TILES = (128, 256, 512, 64, 32, 16)


def _pick_tile(n, candidates):
    for t in candidates:
        if t <= n and n % t == 0:
            return t
    return n  # full axis is always a legal block


def _conv_linear_call(tokens, pp):
    n, c1 = tokens.shape
    c2 = pp["conv_w"].shape[1]
    tn = _pick_tile(n, _POINTWISE_TILES)
    return pl.pallas_call(
        conv_bn_silu_linear_kernel,
        out_shape=jax.ShapeDtypeStruct((n, c2), tokens.dtype),
        grid=(n // tn,),
        in_specs=[pl.BlockSpec((tn, c1), lambda i: (i, 0)),
                  pl.BlockSpec((c1, c2), lambda i: (0, 0)),
                  pl.BlockSpec((1, c2), lambda i: (0, 0)),
                  pl.BlockSpec((1, c2), lambda i: (0, 0)),
                  pl.BlockSpec((c2, c2), lambda i: (0, 0)),
                  pl.BlockSpec((1, c2), lambda i: (0, 0))],
        out_specs=pl.BlockSpec((tn, c2), lambda i: (i, 0)),
        compiler_params=pltpu.CompilerParams(
            dimension_semantics=("parallel",)),
    )(tokens, pp["conv_w"], pp["bn_scale"], pp["bn_shift"],
      pp["lin_w"], pp["lin_b"])


def _linear_residual_call(tokens, pp):
    n, c2 = tokens.shape
    tn = _pick_tile(n, _POINTWISE_TILES)
    return pl.pallas_call(
        linear_residual_kernel,
        out_shape=jax.ShapeDtypeStruct((n, c2), tokens.dtype),
        grid=(n // tn,),
        in_specs=[pl.BlockSpec((tn, c2), lambda i: (i, 0)),
                  pl.BlockSpec((c2, c2), lambda i: (0, 0)),
                  pl.BlockSpec((1, c2), lambda i: (0, 0))],
        out_specs=pl.BlockSpec((tn, c2), lambda i: (i, 0)),
        compiler_params=pltpu.CompilerParams(
            dimension_semantics=("parallel",)),
    )(tokens, pp["lin_w"], pp["lin_b"])


def _qkv_proj_call(tokens, w_qkv, b_qkv):
    n, c = tokens.shape
    c3 = w_qkv.shape[1]
    tn = _pick_tile(n, _POINTWISE_TILES)
    tok_spec = pl.BlockSpec((tn, c), lambda i: (i, 0))
    out_sds = jax.ShapeDtypeStruct((n, c), tokens.dtype)
    return pl.pallas_call(
        qkv_proj_kernel,
        out_shape=(out_sds, out_sds, out_sds),
        grid=(n // tn,),
        in_specs=[pl.BlockSpec((tn, c), lambda i: (i, 0)),
                  pl.BlockSpec((c, c3), lambda i: (0, 0)),
                  pl.BlockSpec((1, c3), lambda i: (0, 0))],
        out_specs=(tok_spec, tok_spec, tok_spec),
        compiler_params=pltpu.CompilerParams(
            dimension_semantics=("parallel",)),
    )(tokens, w_qkv, b_qkv)


def _attn_ffn_call(qh, kh, vh, xb, lp, num_heads):
    b, h, l, hd = qh.shape
    c = xb.shape[-1]
    tq = _pick_tile(l, _QUERY_TILES)
    kern = functools.partial(attn_ffn_kernel, num_heads=num_heads)

    # explicit VMEM budget (double-buffered I/O blocks + resident weights +
    # f32 score temporaries + margin), clamped to [32 MiB default, 64 MiB v7x].
    elt = 2  # bf16
    blk_bytes = 2 * elt * (h * tq * hd + 2 * h * l * hd + 2 * tq * c)
    w_bytes = elt * (h * hd * c + c * c) + 4 * (c + c)
    tmp_bytes = 3 * 4 * h * tq * l
    vmem_limit = int(min(64 * 2 ** 20,
                         max(32 * 2 ** 20,
                             blk_bytes + w_bytes + tmp_bytes + 8 * 2 ** 20)))

    cost = pl.CostEstimate(
        flops=int(4 * b * l * l * c + 4 * b * l * c * c),
        transcendentals=int(b * h * l * l),
        bytes_accessed=int(elt * (5 * b * l * c) + w_bytes * b * (l // tq)))

    return pl.pallas_call(
        kern,
        out_shape=jax.ShapeDtypeStruct((b, l, c), xb.dtype),
        grid=(b, l // tq),
        in_specs=[pl.BlockSpec((1, h, tq, hd), lambda bi, qi: (bi, 0, qi, 0)),
                  pl.BlockSpec((1, h, l, hd), lambda bi, qi: (bi, 0, 0, 0)),
                  pl.BlockSpec((1, h, l, hd), lambda bi, qi: (bi, 0, 0, 0)),
                  pl.BlockSpec((1, tq, c), lambda bi, qi: (bi, qi, 0)),
                  pl.BlockSpec((h, hd, c), lambda bi, qi: (0, 0, 0)),
                  pl.BlockSpec((1, c), lambda bi, qi: (0, 0)),
                  pl.BlockSpec((c, c), lambda bi, qi: (0, 0))],
        out_specs=pl.BlockSpec((1, tq, c), lambda bi, qi: (bi, qi, 0)),
        compiler_params=pltpu.CompilerParams(
            dimension_semantics=("parallel", "parallel"),
            vmem_limit_bytes=vmem_limit),
        cost_estimate=cost,
    )(qh, kh, vh, xb, lp["wo"], lp["bo"], lp["wfc"])


# ----------------------------------------------------------------------------
# Forward pass (glue is plain JAX layout plumbing)
# ----------------------------------------------------------------------------
def transformer_block(x, pp, c1, c2, num_heads, compute_dtype=jnp.bfloat16):
    b, _, hdim, wdim = x.shape
    l = hdim * wdim
    n = b * l
    hd = c2 // num_heads

    # NCHW -> (b*H*W, C) tokens; same per-batch token order as torch x.flatten(2)
    tokens = x.transpose(0, 2, 3, 1).reshape(n, c1).astype(compute_dtype)

    if pp["conv_w"] is not None:          # Conv(c1,c2,1)+BN+SiLU fused with p+Linear(p)
        tok = _conv_linear_call(tokens, pp)
    else:
        tok = _linear_residual_call(tokens, pp)

    def to_heads(t):                      # (N, C) -> head-major (B, H, L, hd)
        return t.reshape(b, l, num_heads, hd).transpose(0, 2, 1, 3)

    for lp in pp["layers"]:
        q, k, v = _qkv_proj_call(tok, lp["w_qkv"], lp["b_qkv"])
        y = _attn_ffn_call(to_heads(q), to_heads(k), to_heads(v),
                           tok.reshape(b, l, c2), lp, num_heads)
        tok = y.reshape(n, c2)

    out = tok.reshape(b, l, c2).astype(jnp.float32)
    # torch unpacks x.shape as (b, _, w, h), so its reshape(b, c2, w, h) is
    # (b, c2, H, W) in NCHW terms; this matches non-square maps as well.
    return out.transpose(0, 2, 1).reshape(b, c2, hdim, wdim)


# ----------------------------------------------------------------------------
# Parameters: torch-like init + host-side folding/fusing/casting
# ----------------------------------------------------------------------------
def init_params(key, c1, c2, num_layers):
    """Torch-like unfused f32 params; weights stored (in, out) = W_torch.T."""
    def wmat(k, din, dout, s=0.05):
        return s * jax.random.normal(k, (din, dout), jnp.float32)

    def bvec(k, d, s=0.05):
        return s * jax.random.normal(k, (1, d), jnp.float32)

    keys = jax.random.split(key, 8 + num_layers)
    params = {}
    if c1 != c2:
        params["conv_w"] = wmat(keys[0], c1, c2)
        params["bn_gamma"] = 1.0 + 0.1 * jax.random.normal(keys[1], (1, c2), jnp.float32)
        params["bn_beta"] = 0.1 * jax.random.normal(keys[2], (1, c2), jnp.float32)
        params["bn_mean"] = 0.1 * jax.random.normal(keys[3], (1, c2), jnp.float32)
        params["bn_var"] = jax.random.uniform(keys[4], (1, c2), jnp.float32, 0.5, 1.5)
    else:
        params["conv_w"] = None
    params["lin_w"] = wmat(keys[5], c2, c2)
    params["lin_b"] = bvec(keys[6], c2)

    layers = []
    for i in range(num_layers):
        lk = jax.random.split(keys[8 + i], 13)
        layers.append((
            wmat(lk[0], c2, c2),   # Wq (pre, bias=False)
            wmat(lk[1], c2, c2),   # Wk (pre)
            wmat(lk[2], c2, c2),   # Wv (pre)
            wmat(lk[3], c2, c2),   # MHA in_proj Wq
            wmat(lk[4], c2, c2),   # MHA in_proj Wk
            wmat(lk[5], c2, c2),   # MHA in_proj Wv
            bvec(lk[6], c2),       # in_proj bq
            bvec(lk[7], c2),       # in_proj bk
            bvec(lk[8], c2),       # in_proj bv
            wmat(lk[9], c2, c2),   # out_proj W
            bvec(lk[10], c2),      # out_proj b
            wmat(lk[11], c2, c2),  # fc1 (bias=False)
            wmat(lk[12], c2, c2),  # fc2 (bias=False)
        ))
    params["layers"] = layers
    return params


def prepare_params(params, c2, num_heads, dtype=jnp.bfloat16):
    """Fold BN -> scale/shift, fold q/k/v pre+in projections (scale folded into
    q), fold fc1@fc2, fuse qkv into (C, 3C), reshape Wo head-major, cast bf16."""
    hd = c2 // num_heads
    scale = 1.0 / math.sqrt(hd)
    pp = {}
    if params.get("conv_w") is not None:
        eps = 1e-5
        bn_scale = params["bn_gamma"] / jnp.sqrt(params["bn_var"] + eps)
        pp["conv_w"] = params["conv_w"].astype(dtype)
        pp["bn_scale"] = bn_scale
        pp["bn_shift"] = params["bn_beta"] - params["bn_mean"] * bn_scale
    else:
        pp["conv_w"] = None
    pp["lin_w"] = params["lin_w"].astype(dtype)
    pp["lin_b"] = params["lin_b"]

    layers = []
    for (wq0, wk0, wv0, wqi, wki, wvi, bqi, bki, bvi,
         wo, bo, wfc1, wfc2) in params["layers"]:
        wq = (wq0 @ wqi) * scale           # attention 1/sqrt(hd) folded into q
        bq = bqi * scale
        wk = wk0 @ wki
        wv = wv0 @ wvi
        layers.append({
            "w_qkv": jnp.concatenate([wq, wk, wv], axis=1).astype(dtype),
            "b_qkv": jnp.concatenate([bq, bki, bvi], axis=1),
            "wo": wo.reshape(num_heads, hd, c2).astype(dtype),
            "bo": bo,
            "wfc": (wfc1 @ wfc2).astype(dtype),
        })
    pp["layers"] = layers
    return pp


# ----------------------------------------------------------------------------
if __name__ == "__main__":
    key = jax.random.PRNGKey(0)
    b, c1, c2 = 2, 4, 128           # lane-dense embedding (c2 multiple of 128)
    h = w = 16                      # L = 256 tokens
    num_heads, num_layers = 4, 2

    kx, kp = jax.random.split(key)
    x = jax.random.normal(kx, (b, c1, h, w), jnp.float32)
    raw_params = init_params(kp, c1, c2, num_layers)
    prepared = prepare_params(raw_params, c2, num_heads)

    fwd = jax.jit(functools.partial(transformer_block,
                                    c1=c1, c2=c2, num_heads=num_heads))
    out = jax.block_until_ready(fwd(x, prepared))

    assert out.shape == (b, c2, h, w), out.shape
    assert bool(jnp.all(jnp.isfinite(out)))
    print("KERNEL_OK")
</pallas_src>

<mosaic_0001>
module attributes {stable_mosaic.version = 11 : i64} {
  func.func @qkv_proj_kernel(%arg0: i32, %arg1: memref<512x128xbf16, #tpu.memory_space<vmem>>, %arg2: memref<128x384xbf16, #tpu.memory_space<vmem>>, %arg3: memref<1x384xf32, #tpu.memory_space<vmem>>, %arg4: memref<512x128xbf16, #tpu.memory_space<vmem>>, %arg5: memref<512x128xbf16, #tpu.memory_space<vmem>>, %arg6: memref<512x128xbf16, #tpu.memory_space<vmem>>) attributes {dimension_semantics = [#tpu.dimension_semantics<parallel>], iteration_bounds = array<i64: 1>, scalar_prefetch = 0 : i64, scratch_operands = 0 : i64, tpu.core_type = #tpu.core_type<tc>, window_params = [{transform_indices = @transform_0, window_bounds = array<i64: 512, 128>}, {pipeline_mode = #tpu.pipeline_mode<synchronous>, transform_indices = @transform_1, window_bounds = array<i64: 128, 384>}, {pipeline_mode = #tpu.pipeline_mode<synchronous>, transform_indices = @transform_2, window_bounds = array<i64: 1, 384>}, {transform_indices = @transform_3, window_bounds = array<i64: 512, 128>}, {transform_indices = @transform_4, window_bounds = array<i64: 512, 128>}, {transform_indices = @transform_5, window_bounds = array<i64: 512, 128>}]} {
    %c0 = arith.constant 0 : index
    %c0_0 = arith.constant 0 : index
    %0 = vector.load %arg1[%c0, %c0_0] : memref<512x128xbf16, #tpu.memory_space<vmem>>, vector<512x128xbf16>
    %c0_1 = arith.constant 0 : index
    %c0_2 = arith.constant 0 : index
    %1 = vector.load %arg2[%c0_1, %c0_2] : memref<128x384xbf16, #tpu.memory_space<vmem>>, vector<128x384xbf16>
    %cst = arith.constant dense<0.000000e+00> : vector<512x384xf32>
    %2 = tpu.matmul %0, %1, %cst {dimension_numbers = #tpu.dot_dimension_numbers<[1], [0], [0], [1], [0, 0, 1, 1], [], []>} : vector<512x128xbf16>, vector<128x384xbf16>, vector<512x384xf32> -> vector<512x384xf32>
    %c0_3 = arith.constant 0 : index
    %c0_4 = arith.constant 0 : index
    %3 = vector.load %arg3[%c0_3, %c0_4] : memref<1x384xf32, #tpu.memory_space<vmem>>, vector<1x384xf32>
    %4 = vector.broadcast %3 : vector<1x384xf32> to vector<512x384xf32>
    %5 = arith.addf %2, %4 : vector<512x384xf32>
    %6 = arith.truncf %5 : vector<512x384xf32> to vector<512x384xbf16>
    %7 = vector.extract_strided_slice %6 {offsets = [0, 0], sizes = [512, 128], strides = [1, 1]} : vector<512x384xbf16> to vector<512x128xbf16>
    %c0_5 = arith.constant 0 : index
    %c0_6 = arith.constant 0 : index
    %8 = vector.load %arg4[%c0_5, %c0_6] : memref<512x128xbf16, #tpu.memory_space<vmem>>, vector<512x128xbf16>
    tpu.vector_store %arg4[%c0_5, %c0_6], %7 {strides = array<i32>} : memref<512x128xbf16, #tpu.memory_space<vmem>>, vector<512x128xbf16>,
    %9 = vector.extract_strided_slice %6 {offsets = [0, 128], sizes = [512, 128], strides = [1, 1]} : vector<512x384xbf16> to vector<512x128xbf16>
    %c0_7 = arith.constant 0 : index
    %c0_8 = arith.constant 0 : index
    %10 = vector.load %arg5[%c0_7, %c0_8] : memref<512x128xbf16, #tpu.memory_space<vmem>>, vector<512x128xbf16>
    tpu.vector_store %arg5[%c0_7, %c0_8], %9 {strides = array<i32>} : memref<512x128xbf16, #tpu.memory_space<vmem>>, vector<512x128xbf16>,
    %11 = vector.extract_strided_slice %6 {offsets = [0, 256], sizes = [512, 128], strides = [1, 1]} : vector<512x384xbf16> to vector<512x128xbf16>
    %c0_9 = arith.constant 0 : index
    %c0_10 = arith.constant 0 : index
    %12 = vector.load %arg6[%c0_9, %c0_10] : memref<512x128xbf16, #tpu.memory_space<vmem>>, vector<512x128xbf16>
    tpu.vector_store %arg6[%c0_9, %c0_10], %11 {strides = array<i32>} : memref<512x128xbf16, #tpu.memory_space<vmem>>, vector<512x128xbf16>,
    return
  }
  func.func @transform_0(%arg0: i32) -> (i32, i32) {
    %c0_i32 = arith.constant 0 : i32
    %c0_i32_0 = arith.constant 0 : i32
    return %arg0, %c0_i32 : i32, i32
  }
  func.func @transform_1(%arg0: i32) -> (i32, i32) {
    %c0_i32 = arith.constant 0 : i32
    %c0_i32_0 = arith.constant 0 : i32
    %c0_i32_1 = arith.constant 0 : i32
    return %c0_i32, %c0_i32_0 : i32, i32
  }
  func.func @transform_2(%arg0: i32) -> (i32, i32) {
    %c0_i32 = arith.constant 0 : i32
    %c0_i32_0 = arith.constant 0 : i32
    %c0_i32_1 = arith.constant 0 : i32
    return %c0_i32, %c0_i32_0 : i32, i32
  }
  func.func @transform_3(%arg0: i32) -> (i32, i32) {
    %c0_i32 = arith.constant 0 : i32
    %c0_i32_0 = arith.constant 0 : i32
    return %arg0, %c0_i32 : i32, i32
  }
  func.func @transform_4(%arg0: i32) -> (i32, i32) {
    %c0_i32 = arith.constant 0 : i32
    %c0_i32_0 = arith.constant 0 : i32
    return %arg0, %c0_i32 : i32, i32
  }
  func.func @transform_5(%arg0: i32) -> (i32, i32) {
    %c0_i32 = arith.constant 0 : i32
    %c0_i32_0 = arith.constant 0 : i32
    return %arg0, %c0_i32 : i32, i32
  }
}

module attributes {stable_mosaic.version = 11 : i64} {
  func.func @conv_bn_silu_linear_kernel(%arg0: i32, %arg1: memref<512x4xbf16, #tpu.memory_space<vmem>>, %arg2: memref<4x128xbf16, #tpu.memory_space<vmem>>, %arg3: memref<1x128xf32, #tpu.memory_space<vmem>>, %arg4: memref<1x128xf32, #tpu.memory_space<vmem>>, %arg5: memref<128x128xbf16, #tpu.memory_space<vmem>>, %arg6: memref<1x128xf32, #tpu.memory_space<vmem>>, %arg7: memref<512x128xbf16, #tpu.memory_space<vmem>>) attributes {dimension_semantics = [#tpu.dimension_semantics<parallel>], iteration_bounds = array<i64: 1>, scalar_prefetch = 0 : i64, scratch_operands = 0 : i64, tpu.core_type = #tpu.core_type<tc>, window_params = [{transform_indices = @transform_0, window_bounds = array<i64: 512, 4>}, {pipeline_mode = #tpu.pipeline_mode<synchronous>, transform_indices = @transform_1, window_bounds = array<i64: 4, 128>}, {pipeline_mode = #tpu.pipeline_mode<synchronous>, transform_indices = @transform_2, window_bounds = array<i64: 1, 128>}, {pipeline_mode = #tpu.pipeline_mode<synchronous>, transform_indices = @transform_3, window_bounds = array<i64: 1, 128>}, {pipeline_mode = #tpu.pipeline_mode<synchronous>, transform_indices = @transform_4, window_bounds = array<i64: 128, 128>}, {pipeline_mode = #tpu.pipeline_mode<synchronous>, transform_indices = @transform_5, window_bounds = array<i64: 1, 128>}, {transform_indices = @transform_6, window_bounds = array<i64: 512, 128>}]} {
    %c0 = arith.constant 0 : index
    %c0_0 = arith.constant 0 : index
    %0 = vector.load %arg1[%c0, %c0_0] : memref<512x4xbf16, #tpu.memory_space<vmem>>, vector<512x4xbf16>
    %c0_1 = arith.constant 0 : index
    %c0_2 = arith.constant 0 : index
    %1 = vector.load %arg2[%c0_1, %c0_2] : memref<4x128xbf16, #tpu.memory_space<vmem>>, vector<4x128xbf16>
    %cst = arith.constant dense<0.000000e+00> : vector<512x128xf32>
    %2 = tpu.matmul %0, %1, %cst {dimension_numbers = #tpu.dot_dimension_numbers<[1], [0], [0], [1], [0, 0, 1, 1], [], []>} : vector<512x4xbf16>, vector<4x128xbf16>, vector<512x128xf32> -> vector<512x128xf32>
    %c0_3 = arith.constant 0 : index
    %c0_4 = arith.constant 0 : index
    %3 = vector.load %arg3[%c0_3, %c0_4] : memref<1x128xf32, #tpu.memory_space<vmem>>, vector<1x128xf32>
    %4 = vector.broadcast %3 : vector<1x128xf32> to vector<512x128xf32>
    %5 = arith.mulf %2, %4 : vector<512x128xf32>
    %c0_5 = arith.constant 0 : index
    %c0_6 = arith.constant 0 : index
    %6 = vector.load %arg4[%c0_5, %c0_6] : memref<1x128xf32, #tpu.memory_space<vmem>>, vector<1x128xf32>
    %7 = vector.broadcast %6 : vector<1x128xf32> to vector<512x128xf32>
    %8 = arith.addf %5, %7 : vector<512x128xf32>
    %9 = arith.negf %8 : vector<512x128xf32>
    %10 = math.exp %9 : vector<512x128xf32>
    %cst_7 = arith.constant 1.000000e+00 : f32
    %11 = vector.broadcast %cst_7 : f32 to vector<512x128xf32>
    %12 = arith.addf %11, %10 : vector<512x128xf32>
    %13 = arith.divf %11, %12 : vector<512x128xf32>
    %14 = arith.mulf %8, %13 : vector<512x128xf32>
    %15 = arith.truncf %14 : vector<512x128xf32> to vector<512x128xbf16>
    %c0_8 = arith.constant 0 : index
    %c0_9 = arith.constant 0 : index
    %16 = vector.load %arg5[%c0_8, %c0_9] : memref<128x128xbf16, #tpu.memory_space<vmem>>, vector<128x128xbf16>
    %cst_10 = arith.constant dense<0.000000e+00> : vector<512x128xf32>
    %17 = tpu.matmul %15, %16, %cst_10 {dimension_numbers = #tpu.dot_dimension_numbers<[1], [0], [0], [1], [0, 0, 1, 1], [], []>} : vector<512x128xbf16>, vector<128x128xbf16>, vector<512x128xf32> -> vector<512x128xf32>
    %c0_11 = arith.constant 0 : index
    %c0_12 = arith.constant 0 : index
    %18 = vector.load %arg6[%c0_11, %c0_12] : memref<1x128xf32, #tpu.memory_space<vmem>>, vector<1x128xf32>
    %19 = vector.broadcast %18 : vector<1x128xf32> to vector<512x128xf32>
    %20 = arith.addf %17, %19 : vector<512x128xf32>
    %21 = arith.addf %14, %20 : vector<512x128xf32>
    %22 = arith.truncf %21 : vector<512x128xf32> to vector<512x128xbf16>
    %c0_13 = arith.constant 0 : index
    %c0_14 = arith.constant 0 : index
    %23 = vector.load %arg7[%c0_13, %c0_14] : memref<512x128xbf16, #tpu.memory_space<vmem>>, vector<512x128xbf16>
    tpu.vector_store %arg7[%c0_13, %c0_14], %22 {strides = array<i32>} : memref<512x128xbf16, #tpu.memory_space<vmem>>, vector<512x128xbf16>,
    return
  }
  func.func @transform_0(%arg0: i32) -> (i32, i32) {
    %c0_i32 = arith.constant 0 : i32
    %c0_i32_0 = arith.constant 0 : i32
    return %arg0, %c0_i32 : i32, i32
  }
  func.func @transform_1(%arg0: i32) -> (i32, i32) {
    %c0_i32 = arith.constant 0 : i32
    %c0_i32_0 = arith.constant 0 : i32
    %c0_i32_1 = arith.constant 0 : i32
    return %c0_i32, %c0_i32_0 : i32, i32
  }
  func.func @transform_2(%arg0: i32) -> (i32, i32) {
    %c0_i32 = arith.constant 0 : i32
    %c0_i32_0 = arith.constant 0 : i32
    %c0_i32_1 = arith.constant 0 : i32
    return %c0_i32, %c0_i32_0 : i32, i32
  }
  func.func @transform_3(%arg0: i32) -> (i32, i32) {
    %c0_i32 = arith.constant 0 : i32
    %c0_i32_0 = arith.constant 0 : i32
    %c0_i32_1 = arith.constant 0 : i32
    return %c0_i32, %c0_i32_0 : i32, i32
  }
  func.func @transform_4(%arg0: i32) -> (i32, i32) {
    %c0_i32 = arith.constant 0 : i32
    %c0_i32_0 = arith.constant 0 : i32
    %c0_i32_1 = arith.constant 0 : i32
    return %c0_i32, %c0_i32_0 : i32, i32
  }
  func.func @transform_5(%arg0: i32) -> (i32, i32) {
    %c0_i32 = arith.constant 0 : i32
    %c0_i32_0 = arith.constant 0 : i32
    %c0_i32_1 = arith.constant 0 : i32
    return %c0_i32, %c0_i32_0 : i32, i32
  }
  func.func @transform_6(%arg0: i32) -> (i32, i32) {
    %c0_i32 = arith.constant 0 : i32
    %c0_i32_0 = arith.constant 0 : i32
    return %arg0, %c0_i32 : i32, i32
  }
}

module attributes {stable_mosaic.version = 11 : i64} {
  func.func @attn_ffn_kernel(%arg0: i32, %arg1: i32, %arg2: memref<1x4x128x32xbf16, #tpu.memory_space<vmem>>, %arg3: memref<1x4x256x32xbf16, #tpu.memory_space<vmem>>, %arg4: memref<1x4x256x32xbf16, #tpu.memory_space<vmem>>, %arg5: memref<1x128x128xbf16, #tpu.memory_space<vmem>>, %arg6: memref<4x32x128xbf16, #tpu.memory_space<vmem>>, %arg7: memref<1x128xf32, #tpu.memory_space<vmem>>, %arg8: memref<128x128xbf16, #tpu.memory_space<vmem>>, %arg9: memref<1x128x128xbf16, #tpu.memory_space<vmem>>) attributes {dimension_semantics = [#tpu.dimension_semantics<parallel>, #tpu.dimension_semantics<parallel>], iteration_bounds = array<i64: 2, 2>, scalar_prefetch = 0 : i64, scratch_operands = 0 : i64, tpu.core_type = #tpu.core_type<tc>, window_params = [{transform_indices = @transform_0, window_bounds = array<i64: 1, 4, 128, 32>}, {transform_indices = @transform_1, window_bounds = array<i64: 1, 4, 256, 32>}, {transform_indices = @transform_2, window_bounds = array<i64: 1, 4, 256, 32>}, {transform_indices = @transform_3, window_bounds = array<i64: 1, 128, 128>}, {pipeline_mode = #tpu.pipeline_mode<synchronous>, transform_indices = @transform_4, window_bounds = array<i64: 4, 32, 128>}, {pipeline_mode = #tpu.pipeline_mode<synchronous>, transform_indices = @transform_5, window_bounds = array<i64: 1, 128>}, {pipeline_mode = #tpu.pipeline_mode<synchronous>, transform_indices = @transform_6, window_bounds = array<i64: 128, 128>}, {transform_indices = @transform_7, window_bounds = array<i64: 1, 128, 128>}]} {
    %c0 = arith.constant 0 : index
    %c0_0 = arith.constant 0 : index
    %c0_1 = arith.constant 0 : index
    %c0_2 = arith.constant 0 : index
    %0 = vector.load %arg2[%c0, %c0_0, %c0_1, %c0_2] : memref<1x4x128x32xbf16, #tpu.memory_space<vmem>>, vector<1x4x128x32xbf16>
    %1 = vector.shape_cast %0 : vector<1x4x128x32xbf16> to vector<4x128x32xbf16>
    %c0_3 = arith.constant 0 : index
    %c0_4 = arith.constant 0 : index
    %c0_5 = arith.constant 0 : index
    %c0_6 = arith.constant 0 : index
    %2 = vector.load %arg3[%c0_3, %c0_4, %c0_5, %c0_6] : memref<1x4x256x32xbf16, #tpu.memory_space<vmem>>, vector<1x4x256x32xbf16>
    %3 = vector.shape_cast %2 : vector<1x4x256x32xbf16> to vector<4x256x32xbf16>
    %c0_7 = arith.constant 0 : index
    %c0_8 = arith.constant 0 : index
    %c0_9 = arith.constant 0 : index
    %c0_10 = arith.constant 0 : index
    %4 = vector.load %arg4[%c0_7, %c0_8, %c0_9, %c0_10] : memref<1x4x256x32xbf16, #tpu.memory_space<vmem>>, vector<1x4x256x32xbf16>
    %5 = vector.shape_cast %4 : vector<1x4x256x32xbf16> to vector<4x256x32xbf16>
    "tpu.trace_start"() <{level = 10 : i32, message = "hqd,hkd->hqk"}> : () -> ()
    %cst = arith.constant dense<0.000000e+00> : vector<4x128x256xf32>
    %6 = tpu.matmul %1, %3, %cst {dimension_numbers = #tpu.dot_dimension_numbers<[2], [2], [1], [1], [0, 0, 0, 1, 1, 1], [0], [0]>} : vector<4x128x32xbf16>, vector<4x256x32xbf16>, vector<4x128x256xf32> -> vector<4x128x256xf32>
    "tpu.trace_stop"() : () -> ()
    %cst_11 = arith.constant dense<0xFF800000> : vector<4x128xf32>
    %7 = vector.multi_reduction <maximumf>, %6, %cst_11 [2] : vector<4x128x256xf32> to vector<4x128xf32>
    %8 = vector.shape_cast %7 : vector<4x128xf32> to vector<4x128x1xf32>
    %9 = vector.broadcast %8 : vector<4x128x1xf32> to vector<4x128x256xf32>
    %10 = arith.subf %6, %9 : vector<4x128x256xf32>
    %11 = math.exp %10 : vector<4x128x256xf32>
    %cst_12 = arith.constant dense<0.000000e+00> : vector<4x128xf32>
    %12 = vector.multi_reduction <add>, %11, %cst_12 [2] : vector<4x128x256xf32> to vector<4x128xf32>
    %13 = vector.shape_cast %12 : vector<4x128xf32> to vector<4x128x1xf32>
    %14 = tpu.reciprocal %13 {approx = true} : vector<4x128x1xf32> -> vector<4x128x1xf32>
    %15 = vector.broadcast %14 : vector<4x128x1xf32> to vector<4x128x256xf32>
    %16 = arith.mulf %11, %15 : vector<4x128x256xf32>
    %17 = arith.truncf %16 : vector<4x128x256xf32> to vector<4x128x256xbf16>
    "tpu.trace_start"() <{level = 10 : i32, message = "hqk,hkd->hqd"}> : () -> ()
    %cst_13 = arith.constant dense<0.000000e+00> : vector<4x128x32xf32>
    %18 = tpu.matmul %17, %5, %cst_13 {dimension_numbers = #tpu.dot_dimension_numbers<[2], [1], [1], [2], [0, 0, 0, 1, 1, 2], [0], [0]>} : vector<4x128x256xbf16>, vector<4x256x32xbf16>, vector<4x128x32xf32> -> vector<4x128x32xf32>
    "tpu.trace_stop"() : () -> ()
    %19 = arith.truncf %18 : vector<4x128x32xf32> to vector<4x128x32xbf16>
    %c0_14 = arith.constant 0 : index
    %c0_15 = arith.constant 0 : index
    %c0_16 = arith.constant 0 : index
    %20 = vector.load %arg6[%c0_14, %c0_15, %c0_16] : memref<4x32x128xbf16, #tpu.memory_space<vmem>>, vector<4x32x128xbf16>
    %cst_17 = arith.constant 0.000000e+00 : f32
    %21 = vector.broadcast %cst_17 : f32 to vector<128x128xf32>
    %22 = vector.extract_strided_slice %19 {offsets = [0, 0, 0], sizes = [1, 128, 32], strides = [1, 1, 1]} : vector<4x128x32xbf16> to vector<1x128x32xbf16>
    %23 = vector.shape_cast %22 : vector<1x128x32xbf16> to vector<128x32xbf16>
    %24 = vector.extract_strided_slice %20 {offsets = [0, 0, 0], sizes = [1, 32, 128], strides = [1, 1, 1]} : vector<4x32x128xbf16> to vector<1x32x128xbf16>
    %25 = vector.shape_cast %24 : vector<1x32x128xbf16> to vector<32x128xbf16>
    %cst_18 = arith.constant dense<0.000000e+00> : vector<128x128xf32>
    %26 = tpu.matmul %23, %25, %cst_18 {dimension_numbers = #tpu.dot_dimension_numbers<[1], [0], [0], [1], [0, 0, 1, 1], [], []>} : vector<128x32xbf16>, vector<32x128xbf16>, vector<128x128xf32> -> vector<128x128xf32>
    %27 = arith.addf %21, %26 : vector<128x128xf32>
    %28 = vector.extract_strided_slice %19 {offsets = [1, 0, 0], sizes = [1, 128, 32], strides = [1, 1, 1]} : vector<4x128x32xbf16> to vector<1x128x32xbf16>
    %29 = vector.shape_cast %28 : vector<1x128x32xbf16> to vector<128x32xbf16>
    %30 = vector.extract_strided_slice %20 {offsets = [1, 0, 0], sizes = [1, 32, 128], strides = [1, 1, 1]} : vector<4x32x128xbf16> to vector<1x32x128xbf16>
    %31 = vector.shape_cast %30 : vector<1x32x128xbf16> to vector<32x128xbf16>
    %cst_19 = arith.constant dense<0.000000e+00> : vector<128x128xf32>
    %32 = tpu.matmul %29, %31, %cst_19 {dimension_numbers = #tpu.dot_dimension_numbers<[1], [0], [0], [1], [0, 0, 1, 1], [], []>} : vector<128x32xbf16>, vector<32x128xbf16>, vector<128x128xf32> -> vector<128x128xf32>
    %33 = arith.addf %27, %32 : vector<128x128xf32>
    %34 = vector.extract_strided_slice %19 {offsets = [2, 0, 0], sizes = [1, 128, 32], strides = [1, 1, 1]} : vector<4x128x32xbf16> to vector<1x128x32xbf16>
    %35 = vector.shape_cast %34 : vector<1x128x32xbf16> to vector<128x32xbf16>
    %36 = vector.extract_strided_slice %20 {offsets = [2, 0, 0], sizes = [1, 32, 128], strides = [1, 1, 1]} : vector<4x32x128xbf16> to vector<1x32x128xbf16>
    %37 = vector.shape_cast %36 : vector<1x32x128xbf16> to vector<32x128xbf16>
    %cst_20 = arith.constant dense<0.000000e+00> : vector<128x128xf32>
    %38 = tpu.matmul %35, %37, %cst_20 {dimension_numbers = #tpu.dot_dimension_numbers<[1], [0], [0], [1], [0, 0, 1, 1], [], []>} : vector<128x32xbf16>, vector<32x128xbf16>, vector<128x128xf32> -> vector<128x128xf32>
    %39 = arith.addf %33, %38 : vector<128x128xf32>
    %40 = vector.extract_strided_slice %19 {offsets = [3, 0, 0], sizes = [1, 128, 32], strides = [1, 1, 1]} : vector<4x128x32xbf16> to vector<1x128x32xbf16>
    %41 = vector.shape_cast %40 : vector<1x128x32xbf16> to vector<128x32xbf16>
    %42 = vector.extract_strided_slice %20 {offsets = [3, 0, 0], sizes = [1, 32, 128], strides = [1, 1, 1]} : vector<4x32x128xbf16> to vector<1x32x128xbf16>
    %43 = vector.shape_cast %42 : vector<1x32x128xbf16> to vector<32x128xbf16>
    %cst_21 = arith.constant dense<0.000000e+00> : vector<128x128xf32>
    %44 = tpu.matmul %41, %43, %cst_21 {dimension_numbers = #tpu.dot_dimension_numbers<[1], [0], [0], [1], [0, 0, 1, 1], [], []>} : vector<128x32xbf16>, vector<32x128xbf16>, vector<128x128xf32> -> vector<128x128xf32>
    %45 = arith.addf %39, %44 : vector<128x128xf32>
    %c0_22 = arith.constant 0 : index
    %c0_23 = arith.constant 0 : index
    %46 = vector.load %arg7[%c0_22, %c0_23] : memref<1x128xf32, #tpu.memory_space<vmem>>, vector<1x128xf32>
    %47 = vector.broadcast %46 : vector<1x128xf32> to vector<128x128xf32>
    %48 = arith.addf %45, %47 : vector<128x128xf32>
    %c0_24 = arith.constant 0 : index
    %c0_25 = arith.constant 0 : index
    %c0_26 = arith.constant 0 : index
    %49 = vector.load %arg5[%c0_24, %c0_25, %c0_26] : memref<1x128x128xbf16, #tpu.memory_space<vmem>>, vector<1x128x128xbf16>
    %50 = vector.shape_cast %49 : vector<1x128x128xbf16> to vector<128x128xbf16>
    %51 = arith.extf %50 : vector<128x128xbf16> to vector<128x128xf32>
    %52 = arith.addf %48, %51 : vector<128x128xf32>
    %53 = arith.truncf %52 : vector<128x128xf32> to vector<128x128xbf16>
    %c0_27 = arith.constant 0 : index
    %c0_28 = arith.constant 0 : index
    %54 = vector.load %arg8[%c0_27, %c0_28] : memref<128x128xbf16, #tpu.memory_space<vmem>>, vector<128x128xbf16>
    %cst_29 = arith.constant dense<0.000000e+00> : vector<128x128xf32>
    %55 = tpu.matmul %53, %54, %cst_29 {dimension_numbers = #tpu.dot_dimension_numbers<[1], [0], [0], [1], [0, 0, 1, 1], [], []>} : vector<128x128xbf16>, vector<128x128xbf16>, vector<128x128xf32> -> vector<128x128xf32>
    %56 = arith.addf %52, %55 : vector<128x128xf32>
    %57 = arith.truncf %56 : vector<128x128xf32> to vector<128x128xbf16>
    %c0_30 = arith.constant 0 : index
    %c0_31 = arith.constant 0 : index
    %c0_32 = arith.constant 0 : index
    %58 = vector.load %arg9[%c0_30, %c0_31, %c0_32] : memref<1x128x128xbf16, #tpu.memory_space<vmem>>, vector<1x128x128xbf16>
    %59 = vector.shape_cast %58 : vector<1x128x128xbf16> to vector<128x128xbf16>
    %60 = vector.shape_cast %57 : vector<128x128xbf16> to vector<1x128x128xbf16>
    tpu.vector_store %arg9[%c0_30, %c0_31, %c0_32], %60 {strides = array<i32>} : memref<1x128x128xbf16, #tpu.memory_space<vmem>>, vector<1x128x128xbf16>,
    return
  }
  func.func @transform_0(%arg0: i32, %arg1: i32) -> (i32, i32, i32, i32) {
    %c0_i32 = arith.constant 0 : i32
    %c0_i32_0 = arith.constant 0 : i32
    %c0_i32_1 = arith.constant 0 : i32
    return %arg0, %c0_i32, %arg1, %c0_i32_0 : i32, i32, i32, i32
  }
  func.func @transform_1(%arg0: i32, %arg1: i32) -> (i32, i32, i32, i32) {
    %c0_i32 = arith.constant 0 : i32
    %c0_i32_0 = arith.constant 0 : i32
    %c0_i32_1 = arith.constant 0 : i32
    %c0_i32_2 = arith.constant 0 : i32
    return %arg0, %c0_i32, %c0_i32_0, %c0_i32_1 : i32, i32, i32, i32
  }
  func.func @transform_2(%arg0: i32, %arg1: i32) -> (i32, i32, i32, i32) {
    %c0_i32 = arith.constant 0 : i32
    %c0_i32_0 = arith.constant 0 : i32
    %c0_i32_1 = arith.constant 0 : i32
    %c0_i32_2 = arith.constant 0 : i32
    return %arg0, %c0_i32, %c0_i32_0, %c0_i32_1 : i32, i32, i32, i32
  }
  func.func @transform_3(%arg0: i32, %arg1: i32) -> (i32, i32, i32) {
    %c0_i32 = arith.constant 0 : i32
    %c0_i32_0 = arith.constant 0 : i32
    return %arg0, %arg1, %c0_i32 : i32, i32, i32
  }
  func.func @transform_4(%arg0: i32, %arg1: i32) -> (i32, i32, i32) {
    %c0_i32 = arith.constant 0 : i32
    %c0_i32_0 = arith.constant 0 : i32
    %c0_i32_1 = arith.constant 0 : i32
    %c0_i32_2 = arith.constant 0 : i32
    return %c0_i32, %c0_i32_0, %c0_i32_1 : i32, i32, i32
  }
  func.func @transform_5(%arg0: i32, %arg1: i32) -> (i32, i32) {
    %c0_i32 = arith.constant 0 : i32
    %c0_i32_0 = arith.constant 0 : i32
    %c0_i32_1 = arith.constant 0 : i32
    return %c0_i32, %c0_i32_0 : i32, i32
  }
  func.func @transform_6(%arg0: i32, %arg1: i32) -> (i32, i32) {
    %c0_i32 = arith.constant 0 : i32
    %c0_i32_0 = arith.constant 0 : i32
    %c0_i32_1 = arith.constant 0 : i32
    return %c0_i32, %c0_i32_0 : i32, i32
  }
  func.func @transform_7(%arg0: i32, %arg1: i32) -> (i32, i32, i32) {
    %c0_i32 = arith.constant 0 : i32
    %c0_i32_0 = arith.constant 0 : i32
    return %arg0, %arg1, %c0_i32 : i32, i32, i32
  }
}

</mosaic_0001>

<llo_original>
// kernel: transformer_block.6
$region0: #{transformer_block.6}
  #allocation0 [shape = 'u32[]', space=smem, size = 0x4, offset = 0x4, fixed_abs, tag = 'smem constant byte address 0x4 - core index']
  #allocation1 [shape = 'u32[72,128]{1,0:T(1,128)}', space=vmem, size = 0x9000, scoped, tag = 'internal scratch']
  %s0 = inlined_call_operand.vmem [shape: bf16[512,128], index: 0, kind: input, shape index: {}]
  %s1 = inlined_call_operand.vmem [shape: bf16[128,384], index: 1, kind: input, shape index: {}]
  %s2 = inlined_call_operand.vmem [shape: f32[1,384], index: 2, kind: input, shape index: {}]
  %s3 = inlined_call_operand.vmem [shape: bf16[512,128], index: 3, kind: output, shape index: {0}]
  %s4 = inlined_call_operand.vmem [shape: bf16[512,128], index: 4, kind: output, shape index: {1}]
  %s5 = inlined_call_operand.vmem [shape: bf16[512,128], index: 5, kind: output, shape index: {2}]
  %6 = xla_tuple %s3, %s4, %s5
  %s7 = sld [smem:[#allocation0]]
  $region38: #{transformer_block.6} parent=0
    _
  %s9 = ssub.s32 1, %s7
  %s10 = scalar_select 0, %s9, %s7
  // Predicated region
  $region2: #{transformer_block.6} parent=0 // pred_check
    _
  $region3: #{transformer_block.6} parent=0 // pred_check_branch
    %12 = sbr.rel (0) target = $region5
  $region4: #{transformer_block.6} parent=0 // pred_region
    _
  $region5: #{transformer_block.6} parent=0 // pred_fallthru
    _
  // Predicated region
  $region6: #{transformer_block.6} parent=0 // pred_check
    _
  $region7: #{transformer_block.6} parent=0 // pred_check_branch
    %14 = sbr.rel (0) target = $region9
  $region8: #{transformer_block.6} parent=0 // pred_region
    _
  $region9: #{transformer_block.6} parent=0 // pred_fallthru
    _
  // Predicated region
  $region10: #{transformer_block.6} parent=0 // pred_check
    _
  $region11: #{transformer_block.6} parent=0 // pred_check_branch
    %16 = sbr.rel (0) target = $region13
  $region12: #{transformer_block.6} parent=0 // pred_region
    _
  $region13: #{transformer_block.6} parent=0 // pred_fallthru
    _
  %v17 = vld [vmem:[%s0] sm:$0xf]
  %v18 = vld [vmem:[%s0 + $0x4] sm:$0xf]
  %v19 = vld [vmem:[%s0 + $0x8] sm:$0xf]
  %v20 = vld [vmem:[%s0 + $0xc] sm:$0xf]
  %v21 = vld [vmem:[%s0 + $0x10] sm:$0xf]
  %v22 = vld [vmem:[%s0 + $0x14] sm:$0xf]
  %v23 = vld [vmem:[%s0 + $0x18] sm:$0xf]
  %v24 = vld [vmem:[%s0 + $0x1c] sm:$0xf]
  %v25 = vld [vmem:[%s0 + $0x20] sm:$0xf]
  %v26 = vld [vmem:[%s0 + $0x24] sm:$0xf]
  %v27 = vld [vmem:[%s0 + $0x28] sm:$0xf]
  %v28 = vld [vmem:[%s0 + $0x2c] sm:$0xf]
  %v29 = vld [vmem:[%s0 + $0x30] sm:$0xf]
  %v30 = vld [vmem:[%s0 + $0x34] sm:$0xf]
  %v31 = vld [vmem:[%s0 + $0x38] sm:$0xf]
  %v32 = vld [vmem:[%s0 + $0x3c] sm:$0xf]
  %v33 = vld [vmem:[%s0 + $0x40] sm:$0xf]
  %v34 = vld [vmem:[%s0 + $0x44] sm:$0xf]
  %v35 = vld [vmem:[%s0 + $0x48] sm:$0xf]
  %v36 = vld [vmem:[%s0 + $0x4c] sm:$0xf]
  %v37 = vld [vmem:[%s0 + $0x50] sm:$0xf]
  %v38 = vld [vmem:[%s0 + $0x54] sm:$0xf]
  %v39 = vld [vmem:[%s0 + $0x58] sm:$0xf]
  %v40 = vld [vmem:[%s0 + $0x5c] sm:$0xf]
  %v41 = vld [vmem:[%s0 + $0x60] sm:$0xf]
  %v42 = vld [vmem:[%s0 + $0x64] sm:$0xf]
  %v43 = vld [vmem:[%s0 + $0x68] sm:$0xf]
  %v44 = vld [vmem:[%s0 + $0x6c] sm:$0xf]
  %v45 = vld [vmem:[%s0 + $0x70] sm:$0xf]
  %v46 = vld [vmem:[%s0 + $0x74] sm:$0xf]
  %v47 = vld [vmem:[%s0 + $0x78] sm:$0xf]
  %v48 = vld [vmem:[%s0 + $0x7c] sm:$0xf]
  %v49 = vld [vmem:[%s0 + $0x80] sm:$0xf]
  %v50 = vld [vmem:[%s0 + $0x84] sm:$0xf]
  %v51 = vld [vmem:[%s0 + $0x88] sm:$0xf]
  %v52 = vld [vmem:[%s0 + $0x8c] sm:$0xf]
  %v53 = vld [vmem:[%s0 + $0x90] sm:$0xf]
  %v54 = vld [vmem:[%s0 + $0x94] sm:$0xf]
  %v55 = vld [vmem:[%s0 + $0x98] sm:$0xf]
  %v56 = vld [vmem:[%s0 + $0x9c] sm:$0xf]
  %v57 = vld [vmem:[%s0 + $0xa0] sm:$0xf]
  %v58 = vld [vmem:[%s0 + $0xa4] sm:$0xf]
  %v59 = vld [vmem:[%s0 + $0xa8] sm:$0xf]
  %v60 = vld [vmem:[%s0 + $0xac] sm:$0xf]
  %v61 = vld [vmem:[%s0 + $0xb0] sm:$0xf]
  %v62 = vld [vmem:[%s0 + $0xb4] sm:$0xf]
  %v63 = vld [vmem:[%s0 + $0xb8] sm:$0xf]
  %v64 = vld [vmem:[%s0 + $0xbc] sm:$0xf]
  %v65 = vld [vmem:[%s0 + $0xc0] sm:$0xf]
  %v66 = vld [vmem:[%s0 + $0xc4] sm:$0xf]
  %v67 = vld [vmem:[%s0 + $0xc8] sm:$0xf]
  %v68 = vld [vmem:[%s0 + $0xcc] sm:$0xf]
  %v69 = vld [vmem:[%s0 + $0xd0] sm:$0xf]
  %v70 = vld [vmem:[%s0 + $0xd4] sm:$0xf]
  %v71 = vld [vmem:[%s0 + $0xd8] sm:$0xf]
  %v72 = vld [vmem:[%s0 + $0xdc] sm:$0xf]
  %v73 = vld [vmem:[%s0 + $0xe0] sm:$0xf]
  %v74 = vld [vmem:[%s0 + $0xe4] sm:$0xf]
  %v75 = vld [vmem:[%s0 + $0xe8] sm:$0xf]
  %v76 = vld [vmem:[%s0 + $0xec] sm:$0xf]
  %v77 = vld [vmem:[%s0 + $0xf0] sm:$0xf]
  %v78 = vld [vmem:[%s0 + $0xf4] sm:$0xf]
  %v79 = vld [vmem:[%s0 + $0xf8] sm:$0xf]
  %v80 = vld [vmem:[%s0 + $0xfc] sm:$0xf]
  %v81 = vld [vmem:[%s1] sm:$0xff]
  %v82 = vld [vmem:[%s1 + $0x8] sm:$0xf]
  %v83 = vld [vmem:[%s1 + $0xc] sm:$0xff]
  %v84 = vld [vmem:[%s1 + $0x14] sm:$0xf]
  %v85 = vld [vmem:[%s1 + $0x18] sm:$0xff]
  %v86 = vld [vmem:[%s1 + $0x20] sm:$0xf]
  %v87 = vld [vmem:[%s1 + $0x24] sm:$0xff]
  %v88 = vld [vmem:[%s1 + $0x2c] sm:$0xf]
  %v89 = vld [vmem:[%s1 + $0x30] sm:$0xff]
  %v90 = vld [vmem:[%s1 + $0x38] sm:$0xf]
  %v91 = vld [vmem:[%s1 + $0x3c] sm:$0xff]
  %v92 = vld [vmem:[%s1 + $0x44] sm:$0xf]
  %v93 = vld [vmem:[%s1 + $0x48] sm:$0xff]
  %v94 = vld [vmem:[%s1 + $0x50] sm:$0xf]
  %v95 = vld [vmem:[%s1 + $0x54] sm:$0xff]
  %v96 = vld [vmem:[%s1 + $0x5c] sm:$0xf]
  %v97 = vld [vmem:[%s1 + $0x60] sm:$0xff]
  %v98 = vld [vmem:[%s1 + $0x68] sm:$0xf]
  %v99 = vld [vmem:[%s1 + $0x6c] sm:$0xff]
  %v100 = vld [vmem:[%s1 + $0x74] sm:$0xf]
  %v101 = vld [vmem:[%s1 + $0x78] sm:$0xff]
  %v102 = vld [vmem:[%s1 + $0x80] sm:$0xf]
  %v103 = vld [vmem:[%s1 + $0x84] sm:$0xff]
  %v104 = vld [vmem:[%s1 + $0x8c] sm:$0xf]
  %v105 = vld [vmem:[%s1 + $0x90] sm:$0xff]
  %v106 = vld [vmem:[%s1 + $0x98] sm:$0xf]
  %v107 = vld [vmem:[%s1 + $0x9c] sm:$0xff]
  %v108 = vld [vmem:[%s1 + $0xa4] sm:$0xf]
  %v109 = vld [vmem:[%s1 + $0xa8] sm:$0xff]
  %v110 = vld [vmem:[%s1 + $0xb0] sm:$0xf]
  %v111 = vld [vmem:[%s1 + $0xb4] sm:$0xff]
  %v112 = vld [vmem:[%s1 + $0xbc] sm:$0xf]
  %v113 = vld [vmem:[%s2] sm:$0x7]
  %v115 = vperm.slane %v113, 0
  %v116 = vperm.slane %v113, 1
  %v117 = vperm.slane %v113, 2
  %v185 = vunpack.c.l.b16 %v17
  %v186 = vunpack.c.l.b16 %v18
  %v187 = vunpack.c.l.b16 %v19
  %v188 = vunpack.c.l.b16 %v20
  %v189 = vunpack.c.l.b16 %v21
  %v190 = vunpack.c.l.b16 %v22
  %v191 = vunpack.c.l.b16 %v23
  %v192 = vunpack.c.l.b16 %v24
  %v193 = vunpack.c.l.b16 %v25
  %v194 = vunpack.c.l.b16 %v26
  %v195 = vunpack.c.l.b16 %v27
  %v196 = vunpack.c.l.b16 %v28
  %v197 = vunpack.c.l.b16 %v29
  %v198 = vunpack.c.l.b16 %v30
  %v199 = vunpack.c.l.b16 %v31
  %v200 = vunpack.c.l.b16 %v32
  %v201 = vunpack.c.l.b16 %v33
  %v202 = vunpack.c.l.b16 %v34
  %v203 = vunpack.c.l.b16 %v35
  %v204 = vunpack.c.l.b16 %v36
  %v205 = vunpack.c.l.b16 %v37
  %v206 = vunpack.c.l.b16 %v38
  %v207 = vunpack.c.l.b16 %v39
  %v208 = vunpack.c.l.b16 %v40
  %v209 = vunpack.c.l.b16 %v41
  %v210 = vunpack.c.l.b16 %v42
  %v211 = vunpack.c.l.b16 %v43
  %v212 = vunpack.c.l.b16 %v44
  %v213 = vunpack.c.l.b16 %v45
  %v214 = vunpack.c.l.b16 %v46
  %v215 = vunpack.c.l.b16 %v47
  %v216 = vunpack.c.l.b16 %v48
  %v217 = vunpack.c.l.b16 %v49
  %v218 = vunpack.c.l.b16 %v50
  %v219 = vunpack.c.l.b16 %v51
  %v220 = vunpack.c.l.b16 %v52
  %v221 = vunpack.c.l.b16 %v53
  %v222 = vunpack.c.l.b16 %v54
  %v223 = vunpack.c.l.b16 %v55
  %v224 = vunpack.c.l.b16 %v56
  %v225 = vunpack.c.l.b16 %v57
  %v226 = vunpack.c.l.b16 %v58
  %v227 = vunpack.c.l.b16 %v59
  %v228 = vunpack.c.l.b16 %v60
  %v229 = vunpack.c.l.b16 %v61
  %v230 = vunpack.c.l.b16 %v62
  %v231 = vunpack.c.l.b16 %v63
  %v232 = vunpack.c.l.b16 %v64
  %v233 = vunpack.c.l.b16 %v65
  %v234 = vunpack.c.l.b16 %v66
  %v235 = vunpack.c.l.b16 %v67
  %v236 = vunpack.c.l.b16 %v68
  %v237 = vunpack.c.l.b16 %v69
  %v238 = vunpack.c.l.b16 %v70
  %v239 = vunpack.c.l.b16 %v71
  %v240 = vunpack.c.l.b16 %v72
  %v241 = vunpack.c.l.b16 %v73
  %v242 = vunpack.c.l.b16 %v74
  %v243 = vunpack.c.l.b16 %v75
  %v244 = vunpack.c.l.b16 %v76
  %v245 = vunpack.c.l.b16 %v77
  %v246 = vunpack.c.l.b16 %v78
  %v247 = vunpack.c.l.b16 %v79
  %v248 = vunpack.c.l.b16 %v80
  %v249 = vpack.c.b16 %v186, %v185
  %v250 = vpack.c.b16 %v188, %v187
  %v251 = vpack.c.b16 %v190, %v189
  %v252 = vpack.c.b16 %v192, %v191
  %v253 = vpack.c.b16 %v194, %v193
  %v254 = vpack.c.b16 %v196, %v195
  %v255 = vpack.c.b16 %v198, %v197
  %v256 = vpack.c.b16 %v200, %v199
  %v257 = vpack.c.b16 %v202, %v201
  %v258 = vpack.c.b16 %v204, %v203
  %v259 = vpack.c.b16 %v206, %v205
  %v260 = vpack.c.b16 %v208, %v207
  %v261 = vpack.c.b16 %v210, %v209
  %v262 = vpack.c.b16 %v212, %v211
  %v263 = vpack.c.b16 %v214, %v213
  %v264 = vpack.c.b16 %v216, %v215
  %v265 = vpack.c.b16 %v218, %v217
  %v266 = vpack.c.b16 %v220, %v219
  %v267 = vpack.c.b16 %v222, %v221
  %v268 = vpack.c.b16 %v224, %v223
  %v269 = vpack.c.b16 %v226, %v225
  %v270 = vpack.c.b16 %v228, %v227
  %v271 = vpack.c.b16 %v230, %v229
  %v272 = vpack.c.b16 %v232, %v231
  %v273 = vpack.c.b16 %v234, %v233
  %v274 = vpack.c.b16 %v236, %v235
  %v275 = vpack.c.b16 %v238, %v237
  %v276 = vpack.c.b16 %v240, %v239
  %v277 = vpack.c.b16 %v242, %v241
  %v278 = vpack.c.b16 %v244, %v243
  %v279 = vpack.c.b16 %v246, %v245
  %v280 = vpack.c.b16 %v248, %v247
  %v345 = vunpack.c.l.b16 %v81
  %v346 = vunpack.c.h.b16 %v81
  %v347 = vunpack.c.l.b16 %v82
  %v348 = vunpack.c.l.b16 %v83
  %v349 = vunpack.c.h.b16 %v83
  %v350 = vunpack.c.l.b16 %v84
  %v351 = vunpack.c.l.b16 %v85
  %v352 = vunpack.c.h.b16 %v85
  %v353 = vunpack.c.l.b16 %v86
  %v354 = vunpack.c.l.b16 %v87
  %v355 = vunpack.c.h.b16 %v87
  %v356 = vunpack.c.l.b16 %v88
  %v357 = vunpack.c.l.b16 %v89
  %v358 = vunpack.c.h.b16 %v89
  %v359 = vunpack.c.l.b16 %v90
  %v360 = vunpack.c.l.b16 %v91
  %v361 = vunpack.c.h.b16 %v91
  %v362 = vunpack.c.l.b16 %v92
  %v363 = vunpack.c.l.b16 %v93
  %v364 = vunpack.c.h.b16 %v93
  %v365 = vunpack.c.l.b16 %v94
  %v366 = vunpack.c.l.b16 %v95
  %v367 = vunpack.c.h.b16 %v95
  %v368 = vunpack.c.l.b16 %v96
  %v369 = vunpack.c.l.b16 %v97
  %v370 = vunpack.c.h.b16 %v97
  %v371 = vunpack.c.l.b16 %v98
  %v372 = vunpack.c.l.b16 %v99
  %v373 = vunpack.c.h.b16 %v99
  %v374 = vunpack.c.l.b16 %v100
  %v375 = vunpack.c.l.b16 %v101
  %v376 = vunpack.c.h.b16 %v101
  %v377 = vunpack.c.l.b16 %v102
  %v378 = vunpack.c.l.b16 %v103
  %v379 = vunpack.c.h.b16 %v103
  %v380 = vunpack.c.l.b16 %v104
  %v381 = vunpack.c.l.b16 %v105
  %v382 = vunpack.c.h.b16 %v105
  %v383 = vunpack.c.l.b16 %v106
  %v384 = vunpack.c.l.b16 %v107
  %v385 = vunpack.c.h.b16 %v107
  %v386 = vunpack.c.l.b16 %v108
  %v387 = vunpack.c.l.b16 %v109
  %v388 = vunpack.c.h.b16 %v109
  %v389 = vunpack.c.l.b16 %v110
  %v390 = vunpack.c.l.b16 %v111
  %v391 = vunpack.c.h.b16 %v111
  %v392 = vunpack.c.l.b16 %v112
  %v393 = vpack.c.b16 %v348, %v345
  %v394 = vpack.c.b16 %v349, %v346
  %v395 = vpack.c.b16 %v350, %v347
  %v396 = vpack.c.b16 %v354, %v351
  %v397 = vpack.c.b16 %v355, %v352
  %v398 = vpack.c.b16 %v356, %v353
  %v399 = vpack.c.b16 %v360, %v357
  %v400 = vpack.c.b16 %v361, %v358
  %v401 = vpack.c.b16 %v362, %v359
  %v402 = vpack.c.b16 %v366, %v363
  %v403 = vpack.c.b16 %v367, %v364
  %v404 = vpack.c.b16 %v368, %v365
  %v405 = vpack.c.b16 %v372, %v369
  %v406 = vpack.c.b16 %v373, %v370
  %v407 = vpack.c.b16 %v374, %v371
  %v408 = vpack.c.b16 %v378, %v375
  %v409 = vpack.c.b16 %v379, %v376
  %v410 = vpack.c.b16 %v380, %v377
  %v411 = vpack.c.b16 %v384, %v381
  %v412 = vpack.c.b16 %v385, %v382
  %v413 = vpack.c.b16 %v386, %v383
  %v414 = vpack.c.b16 %v390, %v387
  %v415 = vpack.c.b16 %v391, %v388
  %v416 = vpack.c.b16 %v392, %v389
  %441 = vmatpush.bf16.msra.mxu0 %v414
  %442 = vmatpush.bf16.msra.mxu0 %v411
  %443 = vmatpush.bf16.msra.mxu0 %v408
  %444 = vmatpush.bf16.msra.mxu0 %v405
  %445 = vmatpush.bf16.msra.mxu0 %v402
  %446 = vmatpush.bf16.msra.mxu0 %v399
  %447 = vmatpush.bf16.msra.mxu0 %v396
  %448 = vmatpush.bf16.msra.mxu0 %v393
  %449 = vmatmul.bf16.gmra.mxu0 %v249
  %v450 = vpop.f32.mrf.mxu0
  %v451 = vadd.f32 %v115, %v450
  %v452 = vpop.f32.mrf.mxu0
  %v453 = vadd.f32 %v115, %v452
  %454 = vmatmul.bf16.gmra.mxu0 %v250
  %v455 = vpop.f32.mrf.mxu0
  %v456 = vadd.f32 %v115, %v455
  %v457 = vpop.f32.mrf.mxu0
  %v458 = vadd.f32 %v115, %v457
  %459 = vmatmul.bf16.gmra.mxu0 %v251
  %v460 = vpop.f32.mrf.mxu0
  %v461 = vadd.f32 %v115, %v460
  %v462 = vpop.f32.mrf.mxu0
  %v463 = vadd.f32 %v115, %v462
  %464 = vmatmul.bf16.gmra.mxu0 %v252
  %v465 = vpop.f32.mrf.mxu0
  %v466 = vadd.f32 %v115, %v465
  %v467 = vpop.f32.mrf.mxu0
  %v468 = vadd.f32 %v115, %v467
  %469 = vmatmul.bf16.gmra.mxu0 %v253
  %v470 = vpop.f32.mrf.mxu0
  %v471 = vadd.f32 %v115, %v470
  %v472 = vpop.f32.mrf.mxu0
  %v473 = vadd.f32 %v115, %v472
  %474 = vmatmul.bf16.gmra.mxu0 %v254
  %v475 = vpop.f32.mrf.mxu0
  %v476 = vadd.f32 %v115, %v475
  %v477 = vpop.f32.mrf.mxu0
  %v478 = vadd.f32 %v115, %v477
  %479 = vmatmul.bf16.gmra.mxu0 %v255
  %v480 = vpop.f32.mrf.mxu0
  %v481 = vadd.f32 %v115, %v480
  %v482 = vpop.f32.mrf.mxu0
  %v483 = vadd.f32 %v115, %v482
  %484 = vmatmul.bf16.gmra.mxu0 %v256
  %v485 = vpop.f32.mrf.mxu0
  %v486 = vadd.f32 %v115, %v485
  %v487 = vpop.f32.mrf.mxu0
  %v488 = vadd.f32 %v115, %v487
  %489 = vmatmul.bf16.gmra.mxu0 %v257
  %v490 = vpop.f32.mrf.mxu0
  %v491 = vadd.f32 %v115, %v490
  %v492 = vpop.f32.mrf.mxu0
  %v493 = vadd.f32 %v115, %v492
  %494 = vmatmul.bf16.gmra.mxu0 %v258
  %v495 = vpop.f32.mrf.mxu0
  %v496 = vadd.f32 %v115, %v495
  %v497 = vpop.f32.mrf.mxu0
  %v498 = vadd.f32 %v115, %v497
  %499 = vmatmul.bf16.gmra.mxu0 %v259
  %v500 = vpop.f32.mrf.mxu0
  %v501 = vadd.f32 %v115, %v500
  %v502 = vpop.f32.mrf.mxu0
  %v503 = vadd.f32 %v115, %v502
  %504 = vmatmul.bf16.gmra.mxu0 %v260
  %v505 = vpop.f32.mrf.mxu0
  %v506 = vadd.f32 %v115, %v505
  %v507 = vpop.f32.mrf.mxu0
  %v508 = vadd.f32 %v115, %v507
  %509 = vmatmul.bf16.gmra.mxu0 %v261
  %v510 = vpop.f32.mrf.mxu0
  %v511 = vadd.f32 %v115, %v510
  %v512 = vpop.f32.mrf.mxu0
  %v513 = vadd.f32 %v115, %v512
  %514 = vmatmul.bf16.gmra.mxu0 %v262
  %v515 = vpop.f32.mrf.mxu0
  %v516 = vadd.f32 %v115, %v515
  %v517 = vpop.f32.mrf.mxu0
  %v518 = vadd.f32 %v115, %v517
  %519 = vmatmul.bf16.gmra.mxu0 %v263
  %v520 = vpop.f32.mrf.mxu0
  %v521 = vadd.f32 %v115, %v520
  %v522 = vpop.f32.mrf.mxu0
  %v523 = vadd.f32 %v115, %v522
  %524 = vmatmul.bf16.gmra.mxu0 %v264
  %v525 = vpop.f32.mrf.mxu0
  %v526 = vadd.f32 %v115, %v525
  %v527 = vpop.f32.mrf.mxu0
  %v528 = vadd.f32 %v115, %v527
  %529 = vmatmul.bf16.gmra.mxu0 %v265
  %v530 = vpop.f32.mrf.mxu0
  %v531 = vadd.f32 %v115, %v530
  %v532 = vpop.f32.mrf.mxu0
  %v533 = vadd.f32 %v115, %v532
  %534 = vmatmul.bf16.gmra.mxu0 %v266
  %v535 = vpop.f32.mrf.mxu0
  %v536 = vadd.f32 %v115, %v535
  %v537 = vpop.f32.mrf.mxu0
  %v538 = vadd.f32 %v115, %v537
  %539 = vmatmul.bf16.gmra.mxu0 %v267
  %v540 = vpop.f32.mrf.mxu0
  %v541 = vadd.f32 %v115, %v540
  %v542 = vpop.f32.mrf.mxu0
  %v543 = vadd.f32 %v115, %v542
  %544 = vmatmul.bf16.gmra.mxu0 %v268
  %v545 = vpop.f32.mrf.mxu0
  %v546 = vadd.f32 %v115, %v545
  %v547 = vpop.f32.mrf.mxu0
  %v548 = vadd.f32 %v115, %v547
  %549 = vmatmul.bf16.gmra.mxu0 %v269
  %v550 = vpop.f32.mrf.mxu0
  %v551 = vadd.f32 %v115, %v550
  %v552 = vpop.f32.mrf.mxu0
  %v553 = vadd.f32 %v115, %v552
  %554 = vmatmul.bf16.gmra.mxu0 %v270
  %v555 = vpop.f32.mrf.mxu0
  %v556 = vadd.f32 %v115, %v555
  %v557 = vpop.f32.mrf.mxu0
  %v558 = vadd.f32 %v115, %v557
  %559 = vmatmul.bf16.gmra.mxu0 %v271
  %v560 = vpop.f32.mrf.mxu0
  %v561 = vadd.f32 %v115, %v560
  %v562 = vpop.f32.mrf.mxu0
  %v563 = vadd.f32 %v115, %v562
  %564 = vmatmul.bf16.gmra.mxu0 %v272
  %v565 = vpop.f32.mrf.mxu0
  %v566 = vadd.f32 %v115, %v565
  %v567 = vpop.f32.mrf.mxu0
  %v568 = vadd.f32 %v115, %v567
  %569 = vmatmul.bf16.gmra.mxu0 %v273
  %v570 = vpop.f32.mrf.mxu0
  %v571 = vadd.f32 %v115, %v570
  %v572 = vpop.f32.mrf.mxu0
  %v573 = vadd.f32 %v115, %v572
  %574 = vmatmul.bf16.gmra.mxu0 %v274
  %v575 = vpop.f32.mrf.mxu0
  %v576 = vadd.f32 %v115, %v575
  %v577 = vpop.f32.mrf.mxu0
  %v578 = vadd.f32 %v115, %v577
  %579 = vmatmul.bf16.gmra.mxu0 %v275
  %v580 = vpop.f32.mrf.mxu0
  %v581 = vadd.f32 %v115, %v580
  %v582 = vpop.f32.mrf.mxu0
  %v583 = vadd.f32 %v115, %v582
  %584 = vmatmul.bf16.gmra.mxu0 %v276
  %v585 = vpop.f32.mrf.mxu0
  %v586 = vadd.f32 %v115, %v585
  %v587 = vpop.f32.mrf.mxu0
  %v588 = vadd.f32 %v115, %v587
  %589 = vmatmul.bf16.gmra.mxu0 %v277
  %v590 = vpop.f32.mrf.mxu0
  %v591 = vadd.f32 %v115, %v590
  %v592 = vpop.f32.mrf.mxu0
  %v593 = vadd.f32 %v115, %v592
  %594 = vmatmul.bf16.gmra.mxu0 %v278
  %v595 = vpop.f32.mrf.mxu0
  %v596 = vadd.f32 %v115, %v595
  %v597 = vpop.f32.mrf.mxu0
  %v598 = vadd.f32 %v115, %v597
  %599 = vmatmul.bf16.gmra.mxu0 %v279
  %v600 = vpop.f32.mrf.mxu0
  %v601 = vadd.f32 %v115, %v600
  %v602 = vpop.f32.mrf.mxu0
  %v603 = vadd.f32 %v115, %v602
  %604 = vmatmul.bf16.gmra.mxu0 %v280
  %v605 = vpop.f32.mrf.mxu0
  %v606 = vadd.f32 %v115, %v605
  %v607 = vpop.f32.mrf.mxu0
  %v608 = vadd.f32 %v115, %v607
  %609 = vdwg.mxu0
  %610 = vmatpush.bf16.msra.mxu0 %v415
  %611 = vmatpush.bf16.msra.mxu0 %v412
  %612 = vmatpush.bf16.msra.mxu0 %v409
  %613 = vmatpush.bf16.msra.mxu0 %v406
  %614 = vmatpush.bf16.msra.mxu0 %v403
  %615 = vmatpush.bf16.msra.mxu0 %v400
  %616 = vmatpush.bf16.msra.mxu0 %v397
  %617 = vmatpush.bf16.msra.mxu0 %v394
  %618 = vmatmul.bf16.gmra.mxu0 %v249
  %v619 = vpop.f32.mrf.mxu0
  %v620 = vadd.f32 %v116, %v619
  %v621 = vpop.f32.mrf.mxu0
  %v622 = vadd.f32 %v116, %v621
  %623 = vmatmul.bf16.gmra.mxu0 %v250
  %v624 = vpop.f32.mrf.mxu0
  %v625 = vadd.f32 %v116, %v624
  %v626 = vpop.f32.mrf.mxu0
  %v627 = vadd.f32 %v116, %v626
  %628 = vmatmul.bf16.gmra.mxu0 %v251
  %v629 = vpop.f32.mrf.mxu0
  %v630 = vadd.f32 %v116, %v629
  %v631 = vpop.f32.mrf.mxu0
  %v632 = vadd.f32 %v116, %v631
  %633 = vmatmul.bf16.gmra.mxu0 %v252
  %v634 = vpop.f32.mrf.mxu0
  %v635 = vadd.f32 %v116, %v634
  %v636 = vpop.f32.mrf.mxu0
  %v637 = vadd.f32 %v116, %v636
  %638 = vmatmul.bf16.gmra.mxu0 %v253
  %v639 = vpop.f32.mrf.mxu0
  %v640 = vadd.f32 %v116, %v639
  %v641 = vpop.f32.mrf.mxu0
  %v642 = vadd.f32 %v116, %v641
  %643 = vmatmul.bf16.gmra.mxu0 %v254
  %v644 = vpop.f32.mrf.mxu0
  %v645 = vadd.f32 %v116, %v644
  %v646 = vpop.f32.mrf.mxu0
  %v647 = vadd.f32 %v116, %v646
  %648 = vmatmul.bf16.gmra.mxu0 %v255
  %v649 = vpop.f32.mrf.mxu0
  %v650 = vadd.f32 %v116, %v649
  %v651 = vpop.f32.mrf.mxu0
  %v652 = vadd.f32 %v116, %v651
  %653 = vmatmul.bf16.gmra.mxu0 %v256
  %v654 = vpop.f32.mrf.mxu0
  %v655 = vadd.f32 %v116, %v654
  %v656 = vpop.f32.mrf.mxu0
  %v657 = vadd.f32 %v116, %v656
  %658 = vmatmul.bf16.gmra.mxu0 %v257
  %v659 = vpop.f32.mrf.mxu0
  %v660 = vadd.f32 %v116, %v659
  %v661 = vpop.f32.mrf.mxu0
  %v662 = vadd.f32 %v116, %v661
  %663 = vmatmul.bf16.gmra.mxu0 %v258
  %v664 = vpop.f32.mrf.mxu0
  %v665 = vadd.f32 %v116, %v664
  %v666 = vpop.f32.mrf.mxu0
  %v667 = vadd.f32 %v116, %v666
  %668 = vmatmul.bf16.gmra.mxu0 %v259
  %v669 = vpop.f32.mrf.mxu0
  %v670 = vadd.f32 %v116, %v669
  %v671 = vpop.f32.mrf.mxu0
  %v672 = vadd.f32 %v116, %v671
  %673 = vmatmul.bf16.gmra.mxu0 %v260
  %v674 = vpop.f32.mrf.mxu0
  %v675 = vadd.f32 %v116, %v674
  %v676 = vpop.f32.mrf.mxu0
  %v677 = vadd.f32 %v116, %v676
  %678 = vmatmul.bf16.gmra.mxu0 %v261
  %v679 = vpop.f32.mrf.mxu0
  %v680 = vadd.f32 %v116, %v679
  %v681 = vpop.f32.mrf.mxu0
  %v682 = vadd.f32 %v116, %v681
  %683 = vmatmul.bf16.gmra.mxu0 %v262
  %v684 = vpop.f32.mrf.mxu0
  %v685 = vadd.f32 %v116, %v684
  %v686 = vpop.f32.mrf.mxu0
  %v687 = vadd.f32 %v116, %v686
  %688 = vmatmul.bf16.gmra.mxu0 %v263
  %v689 = vpop.f32.mrf.mxu0
  %v690 = vadd.f32 %v116, %v689
  %v691 = vpop.f32.mrf.mxu0
  %v692 = vadd.f32 %v116, %v691
  %693 = vmatmul.bf16.gmra.mxu0 %v264
  %v694 = vpop.f32.mrf.mxu0
  %v695 = vadd.f32 %v116, %v694
  %v696 = vpop.f32.mrf.mxu0
  %v697 = vadd.f32 %v116, %v696
  %698 = vmatmul.bf16.gmra.mxu0 %v265
  %v699 = vpop.f32.mrf.mxu0
  %v700 = vadd.f32 %v116, %v699
  %v701 = vpop.f32.mrf.mxu0
  %v702 = vadd.f32 %v116, %v701
  %703 = vmatmul.bf16.gmra.mxu0 %v266
  %v704 = vpop.f32.mrf.mxu0
  %v705 = vadd.f32 %v116, %v704
  %v706 = vpop.f32.mrf.mxu0
  %v707 = vadd.f32 %v116, %v706
  %708 = vmatmul.bf16.gmra.mxu0 %v267
  %v709 = vpop.f32.mrf.mxu0
  %v710 = vadd.f32 %v116, %v709
  %v711 = vpop.f32.mrf.mxu0
  %v712 = vadd.f32 %v116, %v711
  %713 = vmatmul.bf16.gmra.mxu0 %v268
  %v714 = vpop.f32.mrf.mxu0
  %v715 = vadd.f32 %v116, %v714
  %v716 = vpop.f32.mrf.mxu0
  %v717 = vadd.f32 %v116, %v716
  %718 = vmatmul.bf16.gmra.mxu0 %v269
  %v719 = vpop.f32.mrf.mxu0
  %v720 = vadd.f32 %v116, %v719
  %v721 = vpop.f32.mrf.mxu0
  %v722 = vadd.f32 %v116, %v721
  %723 = vmatmul.bf16.gmra.mxu0 %v270
  %v724 = vpop.f32.mrf.mxu0
  %v725 = vadd.f32 %v116, %v724
  %v726 = vpop.f32.mrf.mxu0
  %v727 = vadd.f32 %v116, %v726
  %728 = vmatmul.bf16.gmra.mxu0 %v271
  %v729 = vpop.f32.mrf.mxu0
  %v730 = vadd.f32 %v116, %v729
  %v731 = vpop.f32.mrf.mxu0
  %v732 = vadd.f32 %v116, %v731
  %733 = vmatmul.bf16.gmra.mxu0 %v272
  %v734 = vpop.f32.mrf.mxu0
  %v735 = vadd.f32 %v116, %v734
  %v736 = vpop.f32.mrf.mxu0
  %v737 = vadd.f32 %v116, %v736
  %738 = vmatmul.bf16.gmra.mxu0 %v273
  %v739 = vpop.f32.mrf.mxu0
  %v740 = vadd.f32 %v116, %v739
  %v741 = vpop.f32.mrf.mxu0
  %v742 = vadd.f32 %v116, %v741
  %743 = vmatmul.bf16.gmra.mxu0 %v274
  %v744 = vpop.f32.mrf.mxu0
  %v745 = vadd.f32 %v116, %v744
  %v746 = vpop.f32.mrf.mxu0
  %v747 = vadd.f32 %v116, %v746
  %748 = vmatmul.bf16.gmra.mxu0 %v275
  %v749 = vpop.f32.mrf.mxu0
  %v750 = vadd.f32 %v116, %v749
  %v751 = vpop.f32.mrf.mxu0
  %v752 = vadd.f32 %v116, %v751
  %753 = vmatmul.bf16.gmra.mxu0 %v276
  %v754 = vpop.f32.mrf.mxu0
  %v755 = vadd.f32 %v116, %v754
  %v756 = vpop.f32.mrf.mxu0
  %v757 = vadd.f32 %v116, %v756
  %758 = vmatmul.bf16.gmra.mxu0 %v277
  %v759 = vpop.f32.mrf.mxu0
  %v760 = vadd.f32 %v116, %v759
  %v761 = vpop.f32.mrf.mxu0
  %v762 = vadd.f32 %v116, %v761
  %763 = vmatmul.bf16.gmra.mxu0 %v278
  %v764 = vpop.f32.mrf.mxu0
  %v765 = vadd.f32 %v116, %v764
  %v766 = vpop.f32.mrf.mxu0
  %v767 = vadd.f32 %v116, %v766
  %768 = vmatmul.bf16.gmra.mxu0 %v279
  %v769 = vpop.f32.mrf.mxu0
  %v770 = vadd.f32 %v116, %v769
  %v771 = vpop.f32.mrf.mxu0
  %v772 = vadd.f32 %v116, %v771
  %773 = vmatmul.bf16.gmra.mxu0 %v280
  %v774 = vpop.f32.mrf.mxu0
  %v775 = vadd.f32 %v116, %v774
  %v776 = vpop.f32.mrf.mxu0
  %v777 = vadd.f32 %v116, %v776
  %778 = vdwg.mxu0
  %779 = vmatpush.bf16.msra.mxu0 %v416
  %780 = vmatpush.bf16.msra.mxu0 %v413
  %781 = vmatpush.bf16.msra.mxu0 %v410
  %782 = vmatpush.bf16.msra.mxu0 %v407
  %783 = vmatpush.bf16.msra.mxu0 %v404
  %784 = vmatpush.bf16.msra.mxu0 %v401
  %785 = vmatpush.bf16.msra.mxu0 %v398
  %786 = vmatpush.bf16.msra.mxu0 %v395
  %787 = vmatmul.bf16.gmra.mxu0 %v249
  %v788 = vpop.f32.mrf.mxu0
  %v789 = vadd.f32 %v117, %v788
  %v790 = vpop.f32.mrf.mxu0
  %v791 = vadd.f32 %v117, %v790
  %792 = vmatmul.bf16.gmra.mxu0 %v250
  %v793 = vpop.f32.mrf.mxu0
  %v794 = vadd.f32 %v117, %v793
  %v795 = vpop.f32.mrf.mxu0
  %v796 = vadd.f32 %v117, %v795
  %797 = vmatmul.bf16.gmra.mxu0 %v251
  %v798 = vpop.f32.mrf.mxu0
  %v799 = vadd.f32 %v117, %v798
  %v800 = vpop.f32.mrf.mxu0
  %v801 = vadd.f32 %v117, %v800
  %802 = vmatmul.bf16.gmra.mxu0 %v252
  %v803 = vpop.f32.mrf.mxu0
  %v804 = vadd.f32 %v117, %v803
  %v805 = vpop.f32.mrf.mxu0
  %v806 = vadd.f32 %v117, %v805
  %807 = vmatmul.bf16.gmra.mxu0 %v253
  %v808 = vpop.f32.mrf.mxu0
  %v809 = vadd.f32 %v117, %v808
  %v810 = vpop.f32.mrf.mxu0
  %v811 = vadd.f32 %v117, %v810
  %812 = vmatmul.bf16.gmra.mxu0 %v254
  %v813 = vpop.f32.mrf.mxu0
  %v814 = vadd.f32 %v117, %v813
  %v815 = vpop.f32.mrf.mxu0
  %v816 = vadd.f32 %v117, %v815
  %817 = vmatmul.bf16.gmra.mxu0 %v255
  %v818 = vpop.f32.mrf.mxu0
  %v819 = vadd.f32 %v117, %v818
  %v820 = vpop.f32.mrf.mxu0
  %v821 = vadd.f32 %v117, %v820
  %822 = vmatmul.bf16.gmra.mxu0 %v256
  %v823 = vpop.f32.mrf.mxu0
  %v824 = vadd.f32 %v117, %v823
  %v825 = vpop.f32.mrf.mxu0
  %v826 = vadd.f32 %v117, %v825
  %827 = vmatmul.bf16.gmra.mxu0 %v257
  %v828 = vpop.f32.mrf.mxu0
  %v829 = vadd.f32 %v117, %v828
  %v830 = vpop.f32.mrf.mxu0
  %v831 = vadd.f32 %v117, %v830
  %832 = vmatmul.bf16.gmra.mxu0 %v258
  %v833 = vpop.f32.mrf.mxu0
  %v834 = vadd.f32 %v117, %v833
  %v835 = vpop.f32.mrf.mxu0
  %v836 = vadd.f32 %v117, %v835
  %837 = vmatmul.bf16.gmra.mxu0 %v259
  %v838 = vpop.f32.mrf.mxu0
  %v839 = vadd.f32 %v117, %v838
  %v840 = vpop.f32.mrf.mxu0
  %v841 = vadd.f32 %v117, %v840
  %842 = vmatmul.bf16.gmra.mxu0 %v260
  %v843 = vpop.f32.mrf.mxu0
  %v844 = vadd.f32 %v117, %v843
  %v845 = vpop.f32.mrf.mxu0
  %v846 = vadd.f32 %v117, %v845
  %847 = vmatmul.bf16.gmra.mxu0 %v261
  %v848 = vpop.f32.mrf.mxu0
  %v849 = vadd.f32 %v117, %v848
  %v850 = vpop.f32.mrf.mxu0
  %v851 = vadd.f32 %v117, %v850
  %852 = vmatmul.bf16.gmra.mxu0 %v262
  %v853 = vpop.f32.mrf.mxu0
  %v854 = vadd.f32 %v117, %v853
  %v855 = vpop.f32.mrf.mxu0
  %v856 = vadd.f32 %v117, %v855
  %857 = vmatmul.bf16.gmra.mxu0 %v263
  %v858 = vpop.f32.mrf.mxu0
  %v859 = vadd.f32 %v117, %v858
  %v860 = vpop.f32.mrf.mxu0
  %v861 = vadd.f32 %v117, %v860
  %862 = vmatmul.bf16.gmra.mxu0 %v264
  %v863 = vpop.f32.mrf.mxu0
  %v864 = vadd.f32 %v117, %v863
  %v865 = vpop.f32.mrf.mxu0
  %v866 = vadd.f32 %v117, %v865
  %867 = vmatmul.bf16.gmra.mxu0 %v265
  %v868 = vpop.f32.mrf.mxu0
  %v869 = vadd.f32 %v117, %v868
  %v870 = vpop.f32.mrf.mxu0
  %v871 = vadd.f32 %v117, %v870
  %872 = vmatmul.bf16.gmra.mxu0 %v266
  %v873 = vpop.f32.mrf.mxu0
  %v874 = vadd.f32 %v117, %v873
  %v875 = vpop.f32.mrf.mxu0
  %v876 = vadd.f32 %v117, %v875
  %877 = vmatmul.bf16.gmra.mxu0 %v267
  %v878 = vpop.f32.mrf.mxu0
  %v879 = vadd.f32 %v117, %v878
  %v880 = vpop.f32.mrf.mxu0
  %v881 = vadd.f32 %v117, %v880
  %882 = vmatmul.bf16.gmra.mxu0 %v268
  %v883 = vpop.f32.mrf.mxu0
  %v884 = vadd.f32 %v117, %v883
  %v885 = vpop.f32.mrf.mxu0
  %v886 = vadd.f32 %v117, %v885
  %887 = vmatmul.bf16.gmra.mxu0 %v269
  %v888 = vpop.f32.mrf.mxu0
  %v889 = vadd.f32 %v117, %v888
  %v890 = vpop.f32.mrf.mxu0
  %v891 = vadd.f32 %v117, %v890
  %892 = vmatmul.bf16.gmra.mxu0 %v270
  %v893 = vpop.f32.mrf.mxu0
  %v894 = vadd.f32 %v117, %v893
  %v895 = vpop.f32.mrf.mxu0
  %v896 = vadd.f32 %v117, %v895
  %897 = vmatmul.bf16.gmra.mxu0 %v271
  %v898 = vpop.f32.mrf.mxu0
  %v899 = vadd.f32 %v117, %v898
  %v900 = vpop.f32.mrf.mxu0
  %v901 = vadd.f32 %v117, %v900
  %902 = vmatmul.bf16.gmra.mxu0 %v272
  %v903 = vpop.f32.mrf.mxu0
  %v904 = vadd.f32 %v117, %v903
  %v905 = vpop.f32.mrf.mxu0
  %v906 = vadd.f32 %v117, %v905
  %907 = vmatmul.bf16.gmra.mxu0 %v273
  %v908 = vpop.f32.mrf.mxu0
  %v909 = vadd.f32 %v117, %v908
  %v910 = vpop.f32.mrf.mxu0
  %v911 = vadd.f32 %v117, %v910
  %912 = vmatmul.bf16.gmra.mxu0 %v274
  %v913 = vpop.f32.mrf.mxu0
  %v914 = vadd.f32 %v117, %v913
  %v915 = vpop.f32.mrf.mxu0
  %v916 = vadd.f32 %v117, %v915
  %917 = vmatmul.bf16.gmra.mxu0 %v275
  %v918 = vpop.f32.mrf.mxu0
  %v919 = vadd.f32 %v117, %v918
  %v920 = vpop.f32.mrf.mxu0
  %v921 = vadd.f32 %v117, %v920
  %922 = vmatmul.bf16.gmra.mxu0 %v276
  %v923 = vpop.f32.mrf.mxu0
  %v924 = vadd.f32 %v117, %v923
  %v925 = vpop.f32.mrf.mxu0
  %v926 = vadd.f32 %v117, %v925
  %927 = vmatmul.bf16.gmra.mxu0 %v277
  %v928 = vpop.f32.mrf.mxu0
  %v929 = vadd.f32 %v117, %v928
  %v930 = vpop.f32.mrf.mxu0
  %v931 = vadd.f32 %v117, %v930
  %932 = vmatmul.bf16.gmra.mxu0 %v278
  %v933 = vpop.f32.mrf.mxu0
  %v934 = vadd.f32 %v117, %v933
  %v935 = vpop.f32.mrf.mxu0
  %v936 = vadd.f32 %v117, %v935
  %937 = vmatmul.bf16.gmra.mxu0 %v279
  %v938 = vpop.f32.mrf.mxu0
  %v939 = vadd.f32 %v117, %v938
  %v940 = vpop.f32.mrf.mxu0
  %v941 = vadd.f32 %v117, %v940
  %942 = vmatmul.bf16.gmra.mxu0 %v280
  %v943 = vpop.f32.mrf.mxu0
  %v944 = vadd.f32 %v117, %v943
  %v945 = vpop.f32.mrf.mxu0
  %v946 = vadd.f32 %v117, %v945
  %947 = vdwg.mxu0
  %v948 = vpack.c.bf16 %v620, %v451
  %v949 = vpack.c.bf16 %v789, %v789
  %v950 = vpack.c.bf16 %v622, %v453
  %v951 = vpack.c.bf16 %v791, %v791
  %v952 = vpack.c.bf16 %v625, %v456
  %v953 = vpack.c.bf16 %v794, %v794
  %v954 = vpack.c.bf16 %v627, %v458
  %v955 = vpack.c.bf16 %v796, %v796
  %v956 = vpack.c.bf16 %v630, %v461
  %v957 = vpack.c.bf16 %v799, %v799
  %v958 = vpack.c.bf16 %v632, %v463
  %v959 = vpack.c.bf16 %v801, %v801
  %v960 = vpack.c.bf16 %v635, %v466
  %v961 = vpack.c.bf16 %v804, %v804
  %v962 = vpack.c.bf16 %v637, %v468
  %v963 = vpack.c.bf16 %v806, %v806
  %v964 = vpack.c.bf16 %v640, %v471
  %v965 = vpack.c.bf16 %v809, %v809
  %v966 = vpack.c.bf16 %v642, %v473
  %v967 = vpack.c.bf16 %v811, %v811
  %v968 = vpack.c.bf16 %v645, %v476
  %v969 = vpack.c.bf16 %v814, %v814
  %v970 = vpack.c.bf16 %v647, %v478
  %v971 = vpack.c.bf16 %v816, %v816
  %v972 = vpack.c.bf16 %v650, %v481
  %v973 = vpack.c.bf16 %v819, %v819
  %v974 = vpack.c.bf16 %v652, %v483
  %v975 = vpack.c.bf16 %v821, %v821
  %v976 = vpack.c.bf16 %v655, %v486
  %v977 = vpack.c.bf16 %v824, %v824
  %v978 = vpack.c.bf16 %v657, %v488
  %v979 = vpack.c.bf16 %v826, %v826
  %v980 = vpack.c.bf16 %v660, %v491
  %v981 = vpack.c.bf16 %v829, %v829
  %v982 = vpack.c.bf16 %v662, %v493
  %v983 = vpack.c.bf16 %v831, %v831
  %v984 = vpack.c.bf16 %v665, %v496
  %v985 = vpack.c.bf16 %v834, %v834
  %v986 = vpack.c.bf16 %v667, %v498
  %v987 = vpack.c.bf16 %v836, %v836
  %v988 = vpack.c.bf16 %v670, %v501
  %v989 = vpack.c.bf16 %v839, %v839
  %v990 = vpack.c.bf16 %v672, %v503
  %v991 = vpack.c.bf16 %v841, %v841
  %v992 = vpack.c.bf16 %v675, %v506
  %v993 = vpack.c.bf16 %v844, %v844
  %v994 = vpack.c.bf16 %v677, %v508
  %v995 = vpack.c.bf16 %v846, %v846
  %v996 = vpack.c.bf16 %v680, %v511
  %v997 = vpack.c.bf16 %v849, %v849
  %v998 = vpack.c.bf16 %v682, %v513
  %v999 = vpack.c.bf16 %v851, %v851
  %v1000 = vpack.c.bf16 %v685, %v516
  %v1001 = vpack.c.bf16 %v854, %v854
  %v1002 = vpack.c.bf16 %v687, %v518
  %v1003 = vpack.c.bf16 %v856, %v856
  %v1004 = vpack.c.bf16 %v690, %v521
  %v1005 = vpack.c.bf16 %v859, %v859
  %v1006 = vpack.c.bf16 %v692, %v523
  %v1007 = vpack.c.bf16 %v861, %v861
  %v1008 = vpack.c.bf16 %v695, %v526
  %v1009 = vpack.c.bf16 %v864, %v864
  %v1010 = vpack.c.bf16 %v697, %v528
  %v1011 = vpack.c.bf16 %v866, %v866
  %v1012 = vpack.c.bf16 %v700, %v531
  %v1013 = vpack.c.bf16 %v869, %v869
  %v1014 = vpack.c.bf16 %v702, %v533
  %v1015 = vpack.c.bf16 %v871, %v871
  %v1016 = vpack.c.bf16 %v705, %v536
  %v1017 = vpack.c.bf16 %v874, %v874
  %v1018 = vpack.c.bf16 %v707, %v538
  %v1019 = vpack.c.bf16 %v876, %v876
  %v1020 = vpack.c.bf16 %v710, %v541
  %v1021 = vpack.c.bf16 %v879, %v879
  %v1022 = vpack.c.bf16 %v712, %v543
  %v1023 = vpack.c.bf16 %v881, %v881
  %v1024 = vpack.c.bf16 %v715, %v546
  %v1025 = vpack.c.bf16 %v884, %v884
  %v1026 = vpack.c.bf16 %v717, %v548
  %v1027 = vpack.c.bf16 %v886, %v886
  %v1028 = vpack.c.bf16 %v720, %v551
  %v1029 = vpack.c.bf16 %v889, %v889
  %v1030 = vpack.c.bf16 %v722, %v553
  %v1031 = vpack.c.bf16 %v891, %v891
  %v1032 = vpack.c.bf16 %v725, %v556
  %v1033 = vpack.c.bf16 %v894, %v894
  %v1034 = vpack.c.bf16 %v727, %v558
  %v1035 = vpack.c.bf16 %v896, %v896
  %v1036 = vpack.c.bf16 %v730, %v561
  %v1037 = vpack.c.bf16 %v899, %v899
  %v1038 = vpack.c.bf16 %v732, %v563
  %v1039 = vpack.c.bf16 %v901, %v901
  %v1040 = vpack.c.bf16 %v735, %v566
  %v1041 = vpack.c.bf16 %v904, %v904
  %v1042 = vpack.c.bf16 %v737, %v568
  %v1043 = vpack.c.bf16 %v906, %v906
  %v1044 = vpack.c.bf16 %v740, %v571
  %v1045 = vpack.c.bf16 %v909, %v909
  %v1046 = vpack.c.bf16 %v742, %v573
  %v1047 = vpack.c.bf16 %v911, %v911
  %v1048 = vpack.c.bf16 %v745, %v576
  %v1049 = vpack.c.bf16 %v914, %v914
  %v1050 = vpack.c.bf16 %v747, %v578
  %v1051 = vpack.c.bf16 %v916, %v916
  %v1052 = vpack.c.bf16 %v750, %v581
  %v1053 = vpack.c.bf16 %v919, %v919
  %v1054 = vpack.c.bf16 %v752, %v583
  %v1055 = vpack.c.bf16 %v921, %v921
  %v1056 = vpack.c.bf16 %v755, %v586
  %v1057 = vpack.c.bf16 %v924, %v924
  %v1058 = vpack.c.bf16 %v757, %v588
  %v1059 = vpack.c.bf16 %v926, %v926
  %v1060 = vpack.c.bf16 %v760, %v591
  %v1061 = vpack.c.bf16 %v929, %v929
  %v1062 = vpack.c.bf16 %v762, %v593
  %v1063 = vpack.c.bf16 %v931, %v931
  %v1064 = vpack.c.bf16 %v765, %v596
  %v1065 = vpack.c.bf16 %v934, %v934
  %v1066 = vpack.c.bf16 %v767, %v598
  %v1067 = vpack.c.bf16 %v936, %v936
  %v1068 = vpack.c.bf16 %v770, %v601
  %v1069 = vpack.c.bf16 %v939, %v939
  %v1070 = vpack.c.bf16 %v772, %v603
  %v1071 = vpack.c.bf16 %v941, %v941
  %v1072 = vpack.c.bf16 %v775, %v606
  %v1073 = vpack.c.bf16 %v944, %v944
  %v1074 = vpack.c.bf16 %v777, %v608
  %v1075 = vpack.c.bf16 %v946, %v946
  %1076 = vst [vmem:[%s3] sm:$0xf] %v948
  %1077 = vst [vmem:[%s3 + $0x4] sm:$0xf] %v950
  %1078 = vst [vmem:[%s3 + $0x8] sm:$0xf] %v952
  %1079 = vst [vmem:[%s3 + $0xc] sm:$0xf] %v954
  %1080 = vst [vmem:[%s3 + $0x10] sm:$0xf] %v956
  %1081 = vst [vmem:[%s3 + $0x14] sm:$0xf] %v958
  %1082 = vst [vmem:[%s3 + $0x18] sm:$0xf] %v960
  %1083 = vst [vmem:[%s3 + $0x1c] sm:$0xf] %v962
  %1084 = vst [vmem:[%s3 + $0x20] sm:$0xf] %v964
  %1085 = vst [vmem:[%s3 + $0x24] sm:$0xf] %v966
  %1086 = vst [vmem:[%s3 + $0x28] sm:$0xf] %v968
  %1087 = vst [vmem:[%s3 + $0x2c] sm:$0xf] %v970
  %1088 = vst [vmem:[%s3 + $0x30] sm:$0xf] %v972
  %1089 = vst [vmem:[%s3 + $0x34] sm:$0xf] %v974
  %1090 = vst [vmem:[%s3 + $0x38] sm:$0xf] %v976
  %1091 = vst [vmem:[%s3 + $0x3c] sm:$0xf] %v978
  %1092 = vst [vmem:[%s3 + $0x40] sm:$0xf] %v980
  %1093 = vst [vmem:[%s3 + $0x44] sm:$0xf] %v982
  %1094 = vst [vmem:[%s3 + $0x48] sm:$0xf] %v984
  %1095 = vst [vmem:[%s3 + $0x4c] sm:$0xf] %v986
  %1096 = vst [vmem:[%s3 + $0x50] sm:$0xf] %v988
  %1097 = vst [vmem:[%s3 + $0x54] sm:$0xf] %v990
  %1098 = vst [vmem:[%s3 + $0x58] sm:$0xf] %v992
  %1099 = vst [vmem:[%s3 + $0x5c] sm:$0xf] %v994
  %1100 = vst [vmem:[%s3 + $0x60] sm:$0xf] %v996
  %1101 = vst [vmem:[%s3 + $0x64] sm:$0xf] %v998
  %1102 = vst [vmem:[%s3 + $0x68] sm:$0xf] %v1000
  %1103 = vst [vmem:[%s3 + $0x6c] sm:$0xf] %v1002
  %1104 = vst [vmem:[%s3 + $0x70] sm:$0xf] %v1004
  %1105 = vst [vmem:[%s3 + $0x74] sm:$0xf] %v1006
  %1106 = vst [vmem:[%s3 + $0x78] sm:$0xf] %v1008
  %1107 = vst [vmem:[%s3 + $0x7c] sm:$0xf] %v1010
  %1108 = vst [vmem:[%s3 + $0x80] sm:$0xf] %v1012
  %1109 = vst [vmem:[%s3 + $0x84] sm:$0xf] %v1014
  %1110 = vst [vmem:[%s3 + $0x88] sm:$0xf] %v1016
  %1111 = vst [vmem:[%s3 + $0x8c] sm:$0xf] %v1018
  %1112 = vst [vmem:[%s3 + $0x90] sm:$0xf] %v1020
  %1113 = vst [vmem:[%s3 + $0x94] sm:$0xf] %v1022
  %1114 = vst [vmem:[%s3 + $0x98] sm:$0xf] %v1024
  %1115 = vst [vmem:[%s3 + $0x9c] sm:$0xf] %v1026
  %1116 = vst [vmem:[%s3 + $0xa0] sm:$0xf] %v1028
  %1117 = vst [vmem:[%s3 + $0xa4] sm:$0xf] %v1030
  %1118 = vst [vmem:[%s3 + $0xa8] sm:$0xf] %v1032
  %1119 = vst [vmem:[%s3 + $0xac] sm:$0xf] %v1034
  %1120 = vst [vmem:[%s3 + $0xb0] sm:$0xf] %v1036
  %1121 = vst [vmem:[%s3 + $0xb4] sm:$0xf] %v1038
  %1122 = vst [vmem:[%s3 + $0xb8] sm:$0xf] %v1040
  %1123 = vst [vmem:[%s3 + $0xbc] sm:$0xf] %v1042
  %1124 = vst [vmem:[%s3 + $0xc0] sm:$0xf] %v1044
  %1125 = vst [vmem:[%s3 + $0xc4] sm:$0xf] %v1046
  %1126 = vst [vmem:[%s3 + $0xc8] sm:$0xf] %v1048
  %1127 = vst [vmem:[%s3 + $0xcc] sm:$0xf] %v1050
  %1128 = vst [vmem:[%s3 + $0xd0] sm:$0xf] %v1052
  %1129 = vst [vmem:[%s3 + $0xd4] sm:$0xf] %v1054
  %1130 = vst [vmem:[%s3 + $0xd8] sm:$0xf] %v1056
  %1131 = vst [vmem:[%s3 + $0xdc] sm:$0xf] %v1058
  %1132 = vst [vmem:[%s3 + $0xe0] sm:$0xf] %v1060
  %1133 = vst [vmem:[%s3 + $0xe4] sm:$0xf] %v1062
  %1134 = vst [vmem:[%s3 + $0xe8] sm:$0xf] %v1064
  %1135 = vst [vmem:[%s3 + $0xec] sm:$0xf] %v1066
  %1136 = vst [vmem:[%s3 + $0xf0] sm:$0xf] %v1068
  %1137 = vst [vmem:[%s3 + $0xf4] sm:$0xf] %v1070
  %1138 = vst [vmem:[%s3 + $0xf8] sm:$0xf] %v1072
  %1139 = vst [vmem:[%s3 + $0xfc] sm:$0xf] %v1074
  %v1204 = vrot.slane %v948, 4
  %v1205 = vrot.slane %v950, 4
  %v1206 = vrot.slane %v952, 4
  %v1207 = vrot.slane %v954, 4
  %v1208 = vrot.slane %v956, 4
  %v1209 = vrot.slane %v958, 4
  %v1210 = vrot.slane %v960, 4
  %v1211 = vrot.slane %v962, 4
  %v1212 = vrot.slane %v964, 4
  %v1213 = vrot.slane %v966, 4
  %v1214 = vrot.slane %v968, 4
  %v1215 = vrot.slane %v970, 4
  %v1216 = vrot.slane %v972, 4
  %v1217 = vrot.slane %v974, 4
  %v1218 = vrot.slane %v976, 4
  %v1219 = vrot.slane %v978, 4
  %v1220 = vrot.slane %v980, 4
  %v1221 = vrot.slane %v982, 4
  %v1222 = vrot.slane %v984, 4
  %v1223 = vrot.slane %v986, 4
  %v1224 = vrot.slane %v988, 4
  %v1225 = vrot.slane %v990, 4
  %v1226 = vrot.slane %v992, 4
  %v1227 = vrot.slane %v994, 4
  %v1228 = vrot.slane %v996, 4
  %v1229 = vrot.slane %v998, 4
  %v1230 = vrot.slane %v1000, 4
  %v1231 = vrot.slane %v1002, 4
  %v1232 = vrot.slane %v1004, 4
  %v1233 = vrot.slane %v1006, 4
  %v1234 = vrot.slane %v1008, 4
  %v1235 = vrot.slane %v1010, 4
  %v1236 = vrot.slane %v1012, 4
  %v1237 = vrot.slane %v1014, 4
  %v1238 = vrot.slane %v1016, 4
  %v1239 = vrot.slane %v1018, 4
  %v1240 = vrot.slane %v1020, 4
  %v1241 = vrot.slane %v1022, 4
  %v1242 = vrot.slane %v1024, 4
  %v1243 = vrot.slane %v1026, 4
  %v1244 = vrot.slane %v1028, 4
  %v1245 = vrot.slane %v1030, 4
  %v1246 = vrot.slane %v1032, 4
  %v1247 = vrot.slane %v1034, 4
  %v1248 = vrot.slane %v1036, 4
  %v1249 = vrot.slane %v1038, 4
  %v1250 = vrot.slane %v1040, 4
  %v1251 = vrot.slane %v1042, 4
  %v1252 = vrot.slane %v1044, 4
  %v1253 = vrot.slane %v1046, 4
  %v1254 = vrot.slane %v1048, 4
  %v1255 = vrot.slane %v1050, 4
  %v1256 = vrot.slane %v1052, 4
  %v1257 = vrot.slane %v1054, 4
  %v1258 = vrot.slane %v1056, 4
  %v1259 = vrot.slane %v1058, 4
  %v1260 = vrot.slane %v1060, 4
  %v1261 = vrot.slane %v1062, 4
  %v1262 = vrot.slane %v1064, 4
  %v1263 = vrot.slane %v1066, 4
  %v1264 = vrot.slane %v1068, 4
  %v1265 = vrot.slane %v1070, 4
  %v1266 = vrot.slane %v1072, 4
  %v1267 = vrot.slane %v1074, 4
  %1332 = vst [vmem:[%s4] sm:$0xf] %v1204
  %1333 = vst [vmem:[%s4 + $0x4] sm:$0xf] %v1205
  %1334 = vst [vmem:[%s4 + $0x8] sm:$0xf] %v1206
  %1335 = vst [vmem:[%s4 + $0xc] sm:$0xf] %v1207
  %1336 = vst [vmem:[%s4 + $0x10] sm:$0xf] %v1208
  %1337 = vst [vmem:[%s4 + $0x14] sm:$0xf] %v1209
  %1338 = vst [vmem:[%s4 + $0x18] sm:$0xf] %v1210
  %1339 = vst [vmem:[%s4 + $0x1c] sm:$0xf] %v1211
  %1340 = vst [vmem:[%s4 + $0x20] sm:$0xf] %v1212
  %1341 = vst [vmem:[%s4 + $0x24] sm:$0xf] %v1213
  %1342 = vst [vmem:[%s4 + $0x28] sm:$0xf] %v1214
  %1343 = vst [vmem:[%s4 + $0x2c] sm:$0xf] %v1215
  %1344 = vst [vmem:[%s4 + $0x30] sm:$0xf] %v1216
  %1345 = vst [vmem:[%s4 + $0x34] sm:$0xf] %v1217
  %1346 = vst [vmem:[%s4 + $0x38] sm:$0xf] %v1218
  %1347 = vst [vmem:[%s4 + $0x3c] sm:$0xf] %v1219
  %1348 = vst [vmem:[%s4 + $0x40] sm:$0xf] %v1220
  %1349 = vst [vmem:[%s4 + $0x44] sm:$0xf] %v1221
  %1350 = vst [vmem:[%s4 + $0x48] sm:$0xf] %v1222
  %1351 = vst [vmem:[%s4 + $0x4c] sm:$0xf] %v1223
  %1352 = vst [vmem:[%s4 + $0x50] sm:$0xf] %v1224
  %1353 = vst [vmem:[%s4 + $0x54] sm:$0xf] %v1225
  %1354 = vst [vmem:[%s4 + $0x58] sm:$0xf] %v1226
  %1355 = vst [vmem:[%s4 + $0x5c] sm:$0xf] %v1227
  %1356 = vst [vmem:[%s4 + $0x60] sm:$0xf] %v1228
  %1357 = vst [vmem:[%s4 + $0x64] sm:$0xf] %v1229
  %1358 = vst [vmem:[%s4 + $0x68] sm:$0xf] %v1230
  %1359 = vst [vmem:[%s4 + $0x6c] sm:$0xf] %v1231
  %1360 = vst [vmem:[%s4 + $0x70] sm:$0xf] %v1232
  %1361 = vst [vmem:[%s4 + $0x74] sm:$0xf] %v1233
  %1362 = vst [vmem:[%s4 + $0x78] sm:$0xf] %v1234
  %1363 = vst [vmem:[%s4 + $0x7c] sm:$0xf] %v1235
  %1364 = vst [vmem:[%s4 + $0x80] sm:$0xf] %v1236
  %1365 = vst [vmem:[%s4 + $0x84] sm:$0xf] %v1237
  %1366 = vst [vmem:[%s4 + $0x88] sm:$0xf] %v1238
  %1367 = vst [vmem:[%s4 + $0x8c] sm:$0xf] %v1239
  %1368 = vst [vmem:[%s4 + $0x90] sm:$0xf] %v1240
  %1369 = vst [vmem:[%s4 + $0x94] sm:$0xf] %v1241
  %1370 = vst [vmem:[%s4 + $0x98] sm:$0xf] %v1242
  %1371 = vst [vmem:[%s4 + $0x9c] sm:$0xf] %v1243
  %1372 = vst [vmem:[%s4 + $0xa0] sm:$0xf] %v1244
  %1373 = vst [vmem:[%s4 + $0xa4] sm:$0xf] %v1245
  %1374 = vst [vmem:[%s4 + $0xa8] sm:$0xf] %v1246
  %1375 = vst [vmem:[%s4 + $0xac] sm:$0xf] %v1247
  %1376 = vst [vmem:[%s4 + $0xb0] sm:$0xf] %v1248
  %1377 = vst [vmem:[%s4 + $0xb4] sm:$0xf] %v1249
  %1378 = vst [vmem:[%s4 + $0xb8] sm:$0xf] %v1250
  %1379 = vst [vmem:[%s4 + $0xbc] sm:$0xf] %v1251
  %1380 = vst [vmem:[%s4 + $0xc0] sm:$0xf] %v1252
  %1381 = vst [vmem:[%s4 + $0xc4] sm:$0xf] %v1253
  %1382 = vst [vmem:[%s4 + $0xc8] sm:$0xf] %v1254
  %1383 = vst [vmem:[%s4 + $0xcc] sm:$0xf] %v1255
  %1384 = vst [vmem:[%s4 + $0xd0] sm:$0xf] %v1256
  %1385 = vst [vmem:[%s4 + $0xd4] sm:$0xf] %v1257
  %1386 = vst [vmem:[%s4 + $0xd8] sm:$0xf] %v1258
  %1387 = vst [vmem:[%s4 + $0xdc] sm:$0xf] %v1259
  %1388 = vst [vmem:[%s4 + $0xe0] sm:$0xf] %v1260
  %1389 = vst [vmem:[%s4 + $0xe4] sm:$0xf] %v1261
  %1390 = vst [vmem:[%s4 + $0xe8] sm:$0xf] %v1262
  %1391 = vst [vmem:[%s4 + $0xec] sm:$0xf] %v1263
  %1392 = vst [vmem:[%s4 + $0xf0] sm:$0xf] %v1264
  %1393 = vst [vmem:[%s4 + $0xf4] sm:$0xf] %v1265
  %1394 = vst [vmem:[%s4 + $0xf8] sm:$0xf] %v1266
  %1395 = vst [vmem:[%s4 + $0xfc] sm:$0xf] %v1267
  %1396 = vst [vmem:[%s5] sm:$0xf] %v949
  %1397 = vst [vmem:[%s5 + $0x4] sm:$0xf] %v951
  %1398 = vst [vmem:[%s5 + $0x8] sm:$0xf] %v953
  %1399 = vst [vmem:[%s5 + $0xc] sm:$0xf] %v955
  %1400 = vst [vmem:[%s5 + $0x10] sm:$0xf] %v957
  %1401 = vst [vmem:[%s5 + $0x14] sm:$0xf] %v959
  %1402 = vst [vmem:[%s5 + $0x18] sm:$0xf] %v961
  %1403 = vst [vmem:[%s5 + $0x1c] sm:$0xf] %v963
  %1404 = vst [vmem:[%s5 + $0x20] sm:$0xf] %v965
  %1405 = vst [vmem:[%s5 + $0x24] sm:$0xf] %v967
  %1406 = vst [vmem:[%s5 + $0x28] sm:$0xf] %v969
  %1407 = vst [vmem:[%s5 + $0x2c] sm:$0xf] %v971
  %1408 = vst [vmem:[%s5 + $0x30] sm:$0xf] %v973
  %1409 = vst [vmem:[%s5 + $0x34] sm:$0xf] %v975
  %1410 = vst [vmem:[%s5 + $0x38] sm:$0xf] %v977
  %1411 = vst [vmem:[%s5 + $0x3c] sm:$0xf] %v979
  %1412 = vst [vmem:[%s5 + $0x40] sm:$0xf] %v981
  %1413 = vst [vmem:[%s5 + $0x44] sm:$0xf] %v983
  %1414 = vst [vmem:[%s5 + $0x48] sm:$0xf] %v985
  %1415 = vst [vmem:[%s5 + $0x4c] sm:$0xf] %v987
  %1416 = vst [vmem:[%s5 + $0x50] sm:$0xf] %v989
  %1417 = vst [vmem:[%s5 + $0x54] sm:$0xf] %v991
  %1418 = vst [vmem:[%s5 + $0x58] sm:$0xf] %v993
  %1419 = vst [vmem:[%s5 + $0x5c] sm:$0xf] %v995
  %1420 = vst [vmem:[%s5 + $0x60] sm:$0xf] %v997
  %1421 = vst [vmem:[%s5 + $0x64] sm:$0xf] %v999
  %1422 = vst [vmem:[%s5 + $0x68] sm:$0xf] %v1001
  %1423 = vst [vmem:[%s5 + $0x6c] sm:$0xf] %v1003
  %1424 = vst [vmem:[%s5 + $0x70] sm:$0xf] %v1005
  %1425 = vst [vmem:[%s5 + $0x74] sm:$0xf] %v1007
  %1426 = vst [vmem:[%s5 + $0x78] sm:$0xf] %v1009
  %1427 = vst [vmem:[%s5 + $0x7c] sm:$0xf] %v1011
  %1428 = vst [vmem:[%s5 + $0x80] sm:$0xf] %v1013
  %1429 = vst [vmem:[%s5 + $0x84] sm:$0xf] %v1015
  %1430 = vst [vmem:[%s5 + $0x88] sm:$0xf] %v1017
  %1431 = vst [vmem:[%s5 + $0x8c] sm:$0xf] %v1019
  %1432 = vst [vmem:[%s5 + $0x90] sm:$0xf] %v1021
  %1433 = vst [vmem:[%s5 + $0x94] sm:$0xf] %v1023
  %1434 = vst [vmem:[%s5 + $0x98] sm:$0xf] %v1025
  %1435 = vst [vmem:[%s5 + $0x9c] sm:$0xf] %v1027
  %1436 = vst [vmem:[%s5 + $0xa0] sm:$0xf] %v1029
  %1437 = vst [vmem:[%s5 + $0xa4] sm:$0xf] %v1031
  %1438 = vst [vmem:[%s5 + $0xa8] sm:$0xf] %v1033
  %1439 = vst [vmem:[%s5 + $0xac] sm:$0xf] %v1035
  %1440 = vst [vmem:[%s5 + $0xb0] sm:$0xf] %v1037
  %1441 = vst [vmem:[%s5 + $0xb4] sm:$0xf] %v1039
  %1442 = vst [vmem:[%s5 + $0xb8] sm:$0xf] %v1041
  %1443 = vst [vmem:[%s5 + $0xbc] sm:$0xf] %v1043
  %1444 = vst [vmem:[%s5 + $0xc0] sm:$0xf] %v1045
  %1445 = vst [vmem:[%s5 + $0xc4] sm:$0xf] %v1047
  %1446 = vst [vmem:[%s5 + $0xc8] sm:$0xf] %v1049
  %1447 = vst [vmem:[%s5 + $0xcc] sm:$0xf] %v1051
  %1448 = vst [vmem:[%s5 + $0xd0] sm:$0xf] %v1053
  %1449 = vst [vmem:[%s5 + $0xd4] sm:$0xf] %v1055
  %1450 = vst [vmem:[%s5 + $0xd8] sm:$0xf] %v1057
  %1451 = vst [vmem:[%s5 + $0xdc] sm:$0xf] %v1059
  %1452 = vst [vmem:[%s5 + $0xe0] sm:$0xf] %v1061
  %1453 = vst [vmem:[%s5 + $0xe4] sm:$0xf] %v1063
  %1454 = vst [vmem:[%s5 + $0xe8] sm:$0xf] %v1065
  %1455 = vst [vmem:[%s5 + $0xec] sm:$0xf] %v1067
  %1456 = vst [vmem:[%s5 + $0xf0] sm:$0xf] %v1069
  %1457 = vst [vmem:[%s5 + $0xf4] sm:$0xf] %v1071
  %1458 = vst [vmem:[%s5 + $0xf8] sm:$0xf] %v1073
  %1459 = vst [vmem:[%s5 + $0xfc] sm:$0xf] %v1075
  // Predicated region
  $region14: #{transformer_block.6} parent=0 // pred_check
    _
  $region15: #{transformer_block.6} parent=0 // pred_check_branch
    %1461 = sbr.rel (0) target = $region17
  $region16: #{transformer_block.6} parent=0 // pred_region
    _
  $region17: #{transformer_block.6} parent=0 // pred_fallthru
    _
  // Predicated region
  $region18: #{transformer_block.6} parent=0 // pred_check
    _
  $region19: #{transformer_block.6} parent=0 // pred_check_branch
    %1463 = sbr.rel (0) target = $region21
  $region20: #{transformer_block.6} parent=0 // pred_region
    _
  $region21: #{transformer_block.6} parent=0 // pred_fallthru
    _
  // Predicated region
  $region22: #{transformer_block.6} parent=0 // pred_check
    _
  $region23: #{transformer_block.6} parent=0 // pred_check_branch
    %1465 = sbr.rel (0) target = $region25
  $region24: #{transformer_block.6} parent=0 // pred_region
    _
  $region25: #{transformer_block.6} parent=0 // pred_fallthru
    _
  // Predicated region
  $region26: #{transformer_block.6} parent=0 // pred_check
    _
  $region27: #{transformer_block.6} parent=0 // pred_check_branch
    %1467 = sbr.rel (0) target = $region29
  $region28: #{transformer_block.6} parent=0 // pred_region
    _
  $region29: #{transformer_block.6} parent=0 // pred_fallthru
    _
  // Predicated region
  $region30: #{transformer_block.6} parent=0 // pred_check
    _
  $region31: #{transformer_block.6} parent=0 // pred_check_branch
    %1469 = sbr.rel (0) target = $region33
  $region32: #{transformer_block.6} parent=0 // pred_region
    _
  $region33: #{transformer_block.6} parent=0 // pred_fallthru
    _
  // Predicated region
  $region34: #{transformer_block.6} parent=0 // pred_check
    _
  $region35: #{transformer_block.6} parent=0 // pred_check_branch
    %1471 = sbr.rel (0) target = $region37
  $region36: #{transformer_block.6} parent=0 // pred_region
    _
  $region37: #{transformer_block.6} parent=0 // pred_fallthru
    _

// kernel: transformer_block.5
$region0: #{transformer_block.5}
  #allocation0 [shape = 'u32[]', space=smem, size = 0x4, offset = 0x4, fixed_abs, tag = 'smem constant byte address 0x4 - core index']
  #allocation1 [shape = 'u32[72,128]{1,0:T(1,128)}', space=vmem, size = 0x9000, scoped, tag = 'internal scratch']
  %s0 = inlined_call_operand.vmem [shape: bf16[512,4], index: 0, kind: input, shape index: {}]
  %s1 = inlined_call_operand.vmem [shape: bf16[4,128], index: 1, kind: input, shape index: {}]
  %s2 = inlined_call_operand.vmem [shape: f32[1,128], index: 2, kind: input, shape index: {}]
  %s3 = inlined_call_operand.vmem [shape: f32[1,128], index: 3, kind: input, shape index: {}]
  %s4 = inlined_call_operand.vmem [shape: bf16[128,128], index: 4, kind: input, shape index: {}]
  %s5 = inlined_call_operand.vmem [shape: f32[1,128], index: 5, kind: input, shape index: {}]
  %s6 = inlined_call_operand.vmem [shape: bf16[512,128], index: 6, kind: output, shape index: {}]
  %s7 = sld [smem:[#allocation0]]
  $region34: #{transformer_block.5} parent=0
    _
  %s9 = ssub.s32 1, %s7
  %s10 = scalar_select 0, %s9, %s7
  // Predicated region
  $region2: #{transformer_block.5} parent=0 // pred_check
    _
  $region3: #{transformer_block.5} parent=0 // pred_check_branch
    %12 = sbr.rel (0) target = $region5
  $region4: #{transformer_block.5} parent=0 // pred_region
    _
  $region5: #{transformer_block.5} parent=0 // pred_fallthru
    _
  // Predicated region
  $region6: #{transformer_block.5} parent=0 // pred_check
    _
  $region7: #{transformer_block.5} parent=0 // pred_check_branch
    %14 = sbr.rel (0) target = $region9
  $region8: #{transformer_block.5} parent=0 // pred_region
    _
  $region9: #{transformer_block.5} parent=0 // pred_fallthru
    _
  // Predicated region
  $region10: #{transformer_block.5} parent=0 // pred_check
    _
  $region11: #{transformer_block.5} parent=0 // pred_check_branch
    %16 = sbr.rel (0) target = $region13
  $region12: #{transformer_block.5} parent=0 // pred_region
    _
  $region13: #{transformer_block.5} parent=0 // pred_fallthru
    _
  // Predicated region
  $region14: #{transformer_block.5} parent=0 // pred_check
    _
  $region15: #{transformer_block.5} parent=0 // pred_check_branch
    %18 = sbr.rel (0) target = $region17
  $region16: #{transformer_block.5} parent=0 // pred_region
    _
  $region17: #{transformer_block.5} parent=0 // pred_fallthru
    _
  // Predicated region
  $region18: #{transformer_block.5} parent=0 // pred_check
    _
  $region19: #{transformer_block.5} parent=0 // pred_check_branch
    %20 = sbr.rel (0) target = $region21
  $region20: #{transformer_block.5} parent=0 // pred_region
    _
  $region21: #{transformer_block.5} parent=0 // pred_fallthru
    _
  // Predicated region
  $region22: #{transformer_block.5} parent=0 // pred_check
    _
  $region23: #{transformer_block.5} parent=0 // pred_check_branch
    %22 = sbr.rel (0) target = $region25
  $region24: #{transformer_block.5} parent=0 // pred_region
    _
  $region25: #{transformer_block.5} parent=0 // pred_fallthru
    _
  %v24 = vld [vmem:[%s0] sm:$0xf]
  %v25 = vld [vmem:[%s0 + $0x4] sm:$0xf]
  %v26 = vld [vmem:[%s0 + $0x8] sm:$0xf]
  %v27 = vld [vmem:[%s0 + $0xc] sm:$0xf]
  %v28 = vld [vmem:[%s0 + $0x10] sm:$0xf]
  %v29 = vld [vmem:[%s0 + $0x14] sm:$0xf]
  %v30 = vld [vmem:[%s0 + $0x18] sm:$0xf]
  %v31 = vld [vmem:[%s0 + $0x1c] sm:$0xf]
  %v32 = vld [vmem:[%s0 + $0x20] sm:$0xf]
  %v33 = vld [vmem:[%s0 + $0x24] sm:$0xf]
  %v34 = vld [vmem:[%s0 + $0x28] sm:$0xf]
  %v35 = vld [vmem:[%s0 + $0x2c] sm:$0xf]
  %v36 = vld [vmem:[%s0 + $0x30] sm:$0xf]
  %v37 = vld [vmem:[%s0 + $0x34] sm:$0xf]
  %v38 = vld [vmem:[%s0 + $0x38] sm:$0xf]
  %v39 = vld [vmem:[%s0 + $0x3c] sm:$0xf]
  %v40 = vld [vmem:[%s0 + $0x40] sm:$0xf]
  %v41 = vld [vmem:[%s0 + $0x44] sm:$0xf]
  %v42 = vld [vmem:[%s0 + $0x48] sm:$0xf]
  %v43 = vld [vmem:[%s0 + $0x4c] sm:$0xf]
  %v44 = vld [vmem:[%s0 + $0x50] sm:$0xf]
  %v45 = vld [vmem:[%s0 + $0x54] sm:$0xf]
  %v46 = vld [vmem:[%s0 + $0x58] sm:$0xf]
  %v47 = vld [vmem:[%s0 + $0x5c] sm:$0xf]
  %v48 = vld [vmem:[%s0 + $0x60] sm:$0xf]
  %v49 = vld [vmem:[%s0 + $0x64] sm:$0xf]
  %v50 = vld [vmem:[%s0 + $0x68] sm:$0xf]
  %v51 = vld [vmem:[%s0 + $0x6c] sm:$0xf]
  %v52 = vld [vmem:[%s0 + $0x70] sm:$0xf]
  %v53 = vld [vmem:[%s0 + $0x74] sm:$0xf]
  %v54 = vld [vmem:[%s0 + $0x78] sm:$0xf]
  %v55 = vld [vmem:[%s0 + $0x7c] sm:$0xf]
  %v56 = vld [vmem:[%s0 + $0x80] sm:$0xf]
  %v57 = vld [vmem:[%s0 + $0x84] sm:$0xf]
  %v58 = vld [vmem:[%s0 + $0x88] sm:$0xf]
  %v59 = vld [vmem:[%s0 + $0x8c] sm:$0xf]
  %v60 = vld [vmem:[%s0 + $0x90] sm:$0xf]
  %v61 = vld [vmem:[%s0 + $0x94] sm:$0xf]
  %v62 = vld [vmem:[%s0 + $0x98] sm:$0xf]
  %v63 = vld [vmem:[%s0 + $0x9c] sm:$0xf]
  %v64 = vld [vmem:[%s0 + $0xa0] sm:$0xf]
  %v65 = vld [vmem:[%s0 + $0xa4] sm:$0xf]
  %v66 = vld [vmem:[%s0 + $0xa8] sm:$0xf]
  %v67 = vld [vmem:[%s0 + $0xac] sm:$0xf]
  %v68 = vld [vmem:[%s0 + $0xb0] sm:$0xf]
  %v69 = vld [vmem:[%s0 + $0xb4] sm:$0xf]
  %v70 = vld [vmem:[%s0 + $0xb8] sm:$0xf]
  %v71 = vld [vmem:[%s0 + $0xbc] sm:$0xf]
  %v72 = vld [vmem:[%s0 + $0xc0] sm:$0xf]
  %v73 = vld [vmem:[%s0 + $0xc4] sm:$0xf]
  %v74 = vld [vmem:[%s0 + $0xc8] sm:$0xf]
  %v75 = vld [vmem:[%s0 + $0xcc] sm:$0xf]
  %v76 = vld [vmem:[%s0 + $0xd0] sm:$0xf]
  %v77 = vld [vmem:[%s0 + $0xd4] sm:$0xf]
  %v78 = vld [vmem:[%s0 + $0xd8] sm:$0xf]
  %v79 = vld [vmem:[%s0 + $0xdc] sm:$0xf]
  %v80 = vld [vmem:[%s0 + $0xe0] sm:$0xf]
  %v81 = vld [vmem:[%s0 + $0xe4] sm:$0xf]
  %v82 = vld [vmem:[%s0 + $0xe8] sm:$0xf]
  %v83 = vld [vmem:[%s0 + $0xec] sm:$0xf]
  %v84 = vld [vmem:[%s0 + $0xf0] sm:$0xf]
  %v85 = vld [vmem:[%s0 + $0xf4] sm:$0xf]
  %v86 = vld [vmem:[%s0 + $0xf8] sm:$0xf]
  %v87 = vld [vmem:[%s0 + $0xfc] sm:$0xf]
  %v88 = vld [vmem:[%s1] sm:$0x3]
  %v153 = vunpack.c.l.b16 %v24
  %v154 = vunpack.c.l.b16 %v25
  %v155 = vunpack.c.l.b16 %v26
  %v156 = vunpack.c.l.b16 %v27
  %v157 = vunpack.c.l.b16 %v28
  %v158 = vunpack.c.l.b16 %v29
  %v159 = vunpack.c.l.b16 %v30
  %v160 = vunpack.c.l.b16 %v31
  %v161 = vunpack.c.l.b16 %v32
  %v162 = vunpack.c.l.b16 %v33
  %v163 = vunpack.c.l.b16 %v34
  %v164 = vunpack.c.l.b16 %v35
  %v165 = vunpack.c.l.b16 %v36
  %v166 = vunpack.c.l.b16 %v37
  %v167 = vunpack.c.l.b16 %v38
  %v168 = vunpack.c.l.b16 %v39
  %v169 = vunpack.c.l.b16 %v40
  %v170 = vunpack.c.l.b16 %v41
  %v171 = vunpack.c.l.b16 %v42
  %v172 = vunpack.c.l.b16 %v43
  %v173 = vunpack.c.l.b16 %v44
  %v174 = vunpack.c.l.b16 %v45
  %v175 = vunpack.c.l.b16 %v46
  %v176 = vunpack.c.l.b16 %v47
  %v177 = vunpack.c.l.b16 %v48
  %v178 = vunpack.c.l.b16 %v49
  %v179 = vunpack.c.l.b16 %v50
  %v180 = vunpack.c.l.b16 %v51
  %v181 = vunpack.c.l.b16 %v52
  %v182 = vunpack.c.l.b16 %v53
  %v183 = vunpack.c.l.b16 %v54
  %v184 = vunpack.c.l.b16 %v55
  %v185 = vunpack.c.l.b16 %v56
  %v186 = vunpack.c.l.b16 %v57
  %v187 = vunpack.c.l.b16 %v58
  %v188 = vunpack.c.l.b16 %v59
  %v189 = vunpack.c.l.b16 %v60
  %v190 = vunpack.c.l.b16 %v61
  %v191 = vunpack.c.l.b16 %v62
  %v192 = vunpack.c.l.b16 %v63
  %v193 = vunpack.c.l.b16 %v64
  %v194 = vunpack.c.l.b16 %v65
  %v195 = vunpack.c.l.b16 %v66
  %v196 = vunpack.c.l.b16 %v67
  %v197 = vunpack.c.l.b16 %v68
  %v198 = vunpack.c.l.b16 %v69
  %v199 = vunpack.c.l.b16 %v70
  %v200 = vunpack.c.l.b16 %v71
  %v201 = vunpack.c.l.b16 %v72
  %v202 = vunpack.c.l.b16 %v73
  %v203 = vunpack.c.l.b16 %v74
  %v204 = vunpack.c.l.b16 %v75
  %v205 = vunpack.c.l.b16 %v76
  %v206 = vunpack.c.l.b16 %v77
  %v207 = vunpack.c.l.b16 %v78
  %v208 = vunpack.c.l.b16 %v79
  %v209 = vunpack.c.l.b16 %v80
  %v210 = vunpack.c.l.b16 %v81
  %v211 = vunpack.c.l.b16 %v82
  %v212 = vunpack.c.l.b16 %v83
  %v213 = vunpack.c.l.b16 %v84
  %v214 = vunpack.c.l.b16 %v85
  %v215 = vunpack.c.l.b16 %v86
  %v216 = vunpack.c.l.b16 %v87
  %v217 = vpack.c.b16 %v154, %v153
  %v218 = vpack.c.b16 %v156, %v155
  %v219 = vpack.c.b16 %v158, %v157
  %v220 = vpack.c.b16 %v160, %v159
  %v221 = vpack.c.b16 %v162, %v161
  %v222 = vpack.c.b16 %v164, %v163
  %v223 = vpack.c.b16 %v166, %v165
  %v224 = vpack.c.b16 %v168, %v167
  %v225 = vpack.c.b16 %v170, %v169
  %v226 = vpack.c.b16 %v172, %v171
  %v227 = vpack.c.b16 %v174, %v173
  %v228 = vpack.c.b16 %v176, %v175
  %v229 = vpack.c.b16 %v178, %v177
  %v230 = vpack.c.b16 %v180, %v179
  %v231 = vpack.c.b16 %v182, %v181
  %v232 = vpack.c.b16 %v184, %v183
  %v233 = vpack.c.b16 %v186, %v185
  %v234 = vpack.c.b16 %v188, %v187
  %v235 = vpack.c.b16 %v190, %v189
  %v236 = vpack.c.b16 %v192, %v191
  %v237 = vpack.c.b16 %v194, %v193
  %v238 = vpack.c.b16 %v196, %v195
  %v239 = vpack.c.b16 %v198, %v197
  %v240 = vpack.c.b16 %v200, %v199
  %v241 = vpack.c.b16 %v202, %v201
  %v242 = vpack.c.b16 %v204, %v203
  %v243 = vpack.c.b16 %v206, %v205
  %v244 = vpack.c.b16 %v208, %v207
  %v245 = vpack.c.b16 %v210, %v209
  %v246 = vpack.c.b16 %v212, %v211
  %v247 = vpack.c.b16 %v214, %v213
  %v248 = vpack.c.b16 %v216, %v215
  %vm249 = vcmask 31744
  %v251 = vsel %vm249, %v217, 0
  %v254 = vsel %vm249, %v218, 0
  %v257 = vsel %vm249, %v219, 0
  %v260 = vsel %vm249, %v220, 0
  %v263 = vsel %vm249, %v221, 0
  %v266 = vsel %vm249, %v222, 0
  %v269 = vsel %vm249, %v223, 0
  %v272 = vsel %vm249, %v224, 0
  %v275 = vsel %vm249, %v225, 0
  %v278 = vsel %vm249, %v226, 0
  %v281 = vsel %vm249, %v227, 0
  %v284 = vsel %vm249, %v228, 0
  %v287 = vsel %vm249, %v229, 0
  %v290 = vsel %vm249, %v230, 0
  %v293 = vsel %vm249, %v231, 0
  %v296 = vsel %vm249, %v232, 0
  %v299 = vsel %vm249, %v233, 0
  %v302 = vsel %vm249, %v234, 0
  %v305 = vsel %vm249, %v235, 0
  %v308 = vsel %vm249, %v236, 0
  %v311 = vsel %vm249, %v237, 0
  %v314 = vsel %vm249, %v238, 0
  %v317 = vsel %vm249, %v239, 0
  %v320 = vsel %vm249, %v240, 0
  %v323 = vsel %vm249, %v241, 0
  %v326 = vsel %vm249, %v242, 0
  %v329 = vsel %vm249, %v243, 0
  %v332 = vsel %vm249, %v244, 0
  %v335 = vsel %vm249, %v245, 0
  %v338 = vsel %vm249, %v246, 0
  %v341 = vsel %vm249, %v247, 0
  %v344 = vsel %vm249, %v248, 0
  %vm346 = vcmask 1041408
  %v348 = vsel %vm346, %v88, 0
  %350 = vmatpush.bf16.msra.mxu0 0
  %351 = vmatpush.bf16.msra.mxu0 0
  %352 = vmatpush.bf16.msra.mxu0 0
  %353 = vmatpush.bf16.msra.mxu0 0
  %354 = vmatpush.bf16.msra.mxu0 0
  %355 = vmatpush.bf16.msra.mxu0 0
  %356 = vmatpush.bf16.msra.mxu0 0
  %357 = vmatpush.bf16.msra.mxu0 %v348
  %358 = vmatmul.bf16.gmra.mxu0 %v251
  %v359 = vpop.f32.mrf.mxu0
  %v360 = vadd.f32 0.0, %v359
  %v361 = vpop.f32.mrf.mxu0
  %v362 = vadd.f32 0.0, %v361
  %363 = vmatmul.bf16.gmra.mxu0 %v254
  %v364 = vpop.f32.mrf.mxu0
  %v365 = vadd.f32 0.0, %v364
  %v366 = vpop.f32.mrf.mxu0
  %v367 = vadd.f32 0.0, %v366
  %368 = vmatmul.bf16.gmra.mxu0 %v257
  %v369 = vpop.f32.mrf.mxu0
  %v370 = vadd.f32 0.0, %v369
  %v371 = vpop.f32.mrf.mxu0
  %v372 = vadd.f32 0.0, %v371
  %373 = vmatmul.bf16.gmra.mxu0 %v260
  %v374 = vpop.f32.mrf.mxu0
  %v375 = vadd.f32 0.0, %v374
  %v376 = vpop.f32.mrf.mxu0
  %v377 = vadd.f32 0.0, %v376
  %378 = vmatmul.bf16.gmra.mxu0 %v263
  %v379 = vpop.f32.mrf.mxu0
  %v380 = vadd.f32 0.0, %v379
  %v381 = vpop.f32.mrf.mxu0
  %v382 = vadd.f32 0.0, %v381
  %383 = vmatmul.bf16.gmra.mxu0 %v266
  %v384 = vpop.f32.mrf.mxu0
  %v385 = vadd.f32 0.0, %v384
  %v386 = vpop.f32.mrf.mxu0
  %v387 = vadd.f32 0.0, %v386
  %388 = vmatmul.bf16.gmra.mxu0 %v269
  %v389 = vpop.f32.mrf.mxu0
  %v390 = vadd.f32 0.0, %v389
  %v391 = vpop.f32.mrf.mxu0
  %v392 = vadd.f32 0.0, %v391
  %393 = vmatmul.bf16.gmra.mxu0 %v272
  %v394 = vpop.f32.mrf.mxu0
  %v395 = vadd.f32 0.0, %v394
  %v396 = vpop.f32.mrf.mxu0
  %v397 = vadd.f32 0.0, %v396
  %398 = vmatmul.bf16.gmra.mxu0 %v275
  %v399 = vpop.f32.mrf.mxu0
  %v400 = vadd.f32 0.0, %v399
  %v401 = vpop.f32.mrf.mxu0
  %v402 = vadd.f32 0.0, %v401
  %403 = vmatmul.bf16.gmra.mxu0 %v278
  %v404 = vpop.f32.mrf.mxu0
  %v405 = vadd.f32 0.0, %v404
  %v406 = vpop.f32.mrf.mxu0
  %v407 = vadd.f32 0.0, %v406
  %408 = vmatmul.bf16.gmra.mxu0 %v281
  %v409 = vpop.f32.mrf.mxu0
  %v410 = vadd.f32 0.0, %v409
  %v411 = vpop.f32.mrf.mxu0
  %v412 = vadd.f32 0.0, %v411
  %413 = vmatmul.bf16.gmra.mxu0 %v284
  %v414 = vpop.f32.mrf.mxu0
  %v415 = vadd.f32 0.0, %v414
  %v416 = vpop.f32.mrf.mxu0
  %v417 = vadd.f32 0.0, %v416
  %418 = vmatmul.bf16.gmra.mxu0 %v287
  %v419 = vpop.f32.mrf.mxu0
  %v420 = vadd.f32 0.0, %v419
  %v421 = vpop.f32.mrf.mxu0
  %v422 = vadd.f32 0.0, %v421
  %423 = vmatmul.bf16.gmra.mxu0 %v290
  %v424 = vpop.f32.mrf.mxu0
  %v425 = vadd.f32 0.0, %v424
  %v426 = vpop.f32.mrf.mxu0
  %v427 = vadd.f32 0.0, %v426
  %428 = vmatmul.bf16.gmra.mxu0 %v293
  %v429 = vpop.f32.mrf.mxu0
  %v430 = vadd.f32 0.0, %v429
  %v431 = vpop.f32.mrf.mxu0
  %v432 = vadd.f32 0.0, %v431
  %433 = vmatmul.bf16.gmra.mxu0 %v296
  %v434 = vpop.f32.mrf.mxu0
  %v435 = vadd.f32 0.0, %v434
  %v436 = vpop.f32.mrf.mxu0
  %v437 = vadd.f32 0.0, %v436
  %438 = vmatmul.bf16.gmra.mxu0 %v299
  %v439 = vpop.f32.mrf.mxu0
  %v440 = vadd.f32 0.0, %v439
  %v441 = vpop.f32.mrf.mxu0
  %v442 = vadd.f32 0.0, %v441
  %443 = vmatmul.bf16.gmra.mxu0 %v302
  %v444 = vpop.f32.mrf.mxu0
  %v445 = vadd.f32 0.0, %v444
  %v446 = vpop.f32.mrf.mxu0
  %v447 = vadd.f32 0.0, %v446
  %448 = vmatmul.bf16.gmra.mxu0 %v305
  %v449 = vpop.f32.mrf.mxu0
  %v450 = vadd.f32 0.0, %v449
  %v451 = vpop.f32.mrf.mxu0
  %v452 = vadd.f32 0.0, %v451
  %453 = vmatmul.bf16.gmra.mxu0 %v308
  %v454 = vpop.f32.mrf.mxu0
  %v455 = vadd.f32 0.0, %v454
  %v456 = vpop.f32.mrf.mxu0
  %v457 = vadd.f32 0.0, %v456
  %458 = vmatmul.bf16.gmra.mxu0 %v311
  %v459 = vpop.f32.mrf.mxu0
  %v460 = vadd.f32 0.0, %v459
  %v461 = vpop.f32.mrf.mxu0
  %v462 = vadd.f32 0.0, %v461
  %463 = vmatmul.bf16.gmra.mxu0 %v314
  %v464 = vpop.f32.mrf.mxu0
  %v465 = vadd.f32 0.0, %v464
  %v466 = vpop.f32.mrf.mxu0
  %v467 = vadd.f32 0.0, %v466
  %468 = vmatmul.bf16.gmra.mxu0 %v317
  %v469 = vpop.f32.mrf.mxu0
  %v470 = vadd.f32 0.0, %v469
  %v471 = vpop.f32.mrf.mxu0
  %v472 = vadd.f32 0.0, %v471
  %473 = vmatmul.bf16.gmra.mxu0 %v320
  %v474 = vpop.f32.mrf.mxu0
  %v475 = vadd.f32 0.0, %v474
  %v476 = vpop.f32.mrf.mxu0
  %v477 = vadd.f32 0.0, %v476
  %478 = vmatmul.bf16.gmra.mxu0 %v323
  %v479 = vpop.f32.mrf.mxu0
  %v480 = vadd.f32 0.0, %v479
  %v481 = vpop.f32.mrf.mxu0
  %v482 = vadd.f32 0.0, %v481
  %483 = vmatmul.bf16.gmra.mxu0 %v326
  %v484 = vpop.f32.mrf.mxu0
  %v485 = vadd.f32 0.0, %v484
  %v486 = vpop.f32.mrf.mxu0
  %v487 = vadd.f32 0.0, %v486
  %488 = vmatmul.bf16.gmra.mxu0 %v329
  %v489 = vpop.f32.mrf.mxu0
  %v490 = vadd.f32 0.0, %v489
  %v491 = vpop.f32.mrf.mxu0
  %v492 = vadd.f32 0.0, %v491
  %493 = vmatmul.bf16.gmra.mxu0 %v332
  %v494 = vpop.f32.mrf.mxu0
  %v495 = vadd.f32 0.0, %v494
  %v496 = vpop.f32.mrf.mxu0
  %v497 = vadd.f32 0.0, %v496
  %498 = vmatmul.bf16.gmra.mxu0 %v335
  %v499 = vpop.f32.mrf.mxu0
  %v500 = vadd.f32 0.0, %v499
  %v501 = vpop.f32.mrf.mxu0
  %v502 = vadd.f32 0.0, %v501
  %503 = vmatmul.bf16.gmra.mxu0 %v338
  %v504 = vpop.f32.mrf.mxu0
  %v505 = vadd.f32 0.0, %v504
  %v506 = vpop.f32.mrf.mxu0
  %v507 = vadd.f32 0.0, %v506
  %508 = vmatmul.bf16.gmra.mxu0 %v341
  %v509 = vpop.f32.mrf.mxu0
  %v510 = vadd.f32 0.0, %v509
  %v511 = vpop.f32.mrf.mxu0
  %v512 = vadd.f32 0.0, %v511
  %513 = vmatmul.bf16.gmra.mxu0 %v344
  %v514 = vpop.f32.mrf.mxu0
  %v515 = vadd.f32 0.0, %v514
  %v516 = vpop.f32.mrf.mxu0
  %v517 = vadd.f32 0.0, %v516
  %518 = vdwg.mxu0
  %v519 = vld [vmem:[%s2] sm:$0x1]
  %v521 = vperm.slane %v519, 0
  %v523 = vmul.f32 %v360, %v521
  %v524 = vmul.f32 %v362, %v521
  %v525 = vmul.f32 %v365, %v521
  %v526 = vmul.f32 %v367, %v521
  %v527 = vmul.f32 %v370, %v521
  %v528 = vmul.f32 %v372, %v521
  %v529 = vmul.f32 %v375, %v521
  %v530 = vmul.f32 %v377, %v521
  %v531 = vmul.f32 %v380, %v521
  %v532 = vmul.f32 %v382, %v521
  %v533 = vmul.f32 %v385, %v521
  %v534 = vmul.f32 %v387, %v521
  %v535 = vmul.f32 %v390, %v521
  %v536 = vmul.f32 %v392, %v521
  %v537 = vmul.f32 %v395, %v521
  %v538 = vmul.f32 %v397, %v521
  %v539 = vmul.f32 %v400, %v521
  %v540 = vmul.f32 %v402, %v521
  %v541 = vmul.f32 %v405, %v521
  %v542 = vmul.f32 %v407, %v521
  %v543 = vmul.f32 %v410, %v521
  %v544 = vmul.f32 %v412, %v521
  %v545 = vmul.f32 %v415, %v521
  %v546 = vmul.f32 %v417, %v521
  %v547 = vmul.f32 %v420, %v521
  %v548 = vmul.f32 %v422, %v521
  %v549 = vmul.f32 %v425, %v521
  %v550 = vmul.f32 %v427, %v521
  %v551 = vmul.f32 %v430, %v521
  %v552 = vmul.f32 %v432, %v521
  %v553 = vmul.f32 %v435, %v521
  %v554 = vmul.f32 %v437, %v521
  %v555 = vmul.f32 %v440, %v521
  %v556 = vmul.f32 %v442, %v521
  %v557 = vmul.f32 %v445, %v521
  %v558 = vmul.f32 %v447, %v521
  %v559 = vmul.f32 %v450, %v521
  %v560 = vmul.f32 %v452, %v521
  %v561 = vmul.f32 %v455, %v521
  %v562 = vmul.f32 %v457, %v521
  %v563 = vmul.f32 %v460, %v521
  %v564 = vmul.f32 %v462, %v521
  %v565 = vmul.f32 %v465, %v521
  %v566 = vmul.f32 %v467, %v521
  %v567 = vmul.f32 %v470, %v521
  %v568 = vmul.f32 %v472, %v521
  %v569 = vmul.f32 %v475, %v521
  %v570 = vmul.f32 %v477, %v521
  %v571 = vmul.f32 %v480, %v521
  %v572 = vmul.f32 %v482, %v521
  %v573 = vmul.f32 %v485, %v521
  %v574 = vmul.f32 %v487, %v521
  %v575 = vmul.f32 %v490, %v521
  %v576 = vmul.f32 %v492, %v521
  %v577 = vmul.f32 %v495, %v521
  %v578 = vmul.f32 %v497, %v521
  %v579 = vmul.f32 %v500, %v521
  %v580 = vmul.f32 %v502, %v521
  %v581 = vmul.f32 %v505, %v521
  %v582 = vmul.f32 %v507, %v521
  %v583 = vmul.f32 %v510, %v521
  %v584 = vmul.f32 %v512, %v521
  %v585 = vmul.f32 %v515, %v521
  %v586 = vmul.f32 %v517, %v521
  %v587 = vld [vmem:[%s3] sm:$0x1]
  %v589 = vperm.slane %v587, 0
  %v591 = vadd.f32 %v523, %v589
  %v592 = vadd.f32 %v524, %v589
  %v593 = vadd.f32 %v525, %v589
  %v594 = vadd.f32 %v526, %v589
  %v595 = vadd.f32 %v527, %v589
  %v596 = vadd.f32 %v528, %v589
  %v597 = vadd.f32 %v529, %v589
  %v598 = vadd.f32 %v530, %v589
  %v599 = vadd.f32 %v531, %v589
  %v600 = vadd.f32 %v532, %v589
  %v601 = vadd.f32 %v533, %v589
  %v602 = vadd.f32 %v534, %v589
  %v603 = vadd.f32 %v535, %v589
  %v604 = vadd.f32 %v536, %v589
  %v605 = vadd.f32 %v537, %v589
  %v606 = vadd.f32 %v538, %v589
  %v607 = vadd.f32 %v539, %v589
  %v608 = vadd.f32 %v540, %v589
  %v609 = vadd.f32 %v541, %v589
  %v610 = vadd.f32 %v542, %v589
  %v611 = vadd.f32 %v543, %v589
  %v612 = vadd.f32 %v544, %v589
  %v613 = vadd.f32 %v545, %v589
  %v614 = vadd.f32 %v546, %v589
  %v615 = vadd.f32 %v547, %v589
  %v616 = vadd.f32 %v548, %v589
  %v617 = vadd.f32 %v549, %v589
  %v618 = vadd.f32 %v550, %v589
  %v619 = vadd.f32 %v551, %v589
  %v620 = vadd.f32 %v552, %v589
  %v621 = vadd.f32 %v553, %v589
  %v622 = vadd.f32 %v554, %v589
  %v623 = vadd.f32 %v555, %v589
  %v624 = vadd.f32 %v556, %v589
  %v625 = vadd.f32 %v557, %v589
  %v626 = vadd.f32 %v558, %v589
  %v627 = vadd.f32 %v559, %v589
  %v628 = vadd.f32 %v560, %v589
  %v629 = vadd.f32 %v561, %v589
  %v630 = vadd.f32 %v562, %v589
  %v631 = vadd.f32 %v563, %v589
  %v632 = vadd.f32 %v564, %v589
  %v633 = vadd.f32 %v565, %v589
  %v634 = vadd.f32 %v566, %v589
  %v635 = vadd.f32 %v567, %v589
  %v636 = vadd.f32 %v568, %v589
  %v637 = vadd.f32 %v569, %v589
  %v638 = vadd.f32 %v570, %v589
  %v639 = vadd.f32 %v571, %v589
  %v640 = vadd.f32 %v572, %v589
  %v641 = vadd.f32 %v573, %v589
  %v642 = vadd.f32 %v574, %v589
  %v643 = vadd.f32 %v575, %v589
  %v644 = vadd.f32 %v576, %v589
  %v645 = vadd.f32 %v577, %v589
  %v646 = vadd.f32 %v578, %v589
  %v647 = vadd.f32 %v579, %v589
  %v648 = vadd.f32 %v580, %v589
  %v649 = vadd.f32 %v581, %v589
  %v650 = vadd.f32 %v582, %v589
  %v651 = vadd.f32 %v583, %v589
  %v652 = vadd.f32 %v584, %v589
  %v653 = vadd.f32 %v585, %v589
  %v654 = vadd.f32 %v586, %v589
  %v655 = vxor.u32 %v591, 2147483648
  %v656 = vxor.u32 %v592, 2147483648
  %v657 = vxor.u32 %v593, 2147483648
  %v658 = vxor.u32 %v594, 2147483648
  %v659 = vxor.u32 %v595, 2147483648
  %v660 = vxor.u32 %v596, 2147483648
  %v661 = vxor.u32 %v597, 2147483648
  %v662 = vxor.u32 %v598, 2147483648
  %v663 = vxor.u32 %v599, 2147483648
  %v664 = vxor.u32 %v600, 2147483648
  %v665 = vxor.u32 %v601, 2147483648
  %v666 = vxor.u32 %v602, 2147483648
  %v667 = vxor.u32 %v603, 2147483648
  %v668 = vxor.u32 %v604, 2147483648
  %v669 = vxor.u32 %v605, 2147483648
  %v670 = vxor.u32 %v606, 2147483648
  %v671 = vxor.u32 %v607, 2147483648
  %v672 = vxor.u32 %v608, 2147483648
  %v673 = vxor.u32 %v609, 2147483648
  %v674 = vxor.u32 %v610, 2147483648
  %v675 = vxor.u32 %v611, 2147483648
  %v676 = vxor.u32 %v612, 2147483648
  %v677 = vxor.u32 %v613, 2147483648
  %v678 = vxor.u32 %v614, 2147483648
  %v679 = vxor.u32 %v615, 2147483648
  %v680 = vxor.u32 %v616, 2147483648
  %v681 = vxor.u32 %v617, 2147483648
  %v682 = vxor.u32 %v618, 2147483648
  %v683 = vxor.u32 %v619, 2147483648
  %v684 = vxor.u32 %v620, 2147483648
  %v685 = vxor.u32 %v621, 2147483648
  %v686 = vxor.u32 %v622, 2147483648
  %v687 = vxor.u32 %v623, 2147483648
  %v688 = vxor.u32 %v624, 2147483648
  %v689 = vxor.u32 %v625, 2147483648
  %v690 = vxor.u32 %v626, 2147483648
  %v691 = vxor.u32 %v627, 2147483648
  %v692 = vxor.u32 %v628, 2147483648
  %v693 = vxor.u32 %v629, 2147483648
  %v694 = vxor.u32 %v630, 2147483648
  %v695 = vxor.u32 %v631, 2147483648
  %v696 = vxor.u32 %v632, 2147483648
  %v697 = vxor.u32 %v633, 2147483648
  %v698 = vxor.u32 %v634, 2147483648
  %v699 = vxor.u32 %v635, 2147483648
  %v700 = vxor.u32 %v636, 2147483648
  %v701 = vxor.u32 %v637, 2147483648
  %v702 = vxor.u32 %v638, 2147483648
  %v703 = vxor.u32 %v639, 2147483648
  %v704 = vxor.u32 %v640, 2147483648
  %v705 = vxor.u32 %v641, 2147483648
  %v706 = vxor.u32 %v642, 2147483648
  %v707 = vxor.u32 %v643, 2147483648
  %v708 = vxor.u32 %v644, 2147483648
  %v709 = vxor.u32 %v645, 2147483648
  %v710 = vxor.u32 %v646, 2147483648
  %v711 = vxor.u32 %v647, 2147483648
  %v712 = vxor.u32 %v648, 2147483648
  %v713 = vxor.u32 %v649, 2147483648
  %v714 = vxor.u32 %v650, 2147483648
  %v715 = vxor.u32 %v651, 2147483648
  %v716 = vxor.u32 %v652, 2147483648
  %v717 = vxor.u32 %v653, 2147483648
  %v718 = vxor.u32 %v654, 2147483648
  %v719 = vmul.f32 %v655, 1.442695
  %v720 = vpow.pop %v719
  %v721 = vmul.f32 %v656, 1.442695
  %v722 = vpow.pop %v721
  %v723 = vmul.f32 %v657, 1.442695
  %v724 = vpow.pop %v723
  %v725 = vmul.f32 %v658, 1.442695
  %v726 = vpow.pop %v725
  %v727 = vmul.f32 %v659, 1.442695
  %v728 = vpow.pop %v727
  %v729 = vmul.f32 %v660, 1.442695
  %v730 = vpow.pop %v729
  %v731 = vmul.f32 %v661, 1.442695
  %v732 = vpow.pop %v731
  %v733 = vmul.f32 %v662, 1.442695
  %v734 = vpow.pop %v733
  %v735 = vmul.f32 %v663, 1.442695
  %v736 = vpow.pop %v735
  %v737 = vmul.f32 %v664, 1.442695
  %v738 = vpow.pop %v737
  %v739 = vmul.f32 %v665, 1.442695
  %v740 = vpow.pop %v739
  %v741 = vmul.f32 %v666, 1.442695
  %v742 = vpow.pop %v741
  %v743 = vmul.f32 %v667, 1.442695
  %v744 = vpow.pop %v743
  %v745 = vmul.f32 %v668, 1.442695
  %v746 = vpow.pop %v745
  %v747 = vmul.f32 %v669, 1.442695
  %v748 = vpow.pop %v747
  %v749 = vmul.f32 %v670, 1.442695
  %v750 = vpow.pop %v749
  %v751 = vmul.f32 %v671, 1.442695
  %v752 = vpow.pop %v751
  %v753 = vmul.f32 %v672, 1.442695
  %v754 = vpow.pop %v753
  %v755 = vmul.f32 %v673, 1.442695
  %v756 = vpow.pop %v755
  %v757 = vmul.f32 %v674, 1.442695
  %v758 = vpow.pop %v757
  %v759 = vmul.f32 %v675, 1.442695
  %v760 = vpow.pop %v759
  %v761 = vmul.f32 %v676, 1.442695
  %v762 = vpow.pop %v761
  %v763 = vmul.f32 %v677, 1.442695
  %v764 = vpow.pop %v763
  %v765 = vmul.f32 %v678, 1.442695
  %v766 = vpow.pop %v765
  %v767 = vmul.f32 %v679, 1.442695
  %v768 = vpow.pop %v767
  %v769 = vmul.f32 %v680, 1.442695
  %v770 = vpow.pop %v769
  %v771 = vmul.f32 %v681, 1.442695
  %v772 = vpow.pop %v771
  %v773 = vmul.f32 %v682, 1.442695
  %v774 = vpow.pop %v773
  %v775 = vmul.f32 %v683, 1.442695
  %v776 = vpow.pop %v775
  %v777 = vmul.f32 %v684, 1.442695
  %v778 = vpow.pop %v777
  %v779 = vmul.f32 %v685, 1.442695
  %v780 = vpow.pop %v779
  %v781 = vmul.f32 %v686, 1.442695
  %v782 = vpow.pop %v781
  %v783 = vmul.f32 %v687, 1.442695
  %v784 = vpow.pop %v783
  %v785 = vmul.f32 %v688, 1.442695
  %v786 = vpow.pop %v785
  %v787 = vmul.f32 %v689, 1.442695
  %v788 = vpow.pop %v787
  %v789 = vmul.f32 %v690, 1.442695
  %v790 = vpow.pop %v789
  %v791 = vmul.f32 %v691, 1.442695
  %v792 = vpow.pop %v791
  %v793 = vmul.f32 %v692, 1.442695
  %v794 = vpow.pop %v793
  %v795 = vmul.f32 %v693, 1.442695
  %v796 = vpow.pop %v795
  %v797 = vmul.f32 %v694, 1.442695
  %v798 = vpow.pop %v797
  %v799 = vmul.f32 %v695, 1.442695
  %v800 = vpow.pop %v799
  %v801 = vmul.f32 %v696, 1.442695
  %v802 = vpow.pop %v801
  %v803 = vmul.f32 %v697, 1.442695
  %v804 = vpow.pop %v803
  %v805 = vmul.f32 %v698, 1.442695
  %v806 = vpow.pop %v805
  %v807 = vmul.f32 %v699, 1.442695
  %v808 = vpow.pop %v807
  %v809 = vmul.f32 %v700, 1.442695
  %v810 = vpow.pop %v809
  %v811 = vmul.f32 %v701, 1.442695
  %v812 = vpow.pop %v811
  %v813 = vmul.f32 %v702, 1.442695
  %v814 = vpow.pop %v813
  %v815 = vmul.f32 %v703, 1.442695
  %v816 = vpow.pop %v815
  %v817 = vmul.f32 %v704, 1.442695
  %v818 = vpow.pop %v817
  %v819 = vmul.f32 %v705, 1.442695
  %v820 = vpow.pop %v819
  %v821 = vmul.f32 %v706, 1.442695
  %v822 = vpow.pop %v821
  %v823 = vmul.f32 %v707, 1.442695
  %v824 = vpow.pop %v823
  %v825 = vmul.f32 %v708, 1.442695
  %v826 = vpow.pop %v825
  %v827 = vmul.f32 %v709, 1.442695
  %v828 = vpow.pop %v827
  %v829 = vmul.f32 %v710, 1.442695
  %v830 = vpow.pop %v829
  %v831 = vmul.f32 %v711, 1.442695
  %v832 = vpow.pop %v831
  %v833 = vmul.f32 %v712, 1.442695
  %v834 = vpow.pop %v833
  %v835 = vmul.f32 %v713, 1.442695
  %v836 = vpow.pop %v835
  %v837 = vmul.f32 %v714, 1.442695
  %v838 = vpow.pop %v837
  %v839 = vmul.f32 %v715, 1.442695
  %v840 = vpow.pop %v839
  %v841 = vmul.f32 %v716, 1.442695
  %v842 = vpow.pop %v841
  %v843 = vmul.f32 %v717, 1.442695
  %v844 = vpow.pop %v843
  %v845 = vmul.f32 %v718, 1.442695
  %v846 = vpow.pop %v845
  %v847 = vadd.f32 %v720, 1.0
  %v848 = vadd.f32 %v722, 1.0
  %v849 = vadd.f32 %v724, 1.0
  %v850 = vadd.f32 %v726, 1.0
  %v851 = vadd.f32 %v728, 1.0
  %v852 = vadd.f32 %v730, 1.0
  %v853 = vadd.f32 %v732, 1.0
  %v854 = vadd.f32 %v734, 1.0
  %v855 = vadd.f32 %v736, 1.0
  %v856 = vadd.f32 %v738, 1.0
  %v857 = vadd.f32 %v740, 1.0
  %v858 = vadd.f32 %v742, 1.0
  %v859 = vadd.f32 %v744, 1.0
  %v860 = vadd.f32 %v746, 1.0
  %v861 = vadd.f32 %v748, 1.0
  %v862 = vadd.f32 %v750, 1.0
  %v863 = vadd.f32 %v752, 1.0
  %v864 = vadd.f32 %v754, 1.0
  %v865 = vadd.f32 %v756, 1.0
  %v866 = vadd.f32 %v758, 1.0
  %v867 = vadd.f32 %v760, 1.0
  %v868 = vadd.f32 %v762, 1.0
  %v869 = vadd.f32 %v764, 1.0
  %v870 = vadd.f32 %v766, 1.0
  %v871 = vadd.f32 %v768, 1.0
  %v872 = vadd.f32 %v770, 1.0
  %v873 = vadd.f32 %v772, 1.0
  %v874 = vadd.f32 %v774, 1.0
  %v875 = vadd.f32 %v776, 1.0
  %v876 = vadd.f32 %v778, 1.0
  %v877 = vadd.f32 %v780, 1.0
  %v878 = vadd.f32 %v782, 1.0
  %v879 = vadd.f32 %v784, 1.0
  %v880 = vadd.f32 %v786, 1.0
  %v881 = vadd.f32 %v788, 1.0
  %v882 = vadd.f32 %v790, 1.0
  %v883 = vadd.f32 %v792, 1.0
  %v884 = vadd.f32 %v794, 1.0
  %v885 = vadd.f32 %v796, 1.0
  %v886 = vadd.f32 %v798, 1.0
  %v887 = vadd.f32 %v800, 1.0
  %v888 = vadd.f32 %v802, 1.0
  %v889 = vadd.f32 %v804, 1.0
  %v890 = vadd.f32 %v806, 1.0
  %v891 = vadd.f32 %v808, 1.0
  %v892 = vadd.f32 %v810, 1.0
  %v893 = vadd.f32 %v812, 1.0
  %v894 = vadd.f32 %v814, 1.0
  %v895 = vadd.f32 %v816, 1.0
  %v896 = vadd.f32 %v818, 1.0
  %v897 = vadd.f32 %v820, 1.0
  %v898 = vadd.f32 %v822, 1.0
  %v899 = vadd.f32 %v824, 1.0
  %v900 = vadd.f32 %v826, 1.0
  %v901 = vadd.f32 %v828, 1.0
  %v902 = vadd.f32 %v830, 1.0
  %v903 = vadd.f32 %v832, 1.0
  %v904 = vadd.f32 %v834, 1.0
  %v905 = vadd.f32 %v836, 1.0
  %v906 = vadd.f32 %v838, 1.0
  %v907 = vadd.f32 %v840, 1.0
  %v908 = vadd.f32 %v842, 1.0
  %v909 = vadd.f32 %v844, 1.0
  %v910 = vadd.f32 %v846, 1.0
  %v911 = vrcp.pop %v847
  %v912 = vmul.f32 %v847, %v911
  %v913 = vsub.f32 1.0, %v912
  %v914 = vmul.f32 %v911, %v913
  %v915 = vadd.f32 %v911, %v914
  %vm916 = vweird.f32 %v847
  %vm917 = vweird.f32 %v911
  %vm918 = vmor %vm916, %vm917
  %v919 = vsel %vm918, %v911, %v915
  %v920 = vand.u32 2147483647, %v847
  %vm921 = vcmp.eq.f32.partialorder %v920, 8.507059e+37
  %v922 = vand.u32 %v847, 2147483648
  %v923 = vor.u32 1.1754944e-38, %v922
  %v924 = vsel %vm921, %v923, %v919
  %v925 = vmul.f32 1.0, %v924
  %v926 = vrcp.pop %v848
  %v927 = vmul.f32 %v848, %v926
  %v928 = vsub.f32 1.0, %v927
  %v929 = vmul.f32 %v926, %v928
  %v930 = vadd.f32 %v926, %v929
  %vm931 = vweird.f32 %v848
  %vm932 = vweird.f32 %v926
  %vm933 = vmor %vm931, %vm932
  %v934 = vsel %vm933, %v926, %v930
  %v935 = vand.u32 2147483647, %v848
  %vm936 = vcmp.eq.f32.partialorder %v935, 8.507059e+37
  %v937 = vand.u32 %v848, 2147483648
  %v938 = vor.u32 1.1754944e-38, %v937
  %v939 = vsel %vm936, %v938, %v934
  %v940 = vmul.f32 1.0, %v939
  %v941 = vrcp.pop %v849
  %v942 = vmul.f32 %v849, %v941
  %v943 = vsub.f32 1.0, %v942
  %v944 = vmul.f32 %v941, %v943
  %v945 = vadd.f32 %v941, %v944
  %vm946 = vweird.f32 %v849
  %vm947 = vweird.f32 %v941
  %vm948 = vmor %vm946, %vm947
  %v949 = vsel %vm948, %v941, %v945
  %v950 = vand.u32 2147483647, %v849
  %vm951 = vcmp.eq.f32.partialorder %v950, 8.507059e+37
  %v952 = vand.u32 %v849, 2147483648
  %v953 = vor.u32 1.1754944e-38, %v952
  %v954 = vsel %vm951, %v953, %v949
  %v955 = vmul.f32 1.0, %v954
  %v956 = vrcp.pop %v850
  %v957 = vmul.f32 %v850, %v956
  %v958 = vsub.f32 1.0, %v957
  %v959 = vmul.f32 %v956, %v958
  %v960 = vadd.f32 %v956, %v959
  %vm961 = vweird.f32 %v850
  %vm962 = vweird.f32 %v956
  %vm963 = vmor %vm961, %vm962
  %v964 = vsel %vm963, %v956, %v960
  %v965 = vand.u32 2147483647, %v850
  %vm966 = vcmp.eq.f32.partialorder %v965, 8.507059e+37
  %v967 = vand.u32 %v850, 2147483648
  %v968 = vor.u32 1.1754944e-38, %v967
  %v969 = vsel %vm966, %v968, %v964
  %v970 = vmul.f32 1.0, %v969
  %v971 = vrcp.pop %v851
  %v972 = vmul.f32 %v851, %v971
  %v973 = vsub.f32 1.0, %v972
  %v974 = vmul.f32 %v971, %v973
  %v975 = vadd.f32 %v971, %v974
  %vm976 = vweird.f32 %v851
  %vm977 = vweird.f32 %v971
  %vm978 = vmor %vm976, %vm977
  %v979 = vsel %vm978, %v971, %v975
  %v980 = vand.u32 2147483647, %v851
  %vm981 = vcmp.eq.f32.partialorder %v980, 8.507059e+37
  %v982 = vand.u32 %v851, 2147483648
  %v983 = vor.u32 1.1754944e-38, %v982
  %v984 = vsel %vm981, %v983, %v979
  %v985 = vmul.f32 1.0, %v984
  %v986 = vrcp.pop %v852
  %v987 = vmul.f32 %v852, %v986
  %v988 = vsub.f32 1.0, %v987
  %v989 = vmul.f32 %v986, %v988
  %v990 = vadd.f32 %v986, %v989
  %vm991 = vweird.f32 %v852
  %vm992 = vweird.f32 %v986
  %vm993 = vmor %vm991, %vm992
  %v994 = vsel %vm993, %v986, %v990
  %v995 = vand.u32 2147483647, %v852
  %vm996 = vcmp.eq.f32.partialorder %v995, 8.507059e+37
  %v997 = vand.u32 %v852, 2147483648
  %v998 = vor.u32 1.1754944e-38, %v997
  %v999 = vsel %vm996, %v998, %v994
  %v1000 = vmul.f32 1.0, %v999
  %v1001 = vrcp.pop %v853
  %v1002 = vmul.f32 %v853, %v1001
  %v1003 = vsub.f32 1.0, %v1002
  %v1004 = vmul.f32 %v1001, %v1003
  %v1005 = vadd.f32 %v1001, %v1004
  %vm1006 = vweird.f32 %v853
  %vm1007 = vweird.f32 %v1001
  %vm1008 = vmor %vm1006, %vm1007
  %v1009 = vsel %vm1008, %v1001, %v1005
  %v1010 = vand.u32 2147483647, %v853
  %vm1011 = vcmp.eq.f32.partialorder %v1010, 8.507059e+37
  %v1012 = vand.u32 %v853, 2147483648
  %v1013 = vor.u32 1.1754944e-38, %v1012
  %v1014 = vsel %vm1011, %v1013, %v1009
  %v1015 = vmul.f32 1.0, %v1014
  %v1016 = vrcp.pop %v854
  %v1017 = vmul.f32 %v854, %v1016
  %v1018 = vsub.f32 1.0, %v1017
  %v1019 = vmul.f32 %v1016, %v1018
  %v1020 = vadd.f32 %v1016, %v1019
  %vm1021 = vweird.f32 %v854
  %vm1022 = vweird.f32 %v1016
  %vm1023 = vmor %vm1021, %vm1022
  %v1024 = vsel %vm1023, %v1016, %v1020
  %v1025 = vand.u32 2147483647, %v854
  %vm1026 = vcmp.eq.f32.partialorder %v1025, 8.507059e+37
  %v1027 = vand.u32 %v854, 2147483648
  %v1028 = vor.u32 1.1754944e-38, %v1027
  %v1029 = vsel %vm1026, %v1028, %v1024
  %v1030 = vmul.f32 1.0, %v1029
  %v1031 = vrcp.pop %v855
  %v1032 = vmul.f32 %v855, %v1031
  %v1033 = vsub.f32 1.0, %v1032
  %v1034 = vmul.f32 %v1031, %v1033
  %v1035 = vadd.f32 %v1031, %v1034
  %vm1036 = vweird.f32 %v855
  %vm1037 = vweird.f32 %v1031
  %vm1038 = vmor %vm1036, %vm1037
  %v1039 = vsel %vm1038, %v1031, %v1035
  %v1040 = vand.u32 2147483647, %v855
  %vm1041 = vcmp.eq.f32.partialorder %v1040, 8.507059e+37
  %v1042 = vand.u32 %v855, 2147483648
  %v1043 = vor.u32 1.1754944e-38, %v1042
  %v1044 = vsel %vm1041, %v1043, %v1039
  %v1045 = vmul.f32 1.0, %v1044
  %v1046 = vrcp.pop %v856
  %v1047 = vmul.f32 %v856, %v1046
  %v1048 = vsub.f32 1.0, %v1047
  %v1049 = vmul.f32 %v1046, %v1048
  %v1050 = vadd.f32 %v1046, %v1049
  %vm1051 = vweird.f32 %v856
  %vm1052 = vweird.f32 %v1046
  %vm1053 = vmor %vm1051, %vm1052
  %v1054 = vsel %vm1053, %v1046, %v1050
  %v1055 = vand.u32 2147483647, %v856
  %vm1056 = vcmp.eq.f32.partialorder %v1055, 8.507059e+37
  %v1057 = vand.u32 %v856, 2147483648
  %v1058 = vor.u32 1.1754944e-38, %v1057
  %v1059 = vsel %vm1056, %v1058, %v1054
  %v1060 = vmul.f32 1.0, %v1059
  %v1061 = vrcp.pop %v857
  %v1062 = vmul.f32 %v857, %v1061
  %v1063 = vsub.f32 1.0, %v1062
  %v1064 = vmul.f32 %v1061, %v1063
  %v1065 = vadd.f32 %v1061, %v1064
  %vm1066 = vweird.f32 %v857
  %vm1067 = vweird.f32 %v1061
  %vm1068 = vmor %vm1066, %vm1067
  %v1069 = vsel %vm1068, %v1061, %v1065
  %v1070 = vand.u32 2147483647, %v857
  %vm1071 = vcmp.eq.f32.partialorder %v1070, 8.507059e+37
  %v1072 = vand.u32 %v857, 2147483648
  %v1073 = vor.u32 1.1754944e-38, %v1072
  %v1074 = vsel %vm1071, %v1073, %v1069
  %v1075 = vmul.f32 1.0, %v1074
  %v1076 = vrcp.pop %v858
  %v1077 = vmul.f32 %v858, %v1076
  %v1078 = vsub.f32 1.0, %v1077
  %v1079 = vmul.f32 %v1076, %v1078
  %v1080 = vadd.f32 %v1076, %v1079
  %vm1081 = vweird.f32 %v858
  %vm1082 = vweird.f32 %v1076
  %vm1083 = vmor %vm1081, %vm1082
  %v1084 = vsel %vm1083, %v1076, %v1080
  %v1085 = vand.u32 2147483647, %v858
  %vm1086 = vcmp.eq.f32.partialorder %v1085, 8.507059e+37
  %v1087 = vand.u32 %v858, 2147483648
  %v1088 = vor.u32 1.1754944e-38, %v1087
  %v1089 = vsel %vm1086, %v1088, %v1084
  %v1090 = vmul.f32 1.0, %v1089
  %v1091 = vrcp.pop %v859
  %v1092 = vmul.f32 %v859, %v1091
  %v1093 = vsub.f32 1.0, %v1092
  %v1094 = vmul.f32 %v1091, %v1093
  %v1095 = vadd.f32 %v1091, %v1094
  %vm1096 = vweird.f32 %v859
  %vm1097 = vweird.f32 %v1091
  %vm1098 = vmor %vm1096, %vm1097
  %v1099 = vsel %vm1098, %v1091, %v1095
  %v1100 = vand.u32 2147483647, %v859
  %vm1101 = vcmp.eq.f32.partialorder %v1100, 8.507059e+37
  %v1102 = vand.u32 %v859, 2147483648
  %v1103 = vor.u32 1.1754944e-38, %v1102
  %v1104 = vsel %vm1101, %v1103, %v1099
  %v1105 = vmul.f32 1.0, %v1104
  %v1106 = vrcp.pop %v860
  %v1107 = vmul.f32 %v860, %v1106
  %v1108 = vsub.f32 1.0, %v1107
  %v1109 = vmul.f32 %v1106, %v1108
  %v1110 = vadd.f32 %v1106, %v1109
  %vm1111 = vweird.f32 %v860
  %vm1112 = vweird.f32 %v1106
  %vm1113 = vmor %vm1111, %vm1112
  %v1114 = vsel %vm1113, %v1106, %v1110
  %v1115 = vand.u32 2147483647, %v860
  %vm1116 = vcmp.eq.f32.partialorder %v1115, 8.507059e+37
  %v1117 = vand.u32 %v860, 2147483648
  %v1118 = vor.u32 1.1754944e-38, %v1117
  %v1119 = vsel %vm1116, %v1118, %v1114
  %v1120 = vmul.f32 1.0, %v1119
  %v1121 = vrcp.pop %v861
  %v1122 = vmul.f32 %v861, %v1121
  %v1123 = vsub.f32 1.0, %v1122
  %v1124 = vmul.f32 %v1121, %v1123
  %v1125 = vadd.f32 %v1121, %v1124
  %vm1126 = vweird.f32 %v861
  %vm1127 = vweird.f32 %v1121
  %vm1128 = vmor %vm1126, %vm1127
  %v1129 = vsel %vm1128, %v1121, %v1125
  %v1130 = vand.u32 2147483647, %v861
  %vm1131 = vcmp.eq.f32.partialorder %v1130, 8.507059e+37
  %v1132 = vand.u32 %v861, 2147483648
  %v1133 = vor.u32 1.1754944e-38, %v1132
  %v1134 = vsel %vm1131, %v1133, %v1129
  %v1135 = vmul.f32 1.0, %v1134
  %v1136 = vrcp.pop %v862
  %v1137 = vmul.f32 %v862, %v1136
  %v1138 = vsub.f32 1.0, %v1137
  %v1139 = vmul.f32 %v1136, %v1138
  %v1140 = vadd.f32 %v1136, %v1139
  %vm1141 = vweird.f32 %v862
  %vm1142 = vweird.f32 %v1136
  %vm1143 = vmor %vm1141, %vm1142
  %v1144 = vsel %vm1143, %v1136, %v1140
  %v1145 = vand.u32 2147483647, %v862
  %vm1146 = vcmp.eq.f32.partialorder %v1145, 8.507059e+37
  %v1147 = vand.u32 %v862, 2147483648
  %v1148 = vor.u32 1.1754944e-38, %v1147
  %v1149 = vsel %vm1146, %v1148, %v1144
  %v1150 = vmul.f32 1.0, %v1149
  %v1151 = vrcp.pop %v863
  %v1152 = vmul.f32 %v863, %v1151
  %v1153 = vsub.f32 1.0, %v1152
  %v1154 = vmul.f32 %v1151, %v1153
  %v1155 = vadd.f32 %v1151, %v1154
  %vm1156 = vweird.f32 %v863
  %vm1157 = vweird.f32 %v1151
  %vm1158 = vmor %vm1156, %vm1157
  %v1159 = vsel %vm1158, %v1151, %v1155
  %v1160 = vand.u32 2147483647, %v863
  %vm1161 = vcmp.eq.f32.partialorder %v1160, 8.507059e+37
  %v1162 = vand.u32 %v863, 2147483648
  %v1163 = vor.u32 1.1754944e-38, %v1162
  %v1164 = vsel %vm1161, %v1163, %v1159
  %v1165 = vmul.f32 1.0, %v1164
  %v1166 = vrcp.pop %v864
  %v1167 = vmul.f32 %v864, %v1166
  %v1168 = vsub.f32 1.0, %v1167
  %v1169 = vmul.f32 %v1166, %v1168
  %v1170 = vadd.f32 %v1166, %v1169
  %vm1171 = vweird.f32 %v864
  %vm1172 = vweird.f32 %v1166
  %vm1173 = vmor %vm1171, %vm1172
  %v1174 = vsel %vm1173, %v1166, %v1170
  %v1175 = vand.u32 2147483647, %v864
  %vm1176 = vcmp.eq.f32.partialorder %v1175, 8.507059e+37
  %v1177 = vand.u32 %v864, 2147483648
  %v1178 = vor.u32 1.1754944e-38, %v1177
  %v1179 = vsel %vm1176, %v1178, %v1174
  %v1180 = vmul.f32 1.0, %v1179
  %v1181 = vrcp.pop %v865
  %v1182 = vmul.f32 %v865, %v1181
  %v1183 = vsub.f32 1.0, %v1182
  %v1184 = vmul.f32 %v1181, %v1183
  %v1185 = vadd.f32 %v1181, %v1184
  %vm1186 = vweird.f32 %v865
  %vm1187 = vweird.f32 %v1181
  %vm1188 = vmor %vm1186, %vm1187
  %v1189 = vsel %vm1188, %v1181, %v1185
  %v1190 = vand.u32 2147483647, %v865
  %vm1191 = vcmp.eq.f32.partialorder %v1190, 8.507059e+37
  %v1192 = vand.u32 %v865, 2147483648
  %v1193 = vor.u32 1.1754944e-38, %v1192
  %v1194 = vsel %vm1191, %v1193, %v1189
  %v1195 = vmul.f32 1.0, %v1194
  %v1196 = vrcp.pop %v866
  %v1197 = vmul.f32 %v866, %v1196
  %v1198 = vsub.f32 1.0, %v1197
  %v1199 = vmul.f32 %v1196, %v1198
  %v1200 = vadd.f32 %v1196, %v1199
  %vm1201 = vweird.f32 %v866
  %vm1202 = vweird.f32 %v1196
  %vm1203 = vmor %vm1201, %vm1202
  %v1204 = vsel %vm1203, %v1196, %v1200
  %v1205 = vand.u32 2147483647, %v866
  %vm1206 = vcmp.eq.f32.partialorder %v1205, 8.507059e+37
  %v1207 = vand.u32 %v866, 2147483648
  %v1208 = vor.u32 1.1754944e-38, %v1207
  %v1209 = vsel %vm1206, %v1208, %v1204
  %v1210 = vmul.f32 1.0, %v1209
  %v1211 = vrcp.pop %v867
  %v1212 = vmul.f32 %v867, %v1211
  %v1213 = vsub.f32 1.0, %v1212
  %v1214 = vmul.f32 %v1211, %v1213
  %v1215 = vadd.f32 %v1211, %v1214
  %vm1216 = vweird.f32 %v867
  %vm1217 = vweird.f32 %v1211
  %vm1218 = vmor %vm1216, %vm1217
  %v1219 = vsel %vm1218, %v1211, %v1215
  %v1220 = vand.u32 2147483647, %v867
  %vm1221 = vcmp.eq.f32.partialorder %v1220, 8.507059e+37
  %v1222 = vand.u32 %v867, 2147483648
  %v1223 = vor.u32 1.1754944e-38, %v1222
  %v1224 = vsel %vm1221, %v1223, %v1219
  %v1225 = vmul.f32 1.0, %v1224
  %v1226 = vrcp.pop %v868
  %v1227 = vmul.f32 %v868, %v1226
  %v1228 = vsub.f32 1.0, %v1227
  %v1229 = vmul.f32 %v1226, %v1228
  %v1230 = vadd.f32 %v1226, %v1229
  %vm1231 = vweird.f32 %v868
  %vm1232 = vweird.f32 %v1226
  %vm1233 = vmor %vm1231, %vm1232
  %v1234 = vsel %vm1233, %v1226, %v1230
  %v1235 = vand.u32 2147483647, %v868
  %vm1236 = vcmp.eq.f32.partialorder %v1235, 8.507059e+37
  %v1237 = vand.u32 %v868, 2147483648
  %v1238 = vor.u32 1.1754944e-38, %v1237
  %v1239 = vsel %vm1236, %v1238, %v1234
  %v1240 = vmul.f32 1.0, %v1239
  %v1241 = vrcp.pop %v869
  %v1242 = vmul.f32 %v869, %v1241
  %v1243 = vsub.f32 1.0, %v1242
  %v1244 = vmul.f32 %v1241, %v1243
  %v1245 = vadd.f32 %v1241, %v1244
  %vm1246 = vweird.f32 %v869
  %vm1247 = vweird.f32 %v1241
  %vm1248 = vmor %vm1246, %vm1247
  %v1249 = vsel %vm1248, %v1241, %v1245
  %v1250 = vand.u32 2147483647, %v869
  %vm1251 = vcmp.eq.f32.partialorder %v1250, 8.507059e+37
  %v1252 = vand.u32 %v869, 2147483648
  %v1253 = vor.u32 1.1754944e-38, %v1252
  %v1254 = vsel %vm1251, %v1253, %v1249
  %v1255 = vmul.f32 1.0, %v1254
  %v1256 = vrcp.pop %v870
  %v1257 = vmul.f32 %v870, %v1256
  %v1258 = vsub.f32 1.0, %v1257
  %v1259 = vmul.f32 %v1256, %v1258
  %v1260 = vadd.f32 %v1256, %v1259
  %vm1261 = vweird.f32 %v870
  %vm1262 = vweird.f32 %v1256
  %vm1263 = vmor %vm1261, %vm1262
  %v1264 = vsel %vm1263, %v1256, %v1260
  %v1265 = vand.u32 2147483647, %v870
  %vm1266 = vcmp.eq.f32.partialorder %v1265, 8.507059e+37
  %v1267 = vand.u32 %v870, 2147483648
  %v1268 = vor.u32 1.1754944e-38, %v1267
  %v1269 = vsel %vm1266, %v1268, %v1264
  %v1270 = vmul.f32 1.0, %v1269
  %v1271 = vrcp.pop %v871
  %v1272 = vmul.f32 %v871, %v1271
  %v1273 = vsub.f32 1.0, %v1272
  %v1274 = vmul.f32 %v1271, %v1273
  %v1275 = vadd.f32 %v1271, %v1274
  %vm1276 = vweird.f32 %v871
  %vm1277 = vweird.f32 %v1271
  %vm1278 = vmor %vm1276, %vm1277
  %v1279 = vsel %vm1278, %v1271, %v1275
  %v1280 = vand.u32 2147483647, %v871
  %vm1281 = vcmp.eq.f32.partialorder %v1280, 8.507059e+37
  %v1282 = vand.u32 %v871, 2147483648
  %v1283 = vor.u32 1.1754944e-38, %v1282
  %v1284 = vsel %vm1281, %v1283, %v1279
  %v1285 = vmul.f32 1.0, %v1284
  %v1286 = vrcp.pop %v872
  %v1287 = vmul.f32 %v872, %v1286
  %v1288 = vsub.f32 1.0, %v1287
  %v1289 = vmul.f32 %v1286, %v1288
  %v1290 = vadd.f32 %v1286, %v1289
  %vm1291 = vweird.f32 %v872
  %vm1292 = vweird.f32 %v1286
  %vm1293 = vmor %vm1291, %vm1292
  %v1294 = vsel %vm1293, %v1286, %v1290
  %v1295 = vand.u32 2147483647, %v872
  %vm1296 = vcmp.eq.f32.partialorder %v1295, 8.507059e+37
  %v1297 = vand.u32 %v872, 2147483648
  %v1298 = vor.u32 1.1754944e-38, %v1297
  %v1299 = vsel %vm1296, %v1298, %v1294
  %v1300 = vmul.f32 1.0, %v1299
  %v1301 = vrcp.pop %v873
  %v1302 = vmul.f32 %v873, %v1301
  %v1303 = vsub.f32 1.0, %v1302
  %v1304 = vmul.f32 %v1301, %v1303
  %v1305 = vadd.f32 %v1301, %v1304
  %vm1306 = vweird.f32 %v873
  %vm1307 = vweird.f32 %v1301
  %vm1308 = vmor %vm1306, %vm1307
  %v1309 = vsel %vm1308, %v1301, %v1305
  %v1310 = vand.u32 2147483647, %v873
  %vm1311 = vcmp.eq.f32.partialorder %v1310, 8.507059e+37
  %v1312 = vand.u32 %v873, 2147483648
  %v1313 = vor.u32 1.1754944e-38, %v1312
  %v1314 = vsel %vm1311, %v1313, %v1309
  %v1315 = vmul.f32 1.0, %v1314
  %v1316 = vrcp.pop %v874
  %v1317 = vmul.f32 %v874, %v1316
  %v1318 = vsub.f32 1.0, %v1317
  %v1319 = vmul.f32 %v1316, %v1318
  %v1320 = vadd.f32 %v1316, %v1319
  %vm1321 = vweird.f32 %v874
  %vm1322 = vweird.f32 %v1316
  %vm1323 = vmor %vm1321, %vm1322
  %v1324 = vsel %vm1323, %v1316, %v1320
  %v1325 = vand.u32 2147483647, %v874
  %vm1326 = vcmp.eq.f32.partialorder %v1325, 8.507059e+37
  %v1327 = vand.u32 %v874, 2147483648
  %v1328 = vor.u32 1.1754944e-38, %v1327
  %v1329 = vsel %vm1326, %v1328, %v1324
  %v1330 = vmul.f32 1.0, %v1329
  %v1331 = vrcp.pop %v875
  %v1332 = vmul.f32 %v875, %v1331
  %v1333 = vsub.f32 1.0, %v1332
  %v1334 = vmul.f32 %v1331, %v1333
  %v1335 = vadd.f32 %v1331, %v1334
  %vm1336 = vweird.f32 %v875
  %vm1337 = vweird.f32 %v1331
  %vm1338 = vmor %vm1336, %vm1337
  %v1339 = vsel %vm1338, %v1331, %v1335
  %v1340 = vand.u32 2147483647, %v875
  %vm1341 = vcmp.eq.f32.partialorder %v1340, 8.507059e+37
  %v1342 = vand.u32 %v875, 2147483648
  %v1343 = vor.u32 1.1754944e-38, %v1342
  %v1344 = vsel %vm1341, %v1343, %v1339
  %v1345 = vmul.f32 1.0, %v1344
  %v1346 = vrcp.pop %v876
  %v1347 = vmul.f32 %v876, %v1346
  %v1348 = vsub.f32 1.0, %v1347
  %v1349 = vmul.f32 %v1346, %v1348
  %v1350 = vadd.f32 %v1346, %v1349
  %vm1351 = vweird.f32 %v876
  %vm1352 = vweird.f32 %v1346
  %vm1353 = vmor %vm1351, %vm1352
  %v1354 = vsel %vm1353, %v1346, %v1350
  %v1355 = vand.u32 2147483647, %v876
  %vm1356 = vcmp.eq.f32.partialorder %v1355, 8.507059e+37
  %v1357 = vand.u32 %v876, 2147483648
  %v1358 = vor.u32 1.1754944e-38, %v1357
  %v1359 = vsel %vm1356, %v1358, %v1354
  %v1360 = vmul.f32 1.0, %v1359
  %v1361 = vrcp.pop %v877
  %v1362 = vmul.f32 %v877, %v1361
  %v1363 = vsub.f32 1.0, %v1362
  %v1364 = vmul.f32 %v1361, %v1363
  %v1365 = vadd.f32 %v1361, %v1364
  %vm1366 = vweird.f32 %v877
  %vm1367 = vweird.f32 %v1361
  %vm1368 = vmor %vm1366, %vm1367
  %v1369 = vsel %vm1368, %v1361, %v1365
  %v1370 = vand.u32 2147483647, %v877
  %vm1371 = vcmp.eq.f32.partialorder %v1370, 8.507059e+37
  %v1372 = vand.u32 %v877, 2147483648
  %v1373 = vor.u32 1.1754944e-38, %v1372
  %v1374 = vsel %vm1371, %v1373, %v1369
  %v1375 = vmul.f32 1.0, %v1374
  %v1376 = vrcp.pop %v878
  %v1377 = vmul.f32 %v878, %v1376
  %v1378 = vsub.f32 1.0, %v1377
  %v1379 = vmul.f32 %v1376, %v1378
  %v1380 = vadd.f32 %v1376, %v1379
  %vm1381 = vweird.f32 %v878
  %vm1382 = vweird.f32 %v1376
  %vm1383 = vmor %vm1381, %vm1382
  %v1384 = vsel %vm1383, %v1376, %v1380
  %v1385 = vand.u32 2147483647, %v878
  %vm1386 = vcmp.eq.f32.partialorder %v1385, 8.507059e+37
  %v1387 = vand.u32 %v878, 2147483648
  %v1388 = vor.u32 1.1754944e-38, %v1387
  %v1389 = vsel %vm1386, %v1388, %v1384
  %v1390 = vmul.f32 1.0, %v1389
  %v1391 = vrcp.pop %v879
  %v1392 = vmul.f32 %v879, %v1391
  %v1393 = vsub.f32 1.0, %v1392
  %v1394 = vmul.f32 %v1391, %v1393
  %v1395 = vadd.f32 %v1391, %v1394
  %vm1396 = vweird.f32 %v879
  %vm1397 = vweird.f32 %v1391
  %vm1398 = vmor %vm1396, %vm1397
  %v1399 = vsel %vm1398, %v1391, %v1395
  %v1400 = vand.u32 2147483647, %v879
  %vm1401 = vcmp.eq.f32.partialorder %v1400, 8.507059e+37
  %v1402 = vand.u32 %v879, 2147483648
  %v1403 = vor.u32 1.1754944e-38, %v1402
  %v1404 = vsel %vm1401, %v1403, %v1399
  %v1405 = vmul.f32 1.0, %v1404
  %v1406 = vrcp.pop %v880
  %v1407 = vmul.f32 %v880, %v1406
  %v1408 = vsub.f32 1.0, %v1407
  %v1409 = vmul.f32 %v1406, %v1408
  %v1410 = vadd.f32 %v1406, %v1409
  %vm1411 = vweird.f32 %v880
  %vm1412 = vweird.f32 %v1406
  %vm1413 = vmor %vm1411, %vm1412
  %v1414 = vsel %vm1413, %v1406, %v1410
  %v1415 = vand.u32 2147483647, %v880
  %vm1416 = vcmp.eq.f32.partialorder %v1415, 8.507059e+37
  %v1417 = vand.u32 %v880, 2147483648
  %v1418 = vor.u32 1.1754944e-38, %v1417
  %v1419 = vsel %vm1416, %v1418, %v1414
  %v1420 = vmul.f32 1.0, %v1419
  %v1421 = vrcp.pop %v881
  %v1422 = vmul.f32 %v881, %v1421
  %v1423 = vsub.f32 1.0, %v1422
  %v1424 = vmul.f32 %v1421, %v1423
  %v1425 = vadd.f32 %v1421, %v1424
  %vm1426 = vweird.f32 %v881
  %vm1427 = vweird.f32 %v1421
  %vm1428 = vmor %vm1426, %vm1427
  %v1429 = vsel %vm1428, %v1421, %v1425
  %v1430 = vand.u32 2147483647, %v881
  %vm1431 = vcmp.eq.f32.partialorder %v1430, 8.507059e+37
  %v1432 = vand.u32 %v881, 2147483648
  %v1433 = vor.u32 1.1754944e-38, %v1432
  %v1434 = vsel %vm1431, %v1433, %v1429
  %v1435 = vmul.f32 1.0, %v1434
  %v1436 = vrcp.pop %v882
  %v1437 = vmul.f32 %v882, %v1436
  %v1438 = vsub.f32 1.0, %v1437
  %v1439 = vmul.f32 %v1436, %v1438
  %v1440 = vadd.f32 %v1436, %v1439
  %vm1441 = vweird.f32 %v882
  %vm1442 = vweird.f32 %v1436
  %vm1443 = vmor %vm1441, %vm1442
  %v1444 = vsel %vm1443, %v1436, %v1440
  %v1445 = vand.u32 2147483647, %v882
  %vm1446 = vcmp.eq.f32.partialorder %v1445, 8.507059e+37
  %v1447 = vand.u32 %v882, 2147483648
  %v1448 = vor.u32 1.1754944e-38, %v1447
  %v1449 = vsel %vm1446, %v1448, %v1444
  %v1450 = vmul.f32 1.0, %v1449
  %v1451 = vrcp.pop %v883
  %v1452 = vmul.f32 %v883, %v1451
  %v1453 = vsub.f32 1.0, %v1452
  %v1454 = vmul.f32 %v1451, %v1453
  %v1455 = vadd.f32 %v1451, %v1454
  %vm1456 = vweird.f32 %v883
  %vm1457 = vweird.f32 %v1451
  %vm1458 = vmor %vm1456, %vm1457
  %v1459 = vsel %vm1458, %v1451, %v1455
  %v1460 = vand.u32 2147483647, %v883
  %vm1461 = vcmp.eq.f32.partialorder %v1460, 8.507059e+37
  %v1462 = vand.u32 %v883, 2147483648
  %v1463 = vor.u32 1.1754944e-38, %v1462
  %v1464 = vsel %vm1461, %v1463, %v1459
  %v1465 = vmul.f32 1.0, %v1464
  %v1466 = vrcp.pop %v884
  %v1467 = vmul.f32 %v884, %v1466
  %v1468 = vsub.f32 1.0, %v1467
  %v1469 = vmul.f32 %v1466, %v1468
  %v1470 = vadd.f32 %v1466, %v1469
  %vm1471 = vweird.f32 %v884
  %vm1472 = vweird.f32 %v1466
  %vm1473 = vmor %vm1471, %vm1472
  %v1474 = vsel %vm1473, %v1466, %v1470
  %v1475 = vand.u32 2147483647, %v884
  %vm1476 = vcmp.eq.f32.partialorder %v1475, 8.507059e+37
  %v1477 = vand.u32 %v884, 2147483648
  %v1478 = vor.u32 1.1754944e-38, %v1477
  %v1479 = vsel %vm1476, %v1478, %v1474
  %v1480 = vmul.f32 1.0, %v1479
  %v1481 = vrcp.pop %v885
  %v1482 = vmul.f32 %v885, %v1481
  %v1483 = vsub.f32 1.0, %v1482
  %v1484 = vmul.f32 %v1481, %v1483
  %v1485 = vadd.f32 %v1481, %v1484
  %vm1486 = vweird.f32 %v885
  %vm1487 = vweird.f32 %v1481
  %vm1488 = vmor %vm1486, %vm1487
  %v1489 = vsel %vm1488, %v1481, %v1485
  %v1490 = vand.u32 2147483647, %v885
  %vm1491 = vcmp.eq.f32.partialorder %v1490, 8.507059e+37
  %v1492 = vand.u32 %v885, 2147483648
  %v1493 = vor.u32 1.1754944e-38, %v1492
  %v1494 = vsel %vm1491, %v1493, %v1489
  %v1495 = vmul.f32 1.0, %v1494
  %v1496 = vrcp.pop %v886
  %v1497 = vmul.f32 %v886, %v1496
  %v1498 = vsub.f32 1.0, %v1497
  %v1499 = vmul.f32 %v1496, %v1498
  %v1500 = vadd.f32 %v1496, %v1499
  %vm1501 = vweird.f32 %v886
  %vm1502 = vweird.f32 %v1496
  %vm1503 = vmor %vm1501, %vm1502
  %v1504 = vsel %vm1503, %v1496, %v1500
  %v1505 = vand.u32 2147483647, %v886
  %vm1506 = vcmp.eq.f32.partialorder %v1505, 8.507059e+37
  %v1507 = vand.u32 %v886, 2147483648
  %v1508 = vor.u32 1.1754944e-38, %v1507
  %v1509 = vsel %vm1506, %v1508, %v1504
  %v1510 = vmul.f32 1.0, %v1509
  %v1511 = vrcp.pop %v887
  %v1512 = vmul.f32 %v887, %v1511
  %v1513 = vsub.f32 1.0, %v1512
  %v1514 = vmul.f32 %v1511, %v1513
  %v1515 = vadd.f32 %v1511, %v1514
  %vm1516 = vweird.f32 %v887
  %vm1517 = vweird.f32 %v1511
  %vm1518 = vmor %vm1516, %vm1517
  %v1519 = vsel %vm1518, %v1511, %v1515
  %v1520 = vand.u32 2147483647, %v887
  %vm1521 = vcmp.eq.f32.partialorder %v1520, 8.507059e+37
  %v1522 = vand.u32 %v887, 2147483648
  %v1523 = vor.u32 1.1754944e-38, %v1522
  %v1524 = vsel %vm1521, %v1523, %v1519
  %v1525 = vmul.f32 1.0, %v1524
  %v1526 = vrcp.pop %v888
  %v1527 = vmul.f32 %v888, %v1526
  %v1528 = vsub.f32 1.0, %v1527
  %v1529 = vmul.f32 %v1526, %v1528
  %v1530 = vadd.f32 %v1526, %v1529
  %vm1531 = vweird.f32 %v888
  %vm1532 = vweird.f32 %v1526
  %vm1533 = vmor %vm1531, %vm1532
  %v1534 = vsel %vm1533, %v1526, %v1530
  %v1535 = vand.u32 2147483647, %v888
  %vm1536 = vcmp.eq.f32.partialorder %v1535, 8.507059e+37
  %v1537 = vand.u32 %v888, 2147483648
  %v1538 = vor.u32 1.1754944e-38, %v1537
  %v1539 = vsel %vm1536, %v1538, %v1534
  %v1540 = vmul.f32 1.0, %v1539
  %v1541 = vrcp.pop %v889
  %v1542 = vmul.f32 %v889, %v1541
  %v1543 = vsub.f32 1.0, %v1542
  %v1544 = vmul.f32 %v1541, %v1543
  %v1545 = vadd.f32 %v1541, %v1544
  %vm1546 = vweird.f32 %v889
  %vm1547 = vweird.f32 %v1541
  %vm1548 = vmor %vm1546, %vm1547
  %v1549 = vsel %vm1548, %v1541, %v1545
  %v1550 = vand.u32 2147483647, %v889
  %vm1551 = vcmp.eq.f32.partialorder %v1550, 8.507059e+37
  %v1552 = vand.u32 %v889, 2147483648
  %v1553 = vor.u32 1.1754944e-38, %v1552
  %v1554 = vsel %vm1551, %v1553, %v1549
  %v1555 = vmul.f32 1.0, %v1554
  %v1556 = vrcp.pop %v890
  %v1557 = vmul.f32 %v890, %v1556
  %v1558 = vsub.f32 1.0, %v1557
  %v1559 = vmul.f32 %v1556, %v1558
  %v1560 = vadd.f32 %v1556, %v1559
  %vm1561 = vweird.f32 %v890
  %vm1562 = vweird.f32 %v1556
  %vm1563 = vmor %vm1561, %vm1562
  %v1564 = vsel %vm1563, %v1556, %v1560
  %v1565 = vand.u32 2147483647, %v890
  %vm1566 = vcmp.eq.f32.partialorder %v1565, 8.507059e+37
  %v1567 = vand.u32 %v890, 2147483648
  %v1568 = vor.u32 1.1754944e-38, %v1567
  %v1569 = vsel %vm1566, %v1568, %v1564
  %v1570 = vmul.f32 1.0, %v1569
  %v1571 = vrcp.pop %v891
  %v1572 = vmul.f32 %v891, %v1571
  %v1573 = vsub.f32 1.0, %v1572
  %v1574 = vmul.f32 %v1571, %v1573
  %v1575 = vadd.f32 %v1571, %v1574
  %vm1576 = vweird.f32 %v891
  %vm1577 = vweird.f32 %v1571
  %vm1578 = vmor %vm1576, %vm1577
  %v1579 = vsel %vm1578, %v1571, %v1575
  %v1580 = vand.u32 2147483647, %v891
  %vm1581 = vcmp.eq.f32.partialorder %v1580, 8.507059e+37
  %v1582 = vand.u32 %v891, 2147483648
  %v1583 = vor.u32 1.1754944e-38, %v1582
  %v1584 = vsel %vm1581, %v1583, %v1579
  %v1585 = vmul.f32 1.0, %v1584
  %v1586 = vrcp.pop %v892
  %v1587 = vmul.f32 %v892, %v1586
  %v1588 = vsub.f32 1.0, %v1587
  %v1589 = vmul.f32 %v1586, %v1588
  %v1590 = vadd.f32 %v1586, %v1589
  %vm1591 = vweird.f32 %v892
  %vm1592 = vweird.f32 %v1586
  %vm1593 = vmor %vm1591, %vm1592
  %v1594 = vsel %vm1593, %v1586, %v1590
  %v1595 = vand.u32 2147483647, %v892
  %vm1596 = vcmp.eq.f32.partialorder %v1595, 8.507059e+37
  %v1597 = vand.u32 %v892, 2147483648
  %v1598 = vor.u32 1.1754944e-38, %v1597
  %v1599 = vsel %vm1596, %v1598, %v1594
  %v1600 = vmul.f32 1.0, %v1599
  %v1601 = vrcp.pop %v893
  %v1602 = vmul.f32 %v893, %v1601
  %v1603 = vsub.f32 1.0, %v1602
  %v1604 = vmul.f32 %v1601, %v1603
  %v1605 = vadd.f32 %v1601, %v1604
  %vm1606 = vweird.f32 %v893
  %vm1607 = vweird.f32 %v1601
  %vm1608 = vmor %vm1606, %vm1607
  %v1609 = vsel %vm1608, %v1601, %v1605
  %v1610 = vand.u32 2147483647, %v893
  %vm1611 = vcmp.eq.f32.partialorder %v1610, 8.507059e+37
  %v1612 = vand.u32 %v893, 2147483648
  %v1613 = vor.u32 1.1754944e-38, %v1612
  %v1614 = vsel %vm1611, %v1613, %v1609
  %v1615 = vmul.f32 1.0, %v1614
  %v1616 = vrcp.pop %v894
  %v1617 = vmul.f32 %v894, %v1616
  %v1618 = vsub.f32 1.0, %v1617
  %v1619 = vmul.f32 %v1616, %v1618
  %v1620 = vadd.f32 %v1616, %v1619
  %vm1621 = vweird.f32 %v894
  %vm1622 = vweird.f32 %v1616
  %vm1623 = vmor %vm1621, %vm1622
  %v1624 = vsel %vm1623, %v1616, %v1620
  %v1625 = vand.u32 2147483647, %v894
  %vm1626 = vcmp.eq.f32.partialorder %v1625, 8.507059e+37
  %v1627 = vand.u32 %v894, 2147483648
  %v1628 = vor.u32 1.1754944e-38, %v1627
  %v1629 = vsel %vm1626, %v1628, %v1624
  %v1630 = vmul.f32 1.0, %v1629
  %v1631 = vrcp.pop %v895
  %v1632 = vmul.f32 %v895, %v1631
  %v1633 = vsub.f32 1.0, %v1632
  %v1634 = vmul.f32 %v1631, %v1633
  %v1635 = vadd.f32 %v1631, %v1634
  %vm1636 = vweird.f32 %v895
  %vm1637 = vweird.f32 %v1631
  %vm1638 = vmor %vm1636, %vm1637
  %v1639 = vsel %vm1638, %v1631, %v1635
  %v1640 = vand.u32 2147483647, %v895
  %vm1641 = vcmp.eq.f32.partialorder %v1640, 8.507059e+37
  %v1642 = vand.u32 %v895, 2147483648
  %v1643 = vor.u32 1.1754944e-38, %v1642
  %v1644 = vsel %vm1641, %v1643, %v1639
  %v1645 = vmul.f32 1.0, %v1644
  %v1646 = vrcp.pop %v896
  %v1647 = vmul.f32 %v896, %v1646
  %v1648 = vsub.f32 1.0, %v1647
  %v1649 = vmul.f32 %v1646, %v1648
  %v1650 = vadd.f32 %v1646, %v1649
  %vm1651 = vweird.f32 %v896
  %vm1652 = vweird.f32 %v1646
  %vm1653 = vmor %vm1651, %vm1652
  %v1654 = vsel %vm1653, %v1646, %v1650
  %v1655 = vand.u32 2147483647, %v896
  %vm1656 = vcmp.eq.f32.partialorder %v1655, 8.507059e+37
  %v1657 = vand.u32 %v896, 2147483648
  %v1658 = vor.u32 1.1754944e-38, %v1657
  %v1659 = vsel %vm1656, %v1658, %v1654
  %v1660 = vmul.f32 1.0, %v1659
  %v1661 = vrcp.pop %v897
  %v1662 = vmul.f32 %v897, %v1661
  %v1663 = vsub.f32 1.0, %v1662
  %v1664 = vmul.f32 %v1661, %v1663
  %v1665 = vadd.f32 %v1661, %v1664
  %vm1666 = vweird.f32 %v897
  %vm1667 = vweird.f32 %v1661
  %vm1668 = vmor %vm1666, %vm1667
  %v1669 = vsel %vm1668, %v1661, %v1665
  %v1670 = vand.u32 2147483647, %v897
  %vm1671 = vcmp.eq.f32.partialorder %v1670, 8.507059e+37
  %v1672 = vand.u32 %v897, 2147483648
  %v1673 = vor.u32 1.1754944e-38, %v1672
  %v1674 = vsel %vm1671, %v1673, %v1669
  %v1675 = vmul.f32 1.0, %v1674
  %v1676 = vrcp.pop %v898
  %v1677 = vmul.f32 %v898, %v1676
  %v1678 = vsub.f32 1.0, %v1677
  %v1679 = vmul.f32 %v1676, %v1678
  %v1680 = vadd.f32 %v1676, %v1679
  %vm1681 = vweird.f32 %v898
  %vm1682 = vweird.f32 %v1676
  %vm1683 = vmor %vm1681, %vm1682
  %v1684 = vsel %vm1683, %v1676, %v1680
  %v1685 = vand.u32 2147483647, %v898
  %vm1686 = vcmp.eq.f32.partialorder %v1685, 8.507059e+37
  %v1687 = vand.u32 %v898, 2147483648
  %v1688 = vor.u32 1.1754944e-38, %v1687
  %v1689 = vsel %vm1686, %v1688, %v1684
  %v1690 = vmul.f32 1.0, %v1689
  %v1691 = vrcp.pop %v899
  %v1692 = vmul.f32 %v899, %v1691
  %v1693 = vsub.f32 1.0, %v1692
  %v1694 = vmul.f32 %v1691, %v1693
  %v1695 = vadd.f32 %v1691, %v1694
  %vm1696 = vweird.f32 %v899
  %vm1697 = vweird.f32 %v1691
  %vm1698 = vmor %vm1696, %vm1697
  %v1699 = vsel %vm1698, %v1691, %v1695
  %v1700 = vand.u32 2147483647, %v899
  %vm1701 = vcmp.eq.f32.partialorder %v1700, 8.507059e+37
  %v1702 = vand.u32 %v899, 2147483648
  %v1703 = vor.u32 1.1754944e-38, %v1702
  %v1704 = vsel %vm1701, %v1703, %v1699
  %v1705 = vmul.f32 1.0, %v1704
  %v1706 = vrcp.pop %v900
  %v1707 = vmul.f32 %v900, %v1706
  %v1708 = vsub.f32 1.0, %v1707
  %v1709 = vmul.f32 %v1706, %v1708
  %v1710 = vadd.f32 %v1706, %v1709
  %vm1711 = vweird.f32 %v900
  %vm1712 = vweird.f32 %v1706
  %vm1713 = vmor %vm1711, %vm1712
  %v1714 = vsel %vm1713, %v1706, %v1710
  %v1715 = vand.u32 2147483647, %v900
  %vm1716 = vcmp.eq.f32.partialorder %v1715, 8.507059e+37
  %v1717 = vand.u32 %v900, 2147483648
  %v1718 = vor.u32 1.1754944e-38, %v1717
  %v1719 = vsel %vm1716, %v1718, %v1714
  %v1720 = vmul.f32 1.0, %v1719
  %v1721 = vrcp.pop %v901
  %v1722 = vmul.f32 %v901, %v1721
  %v1723 = vsub.f32 1.0, %v1722
  %v1724 = vmul.f32 %v1721, %v1723
  %v1725 = vadd.f32 %v1721, %v1724
  %vm1726 = vweird.f32 %v901
  %vm1727 = vweird.f32 %v1721
  %vm1728 = vmor %vm1726, %vm1727
  %v1729 = vsel %vm1728, %v1721, %v1725
  %v1730 = vand.u32 2147483647, %v901
  %vm1731 = vcmp.eq.f32.partialorder %v1730, 8.507059e+37
  %v1732 = vand.u32 %v901, 2147483648
  %v1733 = vor.u32 1.1754944e-38, %v1732
  %v1734 = vsel %vm1731, %v1733, %v1729
  %v1735 = vmul.f32 1.0, %v1734
  %v1736 = vrcp.pop %v902
  %v1737 = vmul.f32 %v902, %v1736
  %v1738 = vsub.f32 1.0, %v1737
  %v1739 = vmul.f32 %v1736, %v1738
  %v1740 = vadd.f32 %v1736, %v1739
  %vm1741 = vweird.f32 %v902
  %vm1742 = vweird.f32 %v1736
  %vm1743 = vmor %vm1741, %vm1742
  %v1744 = vsel %vm1743, %v1736, %v1740
  %v1745 = vand.u32 2147483647, %v902
  %vm1746 = vcmp.eq.f32.partialorder %v1745, 8.507059e+37
  %v1747 = vand.u32 %v902, 2147483648
  %v1748 = vor.u32 1.1754944e-38, %v1747
  %v1749 = vsel %vm1746, %v1748, %v1744
  %v1750 = vmul.f32 1.0, %v1749
  %v1751 = vrcp.pop %v903
  %v1752 = vmul.f32 %v903, %v1751
  %v1753 = vsub.f32 1.0, %v1752
  %v1754 = vmul.f32 %v1751, %v1753
  %v1755 = vadd.f32 %v1751, %v1754
  %vm1756 = vweird.f32 %v903
  %vm1757 = vweird.f32 %v1751
  %vm1758 = vmor %vm1756, %vm1757
  %v1759 = vsel %vm1758, %v1751, %v1755
  %v1760 = vand.u32 2147483647, %v903
  %vm1761 = vcmp.eq.f32.partialorder %v1760, 8.507059e+37
  %v1762 = vand.u32 %v903, 2147483648
  %v1763 = vor.u32 1.1754944e-38, %v1762
  %v1764 = vsel %vm1761, %v1763, %v1759
  %v1765 = vmul.f32 1.0, %v1764
  %v1766 = vrcp.pop %v904
  %v1767 = vmul.f32 %v904, %v1766
  %v1768 = vsub.f32 1.0, %v1767
  %v1769 = vmul.f32 %v1766, %v1768
  %v1770 = vadd.f32 %v1766, %v1769
  %vm1771 = vweird.f32 %v904
  %vm1772 = vweird.f32 %v1766
  %vm1773 = vmor %vm1771, %vm1772
  %v1774 = vsel %vm1773, %v1766, %v1770
  %v1775 = vand.u32 2147483647, %v904
  %vm1776 = vcmp.eq.f32.partialorder %v1775, 8.507059e+37
  %v1777 = vand.u32 %v904, 2147483648
  %v1778 = vor.u32 1.1754944e-38, %v1777
  %v1779 = vsel %vm1776, %v1778, %v1774
  %v1780 = vmul.f32 1.0, %v1779
  %v1781 = vrcp.pop %v905
  %v1782 = vmul.f32 %v905, %v1781
  %v1783 = vsub.f32 1.0, %v1782
  %v1784 = vmul.f32 %v1781, %v1783
  %v1785 = vadd.f32 %v1781, %v1784
  %vm1786 = vweird.f32 %v905
  %vm1787 = vweird.f32 %v1781
  %vm1788 = vmor %vm1786, %vm1787
  %v1789 = vsel %vm1788, %v1781, %v1785
  %v1790 = vand.u32 2147483647, %v905
  %vm1791 = vcmp.eq.f32.partialorder %v1790, 8.507059e+37
  %v1792 = vand.u32 %v905, 2147483648
  %v1793 = vor.u32 1.1754944e-38, %v1792
  %v1794 = vsel %vm1791, %v1793, %v1789
  %v1795 = vmul.f32 1.0, %v1794
  %v1796 = vrcp.pop %v906
  %v1797 = vmul.f32 %v906, %v1796
  %v1798 = vsub.f32 1.0, %v1797
  %v1799 = vmul.f32 %v1796, %v1798
  %v1800 = vadd.f32 %v1796, %v1799
  %vm1801 = vweird.f32 %v906
  %vm1802 = vweird.f32 %v1796
  %vm1803 = vmor %vm1801, %vm1802
  %v1804 = vsel %vm1803, %v1796, %v1800
  %v1805 = vand.u32 2147483647, %v906
  %vm1806 = vcmp.eq.f32.partialorder %v1805, 8.507059e+37
  %v1807 = vand.u32 %v906, 2147483648
  %v1808 = vor.u32 1.1754944e-38, %v1807
  %v1809 = vsel %vm1806, %v1808, %v1804
  %v1810 = vmul.f32 1.0, %v1809
  %v1811 = vrcp.pop %v907
  %v1812 = vmul.f32 %v907, %v1811
  %v1813 = vsub.f32 1.0, %v1812
  %v1814 = vmul.f32 %v1811, %v1813
  %v1815 = vadd.f32 %v1811, %v1814
  %vm1816 = vweird.f32 %v907
  %vm1817 = vweird.f32 %v1811
  %vm1818 = vmor %vm1816, %vm1817
  %v1819 = vsel %vm1818, %v1811, %v1815
  %v1820 = vand.u32 2147483647, %v907
  %vm1821 = vcmp.eq.f32.partialorder %v1820, 8.507059e+37
  %v1822 = vand.u32 %v907, 2147483648
  %v1823 = vor.u32 1.1754944e-38, %v1822
  %v1824 = vsel %vm1821, %v1823, %v1819
  %v1825 = vmul.f32 1.0, %v1824
  %v1826 = vrcp.pop %v908
  %v1827 = vmul.f32 %v908, %v1826
  %v1828 = vsub.f32 1.0, %v1827
  %v1829 = vmul.f32 %v1826, %v1828
  %v1830 = vadd.f32 %v1826, %v1829
  %vm1831 = vweird.f32 %v908
  %vm1832 = vweird.f32 %v1826
  %vm1833 = vmor %vm1831, %vm1832
  %v1834 = vsel %vm1833, %v1826, %v1830
  %v1835 = vand.u32 2147483647, %v908
  %vm1836 = vcmp.eq.f32.partialorder %v1835, 8.507059e+37
  %v1837 = vand.u32 %v908, 2147483648
  %v1838 = vor.u32 1.1754944e-38, %v1837
  %v1839 = vsel %vm1836, %v1838, %v1834
  %v1840 = vmul.f32 1.0, %v1839
  %v1841 = vrcp.pop %v909
  %v1842 = vmul.f32 %v909, %v1841
  %v1843 = vsub.f32 1.0, %v1842
  %v1844 = vmul.f32 %v1841, %v1843
  %v1845 = vadd.f32 %v1841, %v1844
  %vm1846 = vweird.f32 %v909
  %vm1847 = vweird.f32 %v1841
  %vm1848 = vmor %vm1846, %vm1847
  %v1849 = vsel %vm1848, %v1841, %v1845
  %v1850 = vand.u32 2147483647, %v909
  %vm1851 = vcmp.eq.f32.partialorder %v1850, 8.507059e+37
  %v1852 = vand.u32 %v909, 2147483648
  %v1853 = vor.u32 1.1754944e-38, %v1852
  %v1854 = vsel %vm1851, %v1853, %v1849
  %v1855 = vmul.f32 1.0, %v1854
  %v1856 = vrcp.pop %v910
  %v1857 = vmul.f32 %v910, %v1856
  %v1858 = vsub.f32 1.0, %v1857
  %v1859 = vmul.f32 %v1856, %v1858
  %v1860 = vadd.f32 %v1856, %v1859
  %vm1861 = vweird.f32 %v910
  %vm1862 = vweird.f32 %v1856
  %vm1863 = vmor %vm1861, %vm1862
  %v1864 = vsel %vm1863, %v1856, %v1860
  %v1865 = vand.u32 2147483647, %v910
  %vm1866 = vcmp.eq.f32.partialorder %v1865, 8.507059e+37
  %v1867 = vand.u32 %v910, 2147483648
  %v1868 = vor.u32 1.1754944e-38, %v1867
  %v1869 = vsel %vm1866, %v1868, %v1864
  %v1870 = vmul.f32 1.0, %v1869
  %v1871 = vmul.f32 %v591, %v925
  %v1872 = vmul.f32 %v592, %v940
  %v1873 = vmul.f32 %v593, %v955
  %v1874 = vmul.f32 %v594, %v970
  %v1875 = vmul.f32 %v595, %v985
  %v1876 = vmul.f32 %v596, %v1000
  %v1877 = vmul.f32 %v597, %v1015
  %v1878 = vmul.f32 %v598, %v1030
  %v1879 = vmul.f32 %v599, %v1045
  %v1880 = vmul.f32 %v600, %v1060
  %v1881 = vmul.f32 %v601, %v1075
  %v1882 = vmul.f32 %v602, %v1090
  %v1883 = vmul.f32 %v603, %v1105
  %v1884 = vmul.f32 %v604, %v1120
  %v1885 = vmul.f32 %v605, %v1135
  %v1886 = vmul.f32 %v606, %v1150
  %v1887 = vmul.f32 %v607, %v1165
  %v1888 = vmul.f32 %v608, %v1180
  %v1889 = vmul.f32 %v609, %v1195
  %v1890 = vmul.f32 %v610, %v1210
  %v1891 = vmul.f32 %v611, %v1225
  %v1892 = vmul.f32 %v612, %v1240
  %v1893 = vmul.f32 %v613, %v1255
  %v1894 = vmul.f32 %v614, %v1270
  %v1895 = vmul.f32 %v615, %v1285
  %v1896 = vmul.f32 %v616, %v1300
  %v1897 = vmul.f32 %v617, %v1315
  %v1898 = vmul.f32 %v618, %v1330
  %v1899 = vmul.f32 %v619, %v1345
  %v1900 = vmul.f32 %v620, %v1360
  %v1901 = vmul.f32 %v621, %v1375
  %v1902 = vmul.f32 %v622, %v1390
  %v1903 = vmul.f32 %v623, %v1405
  %v1904 = vmul.f32 %v624, %v1420
  %v1905 = vmul.f32 %v625, %v1435
  %v1906 = vmul.f32 %v626, %v1450
  %v1907 = vmul.f32 %v627, %v1465
  %v1908 = vmul.f32 %v628, %v1480
  %v1909 = vmul.f32 %v629, %v1495
  %v1910 = vmul.f32 %v630, %v1510
  %v1911 = vmul.f32 %v631, %v1525
  %v1912 = vmul.f32 %v632, %v1540
  %v1913 = vmul.f32 %v633, %v1555
  %v1914 = vmul.f32 %v634, %v1570
  %v1915 = vmul.f32 %v635, %v1585
  %v1916 = vmul.f32 %v636, %v1600
  %v1917 = vmul.f32 %v637, %v1615
  %v1918 = vmul.f32 %v638, %v1630
  %v1919 = vmul.f32 %v639, %v1645
  %v1920 = vmul.f32 %v640, %v1660
  %v1921 = vmul.f32 %v641, %v1675
  %v1922 = vmul.f32 %v642, %v1690
  %v1923 = vmul.f32 %v643, %v1705
  %v1924 = vmul.f32 %v644, %v1720
  %v1925 = vmul.f32 %v645, %v1735
  %v1926 = vmul.f32 %v646, %v1750
  %v1927 = vmul.f32 %v647, %v1765
  %v1928 = vmul.f32 %v648, %v1780
  %v1929 = vmul.f32 %v649, %v1795
  %v1930 = vmul.f32 %v650, %v1810
  %v1931 = vmul.f32 %v651, %v1825
  %v1932 = vmul.f32 %v652, %v1840
  %v1933 = vmul.f32 %v653, %v1855
  %v1934 = vmul.f32 %v654, %v1870
  %v1935 = vpack.c.bf16 %v1872, %v1871
  %v1936 = vpack.c.bf16 %v1874, %v1873
  %v1937 = vpack.c.bf16 %v1876, %v1875
  %v1938 = vpack.c.bf16 %v1878, %v1877
  %v1939 = vpack.c.bf16 %v1880, %v1879
  %v1940 = vpack.c.bf16 %v1882, %v1881
  %v1941 = vpack.c.bf16 %v1884, %v1883
  %v1942 = vpack.c.bf16 %v1886, %v1885
  %v1943 = vpack.c.bf16 %v1888, %v1887
  %v1944 = vpack.c.bf16 %v1890, %v1889
  %v1945 = vpack.c.bf16 %v1892, %v1891
  %v1946 = vpack.c.bf16 %v1894, %v1893
  %v1947 = vpack.c.bf16 %v1896, %v1895
  %v1948 = vpack.c.bf16 %v1898, %v1897
  %v1949 = vpack.c.bf16 %v1900, %v1899
  %v1950 = vpack.c.bf16 %v1902, %v1901
  %v1951 = vpack.c.bf16 %v1904, %v1903
  %v1952 = vpack.c.bf16 %v1906, %v1905
  %v1953 = vpack.c.bf16 %v1908, %v1907
  %v1954 = vpack.c.bf16 %v1910, %v1909
  %v1955 = vpack.c.bf16 %v1912, %v1911
  %v1956 = vpack.c.bf16 %v1914, %v1913
  %v1957 = vpack.c.bf16 %v1916, %v1915
  %v1958 = vpack.c.bf16 %v1918, %v1917
  %v1959 = vpack.c.bf16 %v1920, %v1919
  %v1960 = vpack.c.bf16 %v1922, %v1921
  %v1961 = vpack.c.bf16 %v1924, %v1923
  %v1962 = vpack.c.bf16 %v1926, %v1925
  %v1963 = vpack.c.bf16 %v1928, %v1927
  %v1964 = vpack.c.bf16 %v1930, %v1929
  %v1965 = vpack.c.bf16 %v1932, %v1931
  %v1966 = vpack.c.bf16 %v1934, %v1933
  %v1967 = vld [vmem:[%s4] sm:$0xf]
  %v1968 = vld [vmem:[%s4 + $0x4] sm:$0xf]
  %v1969 = vld [vmem:[%s4 + $0x8] sm:$0xf]
  %v1970 = vld [vmem:[%s4 + $0xc] sm:$0xf]
  %v1971 = vld [vmem:[%s4 + $0x10] sm:$0xf]
  %v1972 = vld [vmem:[%s4 + $0x14] sm:$0xf]
  %v1973 = vld [vmem:[%s4 + $0x18] sm:$0xf]
  %v1974 = vld [vmem:[%s4 + $0x1c] sm:$0xf]
  %v1975 = vld [vmem:[%s4 + $0x20] sm:$0xf]
  %v1976 = vld [vmem:[%s4 + $0x24] sm:$0xf]
  %v1977 = vld [vmem:[%s4 + $0x28] sm:$0xf]
  %v1978 = vld [vmem:[%s4 + $0x2c] sm:$0xf]
  %v1979 = vld [vmem:[%s4 + $0x30] sm:$0xf]
  %v1980 = vld [vmem:[%s4 + $0x34] sm:$0xf]
  %v1981 = vld [vmem:[%s4 + $0x38] sm:$0xf]
  %v1982 = vld [vmem:[%s4 + $0x3c] sm:$0xf]
  %v1983 = vld [vmem:[%s5] sm:$0x1]
  %v1985 = vperm.slane %v1983, 0
  %v2003 = vunpack.c.l.b16 %v1967
  %v2004 = vunpack.c.l.b16 %v1968
  %v2005 = vunpack.c.l.b16 %v1969
  %v2006 = vunpack.c.l.b16 %v1970
  %v2007 = vunpack.c.l.b16 %v1971
  %v2008 = vunpack.c.l.b16 %v1972
  %v2009 = vunpack.c.l.b16 %v1973
  %v2010 = vunpack.c.l.b16 %v1974
  %v2011 = vunpack.c.l.b16 %v1975
  %v2012 = vunpack.c.l.b16 %v1976
  %v2013 = vunpack.c.l.b16 %v1977
  %v2014 = vunpack.c.l.b16 %v1978
  %v2015 = vunpack.c.l.b16 %v1979
  %v2016 = vunpack.c.l.b16 %v1980
  %v2017 = vunpack.c.l.b16 %v1981
  %v2018 = vunpack.c.l.b16 %v1982
  %v2019 = vpack.c.b16 %v2004, %v2003
  %v2020 = vpack.c.b16 %v2006, %v2005
  %v2021 = vpack.c.b16 %v2008, %v2007
  %v2022 = vpack.c.b16 %v2010, %v2009
  %v2023 = vpack.c.b16 %v2012, %v2011
  %v2024 = vpack.c.b16 %v2014, %v2013
  %v2025 = vpack.c.b16 %v2016, %v2015
  %v2026 = vpack.c.b16 %v2018, %v2017
  %2035 = vmatpush.bf16.msra.mxu0 %v2026
  %2036 = vmatpush.bf16.msra.mxu0 %v2025
  %2037 = vmatpush.bf16.msra.mxu0 %v2024
  %2038 = vmatpush.bf16.msra.mxu0 %v2023
  %2039 = vmatpush.bf16.msra.mxu0 %v2022
  %2040 = vmatpush.bf16.msra.mxu0 %v2021
  %2041 = vmatpush.bf16.msra.mxu0 %v2020
  %2042 = vmatpush.bf16.msra.mxu0 %v2019
  %2043 = vmatmul.bf16.gmra.mxu0 %v1935
  %v2044 = vpop.f32.mrf.mxu0
  %v2045 = vadd.f32 %v1985, %v2044
  %v2046 = vpop.f32.mrf.mxu0
  %v2047 = vadd.f32 %v1985, %v2046
  %2048 = vmatmul.bf16.gmra.mxu0 %v1936
  %v2049 = vpop.f32.mrf.mxu0
  %v2050 = vadd.f32 %v1985, %v2049
  %v2051 = vpop.f32.mrf.mxu0
  %v2052 = vadd.f32 %v1985, %v2051
  %2053 = vmatmul.bf16.gmra.mxu0 %v1937
  %v2054 = vpop.f32.mrf.mxu0
  %v2055 = vadd.f32 %v1985, %v2054
  %v2056 = vpop.f32.mrf.mxu0
  %v2057 = vadd.f32 %v1985, %v2056
  %2058 = vmatmul.bf16.gmra.mxu0 %v1938
  %v2059 = vpop.f32.mrf.mxu0
  %v2060 = vadd.f32 %v1985, %v2059
  %v2061 = vpop.f32.mrf.mxu0
  %v2062 = vadd.f32 %v1985, %v2061
  %2063 = vmatmul.bf16.gmra.mxu0 %v1939
  %v2064 = vpop.f32.mrf.mxu0
  %v2065 = vadd.f32 %v1985, %v2064
  %v2066 = vpop.f32.mrf.mxu0
  %v2067 = vadd.f32 %v1985, %v2066
  %2068 = vmatmul.bf16.gmra.mxu0 %v1940
  %v2069 = vpop.f32.mrf.mxu0
  %v2070 = vadd.f32 %v1985, %v2069
  %v2071 = vpop.f32.mrf.mxu0
  %v2072 = vadd.f32 %v1985, %v2071
  %2073 = vmatmul.bf16.gmra.mxu0 %v1941
  %v2074 = vpop.f32.mrf.mxu0
  %v2075 = vadd.f32 %v1985, %v2074
  %v2076 = vpop.f32.mrf.mxu0
  %v2077 = vadd.f32 %v1985, %v2076
  %2078 = vmatmul.bf16.gmra.mxu0 %v1942
  %v2079 = vpop.f32.mrf.mxu0
  %v2080 = vadd.f32 %v1985, %v2079
  %v2081 = vpop.f32.mrf.mxu0
  %v2082 = vadd.f32 %v1985, %v2081
  %2083 = vmatmul.bf16.gmra.mxu0 %v1943
  %v2084 = vpop.f32.mrf.mxu0
  %v2085 = vadd.f32 %v1985, %v2084
  %v2086 = vpop.f32.mrf.mxu0
  %v2087 = vadd.f32 %v1985, %v2086
  %2088 = vmatmul.bf16.gmra.mxu0 %v1944
  %v2089 = vpop.f32.mrf.mxu0
  %v2090 = vadd.f32 %v1985, %v2089
  %v2091 = vpop.f32.mrf.mxu0
  %v2092 = vadd.f32 %v1985, %v2091
  %2093 = vmatmul.bf16.gmra.mxu0 %v1945
  %v2094 = vpop.f32.mrf.mxu0
  %v2095 = vadd.f32 %v1985, %v2094
  %v2096 = vpop.f32.mrf.mxu0
  %v2097 = vadd.f32 %v1985, %v2096
  %2098 = vmatmul.bf16.gmra.mxu0 %v1946
  %v2099 = vpop.f32.mrf.mxu0
  %v2100 = vadd.f32 %v1985, %v2099
  %v2101 = vpop.f32.mrf.mxu0
  %v2102 = vadd.f32 %v1985, %v2101
  %2103 = vmatmul.bf16.gmra.mxu0 %v1947
  %v2104 = vpop.f32.mrf.mxu0
  %v2105 = vadd.f32 %v1985, %v2104
  %v2106 = vpop.f32.mrf.mxu0
  %v2107 = vadd.f32 %v1985, %v2106
  %2108 = vmatmul.bf16.gmra.mxu0 %v1948
  %v2109 = vpop.f32.mrf.mxu0
  %v2110 = vadd.f32 %v1985, %v2109
  %v2111 = vpop.f32.mrf.mxu0
  %v2112 = vadd.f32 %v1985, %v2111
  %2113 = vmatmul.bf16.gmra.mxu0 %v1949
  %v2114 = vpop.f32.mrf.mxu0
  %v2115 = vadd.f32 %v1985, %v2114
  %v2116 = vpop.f32.mrf.mxu0
  %v2117 = vadd.f32 %v1985, %v2116
  %2118 = vmatmul.bf16.gmra.mxu0 %v1950
  %v2119 = vpop.f32.mrf.mxu0
  %v2120 = vadd.f32 %v1985, %v2119
  %v2121 = vpop.f32.mrf.mxu0
  %v2122 = vadd.f32 %v1985, %v2121
  %2123 = vmatmul.bf16.gmra.mxu0 %v1951
  %v2124 = vpop.f32.mrf.mxu0
  %v2125 = vadd.f32 %v1985, %v2124
  %v2126 = vpop.f32.mrf.mxu0
  %v2127 = vadd.f32 %v1985, %v2126
  %2128 = vmatmul.bf16.gmra.mxu0 %v1952
  %v2129 = vpop.f32.mrf.mxu0
  %v2130 = vadd.f32 %v1985, %v2129
  %v2131 = vpop.f32.mrf.mxu0
  %v2132 = vadd.f32 %v1985, %v2131
  %2133 = vmatmul.bf16.gmra.mxu0 %v1953
  %v2134 = vpop.f32.mrf.mxu0
  %v2135 = vadd.f32 %v1985, %v2134
  %v2136 = vpop.f32.mrf.mxu0
  %v2137 = vadd.f32 %v1985, %v2136
  %2138 = vmatmul.bf16.gmra.mxu0 %v1954
  %v2139 = vpop.f32.mrf.mxu0
  %v2140 = vadd.f32 %v1985, %v2139
  %v2141 = vpop.f32.mrf.mxu0
  %v2142 = vadd.f32 %v1985, %v2141
  %2143 = vmatmul.bf16.gmra.mxu0 %v1955
  %v2144 = vpop.f32.mrf.mxu0
  %v2145 = vadd.f32 %v1985, %v2144
  %v2146 = vpop.f32.mrf.mxu0
  %v2147 = vadd.f32 %v1985, %v2146
  %2148 = vmatmul.bf16.gmra.mxu0 %v1956
  %v2149 = vpop.f32.mrf.mxu0
  %v2150 = vadd.f32 %v1985, %v2149
  %v2151 = vpop.f32.mrf.mxu0
  %v2152 = vadd.f32 %v1985, %v2151
  %2153 = vmatmul.bf16.gmra.mxu0 %v1957
  %v2154 = vpop.f32.mrf.mxu0
  %v2155 = vadd.f32 %v1985, %v2154
  %v2156 = vpop.f32.mrf.mxu0
  %v2157 = vadd.f32 %v1985, %v2156
  %2158 = vmatmul.bf16.gmra.mxu0 %v1958
  %v2159 = vpop.f32.mrf.mxu0
  %v2160 = vadd.f32 %v1985, %v2159
  %v2161 = vpop.f32.mrf.mxu0
  %v2162 = vadd.f32 %v1985, %v2161
  %2163 = vmatmul.bf16.gmra.mxu0 %v1959
  %v2164 = vpop.f32.mrf.mxu0
  %v2165 = vadd.f32 %v1985, %v2164
  %v2166 = vpop.f32.mrf.mxu0
  %v2167 = vadd.f32 %v1985, %v2166
  %2168 = vmatmul.bf16.gmra.mxu0 %v1960
  %v2169 = vpop.f32.mrf.mxu0
  %v2170 = vadd.f32 %v1985, %v2169
  %v2171 = vpop.f32.mrf.mxu0
  %v2172 = vadd.f32 %v1985, %v2171
  %2173 = vmatmul.bf16.gmra.mxu0 %v1961
  %v2174 = vpop.f32.mrf.mxu0
  %v2175 = vadd.f32 %v1985, %v2174
  %v2176 = vpop.f32.mrf.mxu0
  %v2177 = vadd.f32 %v1985, %v2176
  %2178 = vmatmul.bf16.gmra.mxu0 %v1962
  %v2179 = vpop.f32.mrf.mxu0
  %v2180 = vadd.f32 %v1985, %v2179
  %v2181 = vpop.f32.mrf.mxu0
  %v2182 = vadd.f32 %v1985, %v2181
  %2183 = vmatmul.bf16.gmra.mxu0 %v1963
  %v2184 = vpop.f32.mrf.mxu0
  %v2185 = vadd.f32 %v1985, %v2184
  %v2186 = vpop.f32.mrf.mxu0
  %v2187 = vadd.f32 %v1985, %v2186
  %2188 = vmatmul.bf16.gmra.mxu0 %v1964
  %v2189 = vpop.f32.mrf.mxu0
  %v2190 = vadd.f32 %v1985, %v2189
  %v2191 = vpop.f32.mrf.mxu0
  %v2192 = vadd.f32 %v1985, %v2191
  %2193 = vmatmul.bf16.gmra.mxu0 %v1965
  %v2194 = vpop.f32.mrf.mxu0
  %v2195 = vadd.f32 %v1985, %v2194
  %v2196 = vpop.f32.mrf.mxu0
  %v2197 = vadd.f32 %v1985, %v2196
  %2198 = vmatmul.bf16.gmra.mxu0 %v1966
  %v2199 = vpop.f32.mrf.mxu0
  %v2200 = vadd.f32 %v1985, %v2199
  %v2201 = vpop.f32.mrf.mxu0
  %v2202 = vadd.f32 %v1985, %v2201
  %2203 = vdwg.mxu0
  %v2204 = vadd.f32 %v1871, %v2045
  %v2205 = vadd.f32 %v1872, %v2047
  %v2206 = vadd.f32 %v1873, %v2050
  %v2207 = vadd.f32 %v1874, %v2052
  %v2208 = vadd.f32 %v1875, %v2055
  %v2209 = vadd.f32 %v1876, %v2057
  %v2210 = vadd.f32 %v1877, %v2060
  %v2211 = vadd.f32 %v1878, %v2062
  %v2212 = vadd.f32 %v1879, %v2065
  %v2213 = vadd.f32 %v1880, %v2067
  %v2214 = vadd.f32 %v1881, %v2070
  %v2215 = vadd.f32 %v1882, %v2072
  %v2216 = vadd.f32 %v1883, %v2075
  %v2217 = vadd.f32 %v1884, %v2077
  %v2218 = vadd.f32 %v1885, %v2080
  %v2219 = vadd.f32 %v1886, %v2082
  %v2220 = vadd.f32 %v1887, %v2085
  %v2221 = vadd.f32 %v1888, %v2087
  %v2222 = vadd.f32 %v1889, %v2090
  %v2223 = vadd.f32 %v1890, %v2092
  %v2224 = vadd.f32 %v1891, %v2095
  %v2225 = vadd.f32 %v1892, %v2097
  %v2226 = vadd.f32 %v1893, %v2100
  %v2227 = vadd.f32 %v1894, %v2102
  %v2228 = vadd.f32 %v1895, %v2105
  %v2229 = vadd.f32 %v1896, %v2107
  %v2230 = vadd.f32 %v1897, %v2110
  %v2231 = vadd.f32 %v1898, %v2112
  %v2232 = vadd.f32 %v1899, %v2115
  %v2233 = vadd.f32 %v1900, %v2117
  %v2234 = vadd.f32 %v1901, %v2120
  %v2235 = vadd.f32 %v1902, %v2122
  %v2236 = vadd.f32 %v1903, %v2125
  %v2237 = vadd.f32 %v1904, %v2127
  %v2238 = vadd.f32 %v1905, %v2130
  %v2239 = vadd.f32 %v1906, %v2132
  %v2240 = vadd.f32 %v1907, %v2135
  %v2241 = vadd.f32 %v1908, %v2137
  %v2242 = vadd.f32 %v1909, %v2140
  %v2243 = vadd.f32 %v1910, %v2142
  %v2244 = vadd.f32 %v1911, %v2145
  %v2245 = vadd.f32 %v1912, %v2147
  %v2246 = vadd.f32 %v1913, %v2150
  %v2247 = vadd.f32 %v1914, %v2152
  %v2248 = vadd.f32 %v1915, %v2155
  %v2249 = vadd.f32 %v1916, %v2157
  %v2250 = vadd.f32 %v1917, %v2160
  %v2251 = vadd.f32 %v1918, %v2162
  %v2252 = vadd.f32 %v1919, %v2165
  %v2253 = vadd.f32 %v1920, %v2167
  %v2254 = vadd.f32 %v1921, %v2170
  %v2255 = vadd.f32 %v1922, %v2172
  %v2256 = vadd.f32 %v1923, %v2175
  %v2257 = vadd.f32 %v1924, %v2177
  %v2258 = vadd.f32 %v1925, %v2180
  %v2259 = vadd.f32 %v1926, %v2182
  %v2260 = vadd.f32 %v1927, %v2185
  %v2261 = vadd.f32 %v1928, %v2187
  %v2262 = vadd.f32 %v1929, %v2190
  %v2263 = vadd.f32 %v1930, %v2192
  %v2264 = vadd.f32 %v1931, %v2195
  %v2265 = vadd.f32 %v1932, %v2197
  %v2266 = vadd.f32 %v1933, %v2200
  %v2267 = vadd.f32 %v1934, %v2202
  %v2268 = vpack.c.bf16 %v2204, %v2204
  %v2269 = vpack.c.bf16 %v2205, %v2205
  %v2270 = vpack.c.bf16 %v2206, %v2206
  %v2271 = vpack.c.bf16 %v2207, %v2207
  %v2272 = vpack.c.bf16 %v2208, %v2208
  %v2273 = vpack.c.bf16 %v2209, %v2209
  %v2274 = vpack.c.bf16 %v2210, %v2210
  %v2275 = vpack.c.bf16 %v2211, %v2211
  %v2276 = vpack.c.bf16 %v2212, %v2212
  %v2277 = vpack.c.bf16 %v2213, %v2213
  %v2278 = vpack.c.bf16 %v2214, %v2214
  %v2279 = vpack.c.bf16 %v2215, %v2215
  %v2280 = vpack.c.bf16 %v2216, %v2216
  %v2281 = vpack.c.bf16 %v2217, %v2217
  %v2282 = vpack.c.bf16 %v2218, %v2218
  %v2283 = vpack.c.bf16 %v2219, %v2219
  %v2284 = vpack.c.bf16 %v2220, %v2220
  %v2285 = vpack.c.bf16 %v2221, %v2221
  %v2286 = vpack.c.bf16 %v2222, %v2222
  %v2287 = vpack.c.bf16 %v2223, %v2223
  %v2288 = vpack.c.bf16 %v2224, %v2224
  %v2289 = vpack.c.bf16 %v2225, %v2225
  %v2290 = vpack.c.bf16 %v2226, %v2226
  %v2291 = vpack.c.bf16 %v2227, %v2227
  %v2292 = vpack.c.bf16 %v2228, %v2228
  %v2293 = vpack.c.bf16 %v2229, %v2229
  %v2294 = vpack.c.bf16 %v2230, %v2230
  %v2295 = vpack.c.bf16 %v2231, %v2231
  %v2296 = vpack.c.bf16 %v2232, %v2232
  %v2297 = vpack.c.bf16 %v2233, %v2233
  %v2298 = vpack.c.bf16 %v2234, %v2234
  %v2299 = vpack.c.bf16 %v2235, %v2235
  %v2300 = vpack.c.bf16 %v2236, %v2236
  %v2301 = vpack.c.bf16 %v2237, %v2237
  %v2302 = vpack.c.bf16 %v2238, %v2238
  %v2303 = vpack.c.bf16 %v2239, %v2239
  %v2304 = vpack.c.bf16 %v2240, %v2240
  %v2305 = vpack.c.bf16 %v2241, %v2241
  %v2306 = vpack.c.bf16 %v2242, %v2242
  %v2307 = vpack.c.bf16 %v2243, %v2243
  %v2308 = vpack.c.bf16 %v2244, %v2244
  %v2309 = vpack.c.bf16 %v2245, %v2245
  %v2310 = vpack.c.bf16 %v2246, %v2246
  %v2311 = vpack.c.bf16 %v2247, %v2247
  %v2312 = vpack.c.bf16 %v2248, %v2248
  %v2313 = vpack.c.bf16 %v2249, %v2249
  %v2314 = vpack.c.bf16 %v2250, %v2250
  %v2315 = vpack.c.bf16 %v2251, %v2251
  %v2316 = vpack.c.bf16 %v2252, %v2252
  %v2317 = vpack.c.bf16 %v2253, %v2253
  %v2318 = vpack.c.bf16 %v2254, %v2254
  %v2319 = vpack.c.bf16 %v2255, %v2255
  %v2320 = vpack.c.bf16 %v2256, %v2256
  %v2321 = vpack.c.bf16 %v2257, %v2257
  %v2322 = vpack.c.bf16 %v2258, %v2258
  %v2323 = vpack.c.bf16 %v2259, %v2259
  %v2324 = vpack.c.bf16 %v2260, %v2260
  %v2325 = vpack.c.bf16 %v2261, %v2261
  %v2326 = vpack.c.bf16 %v2262, %v2262
  %v2327 = vpack.c.bf16 %v2263, %v2263
  %v2328 = vpack.c.bf16 %v2264, %v2264
  %v2329 = vpack.c.bf16 %v2265, %v2265
  %v2330 = vpack.c.bf16 %v2266, %v2266
  %v2331 = vpack.c.bf16 %v2267, %v2267
  %2332 = vst [vmem:[%s6] sm:$0xf] %v2268
  %2333 = vst [vmem:[%s6 + $0x4] sm:$0xf] %v2269
  %2334 = vst [vmem:[%s6 + $0x8] sm:$0xf] %v2270
  %2335 = vst [vmem:[%s6 + $0xc] sm:$0xf] %v2271
  %2336 = vst [vmem:[%s6 + $0x10] sm:$0xf] %v2272
  %2337 = vst [vmem:[%s6 + $0x14] sm:$0xf] %v2273
  %2338 = vst [vmem:[%s6 + $0x18] sm:$0xf] %v2274
  %2339 = vst [vmem:[%s6 + $0x1c] sm:$0xf] %v2275
  %2340 = vst [vmem:[%s6 + $0x20] sm:$0xf] %v2276
  %2341 = vst [vmem:[%s6 + $0x24] sm:$0xf] %v2277
  %2342 = vst [vmem:[%s6 + $0x28] sm:$0xf] %v2278
  %2343 = vst [vmem:[%s6 + $0x2c] sm:$0xf] %v2279
  %2344 = vst [vmem:[%s6 + $0x30] sm:$0xf] %v2280
  %2345 = vst [vmem:[%s6 + $0x34] sm:$0xf] %v2281
  %2346 = vst [vmem:[%s6 + $0x38] sm:$0xf] %v2282
  %2347 = vst [vmem:[%s6 + $0x3c] sm:$0xf] %v2283
  %2348 = vst [vmem:[%s6 + $0x40] sm:$0xf] %v2284
  %2349 = vst [vmem:[%s6 + $0x44] sm:$0xf] %v2285
  %2350 = vst [vmem:[%s6 + $0x48] sm:$0xf] %v2286
  %2351 = vst [vmem:[%s6 + $0x4c] sm:$0xf] %v2287
  %2352 = vst [vmem:[%s6 + $0x50] sm:$0xf] %v2288
  %2353 = vst [vmem:[%s6 + $0x54] sm:$0xf] %v2289
  %2354 = vst [vmem:[%s6 + $0x58] sm:$0xf] %v2290
  %2355 = vst [vmem:[%s6 + $0x5c] sm:$0xf] %v2291
  %2356 = vst [vmem:[%s6 + $0x60] sm:$0xf] %v2292
  %2357 = vst [vmem:[%s6 + $0x64] sm:$0xf] %v2293
  %2358 = vst [vmem:[%s6 + $0x68] sm:$0xf] %v2294
  %2359 = vst [vmem:[%s6 + $0x6c] sm:$0xf] %v2295
  %2360 = vst [vmem:[%s6 + $0x70] sm:$0xf] %v2296
  %2361 = vst [vmem:[%s6 + $0x74] sm:$0xf] %v2297
  %2362 = vst [vmem:[%s6 + $0x78] sm:$0xf] %v2298
  %2363 = vst [vmem:[%s6 + $0x7c] sm:$0xf] %v2299
  %2364 = vst [vmem:[%s6 + $0x80] sm:$0xf] %v2300
  %2365 = vst [vmem:[%s6 + $0x84] sm:$0xf] %v2301
  %2366 = vst [vmem:[%s6 + $0x88] sm:$0xf] %v2302
  %2367 = vst [vmem:[%s6 + $0x8c] sm:$0xf] %v2303
  %2368 = vst [vmem:[%s6 + $0x90] sm:$0xf] %v2304
  %2369 = vst [vmem:[%s6 + $0x94] sm:$0xf] %v2305
  %2370 = vst [vmem:[%s6 + $0x98] sm:$0xf] %v2306
  %2371 = vst [vmem:[%s6 + $0x9c] sm:$0xf] %v2307
  %2372 = vst [vmem:[%s6 + $0xa0] sm:$0xf] %v2308
  %2373 = vst [vmem:[%s6 + $0xa4] sm:$0xf] %v2309
  %2374 = vst [vmem:[%s6 + $0xa8] sm:$0xf] %v2310
  %2375 = vst [vmem:[%s6 + $0xac] sm:$0xf] %v2311
  %2376 = vst [vmem:[%s6 + $0xb0] sm:$0xf] %v2312
  %2377 = vst [vmem:[%s6 + $0xb4] sm:$0xf] %v2313
  %2378 = vst [vmem:[%s6 + $0xb8] sm:$0xf] %v2314
  %2379 = vst [vmem:[%s6 + $0xbc] sm:$0xf] %v2315
  %2380 = vst [vmem:[%s6 + $0xc0] sm:$0xf] %v2316
  %2381 = vst [vmem:[%s6 + $0xc4] sm:$0xf] %v2317
  %2382 = vst [vmem:[%s6 + $0xc8] sm:$0xf] %v2318
  %2383 = vst [vmem:[%s6 + $0xcc] sm:$0xf] %v2319
  %2384 = vst [vmem:[%s6 + $0xd0] sm:$0xf] %v2320
  %2385 = vst [vmem:[%s6 + $0xd4] sm:$0xf] %v2321
  %2386 = vst [vmem:[%s6 + $0xd8] sm:$0xf] %v2322
  %2387 = vst [vmem:[%s6 + $0xdc] sm:$0xf] %v2323
  %2388 = vst [vmem:[%s6 + $0xe0] sm:$0xf] %v2324
  %2389 = vst [vmem:[%s6 + $0xe4] sm:$0xf] %v2325
  %2390 = vst [vmem:[%s6 + $0xe8] sm:$0xf] %v2326
  %2391 = vst [vmem:[%s6 + $0xec] sm:$0xf] %v2327
  %2392 = vst [vmem:[%s6 + $0xf0] sm:$0xf] %v2328
  %2393 = vst [vmem:[%s6 + $0xf4] sm:$0xf] %v2329
  %2394 = vst [vmem:[%s6 + $0xf8] sm:$0xf] %v2330
  %2395 = vst [vmem:[%s6 + $0xfc] sm:$0xf] %v2331
  // Predicated region
  $region26: #{transformer_block.5} parent=0 // pred_check
    _
  $region27: #{transformer_block.5} parent=0 // pred_check_branch
    %2397 = sbr.rel (0) target = $region29
  $region28: #{transformer_block.5} parent=0 // pred_region
    _
  $region29: #{transformer_block.5} parent=0 // pred_fallthru
    _
  // Predicated region
  $region30: #{transformer_block.5} parent=0 // pred_check
    _
  $region31: #{transformer_block.5} parent=0 // pred_check_branch
    %2399 = sbr.rel (0) target = $region33
  $region32: #{transformer_block.5} parent=0 // pred_region
    _
  $region33: #{transformer_block.5} parent=0 // pred_fallthru
    _

// kernel: transformer_block.7
$region0: #{transformer_block.7}
  #allocation0 [shape = 'u32[]', space=smem, size = 0x4, offset = 0x4, fixed_abs, tag = 'smem constant byte address 0x4 - core index']
  #allocation1 [shape = 'u32[72,128]{1,0:T(1,128)}', space=vmem, size = 0x9000, scoped, tag = 'internal scratch']
  %s0 = inlined_call_operand.vmem [shape: bf16[2,4,256,32], index: 0, kind: input, shape index: {}]
  %s1 = inlined_call_operand.vmem [shape: bf16[2,4,256,32], index: 1, kind: input, shape index: {}]
  %s2 = inlined_call_operand.vmem [shape: bf16[2,4,256,32], index: 2, kind: input, shape index: {}]
  %s3 = inlined_call_operand.vmem [shape: bf16[2,256,128], index: 3, kind: input, shape index: {}]
  %s4 = inlined_call_operand.vmem [shape: bf16[4,32,128], index: 4, kind: input, shape index: {}]
  %s5 = inlined_call_operand.vmem [shape: f32[1,128], index: 5, kind: input, shape index: {}]
  %s6 = inlined_call_operand.vmem [shape: bf16[128,128], index: 6, kind: input, shape index: {}]
  %s7 = inlined_call_operand.vmem [shape: bf16[2,256,128], index: 7, kind: output, shape index: {}]
  %s8 = sld [smem:[#allocation0]]
  $region102: #{transformer_block.7} parent=0
    _
  %s10 = ssub.s32 1, %s8
  %s11 = scalar_select 0, %s10, %s8
  $region1: #{transformer_block.7} parent=0
    #allocation2 [shape = 'u8[262144]{0}', space=vmem, size = 0x40000, scoped, tag = 'input window, operand 0']
    loop: start=0, step=1, limit=6
    $region2: #{transformer_block.7} parent=1 // loop_pre_header
      _
    $region3: #{transformer_block.7} parent=1 // loop_header
      %s13 = sphi 0, %s17
      %p14 = scmp.ge.s32.totalorder %s13, 6
      %s20 = sphi 0, %s32
      %s21 = sphi 0, %s28
      %s22 = sphi 0, %s20
      %s23 = sphi 0, %s21
      %s24 = sphi 0, %s22
      %s25 = sphi 0, %s23
      %s37 = sphi 0, %s39
      %s40 = sphi 0, %s37
      %s41 = sphi 0, %s40
      %s57 = sphi 0, %s41
      %s63 = sphi 0, %s65
      %s66 = sphi 0, %s63
      %s67 = sphi 0, %s66
      %s83 = sphi 0, %s67
      %s89 = sphi 0, %s91
      %s92 = sphi 0, %s89
      %s93 = sphi 0, %s92
      %s109 = sphi 0, %s93
      %s117 = sphi 0, %s119
      %s120 = sphi 0, %s117
      %s121 = sphi 0, %s120
      %s137 = sphi 0, %s121
      %s141 = sphi 0, %s141
      %s143 = sphi 0, %s141
      %s144 = sphi 0, %s143
      %s158 = sphi 0, %s144
      %s162 = sphi 0, %s162
      %s164 = sphi 0, %s162
      %s165 = sphi 0, %s164
      %s179 = sphi 0, %s165
      %s183 = sphi 0, %s183
      %s185 = sphi 0, %s183
      %s186 = sphi 0, %s185
      %s200 = sphi 0, %s186
      %s208 = sphi 0, %s210
      %s211 = sphi 0, %s208
      %s212 = sphi 0, %s211
      %s228 = sphi 0, %s212
    $region4: #{transformer_block.7} parent=1 // loop_header_branch
      %16 = sbr.rel (%p14) target = $region8
    $region5: #{transformer_block.7} parent=1 // loop_body
      %s18 = ssub.s32 %s13, 1
      %s19 = ssub.s32 %s13, 2
      %s26 = sadd.s32 1, %s21
      %p27 = scmp.ge.s32.totalorder %s26, 2
      %s28 = scalar_select %p27, 0, %s26
      %s29 = sadd.s32 1, %s20
      %s30 = scalar_select %p27, %s29, %s20
      %p31 = scmp.ge.s32.totalorder %s30, 2
      %s32 = scalar_select %p31, 0, %s30
      %s33 = ssub.s32 %s20, %s32
      %s34 = ssub.s32 %s21, %s28
      %s35 = sor.u32 %s33, %s34
      %p36 = scmp.eq.s32.totalorder %s35, 0
      %s38 = sadd.s32 %s37, 1
      %s39 = scalar_select %p36, %s37, %s38
      %p42 = pneg %p36
      %p43 = scmp.eq.s32.totalorder %s13, 3
      %p44 = por %p42, %p43
      %p45 = scmp.ne.s32.totalorder %s37, %s40
      %p46 = scmp.eq.s32.totalorder %s13, 0
      %p47 = por %p45, %p46
      %p48 = scmp.ne.s32.totalorder %s37, %s40
      %p49 = scmp.eq.s32.totalorder %s18, 3
      %p50 = por %p48, %p49
      %p51 = scmp.ne.s32.totalorder %s40, %s41
      %p52 = scmp.eq.s32.totalorder %s18, 0
      %p53 = por %p51, %p52
      %p54 = scmp.ne.s32.totalorder %s40, %s41
      %p55 = scmp.eq.s32.totalorder %s19, 3
      %p56 = por %p54, %p55
      %p58 = scmp.ne.s32.totalorder %s41, %s57
      %p59 = scmp.eq.s32.totalorder %s19, 0
      %p60 = por %p58, %p59
      %s61 = ssub.s32 %s20, %s32
      %p62 = scmp.eq.s32.totalorder %s61, 0
      %s64 = sadd.s32 %s63, 1
      %s65 = scalar_select %p62, %s63, %s64
      %p68 = pneg %p62
      %p69 = scmp.eq.s32.totalorder %s13, 3
      %p70 = por %p68, %p69
      %p71 = scmp.ne.s32.totalorder %s63, %s66
      %p72 = scmp.eq.s32.totalorder %s13, 0
      %p73 = por %p71, %p72
      %p74 = scmp.ne.s32.totalorder %s63, %s66
      %p75 = scmp.eq.s32.totalorder %s18, 3
      %p76 = por %p74, %p75
      %p77 = scmp.ne.s32.totalorder %s66, %s67
      %p78 = scmp.eq.s32.totalorder %s18, 0
      %p79 = por %p77, %p78
      %p80 = scmp.ne.s32.totalorder %s66, %s67
      %p81 = scmp.eq.s32.totalorder %s19, 3
      %p82 = por %p80, %p81
      %p84 = scmp.ne.s32.totalorder %s67, %s83
      %p85 = scmp.eq.s32.totalorder %s19, 0
      %p86 = por %p84, %p85
      %s87 = ssub.s32 %s20, %s32
      %p88 = scmp.eq.s32.totalorder %s87, 0
      %s90 = sadd.s32 %s89, 1
      %s91 = scalar_select %p88, %s89, %s90
      %p94 = pneg %p88
      %p95 = scmp.eq.s32.totalorder %s13, 3
      %p96 = por %p94, %p95
      %p97 = scmp.ne.s32.totalorder %s89, %s92
      %p98 = scmp.eq.s32.totalorder %s13, 0
      %p99 = por %p97, %p98
      %p100 = scmp.ne.s32.totalorder %s89, %s92
      %p101 = scmp.eq.s32.totalorder %s18, 3
      %p102 = por %p100, %p101
      %p103 = scmp.ne.s32.totalorder %s92, %s93
      %p104 = scmp.eq.s32.totalorder %s18, 0
      %p105 = por %p103, %p104
      %p106 = scmp.ne.s32.totalorder %s92, %s93
      %p107 = scmp.eq.s32.totalorder %s19, 3
      %p108 = por %p106, %p107
      %p110 = scmp.ne.s32.totalorder %s93, %s109
      %p111 = scmp.eq.s32.totalorder %s19, 0
      %p112 = por %p110, %p111
      %s113 = ssub.s32 %s20, %s32
      %s114 = ssub.s32 %s21, %s28
      %s115 = sor.u32 %s113, %s114
      %p116 = scmp.eq.s32.totalorder %s115, 0
      %s118 = sadd.s32 %s117, 1
      %s119 = scalar_select %p116, %s117, %s118
      %p122 = pneg %p116
      %p123 = scmp.eq.s32.totalorder %s13, 3
      %p124 = por %p122, %p123
      %p125 = scmp.ne.s32.totalorder %s117, %s120
      %p126 = scmp.eq.s32.totalorder %s13, 0
      %p127 = por %p125, %p126
      %p128 = scmp.ne.s32.totalorder %s117, %s120
      %p129 = scmp.eq.s32.totalorder %s18, 3
      %p130 = por %p128, %p129
      %p131 = scmp.ne.s32.totalorder %s120, %s121
      %p132 = scmp.eq.s32.totalorder %s18, 0
      %p133 = por %p131, %p132
      %p134 = scmp.ne.s32.totalorder %s120, %s121
      %p135 = scmp.eq.s32.totalorder %s19, 3
      %p136 = por %p134, %p135
      %p138 = scmp.ne.s32.totalorder %s121, %s137
      %p139 = scmp.eq.s32.totalorder %s19, 0
      %p140 = por %p138, %p139
      %s142 = sadd.s32 %s141, 1
      %p145 = scmp.eq.s32.totalorder %s13, 3
      %p146 = scmp.ne.s32.totalorder %s141, %s143
      %p147 = scmp.eq.s32.totalorder %s13, 0
      %p148 = por %p146, %p147
      %p149 = scmp.ne.s32.totalorder %s141, %s143
      %p150 = scmp.eq.s32.totalorder %s18, 3
      %p151 = por %p149, %p150
      %p152 = scmp.ne.s32.totalorder %s143, %s144
      %p153 = scmp.eq.s32.totalorder %s18, 0
      %p154 = por %p152, %p153
      %p155 = scmp.ne.s32.totalorder %s143, %s144
      %p156 = scmp.eq.s32.totalorder %s19, 3
      %p157 = por %p155, %p156
      %p159 = scmp.ne.s32.totalorder %s144, %s158
      %p160 = scmp.eq.s32.totalorder %s19, 0
      %p161 = por %p159, %p160
      %s163 = sadd.s32 %s162, 1
      %p166 = scmp.eq.s32.totalorder %s13, 3
      %p167 = scmp.ne.s32.totalorder %s162, %s164
      %p168 = scmp.eq.s32.totalorder %s13, 0
      %p169 = por %p167, %p168
      %p170 = scmp.ne.s32.totalorder %s162, %s164
      %p171 = scmp.eq.s32.totalorder %s18, 3
      %p172 = por %p170, %p171
      %p173 = scmp.ne.s32.totalorder %s164, %s165
      %p174 = scmp.eq.s32.totalorder %s18, 0
      %p175 = por %p173, %p174
      %p176 = scmp.ne.s32.totalorder %s164, %s165
      %p177 = scmp.eq.s32.totalorder %s19, 3
      %p178 = por %p176, %p177
      %p180 = scmp.ne.s32.totalorder %s165, %s179
      %p181 = scmp.eq.s32.totalorder %s19, 0
      %p182 = por %p180, %p181
      %s184 = sadd.s32 %s183, 1
      %p187 = scmp.eq.s32.totalorder %s13, 3
      %p188 = scmp.ne.s32.totalorder %s183, %s185
      %p189 = scmp.eq.s32.totalorder %s13, 0
      %p190 = por %p188, %p189
      %p191 = scmp.ne.s32.totalorder %s183, %s185
      %p192 = scmp.eq.s32.totalorder %s18, 3
      %p193 = por %p191, %p192
      %p194 = scmp.ne.s32.totalorder %s185, %s186
      %p195 = scmp.eq.s32.totalorder %s18, 0
      %p196 = por %p194, %p195
      %p197 = scmp.ne.s32.totalorder %s185, %s186
      %p198 = scmp.eq.s32.totalorder %s19, 3
      %p199 = por %p197, %p198
      %p201 = scmp.ne.s32.totalorder %s186, %s200
      %p202 = scmp.eq.s32.totalorder %s19, 0
      %p203 = por %p201, %p202
      %s204 = ssub.s32 %s20, %s32
      %s205 = ssub.s32 %s21, %s28
      %s206 = sor.u32 %s204, %s205
      %p207 = scmp.eq.s32.totalorder %s206, 0
      %s209 = sadd.s32 %s208, 1
      %s210 = scalar_select %p207, %s208, %s209
      %p213 = pneg %p207
      %p214 = scmp.eq.s32.totalorder %s13, 3
      %p215 = por %p213, %p214
      %p216 = scmp.ne.s32.totalorder %s208, %s211
      %p217 = scmp.eq.s32.totalorder %s13, 0
      %p218 = por %p216, %p217
      %p219 = scmp.ne.s32.totalorder %s208, %s211
      %p220 = scmp.eq.s32.totalorder %s18, 3
      %p221 = por %p219, %p220
      %p222 = scmp.ne.s32.totalorder %s211, %s212
      %p223 = scmp.eq.s32.totalorder %s18, 0
      %p224 = por %p222, %p223
      %p225 = scmp.ne.s32.totalorder %s211, %s212
      %p226 = scmp.eq.s32.totalorder %s19, 3
      %p227 = por %p225, %p226
      %p229 = scmp.ne.s32.totalorder %s212, %s228
      %p230 = scmp.eq.s32.totalorder %s19, 0
      %p231 = por %p229, %p230
      %p232 = scmp.le.s32.totalorder 1, %s13
      %p233 = scmp.lt.s32.totalorder %s13, 5
      %p234 = pnand %p232, %p233
      %p235 = pneg %p234
      // Predicated region
      $region9: #{transformer_block.7} parent=5 // pred_check
        _
      $region10: #{transformer_block.7} parent=5 // pred_check_branch
        %237 = sbr.rel (%p234) target = $region12
      $region11: #{transformer_block.7} parent=5 // pred_region
        %s238 = ssub.s32 %s13, 1
        // Predicated region
        $region13: #{transformer_block.7} parent=11 // pred_check
          %p239 = pneg %p154
        $region14: #{transformer_block.7} parent=11 // pred_check_branch
          %241 = sbr.rel (%p239) target = $region16
        $region15: #{transformer_block.7} parent=11 // pred_region
          _
        $region16: #{transformer_block.7} parent=11 // pred_fallthru
          _
        // Predicated region
        $region17: #{transformer_block.7} parent=11 // pred_check
          %p242 = pneg %p175
        $region18: #{transformer_block.7} parent=11 // pred_check_branch
          %244 = sbr.rel (%p242) target = $region20
        $region19: #{transformer_block.7} parent=11 // pred_region
          _
        $region20: #{transformer_block.7} parent=11 // pred_fallthru
          _
        // Predicated region
        $region21: #{transformer_block.7} parent=11 // pred_check
          %p245 = pneg %p196
        $region22: #{transformer_block.7} parent=11 // pred_check_branch
          %247 = sbr.rel (%p245) target = $region24
        $region23: #{transformer_block.7} parent=11 // pred_region
          _
        $region24: #{transformer_block.7} parent=11 // pred_fallthru
          _
      $region12: #{transformer_block.7} parent=5 // pred_fallthru
        _
      %p248 = scmp.lt.s32.totalorder %s13, 4
      // Predicated region
      $region25: #{transformer_block.7} parent=5 // pred_check
        %p249 = pneg %p248
      $region26: #{transformer_block.7} parent=5 // pred_check_branch
        %251 = sbr.rel (%p249) target = $region28
      $region27: #{transformer_block.7} parent=5 // pred_region
        // Predicated region
        $region29: #{transformer_block.7} parent=27 // pred_check
          %p252 = pneg %p47
        $region30: #{transformer_block.7} parent=27 // pred_check_branch
          %254 = sbr.rel (%p252) target = $region32
        $region31: #{transformer_block.7} parent=27 // pred_region
          %s255 = sand.u32 %s37, 1
          %s256 = sand.u32 %s37, 1
          %s257 = smul.addr %s256, 256
          %s258 = scalar_lea.vmem [#allocation2], %s257
          %s259 = smul.u32 16, %s21
          %s260 = smul.addr %s20, 128
          %s261 = sadd.s32 %s259, %s260
          %s262 = smul.addr %s261, 4
          %s263 = scalar_lea.vmem %s0, %s262
          // Predicated region
          $region33: #{transformer_block.7} parent=31 // pred_check
            _
          $region34: #{transformer_block.7} parent=31 // pred_check_branch
            %265 = sbr.rel (0) target = $region36
          $region35: #{transformer_block.7} parent=31 // pred_region
            // Predicated region
            $region37: #{transformer_block.7} parent=35 // pred_check
              _
            $region38: #{transformer_block.7} parent=35 // pred_check_branch
              %267 = sbr.rel target = $region40
            $region39: #{transformer_block.7} parent=35 // pred_region
              // Predicated region
              $region52: #{transformer_block.7} parent=39 // pred_check
                _
              $region53: #{transformer_block.7} parent=39 // pred_check_branch
                %409 = sbr.rel (0) target = $region55
              $region54: #{transformer_block.7} parent=39 // pred_region
                loop: start=0, step=1, limit=1
                $region56: #{transformer_block.7} parent=54 // loop_pre_header
                  _
                $region57: #{transformer_block.7} parent=54 // loop_header
                  %s411 = sphi 0, %s415
                  %p412 = scmp.ge.s32.totalorder %s411, 1
                  %s416 = sphi %s263, %s263
                  %s417 = sphi %s258, %s258
                $region58: #{transformer_block.7} parent=54 // loop_header_branch
                  %414 = sbr.rel (%p412) target = $region62
                $region59: #{transformer_block.7} parent=54 // loop_body
                  _
                $region60: #{transformer_block.7} parent=54 // loop_footer
                  %s415 = sadd.s32 1, %s411
                $region61: #{transformer_block.7} parent=54 // loop_footer_branch
                  %410 = sbr.rel target = $region57
                $region62: #{transformer_block.7} parent=54 // loop_exit
                  _
                %s419 = ssub.s32 16, 1
                loop: start=0, step=1, limit=1
                $region63: #{transformer_block.7} parent=54 // loop_pre_header
                  _
                $region64: #{transformer_block.7} parent=54 // loop_header
                  %s421 = sphi 0, %s425
                  %p422 = scmp.ge.s32.totalorder %s421, 1
                  %s426 = sphi %s263, %s263
                  %s427 = sphi %s258, %s258
                $region65: #{transformer_block.7} parent=54 // loop_header_branch
                  %424 = sbr.rel (%p422) target = $region69
                $region66: #{transformer_block.7} parent=54 // loop_body
                  %v428 = vld [vmem:[%s426] sm:%s419]
                  %429 = vst [vmem:[%s427] sm:%s419] %v428
                  %v430 = vld [vmem:[%s426 + $0x4] sm:%s419]
                  %431 = vst [vmem:[%s427 + $0x4] sm:%s419] %v430
                  %v432 = vld [vmem:[%s426 + $0x8] sm:%s419]
                  %433 = vst [vmem:[%s427 + $0x8] sm:%s419] %v432
                  %v434 = vld [vmem:[%s426 + $0xc] sm:%s419]
                  %435 = vst [vmem:[%s427 + $0xc] sm:%s419] %v434
                  %v436 = vld [vmem:[%s426 + $0x10] sm:%s419]
                  %437 = vst [vmem:[%s427 + $0x10] sm:%s419] %v436
                  %v438 = vld [vmem:[%s426 + $0x14] sm:%s419]
                  %439 = vst [vmem:[%s427 + $0x14] sm:%s419] %v438
                  %v440 = vld [vmem:[%s426 + $0x18] sm:%s419]
                  %441 = vst [vmem:[%s427 + $0x18] sm:%s419] %v440
                  %v442 = vld [vmem:[%s426 + $0x1c] sm:%s419]
                  %443 = vst [vmem:[%s427 + $0x1c] sm:%s419] %v442
                  %v444 = vld [vmem:[%s426 + $0x20] sm:%s419]
                  %445 = vst [vmem:[%s427 + $0x20] sm:%s419] %v444
                  %v446 = vld [vmem:[%s426 + $0x24] sm:%s419]
                  %447 = vst [vmem:[%s427 + $0x24] sm:%s419] %v446
                  %v448 = vld [vmem:[%s426 + $0x28] sm:%s419]
                  %449 = vst [vmem:[%s427 + $0x28] sm:%s419] %v448
                  %v450 = vld [vmem:[%s426 + $0x2c] sm:%s419]
                  %451 = vst [vmem:[%s427 + $0x2c] sm:%s419] %v450
                  %v452 = vld [vmem:[%s426 + $0x30] sm:%s419]
                  %453 = vst [vmem:[%s427 + $0x30] sm:%s419] %v452
                  %v454 = vld [vmem:[%s426 + $0x34] sm:%s419]
                  %455 = vst [vmem:[%s427 + $0x34] sm:%s419] %v454
                  %v456 = vld [vmem:[%s426 + $0x38] sm:%s419]
                  %457 = vst [vmem:[%s427 + $0x38] sm:%s419] %v456
                  %v458 = vld [vmem:[%s426 + $0x3c] sm:%s419]
                  %459 = vst [vmem:[%s427 + $0x3c] sm:%s419] %v458
                  %v460 = vld [vmem:[%s426 + $0x80] sm:%s419]
                  %461 = vst [vmem:[%s427 + $0x40] sm:%s419] %v460
                  %v462 = vld [vmem:[%s426 + $0x84] sm:%s419]
                  %463 = vst [vmem:[%s427 + $0x44] sm:%s419] %v462
                  %v464 = vld [vmem:[%s426 + $0x88] sm:%s419]
                  %465 = vst [vmem:[%s427 + $0x48] sm:%s419] %v464
                  %v466 = vld [vmem:[%s426 + $0x8c] sm:%s419]
                  %467 = vst [vmem:[%s427 + $0x4c] sm:%s419] %v466
                  %v468 = vld [vmem:[%s426 + $0x90] sm:%s419]
                  %469 = vst [vmem:[%s427 + $0x50] sm:%s419] %v468
                  %v470 = vld [vmem:[%s426 + $0x94] sm:%s419]
                  %471 = vst [vmem:[%s427 + $0x54] sm:%s419] %v470
                  %v472 = vld [vmem:[%s426 + $0x98] sm:%s419]
                  %473 = vst [vmem:[%s427 + $0x58] sm:%s419] %v472
                  %v474 = vld [vmem:[%s426 + $0x9c] sm:%s419]
                  %475 = vst [vmem:[%s427 + $0x5c] sm:%s419] %v474
                  %v476 = vld [vmem:[%s426 + $0xa0] sm:%s419]
                  %477 = vst [vmem:[%s427 + $0x60] sm:%s419] %v476
                  %v478 = vld [vmem:[%s426 + $0xa4] sm:%s419]
                  %479 = vst [vmem:[%s427 + $0x64] sm:%s419] %v478
                  %v480 = vld [vmem:[%s426 + $0xa8] sm:%s419]
                  %481 = vst [vmem:[%s427 + $0x68] sm:%s419] %v480
                  %v482 = vld [vmem:[%s426 + $0xac] sm:%s419]
                  %483 = vst [vmem:[%s427 + $0x6c] sm:%s419] %v482
                  %v484 = vld [vmem:[%s426 + $0xb0] sm:%s419]
                  %485 = vst [vmem:[%s427 + $0x70] sm:%s419] %v484
                  %v486 = vld [vmem:[%s426 + $0xb4] sm:%s419]
                  %487 = vst [vmem:[%s427 + $0x74] sm:%s419] %v486
                  %v488 = vld [vmem:[%s426 + $0xb8] sm:%s419]
                  %489 = vst [vmem:[%s427 + $0x78] sm:%s419] %v488
                  %v490 = vld [vmem:[%s426 + $0xbc] sm:%s419]
                  %491 = vst [vmem:[%s427 + $0x7c] sm:%s419] %v490
                  %v492 = vld [vmem:[%s426 + $0x100] sm:%s419]
                  %493 = vst [vmem:[%s427 + $0x80] sm:%s419] %v492
                  %v494 = vld [vmem:[%s426 + $0x104] sm:%s419]
                  %495 = vst [vmem:[%s427 + $0x84] sm:%s419] %v494
                  %v496 = vld [vmem:[%s426 + $0x108] sm:%s419]
                  %497 = vst [vmem:[%s427 + $0x88] sm:%s419] %v496
                  %v498 = vld [vmem:[%s426 + $0x10c] sm:%s419]
                  %499 = vst [vmem:[%s427 + $0x8c] sm:%s419] %v498
                  %v500 = vld [vmem:[%s426 + $0x110] sm:%s419]
                  %501 = vst [vmem:[%s427 + $0x90] sm:%s419] %v500
                  %v502 = vld [vmem:[%s426 + $0x114] sm:%s419]
                  %503 = vst [vmem:[%s427 + $0x94] sm:%s419] %v502
                  %v504 = vld [vmem:[%s426 + $0x118] sm:%s419]
                  %505 = vst [vmem:[%s427 + $0x98] sm:%s419] %v504
                  %v506 = vld [vmem:[%s426 + $0x11c] sm:%s419]
                  %507 = vst [vmem:[%s427 + $0x9c] sm:%s419] %v506
                  %v508 = vld [vmem:[%s426 + $0x120] sm:%s419]
                  %509 = vst [vmem:[%s427 + $0xa0] sm:%s419] %v508
                  %v510 = vld [vmem:[%s426 + $0x124] sm:%s419]
                  %511 = vst [vmem:[%s427 + $0xa4] sm:%s419] %v510
                  %v512 = vld [vmem:[%s426 + $0x128] sm:%s419]
                  %513 = vst [vmem:[%s427 + $0xa8] sm:%s419] %v512
                  %v514 = vld [vmem:[%s426 + $0x12c] sm:%s419]
                  %515 = vst [vmem:[%s427 + $0xac] sm:%s419] %v514
                  %v516 = vld [vmem:[%s426 + $0x130] sm:%s419]
                  %517 = vst [vmem:[%s427 + $0xb0] sm:%s419] %v516
                  %v518 = vld [vmem:[%s426 + $0x134] sm:%s419]
                  %519 = vst [vmem:[%s427 + $0xb4] sm:%s419] %v518
                  %v520 = vld [vmem:[%s426 + $0x138] sm:%s419]
                  %521 = vst [vmem:[%s427 + $0xb8] sm:%s419] %v520
                  %v522 = vld [vmem:[%s426 + $0x13c] sm:%s419]
                  %523 = vst [vmem:[%s427 + $0xbc] sm:%s419] %v522
                  %v524 = vld [vmem:[%s426 + $0x180] sm:%s419]
                  %525 = vst [vmem:[%s427 + $0xc0] sm:%s419] %v524
                  %v526 = vld [vmem:[%s426 + $0x184] sm:%s419]
                  %527 = vst [vmem:[%s427 + $0xc4] sm:%s419] %v526
                  %v528 = vld [vmem:[%s426 + $0x188] sm:%s419]
                  %529 = vst [vmem:[%s427 + $0xc8] sm:%s419] %v528
                  %v530 = vld [vmem:[%s426 + $0x18c] sm:%s419]
                  %531 = vst [vmem:[%s427 + $0xcc] sm:%s419] %v530
                  %v532 = vld [vmem:[%s426 + $0x190] sm:%s419]
                  %533 = vst [vmem:[%s427 + $0xd0] sm:%s419] %v532
                  %v534 = vld [vmem:[%s426 + $0x194] sm:%s419]
                  %535 = vst [vmem:[%s427 + $0xd4] sm:%s419] %v534
                  %v536 = vld [vmem:[%s426 + $0x198] sm:%s419]
                  %537 = vst [vmem:[%s427 + $0xd8] sm:%s419] %v536
                  %v538 = vld [vmem:[%s426 + $0x19c] sm:%s419]
                  %539 = vst [vmem:[%s427 + $0xdc] sm:%s419] %v538
                  %v540 = vld [vmem:[%s426 + $0x1a0] sm:%s419]
                  %541 = vst [vmem:[%s427 + $0xe0] sm:%s419] %v540
                  %v542 = vld [vmem:[%s426 + $0x1a4] sm:%s419]
                  %543 = vst [vmem:[%s427 + $0xe4] sm:%s419] %v542
                  %v544 = vld [vmem:[%s426 + $0x1a8] sm:%s419]
                  %545 = vst [vmem:[%s427 + $0xe8] sm:%s419] %v544
                  %v546 = vld [vmem:[%s426 + $0x1ac] sm:%s419]
                  %547 = vst [vmem:[%s427 + $0xec] sm:%s419] %v546
                  %v548 = vld [vmem:[%s426 + $0x1b0] sm:%s419]
                  %549 = vst [vmem:[%s427 + $0xf0] sm:%s419] %v548
                  %v550 = vld [vmem:[%s426 + $0x1b4] sm:%s419]
                  %551 = vst [vmem:[%s427 + $0xf4] sm:%s419] %v550
                  %v552 = vld [vmem:[%s426 + $0x1b8] sm:%s419]
                  %553 = vst [vmem:[%s427 + $0xf8] sm:%s419] %v552
                  %v554 = vld [vmem:[%s426 + $0x1bc] sm:%s419]
                  %555 = vst [vmem:[%s427 + $0xfc] sm:%s419] %v554
                $region67: #{transformer_block.7} parent=54 // loop_footer
                  %s425 = sadd.s32 1, %s421
                $region68: #{transformer_block.7} parent=54 // loop_footer_branch
                  %420 = sbr.rel target = $region64
                $region69: #{transformer_block.7} parent=54 // loop_exit
                  _
              $region55: #{transformer_block.7} parent=39 // pred_fallthru
                _
            $region40: #{transformer_block.7} parent=35 // pred_fallthru
              _
            // Predicated region
            $region41: #{transformer_block.7} parent=35 // pred_check
              _
            $region42: #{transformer_block.7} parent=35 // pred_check_branch
              %269 = sbr.rel (0) target = $region44
            $region43: #{transformer_block.7} parent=35 // pred_region
              %s271 = ssub.s32 16, 1
              loop: start=0, step=1, limit=1
              $region45: #{transformer_block.7} parent=43 // loop_pre_header
                _
              $region46: #{transformer_block.7} parent=43 // loop_header
                %s273 = sphi 0, %s277
                %p274 = scmp.ge.s32.totalorder %s273, 1
                %s278 = sphi %s263, %s263
                %s279 = sphi %s258, %s258
              $region47: #{transformer_block.7} parent=43 // loop_header_branch
                %276 = sbr.rel (%p274) target = $region51
              $region48: #{transformer_block.7} parent=43 // loop_body
                %v280 = vld [vmem:[%s278] sm:%s271]
                %281 = vst [vmem:[%s279] sm:%s271] %v280
                %v282 = vld [vmem:[%s278 + $0x4] sm:%s271]
                %283 = vst [vmem:[%s279 + $0x4] sm:%s271] %v282
                %v284 = vld [vmem:[%s278 + $0x8] sm:%s271]
                %285 = vst [vmem:[%s279 + $0x8] sm:%s271] %v284
                %v286 = vld [vmem:[%s278 + $0xc] sm:%s271]
                %287 = vst [vmem:[%s279 + $0xc] sm:%s271] %v286
                %v288 = vld [vmem:[%s278 + $0x10] sm:%s271]
                %289 = vst [vmem:[%s279 + $0x10] sm:%s271] %v288
                %v290 = vld [vmem:[%s278 + $0x14] sm:%s271]
                %291 = vst [vmem:[%s279 + $0x14] sm:%s271] %v290
                %v292 = vld [vmem:[%s278 + $0x18] sm:%s271]
                %293 = vst [vmem:[%s279 + $0x18] sm:%s271] %v292
                %v294 = vld [vmem:[%s278 + $0x1c] sm:%s271]
                %295 = vst [vmem:[%s279 + $0x1c] sm:%s271] %v294
                %v296 = vld [vmem:[%s278 + $0x20] sm:%s271]
                %297 = vst [vmem:[%s279 + $0x20] sm:%s271] %v296
                %v298 = vld [vmem:[%s278 + $0x24] sm:%s271]
                %299 = vst [vmem:[%s279 + $0x24] sm:%s271] %v298
                %v300 = vld [vmem:[%s278 + $0x28] sm:%s271]
                %301 = vst [vmem:[%s279 + $0x28] sm:%s271] %v300
                %v302 = vld [vmem:[%s278 + $0x2c] sm:%s271]
                %303 = vst [vmem:[%s279 + $0x2c] sm:%s271] %v302
                %v304 = vld [vmem:[%s278 + $0x30] sm:%s271]
                %305 = vst [vmem:[%s279 + $0x30] sm:%s271] %v304
                %v306 = vld [vmem:[%s278 + $0x34] sm:%s271]
                %307 = vst [vmem:[%s279 + $0x34] sm:%s271] %v306
                %v308 = vld [vmem:[%s278 + $0x38] sm:%s271]
                %309 = vst [vmem:[%s279 + $0x38] sm:%s271] %v308
                %v310 = vld [vmem:[%s278 + $0x3c] sm:%s271]
                %311 = vst [vmem:[%s279 + $0x3c] sm:%s271] %v310
                %v312 = vld [vmem:[%s278 + $0x80] sm:%s271]
                %313 = vst [vmem:[%s279 + $0x40] sm:%s271] %v312
                %v314 = vld [vmem:[%s278 + $0x84] sm:%s271]
                %315 = vst [vmem:[%s279 + $0x44] sm:%s271] %v314
                %v316 = vld [vmem:[%s278 + $0x88] sm:%s271]
                %317 = vst [vmem:[%s279 + $0x48] sm:%s271] %v316
                %v318 = vld [vmem:[%s278 + $0x8c] sm:%s271]
                %319 = vst [vmem:[%s279 + $0x4c] sm:%s271] %v318
                %v320 = vld [vmem:[%s278 + $0x90] sm:%s271]
                %321 = vst [vmem:[%s279 + $0x50] sm:%s271] %v320
                %v322 = vld [vmem:[%s278 + $0x94] sm:%s271]
                %323 = vst [vmem:[%s279 + $0x54] sm:%s271] %v322
                %v324 = vld [vmem:[%s278 + $0x98] sm:%s271]
                %325 = vst [vmem:[%s279 + $0x58] sm:%s271] %v324
                %v326 = vld [vmem:[%s278 + $0x9c] sm:%s271]
                %327 = vst [vmem:[%s279 + $0x5c] sm:%s271] %v326
                %v328 = vld [vmem:[%s278 + $0xa0] sm:%s271]
                %329 = vst [vmem:[%s279 + $0x60] sm:%s271] %v328
                %v330 = vld [vmem:[%s278 + $0xa4] sm:%s271]
                %331 = vst [vmem:[%s279 + $0x64] sm:%s271] %v330
                %v332 = vld [vmem:[%s278 + $0xa8] sm:%s271]
                %333 = vst [vmem:[%s279 + $0x68] sm:%s271] %v332
                %v334 = vld [vmem:[%s278 + $0xac] sm:%s271]
                %335 = vst [vmem:[%s279 + $0x6c] sm:%s271] %v334
                %v336 = vld [vmem:[%s278 + $0xb0] sm:%s271]
                %337 = vst [vmem:[%s279 + $0x70] sm:%s271] %v336
                %v338 = vld [vmem:[%s278 + $0xb4] sm:%s271]
                %339 = vst [vmem:[%s279 + $0x74] sm:%s271] %v338
                %v340 = vld [vmem:[%s278 + $0xb8] sm:%s271]
                %341 = vst [vmem:[%s279 + $0x78] sm:%s271] %v340
                %v342 = vld [vmem:[%s278 + $0xbc] sm:%s271]
                %343 = vst [vmem:[%s279 + $0x7c] sm:%s271] %v342
                %v344 = vld [vmem:[%s278 + $0x100] sm:%s271]
                %345 = vst [vmem:[%s279 + $0x80] sm:%s271] %v344
                %v346 = vld [vmem:[%s278 + $0x104] sm:%s271]
                %347 = vst [vmem:[%s279 + $0x84] sm:%s271] %v346
                %v348 = vld [vmem:[%s278 + $0x108] sm:%s271]
                %349 = vst [vmem:[%s279 + $0x88] sm:%s271] %v348
                %v350 = vld [vmem:[%s278 + $0x10c] sm:%s271]
                %351 = vst [vmem:[%s279 + $0x8c] sm:%s271] %v350
                %v352 = vld [vmem:[%s278 + $0x110] sm:%s271]
                %353 = vst [vmem:[%s279 + $0x90] sm:%s271] %v352
                %v354 = vld [vmem:[%s278 + $0x114] sm:%s271]
                %355 = vst [vmem:[%s279 + $0x94] sm:%s271] %v354
                %v356 = vld [vmem:[%s278 + $0x118] sm:%s271]
                %357 = vst [vmem:[%s279 + $0x98] sm:%s271] %v356
                %v358 = vld [vmem:[%s278 + $0x11c] sm:%s271]
                %359 = vst [vmem:[%s279 + $0x9c] sm:%s271] %v358
                %v360 = vld [vmem:[%s278 + $0x120] sm:%s271]
                %361 = vst [vmem:[%s279 + $0xa0] sm:%s271] %v360
                %v362 = vld [vmem:[%s278 + $0x124] sm:%s271]
                %363 = vst [vmem:[%s279 + $0xa4] sm:%s271] %v362
                %v364 = vld [vmem:[%s278 + $0x128] sm:%s271]
                %365 = vst [vmem:[%s279 + $0xa8] sm:%s271] %v364
                %v366 = vld [vmem:[%s278 + $0x12c] sm:%s271]
                %367 = vst [vmem:[%s279 + $0xac] sm:%s271] %v366
                %v368 = vld [vmem:[%s278 + $0x130] sm:%s271]
                %369 = vst [vmem:[%s279 + $0xb0] sm:%s271] %v368
                %v370 = vld [vmem:[%s278 + $0x134] sm:%s271]
                %371 = vst [vmem:[%s279 + $0xb4] sm:%s271] %v370
                %v372 = vld [vmem:[%s278 + $0x138] sm:%s271]
                %373 = vst [vmem:[%s279 + $0xb8] sm:%s271] %v372
                %v374 = vld [vmem:[%s278 + $0x13c] sm:%s271]
                %375 = vst [vmem:[%s279 + $0xbc] sm:%s271] %v374
                %v376 = vld [vmem:[%s278 + $0x180] sm:%s271]
                %377 = vst [vmem:[%s279 + $0xc0] sm:%s271] %v376
                %v378 = vld [vmem:[%s278 + $0x184] sm:%s271]
                %379 = vst [vmem:[%s279 + $0xc4] sm:%s271] %v378
                %v380 = vld [vmem:[%s278 + $0x188] sm:%s271]
                %381 = vst [vmem:[%s279 + $0xc8] sm:%s271] %v380
                %v382 = vld [vmem:[%s278 + $0x18c] sm:%s271]
                %383 = vst [vmem:[%s279 + $0xcc] sm:%s271] %v382
                %v384 = vld [vmem:[%s278 + $0x190] sm:%s271]
                %385 = vst [vmem:[%s279 + $0xd0] sm:%s271] %v384
                %v386 = vld [vmem:[%s278 + $0x194] sm:%s271]
                %387 = vst [vmem:[%s279 + $0xd4] sm:%s271] %v386
                %v388 = vld [vmem:[%s278 + $0x198] sm:%s271]
                %389 = vst [vmem:[%s279 + $0xd8] sm:%s271] %v388
                %v390 = vld [vmem:[%s278 + $0x19c] sm:%s271]
                %391 = vst [vmem:[%s279 + $0xdc] sm:%s271] %v390
                %v392 = vld [vmem:[%s278 + $0x1a0] sm:%s271]
                %393 = vst [vmem:[%s279 + $0xe0] sm:%s271] %v392
                %v394 = vld [vmem:[%s278 + $0x1a4] sm:%s271]
                %395 = vst [vmem:[%s279 + $0xe4] sm:%s271] %v394
                %v396 = vld [vmem:[%s278 + $0x1a8] sm:%s271]
                %397 = vst [vmem:[%s279 + $0xe8] sm:%s271] %v396
                %v398 = vld [vmem:[%s278 + $0x1ac] sm:%s271]
                %399 = vst [vmem:[%s279 + $0xec] sm:%s271] %v398
                %v400 = vld [vmem:[%s278 + $0x1b0] sm:%s271]
                %401 = vst [vmem:[%s279 + $0xf0] sm:%s271] %v400
                %v402 = vld [vmem:[%s278 + $0x1b4] sm:%s271]
                %403 = vst [vmem:[%s279 + $0xf4] sm:%s271] %v402
                %v404 = vld [vmem:[%s278 + $0x1b8] sm:%s271]
                %405 = vst [vmem:[%s279 + $0xf8] sm:%s271] %v404
                %v406 = vld [vmem:[%s278 + $0x1bc] sm:%s271]
                %407 = vst [vmem:[%s279 + $0xfc] sm:%s271] %v406
              $region49: #{transformer_block.7} parent=43 // loop_footer
                %s277 = sadd.s32 1, %s273
              $region50: #{transformer_block.7} parent=43 // loop_footer_branch
                %272 = sbr.rel target = $region46
              $region51: #{transformer_block.7} parent=43 // loop_exit
                _
            $region44: #{transformer_block.7} parent=35 // pred_fallthru
              _
          $region36: #{transformer_block.7} parent=31 // pred_fallthru
            _
          %556 = vnop
        $region32: #{transformer_block.7} parent=27 // pred_fallthru
          _
        // Predicated region
        $region70: #{transformer_block.7} parent=27 // pred_check
          %p557 = pneg %p73
        $region71: #{transformer_block.7} parent=27 // pred_check_branch
          %559 = sbr.rel (%p557) target = $region73
        $region72: #{transformer_block.7} parent=27 // pred_region
          %p560 = scmp.lt.s32.totalorder %s20, 1
          %s561 = scalar_select %p560, %s20, 1
          %s562 = smul.addr %s561, 128
          %s563 = smul.addr %s562, 4
          %s564 = scalar_lea.vmem %s1, %s563
        $region73: #{transformer_block.7} parent=27 // pred_fallthru
          _
        // Predicated region
        $region74: #{transformer_block.7} parent=27 // pred_check
          %p565 = pneg %p99
        $region75: #{transformer_block.7} parent=27 // pred_check_branch
          %567 = sbr.rel (%p565) target = $region77
        $region76: #{transformer_block.7} parent=27 // pred_region
          %p568 = scmp.lt.s32.totalorder %s20, 1
          %s569 = scalar_select %p568, %s20, 1
          %s570 = smul.addr %s569, 128
          %s571 = smul.addr %s570, 4
          %s572 = scalar_lea.vmem %s2, %s571
        $region77: #{transformer_block.7} parent=27 // pred_fallthru
          _
        // Predicated region
        $region78: #{transformer_block.7} parent=27 // pred_check
          %p573 = pneg %p127
        $region79: #{transformer_block.7} parent=27 // pred_check_branch
          %575 = sbr.rel (%p573) target = $region81
        $region80: #{transformer_block.7} parent=27 // pred_region
          %s576 = smul.u32 16, %s21
          %p577 = scmp.lt.s32.totalorder %s20, 1
          %s578 = scalar_select %p577, %s20, 1
          %p579 = scmp.lt.s32.totalorder %s576, 31
          %s580 = scalar_select %p579, %s576, 31
          %s581 = smul.addr %s578, 32
          %s582 = sadd.s32 %s580, %s581
          %s583 = smul.addr %s582, 4
          %s584 = scalar_lea.vmem %s3, %s583
          %s585 = smul.u32 16, %s21
        $region81: #{transformer_block.7} parent=27 // pred_fallthru
          _
      $region28: #{transformer_block.7} parent=5 // pred_fallthru
        _
      %p586 = scmp.le.s32.totalorder 1, %s13
      %p587 = scmp.lt.s32.totalorder %s13, 5
      %p588 = pnand %p586, %p587
      %p589 = pneg %p588
      // Predicated region
      $region82: #{transformer_block.7} parent=5 // pred_check
        _
      $region83: #{transformer_block.7} parent=5 // pred_check_branch
        %591 = sbr.rel (%p588) target = $region85
      $region84: #{transformer_block.7} parent=5 // pred_region
        %s592 = ssub.s32 %s13, 1
        %s593 = sand.u32 %s40, 1
        %s594 = sand.u32 %s40, 1
        %s595 = smul.addr %s594, 256
        %s596 = scalar_lea.vmem [#allocation2], %s595
        // Predicated region
        $region86: #{transformer_block.7} parent=84 // pred_check
          %p597 = pneg %p53
        $region87: #{transformer_block.7} parent=84 // pred_check_branch
          %599 = sbr.rel (%p597) target = $region89
        $region88: #{transformer_block.7} parent=84 // pred_region
          _
        $region89: #{transformer_block.7} parent=84 // pred_fallthru
          _
        %s600 = sand.u32 %s40, 1
        %s601 = sand.u32 %s40, 1
        %s602 = smul.addr %s601, 256
        %s603 = scalar_lea.vmem [#allocation2], %s602
        %p604 = pneg %p53
        %p605 = pneg %p50
        %p606 = scmp.lt.s32.totalorder %s22, 1
        %s607 = scalar_select %p606, %s22, 1
        %s608 = smul.addr %s607, 128
        %s609 = smul.addr %s608, 4
        %s610 = scalar_lea.vmem %s1, %s609
        %p611 = pneg %p79
        %p612 = pneg %p76
        %p613 = scmp.lt.s32.totalorder %s22, 1
        %s614 = scalar_select %p613, %s22, 1
        %s615 = smul.addr %s614, 128
        %s616 = smul.addr %s615, 4
        %s617 = scalar_lea.vmem %s2, %s616
        %p618 = pneg %p105
        %p619 = pneg %p102
        %s620 = smul.u32 16, %s23
        %p621 = scmp.lt.s32.totalorder %s22, 1
        %s622 = scalar_select %p621, %s22, 1
        %p623 = scmp.lt.s32.totalorder %s620, 31
        %s624 = scalar_select %p623, %s620, 31
        %s625 = smul.addr %s622, 32
        %s626 = sadd.s32 %s624, %s625
        %s627 = smul.addr %s626, 4
        %s628 = scalar_lea.vmem %s3, %s627
        %p629 = pneg %p133
        %p630 = pneg %p130
        %p631 = pneg %p154
        %p632 = pneg %p151
        %p633 = pneg %p175
        %p634 = pneg %p172
        %p635 = pneg %p196
        %p636 = pneg %p193
        %p637 = pneg %p224
        %p638 = pneg %p221
        %s639 = smul.u32 16, %s23
        %p640 = scmp.lt.s32.totalorder %s22, 1
        %s641 = scalar_select %p640, %s22, 1
        %p642 = scmp.lt.s32.totalorder %s639, 31
        %s643 = scalar_select %p642, %s639, 31
        %s644 = smul.addr %s641, 32
        %s645 = sadd.s32 %s643, %s644
        %s646 = smul.addr %s645, 4
        %s647 = scalar_lea.vmem %s7, %s646
        %s648 = smul.u32 16, %s23
        %p649 = scmp.lt.s32.totalorder %s22, 1
        %s650 = scalar_select %p649, %s22, 1
        %s651 = smul.addr %s650, 128
        %s652 = smul.addr %s651, 4
        %s653 = scalar_lea.vmem %s1, %s652
        %p654 = scmp.lt.s32.totalorder %s22, 1
        %s655 = scalar_select %p654, %s22, 1
        %s656 = smul.addr %s655, 128
        %s657 = smul.addr %s656, 4
        %s658 = scalar_lea.vmem %s2, %s657
        %s659 = smul.u32 16, %s23
        %p660 = scmp.lt.s32.totalorder %s22, 1
        %s661 = scalar_select %p660, %s22, 1
        %p662 = scmp.lt.s32.totalorder %s659, 31
        %s663 = scalar_select %p662, %s659, 31
        %s664 = smul.addr %s661, 32
        %s665 = sadd.s32 %s663, %s664
        %s666 = smul.addr %s665, 4
        %s667 = scalar_lea.vmem %s3, %s666
        %s668 = smul.u32 16, %s23
        %s669 = smul.u32 16, %s23
        %p670 = scmp.lt.s32.totalorder %s22, 1
        %s671 = scalar_select %p670, %s22, 1
        %p672 = scmp.lt.s32.totalorder %s669, 31
        %s673 = scalar_select %p672, %s669, 31
        %s674 = smul.addr %s671, 32
        %s675 = sadd.s32 %s673, %s674
        %s676 = smul.addr %s675, 4
        %s677 = scalar_lea.vmem %s7, %s676
        %s678 = smul.u32 16, %s23
        %v680 = vld [vmem:[%s596] sm:$0xf]
        %v681 = vld [vmem:[%s596 + $0x4] sm:$0xf]
        %v682 = vld [vmem:[%s596 + $0x8] sm:$0xf]
        %v683 = vld [vmem:[%s596 + $0xc] sm:$0xf]
        %v684 = vld [vmem:[%s596 + $0x10] sm:$0xf]
        %v685 = vld [vmem:[%s596 + $0x14] sm:$0xf]
        %v686 = vld [vmem:[%s596 + $0x18] sm:$0xf]
        %v687 = vld [vmem:[%s596 + $0x1c] sm:$0xf]
        %v688 = vld [vmem:[%s596 + $0x20] sm:$0xf]
        %v689 = vld [vmem:[%s596 + $0x24] sm:$0xf]
        %v690 = vld [vmem:[%s596 + $0x28] sm:$0xf]
        %v691 = vld [vmem:[%s596 + $0x2c] sm:$0xf]
        %v692 = vld [vmem:[%s596 + $0x30] sm:$0xf]
        %v693 = vld [vmem:[%s596 + $0x34] sm:$0xf]
        %v694 = vld [vmem:[%s596 + $0x38] sm:$0xf]
        %v695 = vld [vmem:[%s596 + $0x3c] sm:$0xf]
        %v696 = vld [vmem:[%s596 + $0x40] sm:$0xf]
        %v697 = vld [vmem:[%s596 + $0x44] sm:$0xf]
        %v698 = vld [vmem:[%s596 + $0x48] sm:$0xf]
        %v699 = vld [vmem:[%s596 + $0x4c] sm:$0xf]
        %v700 = vld [vmem:[%s596 + $0x50] sm:$0xf]
        %v701 = vld [vmem:[%s596 + $0x54] sm:$0xf]
        %v702 = vld [vmem:[%s596 + $0x58] sm:$0xf]
        %v703 = vld [vmem:[%s596 + $0x5c] sm:$0xf]
        %v704 = vld [vmem:[%s596 + $0x60] sm:$0xf]
        %v705 = vld [vmem:[%s596 + $0x64] sm:$0xf]
        %v706 = vld [vmem:[%s596 + $0x68] sm:$0xf]
        %v707 = vld [vmem:[%s596 + $0x6c] sm:$0xf]
        %v708 = vld [vmem:[%s596 + $0x70] sm:$0xf]
        %v709 = vld [vmem:[%s596 + $0x74] sm:$0xf]
        %v710 = vld [vmem:[%s596 + $0x78] sm:$0xf]
        %v711 = vld [vmem:[%s596 + $0x7c] sm:$0xf]
        %v712 = vld [vmem:[%s596 + $0x80] sm:$0xf]
        %v713 = vld [vmem:[%s596 + $0x84] sm:$0xf]
        %v714 = vld [vmem:[%s596 + $0x88] sm:$0xf]
        %v715 = vld [vmem:[%s596 + $0x8c] sm:$0xf]
        %v716 = vld [vmem:[%s596 + $0x90] sm:$0xf]
        %v717 = vld [vmem:[%s596 + $0x94] sm:$0xf]
        %v718 = vld [vmem:[%s596 + $0x98] sm:$0xf]
        %v719 = vld [vmem:[%s596 + $0x9c] sm:$0xf]
        %v720 = vld [vmem:[%s596 + $0xa0] sm:$0xf]
        %v721 = vld [vmem:[%s596 + $0xa4] sm:$0xf]
        %v722 = vld [vmem:[%s596 + $0xa8] sm:$0xf]
        %v723 = vld [vmem:[%s596 + $0xac] sm:$0xf]
        %v724 = vld [vmem:[%s596 + $0xb0] sm:$0xf]
        %v725 = vld [vmem:[%s596 + $0xb4] sm:$0xf]
        %v726 = vld [vmem:[%s596 + $0xb8] sm:$0xf]
        %v727 = vld [vmem:[%s596 + $0xbc] sm:$0xf]
        %v728 = vld [vmem:[%s596 + $0xc0] sm:$0xf]
        %v729 = vld [vmem:[%s596 + $0xc4] sm:$0xf]
        %v730 = vld [vmem:[%s596 + $0xc8] sm:$0xf]
        %v731 = vld [vmem:[%s596 + $0xcc] sm:$0xf]
        %v732 = vld [vmem:[%s596 + $0xd0] sm:$0xf]
        %v733 = vld [vmem:[%s596 + $0xd4] sm:$0xf]
        %v734 = vld [vmem:[%s596 + $0xd8] sm:$0xf]
        %v735 = vld [vmem:[%s596 + $0xdc] sm:$0xf]
        %v736 = vld [vmem:[%s596 + $0xe0] sm:$0xf]
        %v737 = vld [vmem:[%s596 + $0xe4] sm:$0xf]
        %v738 = vld [vmem:[%s596 + $0xe8] sm:$0xf]
        %v739 = vld [vmem:[%s596 + $0xec] sm:$0xf]
        %v740 = vld [vmem:[%s596 + $0xf0] sm:$0xf]
        %v741 = vld [vmem:[%s596 + $0xf4] sm:$0xf]
        %v742 = vld [vmem:[%s596 + $0xf8] sm:$0xf]
        %v743 = vld [vmem:[%s596 + $0xfc] sm:$0xf]
        %v744 = vld [vmem:[%s653] sm:$0xf]
        %v745 = vld [vmem:[%s653 + $0x4] sm:$0xf]
        %v746 = vld [vmem:[%s653 + $0x8] sm:$0xf]
        %v747 = vld [vmem:[%s653 + $0xc] sm:$0xf]
        %v748 = vld [vmem:[%s653 + $0x10] sm:$0xf]
        %v749 = vld [vmem:[%s653 + $0x14] sm:$0xf]
        %v750 = vld [vmem:[%s653 + $0x18] sm:$0xf]
        %v751 = vld [vmem:[%s653 + $0x1c] sm:$0xf]
        %v752 = vld [vmem:[%s653 + $0x20] sm:$0xf]
        %v753 = vld [vmem:[%s653 + $0x24] sm:$0xf]
        %v754 = vld [vmem:[%s653 + $0x28] sm:$0xf]
        %v755 = vld [vmem:[%s653 + $0x2c] sm:$0xf]
        %v756 = vld [vmem:[%s653 + $0x30] sm:$0xf]
        %v757 = vld [vmem:[%s653 + $0x34] sm:$0xf]
        %v758 = vld [vmem:[%s653 + $0x38] sm:$0xf]
        %v759 = vld [vmem:[%s653 + $0x3c] sm:$0xf]
        %v760 = vld [vmem:[%s653 + $0x40] sm:$0xf]
        %v761 = vld [vmem:[%s653 + $0x44] sm:$0xf]
        %v762 = vld [vmem:[%s653 + $0x48] sm:$0xf]
        %v763 = vld [vmem:[%s653 + $0x4c] sm:$0xf]
        %v764 = vld [vmem:[%s653 + $0x50] sm:$0xf]
        %v765 = vld [vmem:[%s653 + $0x54] sm:$0xf]
        %v766 = vld [vmem:[%s653 + $0x58] sm:$0xf]
        %v767 = vld [vmem:[%s653 + $0x5c] sm:$0xf]
        %v768 = vld [vmem:[%s653 + $0x60] sm:$0xf]
        %v769 = vld [vmem:[%s653 + $0x64] sm:$0xf]
        %v770 = vld [vmem:[%s653 + $0x68] sm:$0xf]
        %v771 = vld [vmem:[%s653 + $0x6c] sm:$0xf]
        %v772 = vld [vmem:[%s653 + $0x70] sm:$0xf]
        %v773 = vld [vmem:[%s653 + $0x74] sm:$0xf]
        %v774 = vld [vmem:[%s653 + $0x78] sm:$0xf]
        %v775 = vld [vmem:[%s653 + $0x7c] sm:$0xf]
        %v776 = vld [vmem:[%s653 + $0x80] sm:$0xf]
        %v777 = vld [vmem:[%s653 + $0x84] sm:$0xf]
        %v778 = vld [vmem:[%s653 + $0x88] sm:$0xf]
        %v779 = vld [vmem:[%s653 + $0x8c] sm:$0xf]
        %v780 = vld [vmem:[%s653 + $0x90] sm:$0xf]
        %v781 = vld [vmem:[%s653 + $0x94] sm:$0xf]
        %v782 = vld [vmem:[%s653 + $0x98] sm:$0xf]
        %v783 = vld [vmem:[%s653 + $0x9c] sm:$0xf]
        %v784 = vld [vmem:[%s653 + $0xa0] sm:$0xf]
        %v785 = vld [vmem:[%s653 + $0xa4] sm:$0xf]
        %v786 = vld [vmem:[%s653 + $0xa8] sm:$0xf]
        %v787 = vld [vmem:[%s653 + $0xac] sm:$0xf]
        %v788 = vld [vmem:[%s653 + $0xb0] sm:$0xf]
        %v789 = vld [vmem:[%s653 + $0xb4] sm:$0xf]
        %v790 = vld [vmem:[%s653 + $0xb8] sm:$0xf]
        %v791 = vld [vmem:[%s653 + $0xbc] sm:$0xf]
        %v792 = vld [vmem:[%s653 + $0xc0] sm:$0xf]
        %v793 = vld [vmem:[%s653 + $0xc4] sm:$0xf]
        %v794 = vld [vmem:[%s653 + $0xc8] sm:$0xf]
        %v795 = vld [vmem:[%s653 + $0xcc] sm:$0xf]
        %v796 = vld [vmem:[%s653 + $0xd0] sm:$0xf]
        %v797 = vld [vmem:[%s653 + $0xd4] sm:$0xf]
        %v798 = vld [vmem:[%s653 + $0xd8] sm:$0xf]
        %v799 = vld [vmem:[%s653 + $0xdc] sm:$0xf]
        %v800 = vld [vmem:[%s653 + $0xe0] sm:$0xf]
        %v801 = vld [vmem:[%s653 + $0xe4] sm:$0xf]
        %v802 = vld [vmem:[%s653 + $0xe8] sm:$0xf]
        %v803 = vld [vmem:[%s653 + $0xec] sm:$0xf]
        %v804 = vld [vmem:[%s653 + $0xf0] sm:$0xf]
        %v805 = vld [vmem:[%s653 + $0xf4] sm:$0xf]
        %v806 = vld [vmem:[%s653 + $0xf8] sm:$0xf]
        %v807 = vld [vmem:[%s653 + $0xfc] sm:$0xf]
        %v808 = vld [vmem:[%s653 + $0x100] sm:$0xf]
        %v809 = vld [vmem:[%s653 + $0x104] sm:$0xf]
        %v810 = vld [vmem:[%s653 + $0x108] sm:$0xf]
        %v811 = vld [vmem:[%s653 + $0x10c] sm:$0xf]
        %v812 = vld [vmem:[%s653 + $0x110] sm:$0xf]
        %v813 = vld [vmem:[%s653 + $0x114] sm:$0xf]
        %v814 = vld [vmem:[%s653 + $0x118] sm:$0xf]
        %v815 = vld [vmem:[%s653 + $0x11c] sm:$0xf]
        %v816 = vld [vmem:[%s653 + $0x120] sm:$0xf]
        %v817 = vld [vmem:[%s653 + $0x124] sm:$0xf]
        %v818 = vld [vmem:[%s653 + $0x128] sm:$0xf]
        %v819 = vld [vmem:[%s653 + $0x12c] sm:$0xf]
        %v820 = vld [vmem:[%s653 + $0x130] sm:$0xf]
        %v821 = vld [vmem:[%s653 + $0x134] sm:$0xf]
        %v822 = vld [vmem:[%s653 + $0x138] sm:$0xf]
        %v823 = vld [vmem:[%s653 + $0x13c] sm:$0xf]
        %v824 = vld [vmem:[%s653 + $0x140] sm:$0xf]
        %v825 = vld [vmem:[%s653 + $0x144] sm:$0xf]
        %v826 = vld [vmem:[%s653 + $0x148] sm:$0xf]
        %v827 = vld [vmem:[%s653 + $0x14c] sm:$0xf]
        %v828 = vld [vmem:[%s653 + $0x150] sm:$0xf]
        %v829 = vld [vmem:[%s653 + $0x154] sm:$0xf]
        %v830 = vld [vmem:[%s653 + $0x158] sm:$0xf]
        %v831 = vld [vmem:[%s653 + $0x15c] sm:$0xf]
        %v832 = vld [vmem:[%s653 + $0x160] sm:$0xf]
        %v833 = vld [vmem:[%s653 + $0x164] sm:$0xf]
        %v834 = vld [vmem:[%s653 + $0x168] sm:$0xf]
        %v835 = vld [vmem:[%s653 + $0x16c] sm:$0xf]
        %v836 = vld [vmem:[%s653 + $0x170] sm:$0xf]
        %v837 = vld [vmem:[%s653 + $0x174] sm:$0xf]
        %v838 = vld [vmem:[%s653 + $0x178] sm:$0xf]
        %v839 = vld [vmem:[%s653 + $0x17c] sm:$0xf]
        %v840 = vld [vmem:[%s653 + $0x180] sm:$0xf]
        %v841 = vld [vmem:[%s653 + $0x184] sm:$0xf]
        %v842 = vld [vmem:[%s653 + $0x188] sm:$0xf]
        %v843 = vld [vmem:[%s653 + $0x18c] sm:$0xf]
        %v844 = vld [vmem:[%s653 + $0x190] sm:$0xf]
        %v845 = vld [vmem:[%s653 + $0x194] sm:$0xf]
        %v846 = vld [vmem:[%s653 + $0x198] sm:$0xf]
        %v847 = vld [vmem:[%s653 + $0x19c] sm:$0xf]
        %v848 = vld [vmem:[%s653 + $0x1a0] sm:$0xf]
        %v849 = vld [vmem:[%s653 + $0x1a4] sm:$0xf]
        %v850 = vld [vmem:[%s653 + $0x1a8] sm:$0xf]
        %v851 = vld [vmem:[%s653 + $0x1ac] sm:$0xf]
        %v852 = vld [vmem:[%s653 + $0x1b0] sm:$0xf]
        %v853 = vld [vmem:[%s653 + $0x1b4] sm:$0xf]
        %v854 = vld [vmem:[%s653 + $0x1b8] sm:$0xf]
        %v855 = vld [vmem:[%s653 + $0x1bc] sm:$0xf]
        %v856 = vld [vmem:[%s653 + $0x1c0] sm:$0xf]
        %v857 = vld [vmem:[%s653 + $0x1c4] sm:$0xf]
        %v858 = vld [vmem:[%s653 + $0x1c8] sm:$0xf]
        %v859 = vld [vmem:[%s653 + $0x1cc] sm:$0xf]
        %v860 = vld [vmem:[%s653 + $0x1d0] sm:$0xf]
        %v861 = vld [vmem:[%s653 + $0x1d4] sm:$0xf]
        %v862 = vld [vmem:[%s653 + $0x1d8] sm:$0xf]
        %v863 = vld [vmem:[%s653 + $0x1dc] sm:$0xf]
        %v864 = vld [vmem:[%s653 + $0x1e0] sm:$0xf]
        %v865 = vld [vmem:[%s653 + $0x1e4] sm:$0xf]
        %v866 = vld [vmem:[%s653 + $0x1e8] sm:$0xf]
        %v867 = vld [vmem:[%s653 + $0x1ec] sm:$0xf]
        %v868 = vld [vmem:[%s653 + $0x1f0] sm:$0xf]
        %v869 = vld [vmem:[%s653 + $0x1f4] sm:$0xf]
        %v870 = vld [vmem:[%s653 + $0x1f8] sm:$0xf]
        %v871 = vld [vmem:[%s653 + $0x1fc] sm:$0xf]
        %v872 = vld [vmem:[%s658] sm:$0xf]
        %v873 = vld [vmem:[%s658 + $0x4] sm:$0xf]
        %v874 = vld [vmem:[%s658 + $0x8] sm:$0xf]
        %v875 = vld [vmem:[%s658 + $0xc] sm:$0xf]
        %v876 = vld [vmem:[%s658 + $0x10] sm:$0xf]
        %v877 = vld [vmem:[%s658 + $0x14] sm:$0xf]
        %v878 = vld [vmem:[%s658 + $0x18] sm:$0xf]
        %v879 = vld [vmem:[%s658 + $0x1c] sm:$0xf]
        %v880 = vld [vmem:[%s658 + $0x20] sm:$0xf]
        %v881 = vld [vmem:[%s658 + $0x24] sm:$0xf]
        %v882 = vld [vmem:[%s658 + $0x28] sm:$0xf]
        %v883 = vld [vmem:[%s658 + $0x2c] sm:$0xf]
        %v884 = vld [vmem:[%s658 + $0x30] sm:$0xf]
        %v885 = vld [vmem:[%s658 + $0x34] sm:$0xf]
        %v886 = vld [vmem:[%s658 + $0x38] sm:$0xf]
        %v887 = vld [vmem:[%s658 + $0x3c] sm:$0xf]
        %v888 = vld [vmem:[%s658 + $0x40] sm:$0xf]
        %v889 = vld [vmem:[%s658 + $0x44] sm:$0xf]
        %v890 = vld [vmem:[%s658 + $0x48] sm:$0xf]
        %v891 = vld [vmem:[%s658 + $0x4c] sm:$0xf]
        %v892 = vld [vmem:[%s658 + $0x50] sm:$0xf]
        %v893 = vld [vmem:[%s658 + $0x54] sm:$0xf]
        %v894 = vld [vmem:[%s658 + $0x58] sm:$0xf]
        %v895 = vld [vmem:[%s658 + $0x5c] sm:$0xf]
        %v896 = vld [vmem:[%s658 + $0x60] sm:$0xf]
        %v897 = vld [vmem:[%s658 + $0x64] sm:$0xf]
        %v898 = vld [vmem:[%s658 + $0x68] sm:$0xf]
        %v899 = vld [vmem:[%s658 + $0x6c] sm:$0xf]
        %v900 = vld [vmem:[%s658 + $0x70] sm:$0xf]
        %v901 = vld [vmem:[%s658 + $0x74] sm:$0xf]
        %v902 = vld [vmem:[%s658 + $0x78] sm:$0xf]
        %v903 = vld [vmem:[%s658 + $0x7c] sm:$0xf]
        %v904 = vld [vmem:[%s658 + $0x80] sm:$0xf]
        %v905 = vld [vmem:[%s658 + $0x84] sm:$0xf]
        %v906 = vld [vmem:[%s658 + $0x88] sm:$0xf]
        %v907 = vld [vmem:[%s658 + $0x8c] sm:$0xf]
        %v908 = vld [vmem:[%s658 + $0x90] sm:$0xf]
        %v909 = vld [vmem:[%s658 + $0x94] sm:$0xf]
        %v910 = vld [vmem:[%s658 + $0x98] sm:$0xf]
        %v911 = vld [vmem:[%s658 + $0x9c] sm:$0xf]
        %v912 = vld [vmem:[%s658 + $0xa0] sm:$0xf]
        %v913 = vld [vmem:[%s658 + $0xa4] sm:$0xf]
        %v914 = vld [vmem:[%s658 + $0xa8] sm:$0xf]
        %v915 = vld [vmem:[%s658 + $0xac] sm:$0xf]
        %v916 = vld [vmem:[%s658 + $0xb0] sm:$0xf]
        %v917 = vld [vmem:[%s658 + $0xb4] sm:$0xf]
        %v918 = vld [vmem:[%s658 + $0xb8] sm:$0xf]
        %v919 = vld [vmem:[%s658 + $0xbc] sm:$0xf]
        %v920 = vld [vmem:[%s658 + $0xc0] sm:$0xf]
        %v921 = vld [vmem:[%s658 + $0xc4] sm:$0xf]
        %v922 = vld [vmem:[%s658 + $0xc8] sm:$0xf]
        %v923 = vld [vmem:[%s658 + $0xcc] sm:$0xf]
        %v924 = vld [vmem:[%s658 + $0xd0] sm:$0xf]
        %v925 = vld [vmem:[%s658 + $0xd4] sm:$0xf]
        %v926 = vld [vmem:[%s658 + $0xd8] sm:$0xf]
        %v927 = vld [vmem:[%s658 + $0xdc] sm:$0xf]
        %v928 = vld [vmem:[%s658 + $0xe0] sm:$0xf]
        %v929 = vld [vmem:[%s658 + $0xe4] sm:$0xf]
        %v930 = vld [vmem:[%s658 + $0xe8] sm:$0xf]
        %v931 = vld [vmem:[%s658 + $0xec] sm:$0xf]
        %v932 = vld [vmem:[%s658 + $0xf0] sm:$0xf]
        %v933 = vld [vmem:[%s658 + $0xf4] sm:$0xf]
        %v934 = vld [vmem:[%s658 + $0xf8] sm:$0xf]
        %v935 = vld [vmem:[%s658 + $0xfc] sm:$0xf]
        %v936 = vld [vmem:[%s658 + $0x100] sm:$0xf]
        %v937 = vld [vmem:[%s658 + $0x104] sm:$0xf]
        %v938 = vld [vmem:[%s658 + $0x108] sm:$0xf]
        %v939 = vld [vmem:[%s658 + $0x10c] sm:$0xf]
        %v940 = vld [vmem:[%s658 + $0x110] sm:$0xf]
        %v941 = vld [vmem:[%s658 + $0x114] sm:$0xf]
        %v942 = vld [vmem:[%s658 + $0x118] sm:$0xf]
        %v943 = vld [vmem:[%s658 + $0x11c] sm:$0xf]
        %v944 = vld [vmem:[%s658 + $0x120] sm:$0xf]
        %v945 = vld [vmem:[%s658 + $0x124] sm:$0xf]
        %v946 = vld [vmem:[%s658 + $0x128] sm:$0xf]
        %v947 = vld [vmem:[%s658 + $0x12c] sm:$0xf]
        %v948 = vld [vmem:[%s658 + $0x130] sm:$0xf]
        %v949 = vld [vmem:[%s658 + $0x134] sm:$0xf]
        %v950 = vld [vmem:[%s658 + $0x138] sm:$0xf]
        %v951 = vld [vmem:[%s658 + $0x13c] sm:$0xf]
        %v952 = vld [vmem:[%s658 + $0x140] sm:$0xf]
        %v953 = vld [vmem:[%s658 + $0x144] sm:$0xf]
        %v954 = vld [vmem:[%s658 + $0x148] sm:$0xf]
        %v955 = vld [vmem:[%s658 + $0x14c] sm:$0xf]
        %v956 = vld [vmem:[%s658 + $0x150] sm:$0xf]
        %v957 = vld [vmem:[%s658 + $0x154] sm:$0xf]
        %v958 = vld [vmem:[%s658 + $0x158] sm:$0xf]
        %v959 = vld [vmem:[%s658 + $0x15c] sm:$0xf]
        %v960 = vld [vmem:[%s658 + $0x160] sm:$0xf]
        %v961 = vld [vmem:[%s658 + $0x164] sm:$0xf]
        %v962 = vld [vmem:[%s658 + $0x168] sm:$0xf]
        %v963 = vld [vmem:[%s658 + $0x16c] sm:$0xf]
        %v964 = vld [vmem:[%s658 + $0x170] sm:$0xf]
        %v965 = vld [vmem:[%s658 + $0x174] sm:$0xf]
        %v966 = vld [vmem:[%s658 + $0x178] sm:$0xf]
        %v967 = vld [vmem:[%s658 + $0x17c] sm:$0xf]
        %v968 = vld [vmem:[%s658 + $0x180] sm:$0xf]
        %v969 = vld [vmem:[%s658 + $0x184] sm:$0xf]
        %v970 = vld [vmem:[%s658 + $0x188] sm:$0xf]
        %v971 = vld [vmem:[%s658 + $0x18c] sm:$0xf]
        %v972 = vld [vmem:[%s658 + $0x190] sm:$0xf]
        %v973 = vld [vmem:[%s658 + $0x194] sm:$0xf]
        %v974 = vld [vmem:[%s658 + $0x198] sm:$0xf]
        %v975 = vld [vmem:[%s658 + $0x19c] sm:$0xf]
        %v976 = vld [vmem:[%s658 + $0x1a0] sm:$0xf]
        %v977 = vld [vmem:[%s658 + $0x1a4] sm:$0xf]
        %v978 = vld [vmem:[%s658 + $0x1a8] sm:$0xf]
        %v979 = vld [vmem:[%s658 + $0x1ac] sm:$0xf]
        %v980 = vld [vmem:[%s658 + $0x1b0] sm:$0xf]
        %v981 = vld [vmem:[%s658 + $0x1b4] sm:$0xf]
        %v982 = vld [vmem:[%s658 + $0x1b8] sm:$0xf]
        %v983 = vld [vmem:[%s658 + $0x1bc] sm:$0xf]
        %v984 = vld [vmem:[%s658 + $0x1c0] sm:$0xf]
        %v985 = vld [vmem:[%s658 + $0x1c4] sm:$0xf]
        %v986 = vld [vmem:[%s658 + $0x1c8] sm:$0xf]
        %v987 = vld [vmem:[%s658 + $0x1cc] sm:$0xf]
        %v988 = vld [vmem:[%s658 + $0x1d0] sm:$0xf]
        %v989 = vld [vmem:[%s658 + $0x1d4] sm:$0xf]
        %v990 = vld [vmem:[%s658 + $0x1d8] sm:$0xf]
        %v991 = vld [vmem:[%s658 + $0x1dc] sm:$0xf]
        %v992 = vld [vmem:[%s658 + $0x1e0] sm:$0xf]
        %v993 = vld [vmem:[%s658 + $0x1e4] sm:$0xf]
        %v994 = vld [vmem:[%s658 + $0x1e8] sm:$0xf]
        %v995 = vld [vmem:[%s658 + $0x1ec] sm:$0xf]
        %v996 = vld [vmem:[%s658 + $0x1f0] sm:$0xf]
        %v997 = vld [vmem:[%s658 + $0x1f4] sm:$0xf]
        %v998 = vld [vmem:[%s658 + $0x1f8] sm:$0xf]
        %v999 = vld [vmem:[%s658 + $0x1fc] sm:$0xf]
        %v1016 = vunpack.c.l.b16 %v680
        %v1017 = vunpack.c.l.b16 %v681
        %v1018 = vunpack.c.l.b16 %v682
        %v1019 = vunpack.c.l.b16 %v683
        %v1020 = vunpack.c.l.b16 %v684
        %v1021 = vunpack.c.l.b16 %v685
        %v1022 = vunpack.c.l.b16 %v686
        %v1023 = vunpack.c.l.b16 %v687
        %v1024 = vunpack.c.l.b16 %v688
        %v1025 = vunpack.c.l.b16 %v689
        %v1026 = vunpack.c.l.b16 %v690
        %v1027 = vunpack.c.l.b16 %v691
        %v1028 = vunpack.c.l.b16 %v692
        %v1029 = vunpack.c.l.b16 %v693
        %v1030 = vunpack.c.l.b16 %v694
        %v1031 = vunpack.c.l.b16 %v695
        %v1032 = vpack.c.b16 %v1017, %v1016
        %v1033 = vpack.c.b16 %v1019, %v1018
        %v1034 = vpack.c.b16 %v1021, %v1020
        %v1035 = vpack.c.b16 %v1023, %v1022
        %v1036 = vpack.c.b16 %v1025, %v1024
        %v1037 = vpack.c.b16 %v1027, %v1026
        %v1038 = vpack.c.b16 %v1029, %v1028
        %v1039 = vpack.c.b16 %v1031, %v1030
        %v1072 = vunpack.c.l.b16 %v744
        %v1073 = vunpack.c.l.b16 %v745
        %v1074 = vunpack.c.l.b16 %v746
        %v1075 = vunpack.c.l.b16 %v747
        %v1076 = vunpack.c.l.b16 %v748
        %v1077 = vunpack.c.l.b16 %v749
        %v1078 = vunpack.c.l.b16 %v750
        %v1079 = vunpack.c.l.b16 %v751
        %v1080 = vunpack.c.l.b16 %v752
        %v1081 = vunpack.c.l.b16 %v753
        %v1082 = vunpack.c.l.b16 %v754
        %v1083 = vunpack.c.l.b16 %v755
        %v1084 = vunpack.c.l.b16 %v756
        %v1085 = vunpack.c.l.b16 %v757
        %v1086 = vunpack.c.l.b16 %v758
        %v1087 = vunpack.c.l.b16 %v759
        %v1088 = vunpack.c.l.b16 %v760
        %v1089 = vunpack.c.l.b16 %v761
        %v1090 = vunpack.c.l.b16 %v762
        %v1091 = vunpack.c.l.b16 %v763
        %v1092 = vunpack.c.l.b16 %v764
        %v1093 = vunpack.c.l.b16 %v765
        %v1094 = vunpack.c.l.b16 %v766
        %v1095 = vunpack.c.l.b16 %v767
        %v1096 = vunpack.c.l.b16 %v768
        %v1097 = vunpack.c.l.b16 %v769
        %v1098 = vunpack.c.l.b16 %v770
        %v1099 = vunpack.c.l.b16 %v771
        %v1100 = vunpack.c.l.b16 %v772
        %v1101 = vunpack.c.l.b16 %v773
        %v1102 = vunpack.c.l.b16 %v774
        %v1103 = vunpack.c.l.b16 %v775
        %v1104 = vpack.c.b16 %v1073, %v1072
        %v1105 = vpack.c.b16 %v1075, %v1074
        %v1106 = vpack.c.b16 %v1077, %v1076
        %v1107 = vpack.c.b16 %v1079, %v1078
        %v1108 = vpack.c.b16 %v1081, %v1080
        %v1109 = vpack.c.b16 %v1083, %v1082
        %v1110 = vpack.c.b16 %v1085, %v1084
        %v1111 = vpack.c.b16 %v1087, %v1086
        %v1112 = vpack.c.b16 %v1089, %v1088
        %v1113 = vpack.c.b16 %v1091, %v1090
        %v1114 = vpack.c.b16 %v1093, %v1092
        %v1115 = vpack.c.b16 %v1095, %v1094
        %v1116 = vpack.c.b16 %v1097, %v1096
        %v1117 = vpack.c.b16 %v1099, %v1098
        %v1118 = vpack.c.b16 %v1101, %v1100
        %v1119 = vpack.c.b16 %v1103, %v1102
        %vm1120 = vcmask 261120
        %v1122 = vsel %vm1120, %v1032, 0
        %v1125 = vsel %vm1120, %v1033, 0
        %v1128 = vsel %vm1120, %v1034, 0
        %v1131 = vsel %vm1120, %v1035, 0
        %v1134 = vsel %vm1120, %v1036, 0
        %v1137 = vsel %vm1120, %v1037, 0
        %v1140 = vsel %vm1120, %v1038, 0
        %v1143 = vsel %vm1120, %v1039, 0
        %v1146 = vsel %vm1120, %v1104, 0
        %v1149 = vsel %vm1120, %v1105, 0
        %v1152 = vsel %vm1120, %v1106, 0
        %v1155 = vsel %vm1120, %v1107, 0
        %v1158 = vsel %vm1120, %v1108, 0
        %v1161 = vsel %vm1120, %v1109, 0
        %v1164 = vsel %vm1120, %v1110, 0
        %v1167 = vsel %vm1120, %v1111, 0
        %v1170 = vsel %vm1120, %v1112, 0
        %v1173 = vsel %vm1120, %v1113, 0
        %v1176 = vsel %vm1120, %v1114, 0
        %v1179 = vsel %vm1120, %v1115, 0
        %v1182 = vsel %vm1120, %v1116, 0
        %v1185 = vsel %vm1120, %v1117, 0
        %v1188 = vsel %vm1120, %v1118, 0
        %v1191 = vsel %vm1120, %v1119, 0
        %1193 = vmatpush.bf16.xpose.msra.mxu0 %v1167
        %1194 = vmatpush.bf16.xpose.msra.mxu0 %v1164
        %1195 = vmatpush.bf16.xpose.msra.mxu0 %v1161
        %1196 = vmatpush.bf16.xpose.msra.mxu0 %v1158
        %1197 = vmatpush.bf16.xpose.msra.mxu0 %v1155
        %1198 = vmatpush.bf16.xpose.msra.mxu0 %v1152
        %1199 = vmatpush.bf16.xpose.msra.mxu0 %v1149
        %1200 = vmatpush.bf16.xpose.msra.mxu0 %v1146
        %1201 = vmatmul.bf16.gmra.mxu0 %v1122
        %v1202 = vpop.f32.mrf.mxu0
        %v1203 = vadd.f32 0.0, %v1202
        %v1204 = vpop.f32.mrf.mxu0
        %v1205 = vadd.f32 0.0, %v1204
        %1206 = vmatmul.bf16.gmra.mxu0 %v1125
        %v1207 = vpop.f32.mrf.mxu0
        %v1208 = vadd.f32 0.0, %v1207
        %v1209 = vpop.f32.mrf.mxu0
        %v1210 = vadd.f32 0.0, %v1209
        %1211 = vmatmul.bf16.gmra.mxu0 %v1128
        %v1212 = vpop.f32.mrf.mxu0
        %v1213 = vadd.f32 0.0, %v1212
        %v1214 = vpop.f32.mrf.mxu0
        %v1215 = vadd.f32 0.0, %v1214
        %1216 = vmatmul.bf16.gmra.mxu0 %v1131
        %v1217 = vpop.f32.mrf.mxu0
        %v1218 = vadd.f32 0.0, %v1217
        %v1219 = vpop.f32.mrf.mxu0
        %v1220 = vadd.f32 0.0, %v1219
        %1221 = vmatmul.bf16.gmra.mxu0 %v1134
        %v1222 = vpop.f32.mrf.mxu0
        %v1223 = vadd.f32 0.0, %v1222
        %v1224 = vpop.f32.mrf.mxu0
        %v1225 = vadd.f32 0.0, %v1224
        %1226 = vmatmul.bf16.gmra.mxu0 %v1137
        %v1227 = vpop.f32.mrf.mxu0
        %v1228 = vadd.f32 0.0, %v1227
        %v1229 = vpop.f32.mrf.mxu0
        %v1230 = vadd.f32 0.0, %v1229
        %1231 = vmatmul.bf16.gmra.mxu0 %v1140
        %v1232 = vpop.f32.mrf.mxu0
        %v1233 = vadd.f32 0.0, %v1232
        %v1234 = vpop.f32.mrf.mxu0
        %v1235 = vadd.f32 0.0, %v1234
        %1236 = vmatmul.bf16.gmra.mxu0 %v1143
        %v1237 = vpop.f32.mrf.mxu0
        %v1238 = vadd.f32 0.0, %v1237
        %v1239 = vpop.f32.mrf.mxu0
        %v1240 = vadd.f32 0.0, %v1239
        %1241 = vdwg.mxu0
        %1242 = vmatpush.bf16.xpose.msra.mxu0 %v1191
        %1243 = vmatpush.bf16.xpose.msra.mxu0 %v1188
        %1244 = vmatpush.bf16.xpose.msra.mxu0 %v1185
        %1245 = vmatpush.bf16.xpose.msra.mxu0 %v1182
        %1246 = vmatpush.bf16.xpose.msra.mxu0 %v1179
        %1247 = vmatpush.bf16.xpose.msra.mxu0 %v1176
        %1248 = vmatpush.bf16.xpose.msra.mxu0 %v1173
        %1249 = vmatpush.bf16.xpose.msra.mxu0 %v1170
        %1250 = vmatmul.bf16.gmra.mxu0 %v1122
        %v1251 = vpop.f32.mrf.mxu0
        %v1252 = vadd.f32 0.0, %v1251
        %v1253 = vpop.f32.mrf.mxu0
        %v1254 = vadd.f32 0.0, %v1253
        %1255 = vmatmul.bf16.gmra.mxu0 %v1125
        %v1256 = vpop.f32.mrf.mxu0
        %v1257 = vadd.f32 0.0, %v1256
        %v1258 = vpop.f32.mrf.mxu0
        %v1259 = vadd.f32 0.0, %v1258
        %1260 = vmatmul.bf16.gmra.mxu0 %v1128
        %v1261 = vpop.f32.mrf.mxu0
        %v1262 = vadd.f32 0.0, %v1261
        %v1263 = vpop.f32.mrf.mxu0
        %v1264 = vadd.f32 0.0, %v1263
        %1265 = vmatmul.bf16.gmra.mxu0 %v1131
        %v1266 = vpop.f32.mrf.mxu0
        %v1267 = vadd.f32 0.0, %v1266
        %v1268 = vpop.f32.mrf.mxu0
        %v1269 = vadd.f32 0.0, %v1268
        %1270 = vmatmul.bf16.gmra.mxu0 %v1134
        %v1271 = vpop.f32.mrf.mxu0
        %v1272 = vadd.f32 0.0, %v1271
        %v1273 = vpop.f32.mrf.mxu0
        %v1274 = vadd.f32 0.0, %v1273
        %1275 = vmatmul.bf16.gmra.mxu0 %v1137
        %v1276 = vpop.f32.mrf.mxu0
        %v1277 = vadd.f32 0.0, %v1276
        %v1278 = vpop.f32.mrf.mxu0
        %v1279 = vadd.f32 0.0, %v1278
        %1280 = vmatmul.bf16.gmra.mxu0 %v1140
        %v1281 = vpop.f32.mrf.mxu0
        %v1282 = vadd.f32 0.0, %v1281
        %v1283 = vpop.f32.mrf.mxu0
        %v1284 = vadd.f32 0.0, %v1283
        %1285 = vmatmul.bf16.gmra.mxu0 %v1143
        %v1286 = vpop.f32.mrf.mxu0
        %v1287 = vadd.f32 0.0, %v1286
        %v1288 = vpop.f32.mrf.mxu0
        %v1289 = vadd.f32 0.0, %v1288
        %1290 = vdwg.mxu0
        %v1307 = vunpack.c.l.b16 %v696
        %v1308 = vunpack.c.l.b16 %v697
        %v1309 = vunpack.c.l.b16 %v698
        %v1310 = vunpack.c.l.b16 %v699
        %v1311 = vunpack.c.l.b16 %v700
        %v1312 = vunpack.c.l.b16 %v701
        %v1313 = vunpack.c.l.b16 %v702
        %v1314 = vunpack.c.l.b16 %v703
        %v1315 = vunpack.c.l.b16 %v704
        %v1316 = vunpack.c.l.b16 %v705
        %v1317 = vunpack.c.l.b16 %v706
        %v1318 = vunpack.c.l.b16 %v707
        %v1319 = vunpack.c.l.b16 %v708
        %v1320 = vunpack.c.l.b16 %v709
        %v1321 = vunpack.c.l.b16 %v710
        %v1322 = vunpack.c.l.b16 %v711
        %v1323 = vpack.c.b16 %v1308, %v1307
        %v1324 = vpack.c.b16 %v1310, %v1309
        %v1325 = vpack.c.b16 %v1312, %v1311
        %v1326 = vpack.c.b16 %v1314, %v1313
        %v1327 = vpack.c.b16 %v1316, %v1315
        %v1328 = vpack.c.b16 %v1318, %v1317
        %v1329 = vpack.c.b16 %v1320, %v1319
        %v1330 = vpack.c.b16 %v1322, %v1321
        %v1363 = vunpack.c.l.b16 %v776
        %v1364 = vunpack.c.l.b16 %v777
        %v1365 = vunpack.c.l.b16 %v778
        %v1366 = vunpack.c.l.b16 %v779
        %v1367 = vunpack.c.l.b16 %v780
        %v1368 = vunpack.c.l.b16 %v781
        %v1369 = vunpack.c.l.b16 %v782
        %v1370 = vunpack.c.l.b16 %v783
        %v1371 = vunpack.c.l.b16 %v784
        %v1372 = vunpack.c.l.b16 %v785
        %v1373 = vunpack.c.l.b16 %v786
        %v1374 = vunpack.c.l.b16 %v787
        %v1375 = vunpack.c.l.b16 %v788
        %v1376 = vunpack.c.l.b16 %v789
        %v1377 = vunpack.c.l.b16 %v790
        %v1378 = vunpack.c.l.b16 %v791
        %v1379 = vunpack.c.l.b16 %v792
        %v1380 = vunpack.c.l.b16 %v793
        %v1381 = vunpack.c.l.b16 %v794
        %v1382 = vunpack.c.l.b16 %v795
        %v1383 = vunpack.c.l.b16 %v796
        %v1384 = vunpack.c.l.b16 %v797
        %v1385 = vunpack.c.l.b16 %v798
        %v1386 = vunpack.c.l.b16 %v799
        %v1387 = vunpack.c.l.b16 %v800
        %v1388 = vunpack.c.l.b16 %v801
        %v1389 = vunpack.c.l.b16 %v802
        %v1390 = vunpack.c.l.b16 %v803
        %v1391 = vunpack.c.l.b16 %v804
        %v1392 = vunpack.c.l.b16 %v805
        %v1393 = vunpack.c.l.b16 %v806
        %v1394 = vunpack.c.l.b16 %v807
        %v1395 = vpack.c.b16 %v1364, %v1363
        %v1396 = vpack.c.b16 %v1366, %v1365
        %v1397 = vpack.c.b16 %v1368, %v1367
        %v1398 = vpack.c.b16 %v1370, %v1369
        %v1399 = vpack.c.b16 %v1372, %v1371
        %v1400 = vpack.c.b16 %v1374, %v1373
        %v1401 = vpack.c.b16 %v1376, %v1375
        %v1402 = vpack.c.b16 %v1378, %v1377
        %v1403 = vpack.c.b16 %v1380, %v1379
        %v1404 = vpack.c.b16 %v1382, %v1381
        %v1405 = vpack.c.b16 %v1384, %v1383
        %v1406 = vpack.c.b16 %v1386, %v1385
        %v1407 = vpack.c.b16 %v1388, %v1387
        %v1408 = vpack.c.b16 %v1390, %v1389
        %v1409 = vpack.c.b16 %v1392, %v1391
        %v1410 = vpack.c.b16 %v1394, %v1393
        %v1412 = vsel %vm1120, %v1323, 0
        %v1415 = vsel %vm1120, %v1324, 0
        %v1418 = vsel %vm1120, %v1325, 0
        %v1421 = vsel %vm1120, %v1326, 0
        %v1424 = vsel %vm1120, %v1327, 0
        %v1427 = vsel %vm1120, %v1328, 0
        %v1430 = vsel %vm1120, %v1329, 0
        %v1433 = vsel %vm1120, %v1330, 0
        %v1436 = vsel %vm1120, %v1395, 0
        %v1439 = vsel %vm1120, %v1396, 0
        %v1442 = vsel %vm1120, %v1397, 0
        %v1445 = vsel %vm1120, %v1398, 0
        %v1448 = vsel %vm1120, %v1399, 0
        %v1451 = vsel %vm1120, %v1400, 0
        %v1454 = vsel %vm1120, %v1401, 0
        %v1457 = vsel %vm1120, %v1402, 0
        %v1460 = vsel %vm1120, %v1403, 0
        %v1463 = vsel %vm1120, %v1404, 0
        %v1466 = vsel %vm1120, %v1405, 0
        %v1469 = vsel %vm1120, %v1406, 0
        %v1472 = vsel %vm1120, %v1407, 0
        %v1475 = vsel %vm1120, %v1408, 0
        %v1478 = vsel %vm1120, %v1409, 0
        %v1481 = vsel %vm1120, %v1410, 0
        %1483 = vmatpush.bf16.xpose.msra.mxu0 %v1457
        %1484 = vmatpush.bf16.xpose.msra.mxu0 %v1454
        %1485 = vmatpush.bf16.xpose.msra.mxu0 %v1451
        %1486 = vmatpush.bf16.xpose.msra.mxu0 %v1448
        %1487 = vmatpush.bf16.xpose.msra.mxu0 %v1445
        %1488 = vmatpush.bf16.xpose.msra.mxu0 %v1442
        %1489 = vmatpush.bf16.xpose.msra.mxu0 %v1439
        %1490 = vmatpush.bf16.xpose.msra.mxu0 %v1436
        %1491 = vmatmul.bf16.gmra.mxu0 %v1412
        %v1492 = vpop.f32.mrf.mxu0
        %v1493 = vadd.f32 0.0, %v1492
        %v1494 = vpop.f32.mrf.mxu0
        %v1495 = vadd.f32 0.0, %v1494
        %1496 = vmatmul.bf16.gmra.mxu0 %v1415
        %v1497 = vpop.f32.mrf.mxu0
        %v1498 = vadd.f32 0.0, %v1497
        %v1499 = vpop.f32.mrf.mxu0
        %v1500 = vadd.f32 0.0, %v1499
        %1501 = vmatmul.bf16.gmra.mxu0 %v1418
        %v1502 = vpop.f32.mrf.mxu0
        %v1503 = vadd.f32 0.0, %v1502
        %v1504 = vpop.f32.mrf.mxu0
        %v1505 = vadd.f32 0.0, %v1504
        %1506 = vmatmul.bf16.gmra.mxu0 %v1421
        %v1507 = vpop.f32.mrf.mxu0
        %v1508 = vadd.f32 0.0, %v1507
        %v1509 = vpop.f32.mrf.mxu0
        %v1510 = vadd.f32 0.0, %v1509
        %1511 = vmatmul.bf16.gmra.mxu0 %v1424
        %v1512 = vpop.f32.mrf.mxu0
        %v1513 = vadd.f32 0.0, %v1512
        %v1514 = vpop.f32.mrf.mxu0
        %v1515 = vadd.f32 0.0, %v1514
        %1516 = vmatmul.bf16.gmra.mxu0 %v1427
        %v1517 = vpop.f32.mrf.mxu0
        %v1518 = vadd.f32 0.0, %v1517
        %v1519 = vpop.f32.mrf.mxu0
        %v1520 = vadd.f32 0.0, %v1519
        %1521 = vmatmul.bf16.gmra.mxu0 %v1430
        %v1522 = vpop.f32.mrf.mxu0
        %v1523 = vadd.f32 0.0, %v1522
        %v1524 = vpop.f32.mrf.mxu0
        %v1525 = vadd.f32 0.0, %v1524
        %1526 = vmatmul.bf16.gmra.mxu0 %v1433
        %v1527 = vpop.f32.mrf.mxu0
        %v1528 = vadd.f32 0.0, %v1527
        %v1529 = vpop.f32.mrf.mxu0
        %v1530 = vadd.f32 0.0, %v1529
        %1531 = vdwg.mxu0
        %1532 = vmatpush.bf16.xpose.msra.mxu0 %v1481
        %1533 = vmatpush.bf16.xpose.msra.mxu0 %v1478
        %1534 = vmatpush.bf16.xpose.msra.mxu0 %v1475
        %1535 = vmatpush.bf16.xpose.msra.mxu0 %v1472
        %1536 = vmatpush.bf16.xpose.msra.mxu0 %v1469
        %1537 = vmatpush.bf16.xpose.msra.mxu0 %v1466
        %1538 = vmatpush.bf16.xpose.msra.mxu0 %v1463
        %1539 = vmatpush.bf16.xpose.msra.mxu0 %v1460
        %1540 = vmatmul.bf16.gmra.mxu0 %v1412
        %v1541 = vpop.f32.mrf.mxu0
        %v1542 = vadd.f32 0.0, %v1541
        %v1543 = vpop.f32.mrf.mxu0
        %v1544 = vadd.f32 0.0, %v1543
        %1545 = vmatmul.bf16.gmra.mxu0 %v1415
        %v1546 = vpop.f32.mrf.mxu0
        %v1547 = vadd.f32 0.0, %v1546
        %v1548 = vpop.f32.mrf.mxu0
        %v1549 = vadd.f32 0.0, %v1548
        %1550 = vmatmul.bf16.gmra.mxu0 %v1418
        %v1551 = vpop.f32.mrf.mxu0
        %v1552 = vadd.f32 0.0, %v1551
        %v1553 = vpop.f32.mrf.mxu0
        %v1554 = vadd.f32 0.0, %v1553
        %1555 = vmatmul.bf16.gmra.mxu0 %v1421
        %v1556 = vpop.f32.mrf.mxu0
        %v1557 = vadd.f32 0.0, %v1556
        %v1558 = vpop.f32.mrf.mxu0
        %v1559 = vadd.f32 0.0, %v1558
        %1560 = vmatmul.bf16.gmra.mxu0 %v1424
        %v1561 = vpop.f32.mrf.mxu0
        %v1562 = vadd.f32 0.0, %v1561
        %v1563 = vpop.f32.mrf.mxu0
        %v1564 = vadd.f32 0.0, %v1563
        %1565 = vmatmul.bf16.gmra.mxu0 %v1427
        %v1566 = vpop.f32.mrf.mxu0
        %v1567 = vadd.f32 0.0, %v1566
        %v1568 = vpop.f32.mrf.mxu0
        %v1569 = vadd.f32 0.0, %v1568
        %1570 = vmatmul.bf16.gmra.mxu0 %v1430
        %v1571 = vpop.f32.mrf.mxu0
        %v1572 = vadd.f32 0.0, %v1571
        %v1573 = vpop.f32.mrf.mxu0
        %v1574 = vadd.f32 0.0, %v1573
        %1575 = vmatmul.bf16.gmra.mxu0 %v1433
        %v1576 = vpop.f32.mrf.mxu0
        %v1577 = vadd.f32 0.0, %v1576
        %v1578 = vpop.f32.mrf.mxu0
        %v1579 = vadd.f32 0.0, %v1578
        %1580 = vdwg.mxu0
        %v1597 = vunpack.c.l.b16 %v712
        %v1598 = vunpack.c.l.b16 %v713
        %v1599 = vunpack.c.l.b16 %v714
        %v1600 = vunpack.c.l.b16 %v715
        %v1601 = vunpack.c.l.b16 %v716
        %v1602 = vunpack.c.l.b16 %v717
        %v1603 = vunpack.c.l.b16 %v718
        %v1604 = vunpack.c.l.b16 %v719
        %v1605 = vunpack.c.l.b16 %v720
        %v1606 = vunpack.c.l.b16 %v721
        %v1607 = vunpack.c.l.b16 %v722
        %v1608 = vunpack.c.l.b16 %v723
        %v1609 = vunpack.c.l.b16 %v724
        %v1610 = vunpack.c.l.b16 %v725
        %v1611 = vunpack.c.l.b16 %v726
        %v1612 = vunpack.c.l.b16 %v727
        %v1613 = vpack.c.b16 %v1598, %v1597
        %v1614 = vpack.c.b16 %v1600, %v1599
        %v1615 = vpack.c.b16 %v1602, %v1601
        %v1616 = vpack.c.b16 %v1604, %v1603
        %v1617 = vpack.c.b16 %v1606, %v1605
        %v1618 = vpack.c.b16 %v1608, %v1607
        %v1619 = vpack.c.b16 %v1610, %v1609
        %v1620 = vpack.c.b16 %v1612, %v1611
        %v1653 = vunpack.c.l.b16 %v808
        %v1654 = vunpack.c.l.b16 %v809
        %v1655 = vunpack.c.l.b16 %v810
        %v1656 = vunpack.c.l.b16 %v811
        %v1657 = vunpack.c.l.b16 %v812
        %v1658 = vunpack.c.l.b16 %v813
        %v1659 = vunpack.c.l.b16 %v814
        %v1660 = vunpack.c.l.b16 %v815
        %v1661 = vunpack.c.l.b16 %v816
        %v1662 = vunpack.c.l.b16 %v817
        %v1663 = vunpack.c.l.b16 %v818
        %v1664 = vunpack.c.l.b16 %v819
        %v1665 = vunpack.c.l.b16 %v820
        %v1666 = vunpack.c.l.b16 %v821
        %v1667 = vunpack.c.l.b16 %v822
        %v1668 = vunpack.c.l.b16 %v823
        %v1669 = vunpack.c.l.b16 %v824
        %v1670 = vunpack.c.l.b16 %v825
        %v1671 = vunpack.c.l.b16 %v826
        %v1672 = vunpack.c.l.b16 %v827
        %v1673 = vunpack.c.l.b16 %v828
        %v1674 = vunpack.c.l.b16 %v829
        %v1675 = vunpack.c.l.b16 %v830
        %v1676 = vunpack.c.l.b16 %v831
        %v1677 = vunpack.c.l.b16 %v832
        %v1678 = vunpack.c.l.b16 %v833
        %v1679 = vunpack.c.l.b16 %v834
        %v1680 = vunpack.c.l.b16 %v835
        %v1681 = vunpack.c.l.b16 %v836
        %v1682 = vunpack.c.l.b16 %v837
        %v1683 = vunpack.c.l.b16 %v838
        %v1684 = vunpack.c.l.b16 %v839
        %v1685 = vpack.c.b16 %v1654, %v1653
        %v1686 = vpack.c.b16 %v1656, %v1655
        %v1687 = vpack.c.b16 %v1658, %v1657
        %v1688 = vpack.c.b16 %v1660, %v1659
        %v1689 = vpack.c.b16 %v1662, %v1661
        %v1690 = vpack.c.b16 %v1664, %v1663
        %v1691 = vpack.c.b16 %v1666, %v1665
        %v1692 = vpack.c.b16 %v1668, %v1667
        %v1693 = vpack.c.b16 %v1670, %v1669
        %v1694 = vpack.c.b16 %v1672, %v1671
        %v1695 = vpack.c.b16 %v1674, %v1673
        %v1696 = vpack.c.b16 %v1676, %v1675
        %v1697 = vpack.c.b16 %v1678, %v1677
        %v1698 = vpack.c.b16 %v1680, %v1679
        %v1699 = vpack.c.b16 %v1682, %v1681
        %v1700 = vpack.c.b16 %v1684, %v1683
        %v1702 = vsel %vm1120, %v1613, 0
        %v1705 = vsel %vm1120, %v1614, 0
        %v1708 = vsel %vm1120, %v1615, 0
        %v1711 = vsel %vm1120, %v1616, 0
        %v1714 = vsel %vm1120, %v1617, 0
        %v1717 = vsel %vm1120, %v1618, 0
        %v1720 = vsel %vm1120, %v1619, 0
        %v1723 = vsel %vm1120, %v1620, 0
        %v1726 = vsel %vm1120, %v1685, 0
        %v1729 = vsel %vm1120, %v1686, 0
        %v1732 = vsel %vm1120, %v1687, 0
        %v1735 = vsel %vm1120, %v1688, 0
        %v1738 = vsel %vm1120, %v1689, 0
        %v1741 = vsel %vm1120, %v1690, 0
        %v1744 = vsel %vm1120, %v1691, 0
        %v1747 = vsel %vm1120, %v1692, 0
        %v1750 = vsel %vm1120, %v1693, 0
        %v1753 = vsel %vm1120, %v1694, 0
        %v1756 = vsel %vm1120, %v1695, 0
        %v1759 = vsel %vm1120, %v1696, 0
        %v1762 = vsel %vm1120, %v1697, 0
        %v1765 = vsel %vm1120, %v1698, 0
        %v1768 = vsel %vm1120, %v1699, 0
        %v1771 = vsel %vm1120, %v1700, 0
        %1773 = vmatpush.bf16.xpose.msra.mxu0 %v1747
        %1774 = vmatpush.bf16.xpose.msra.mxu0 %v1744
        %1775 = vmatpush.bf16.xpose.msra.mxu0 %v1741
        %1776 = vmatpush.bf16.xpose.msra.mxu0 %v1738
        %1777 = vmatpush.bf16.xpose.msra.mxu0 %v1735
        %1778 = vmatpush.bf16.xpose.msra.mxu0 %v1732
        %1779 = vmatpush.bf16.xpose.msra.mxu0 %v1729
        %1780 = vmatpush.bf16.xpose.msra.mxu0 %v1726
        %1781 = vmatmul.bf16.gmra.mxu0 %v1702
        %v1782 = vpop.f32.mrf.mxu0
        %v1783 = vadd.f32 0.0, %v1782
        %v1784 = vpop.f32.mrf.mxu0
        %v1785 = vadd.f32 0.0, %v1784
        %1786 = vmatmul.bf16.gmra.mxu0 %v1705
        %v1787 = vpop.f32.mrf.mxu0
        %v1788 = vadd.f32 0.0, %v1787
        %v1789 = vpop.f32.mrf.mxu0
        %v1790 = vadd.f32 0.0, %v1789
        %1791 = vmatmul.bf16.gmra.mxu0 %v1708
        %v1792 = vpop.f32.mrf.mxu0
        %v1793 = vadd.f32 0.0, %v1792
        %v1794 = vpop.f32.mrf.mxu0
        %v1795 = vadd.f32 0.0, %v1794
        %1796 = vmatmul.bf16.gmra.mxu0 %v1711
        %v1797 = vpop.f32.mrf.mxu0
        %v1798 = vadd.f32 0.0, %v1797
        %v1799 = vpop.f32.mrf.mxu0
        %v1800 = vadd.f32 0.0, %v1799
        %1801 = vmatmul.bf16.gmra.mxu0 %v1714
        %v1802 = vpop.f32.mrf.mxu0
        %v1803 = vadd.f32 0.0, %v1802
        %v1804 = vpop.f32.mrf.mxu0
        %v1805 = vadd.f32 0.0, %v1804
        %1806 = vmatmul.bf16.gmra.mxu0 %v1717
        %v1807 = vpop.f32.mrf.mxu0
        %v1808 = vadd.f32 0.0, %v1807
        %v1809 = vpop.f32.mrf.mxu0
        %v1810 = vadd.f32 0.0, %v1809
        %1811 = vmatmul.bf16.gmra.mxu0 %v1720
        %v1812 = vpop.f32.mrf.mxu0
        %v1813 = vadd.f32 0.0, %v1812
        %v1814 = vpop.f32.mrf.mxu0
        %v1815 = vadd.f32 0.0, %v1814
        %1816 = vmatmul.bf16.gmra.mxu0 %v1723
        %v1817 = vpop.f32.mrf.mxu0
        %v1818 = vadd.f32 0.0, %v1817
        %v1819 = vpop.f32.mrf.mxu0
        %v1820 = vadd.f32 0.0, %v1819
        %1821 = vdwg.mxu0
        %1822 = vmatpush.bf16.xpose.msra.mxu0 %v1771
        %1823 = vmatpush.bf16.xpose.msra.mxu0 %v1768
        %1824 = vmatpush.bf16.xpose.msra.mxu0 %v1765
        %1825 = vmatpush.bf16.xpose.msra.mxu0 %v1762
        %1826 = vmatpush.bf16.xpose.msra.mxu0 %v1759
        %1827 = vmatpush.bf16.xpose.msra.mxu0 %v1756
        %1828 = vmatpush.bf16.xpose.msra.mxu0 %v1753
        %1829 = vmatpush.bf16.xpose.msra.mxu0 %v1750
        %1830 = vmatmul.bf16.gmra.mxu0 %v1702
        %v1831 = vpop.f32.mrf.mxu0
        %v1832 = vadd.f32 0.0, %v1831
        %v1833 = vpop.f32.mrf.mxu0
        %v1834 = vadd.f32 0.0, %v1833
        %1835 = vmatmul.bf16.gmra.mxu0 %v1705
        %v1836 = vpop.f32.mrf.mxu0
        %v1837 = vadd.f32 0.0, %v1836
        %v1838 = vpop.f32.mrf.mxu0
        %v1839 = vadd.f32 0.0, %v1838
        %1840 = vmatmul.bf16.gmra.mxu0 %v1708
        %v1841 = vpop.f32.mrf.mxu0
        %v1842 = vadd.f32 0.0, %v1841
        %v1843 = vpop.f32.mrf.mxu0
        %v1844 = vadd.f32 0.0, %v1843
        %1845 = vmatmul.bf16.gmra.mxu0 %v1711
        %v1846 = vpop.f32.mrf.mxu0
        %v1847 = vadd.f32 0.0, %v1846
        %v1848 = vpop.f32.mrf.mxu0
        %v1849 = vadd.f32 0.0, %v1848
        %1850 = vmatmul.bf16.gmra.mxu0 %v1714
        %v1851 = vpop.f32.mrf.mxu0
        %v1852 = vadd.f32 0.0, %v1851
        %v1853 = vpop.f32.mrf.mxu0
        %v1854 = vadd.f32 0.0, %v1853
        %1855 = vmatmul.bf16.gmra.mxu0 %v1717
        %v1856 = vpop.f32.mrf.mxu0
        %v1857 = vadd.f32 0.0, %v1856
        %v1858 = vpop.f32.mrf.mxu0
        %v1859 = vadd.f32 0.0, %v1858
        %1860 = vmatmul.bf16.gmra.mxu0 %v1720
        %v1861 = vpop.f32.mrf.mxu0
        %v1862 = vadd.f32 0.0, %v1861
        %v1863 = vpop.f32.mrf.mxu0
        %v1864 = vadd.f32 0.0, %v1863
        %1865 = vmatmul.bf16.gmra.mxu0 %v1723
        %v1866 = vpop.f32.mrf.mxu0
        %v1867 = vadd.f32 0.0, %v1866
        %v1868 = vpop.f32.mrf.mxu0
        %v1869 = vadd.f32 0.0, %v1868
        %1870 = vdwg.mxu0
        %v1887 = vunpack.c.l.b16 %v728
        %v1888 = vunpack.c.l.b16 %v729
        %v1889 = vunpack.c.l.b16 %v730
        %v1890 = vunpack.c.l.b16 %v731
        %v1891 = vunpack.c.l.b16 %v732
        %v1892 = vunpack.c.l.b16 %v733
        %v1893 = vunpack.c.l.b16 %v734
        %v1894 = vunpack.c.l.b16 %v735
        %v1895 = vunpack.c.l.b16 %v736
        %v1896 = vunpack.c.l.b16 %v737
        %v1897 = vunpack.c.l.b16 %v738
        %v1898 = vunpack.c.l.b16 %v739
        %v1899 = vunpack.c.l.b16 %v740
        %v1900 = vunpack.c.l.b16 %v741
        %v1901 = vunpack.c.l.b16 %v742
        %v1902 = vunpack.c.l.b16 %v743
        %v1903 = vpack.c.b16 %v1888, %v1887
        %v1904 = vpack.c.b16 %v1890, %v1889
        %v1905 = vpack.c.b16 %v1892, %v1891
        %v1906 = vpack.c.b16 %v1894, %v1893
        %v1907 = vpack.c.b16 %v1896, %v1895
        %v1908 = vpack.c.b16 %v1898, %v1897
        %v1909 = vpack.c.b16 %v1900, %v1899
        %v1910 = vpack.c.b16 %v1902, %v1901
        %v1943 = vunpack.c.l.b16 %v840
        %v1944 = vunpack.c.l.b16 %v841
        %v1945 = vunpack.c.l.b16 %v842
        %v1946 = vunpack.c.l.b16 %v843
        %v1947 = vunpack.c.l.b16 %v844
        %v1948 = vunpack.c.l.b16 %v845
        %v1949 = vunpack.c.l.b16 %v846
        %v1950 = vunpack.c.l.b16 %v847
        %v1951 = vunpack.c.l.b16 %v848
        %v1952 = vunpack.c.l.b16 %v849
        %v1953 = vunpack.c.l.b16 %v850
        %v1954 = vunpack.c.l.b16 %v851
        %v1955 = vunpack.c.l.b16 %v852
        %v1956 = vunpack.c.l.b16 %v853
        %v1957 = vunpack.c.l.b16 %v854
        %v1958 = vunpack.c.l.b16 %v855
        %v1959 = vunpack.c.l.b16 %v856
        %v1960 = vunpack.c.l.b16 %v857
        %v1961 = vunpack.c.l.b16 %v858
        %v1962 = vunpack.c.l.b16 %v859
        %v1963 = vunpack.c.l.b16 %v860
        %v1964 = vunpack.c.l.b16 %v861
        %v1965 = vunpack.c.l.b16 %v862
        %v1966 = vunpack.c.l.b16 %v863
        %v1967 = vunpack.c.l.b16 %v864
        %v1968 = vunpack.c.l.b16 %v865
        %v1969 = vunpack.c.l.b16 %v866
        %v1970 = vunpack.c.l.b16 %v867
        %v1971 = vunpack.c.l.b16 %v868
        %v1972 = vunpack.c.l.b16 %v869
        %v1973 = vunpack.c.l.b16 %v870
        %v1974 = vunpack.c.l.b16 %v871
        %v1975 = vpack.c.b16 %v1944, %v1943
        %v1976 = vpack.c.b16 %v1946, %v1945
        %v1977 = vpack.c.b16 %v1948, %v1947
        %v1978 = vpack.c.b16 %v1950, %v1949
        %v1979 = vpack.c.b16 %v1952, %v1951
        %v1980 = vpack.c.b16 %v1954, %v1953
        %v1981 = vpack.c.b16 %v1956, %v1955
        %v1982 = vpack.c.b16 %v1958, %v1957
        %v1983 = vpack.c.b16 %v1960, %v1959
        %v1984 = vpack.c.b16 %v1962, %v1961
        %v1985 = vpack.c.b16 %v1964, %v1963
        %v1986 = vpack.c.b16 %v1966, %v1965
        %v1987 = vpack.c.b16 %v1968, %v1967
        %v1988 = vpack.c.b16 %v1970, %v1969
        %v1989 = vpack.c.b16 %v1972, %v1971
        %v1990 = vpack.c.b16 %v1974, %v1973
        %v1992 = vsel %vm1120, %v1903, 0
        %v1995 = vsel %vm1120, %v1904, 0
        %v1998 = vsel %vm1120, %v1905, 0
        %v2001 = vsel %vm1120, %v1906, 0
        %v2004 = vsel %vm1120, %v1907, 0
        %v2007 = vsel %vm1120, %v1908, 0
        %v2010 = vsel %vm1120, %v1909, 0
        %v2013 = vsel %vm1120, %v1910, 0
        %v2016 = vsel %vm1120, %v1975, 0
        %v2019 = vsel %vm1120, %v1976, 0
        %v2022 = vsel %vm1120, %v1977, 0
        %v2025 = vsel %vm1120, %v1978, 0
        %v2028 = vsel %vm1120, %v1979, 0
        %v2031 = vsel %vm1120, %v1980, 0
        %v2034 = vsel %vm1120, %v1981, 0
        %v2037 = vsel %vm1120, %v1982, 0
        %v2040 = vsel %vm1120, %v1983, 0
        %v2043 = vsel %vm1120, %v1984, 0
        %v2046 = vsel %vm1120, %v1985, 0
        %v2049 = vsel %vm1120, %v1986, 0
        %v2052 = vsel %vm1120, %v1987, 0
        %v2055 = vsel %vm1120, %v1988, 0
        %v2058 = vsel %vm1120, %v1989, 0
        %v2061 = vsel %vm1120, %v1990, 0
        %2063 = vmatpush.bf16.xpose.msra.mxu0 %v2037
        %2064 = vmatpush.bf16.xpose.msra.mxu0 %v2034
        %2065 = vmatpush.bf16.xpose.msra.mxu0 %v2031
        %2066 = vmatpush.bf16.xpose.msra.mxu0 %v2028
        %2067 = vmatpush.bf16.xpose.msra.mxu0 %v2025
        %2068 = vmatpush.bf16.xpose.msra.mxu0 %v2022
        %2069 = vmatpush.bf16.xpose.msra.mxu0 %v2019
        %2070 = vmatpush.bf16.xpose.msra.mxu0 %v2016
        %2071 = vmatmul.bf16.gmra.mxu0 %v1992
        %v2072 = vpop.f32.mrf.mxu0
        %v2073 = vadd.f32 0.0, %v2072
        %v2074 = vpop.f32.mrf.mxu0
        %v2075 = vadd.f32 0.0, %v2074
        %2076 = vmatmul.bf16.gmra.mxu0 %v1995
        %v2077 = vpop.f32.mrf.mxu0
        %v2078 = vadd.f32 0.0, %v2077
        %v2079 = vpop.f32.mrf.mxu0
        %v2080 = vadd.f32 0.0, %v2079
        %2081 = vmatmul.bf16.gmra.mxu0 %v1998
        %v2082 = vpop.f32.mrf.mxu0
        %v2083 = vadd.f32 0.0, %v2082
        %v2084 = vpop.f32.mrf.mxu0
        %v2085 = vadd.f32 0.0, %v2084
        %2086 = vmatmul.bf16.gmra.mxu0 %v2001
        %v2087 = vpop.f32.mrf.mxu0
        %v2088 = vadd.f32 0.0, %v2087
        %v2089 = vpop.f32.mrf.mxu0
        %v2090 = vadd.f32 0.0, %v2089
        %2091 = vmatmul.bf16.gmra.mxu0 %v2004
        %v2092 = vpop.f32.mrf.mxu0
        %v2093 = vadd.f32 0.0, %v2092
        %v2094 = vpop.f32.mrf.mxu0
        %v2095 = vadd.f32 0.0, %v2094
        %2096 = vmatmul.bf16.gmra.mxu0 %v2007
        %v2097 = vpop.f32.mrf.mxu0
        %v2098 = vadd.f32 0.0, %v2097
        %v2099 = vpop.f32.mrf.mxu0
        %v2100 = vadd.f32 0.0, %v2099
        %2101 = vmatmul.bf16.gmra.mxu0 %v2010
        %v2102 = vpop.f32.mrf.mxu0
        %v2103 = vadd.f32 0.0, %v2102
        %v2104 = vpop.f32.mrf.mxu0
        %v2105 = vadd.f32 0.0, %v2104
        %2106 = vmatmul.bf16.gmra.mxu0 %v2013
        %v2107 = vpop.f32.mrf.mxu0
        %v2108 = vadd.f32 0.0, %v2107
        %v2109 = vpop.f32.mrf.mxu0
        %v2110 = vadd.f32 0.0, %v2109
        %2111 = vdwg.mxu0
        %2112 = vmatpush.bf16.xpose.msra.mxu0 %v2061
        %2113 = vmatpush.bf16.xpose.msra.mxu0 %v2058
        %2114 = vmatpush.bf16.xpose.msra.mxu0 %v2055
        %2115 = vmatpush.bf16.xpose.msra.mxu0 %v2052
        %2116 = vmatpush.bf16.xpose.msra.mxu0 %v2049
        %2117 = vmatpush.bf16.xpose.msra.mxu0 %v2046
        %2118 = vmatpush.bf16.xpose.msra.mxu0 %v2043
        %2119 = vmatpush.bf16.xpose.msra.mxu0 %v2040
        %2120 = vmatmul.bf16.gmra.mxu0 %v1992
        %v2121 = vpop.f32.mrf.mxu0
        %v2122 = vadd.f32 0.0, %v2121
        %v2123 = vpop.f32.mrf.mxu0
        %v2124 = vadd.f32 0.0, %v2123
        %2125 = vmatmul.bf16.gmra.mxu0 %v1995
        %v2126 = vpop.f32.mrf.mxu0
        %v2127 = vadd.f32 0.0, %v2126
        %v2128 = vpop.f32.mrf.mxu0
        %v2129 = vadd.f32 0.0, %v2128
        %2130 = vmatmul.bf16.gmra.mxu0 %v1998
        %v2131 = vpop.f32.mrf.mxu0
        %v2132 = vadd.f32 0.0, %v2131
        %v2133 = vpop.f32.mrf.mxu0
        %v2134 = vadd.f32 0.0, %v2133
        %2135 = vmatmul.bf16.gmra.mxu0 %v2001
        %v2136 = vpop.f32.mrf.mxu0
        %v2137 = vadd.f32 0.0, %v2136
        %v2138 = vpop.f32.mrf.mxu0
        %v2139 = vadd.f32 0.0, %v2138
        %2140 = vmatmul.bf16.gmra.mxu0 %v2004
        %v2141 = vpop.f32.mrf.mxu0
        %v2142 = vadd.f32 0.0, %v2141
        %v2143 = vpop.f32.mrf.mxu0
        %v2144 = vadd.f32 0.0, %v2143
        %2145 = vmatmul.bf16.gmra.mxu0 %v2007
        %v2146 = vpop.f32.mrf.mxu0
        %v2147 = vadd.f32 0.0, %v2146
        %v2148 = vpop.f32.mrf.mxu0
        %v2149 = vadd.f32 0.0, %v2148
        %2150 = vmatmul.bf16.gmra.mxu0 %v2010
        %v2151 = vpop.f32.mrf.mxu0
        %v2152 = vadd.f32 0.0, %v2151
        %v2153 = vpop.f32.mrf.mxu0
        %v2154 = vadd.f32 0.0, %v2153
        %2155 = vmatmul.bf16.gmra.mxu0 %v2013
        %v2156 = vpop.f32.mrf.mxu0
        %v2157 = vadd.f32 0.0, %v2156
        %v2158 = vpop.f32.mrf.mxu0
        %v2159 = vadd.f32 0.0, %v2158
        %2160 = vdwg.mxu0
        %v2161 = vmax.f32 %v1203, %v1252
        %2162 = vmax.xlane.f32.xlu0 %v2161
        %v2163 = vpop.xlane.xlu0 %2162
        %v2164 = vmax.f32 %v1205, %v1254
        %2165 = vmax.xlane.f32.xlu0 %v2164
        %v2166 = vpop.xlane.xlu0 %2165
        %v2167 = vmax.f32 %v1208, %v1257
        %2168 = vmax.xlane.f32.xlu0 %v2167
        %v2169 = vpop.xlane.xlu0 %2168
        %v2170 = vmax.f32 %v1210, %v1259
        %2171 = vmax.xlane.f32.xlu0 %v2170
        %v2172 = vpop.xlane.xlu0 %2171
        %v2173 = vmax.f32 %v1213, %v1262
        %2174 = vmax.xlane.f32.xlu0 %v2173
        %v2175 = vpop.xlane.xlu0 %2174
        %v2176 = vmax.f32 %v1215, %v1264
        %2177 = vmax.xlane.f32.xlu0 %v2176
        %v2178 = vpop.xlane.xlu0 %2177
        %v2179 = vmax.f32 %v1218, %v1267
        %2180 = vmax.xlane.f32.xlu0 %v2179
        %v2181 = vpop.xlane.xlu0 %2180
        %v2182 = vmax.f32 %v1220, %v1269
        %2183 = vmax.xlane.f32.xlu0 %v2182
        %v2184 = vpop.xlane.xlu0 %2183
        %v2185 = vmax.f32 %v1223, %v1272
        %2186 = vmax.xlane.f32.xlu0 %v2185
        %v2187 = vpop.xlane.xlu0 %2186
        %v2188 = vmax.f32 %v1225, %v1274
        %2189 = vmax.xlane.f32.xlu0 %v2188
        %v2190 = vpop.xlane.xlu0 %2189
        %v2191 = vmax.f32 %v1228, %v1277
        %2192 = vmax.xlane.f32.xlu0 %v2191
        %v2193 = vpop.xlane.xlu0 %2192
        %v2194 = vmax.f32 %v1230, %v1279
        %2195 = vmax.xlane.f32.xlu0 %v2194
        %v2196 = vpop.xlane.xlu0 %2195
        %v2197 = vmax.f32 %v1233, %v1282
        %2198 = vmax.xlane.f32.xlu0 %v2197
        %v2199 = vpop.xlane.xlu0 %2198
        %v2200 = vmax.f32 %v1235, %v1284
        %2201 = vmax.xlane.f32.xlu0 %v2200
        %v2202 = vpop.xlane.xlu0 %2201
        %v2203 = vmax.f32 %v1238, %v1287
        %2204 = vmax.xlane.f32.xlu0 %v2203
        %v2205 = vpop.xlane.xlu0 %2204
        %v2206 = vmax.f32 %v1240, %v1289
        %2207 = vmax.xlane.f32.xlu0 %v2206
        %v2208 = vpop.xlane.xlu0 %2207
        %v2209 = vmax.f32 %v1493, %v1542
        %2210 = vmax.xlane.f32.xlu0 %v2209
        %v2211 = vpop.xlane.xlu0 %2210
        %v2212 = vmax.f32 %v1495, %v1544
        %2213 = vmax.xlane.f32.xlu0 %v2212
        %v2214 = vpop.xlane.xlu0 %2213
        %v2215 = vmax.f32 %v1498, %v1547
        %2216 = vmax.xlane.f32.xlu0 %v2215
        %v2217 = vpop.xlane.xlu0 %2216
        %v2218 = vmax.f32 %v1500, %v1549
        %2219 = vmax.xlane.f32.xlu0 %v2218
        %v2220 = vpop.xlane.xlu0 %2219
        %v2221 = vmax.f32 %v1503, %v1552
        %2222 = vmax.xlane.f32.xlu0 %v2221
        %v2223 = vpop.xlane.xlu0 %2222
        %v2224 = vmax.f32 %v1505, %v1554
        %2225 = vmax.xlane.f32.xlu0 %v2224
        %v2226 = vpop.xlane.xlu0 %2225
        %v2227 = vmax.f32 %v1508, %v1557
        %2228 = vmax.xlane.f32.xlu0 %v2227
        %v2229 = vpop.xlane.xlu0 %2228
        %v2230 = vmax.f32 %v1510, %v1559
        %2231 = vmax.xlane.f32.xlu0 %v2230
        %v2232 = vpop.xlane.xlu0 %2231
        %v2233 = vmax.f32 %v1513, %v1562
        %2234 = vmax.xlane.f32.xlu0 %v2233
        %v2235 = vpop.xlane.xlu0 %2234
        %v2236 = vmax.f32 %v1515, %v1564
        %2237 = vmax.xlane.f32.xlu0 %v2236
        %v2238 = vpop.xlane.xlu0 %2237
        %v2239 = vmax.f32 %v1518, %v1567
        %2240 = vmax.xlane.f32.xlu0 %v2239
        %v2241 = vpop.xlane.xlu0 %2240
        %v2242 = vmax.f32 %v1520, %v1569
        %2243 = vmax.xlane.f32.xlu0 %v2242
        %v2244 = vpop.xlane.xlu0 %2243
        %v2245 = vmax.f32 %v1523, %v1572
        %2246 = vmax.xlane.f32.xlu0 %v2245
        %v2247 = vpop.xlane.xlu0 %2246
        %v2248 = vmax.f32 %v1525, %v1574
        %2249 = vmax.xlane.f32.xlu0 %v2248
        %v2250 = vpop.xlane.xlu0 %2249
        %v2251 = vmax.f32 %v1528, %v1577
        %2252 = vmax.xlane.f32.xlu0 %v2251
        %v2253 = vpop.xlane.xlu0 %2252
        %v2254 = vmax.f32 %v1530, %v1579
        %2255 = vmax.xlane.f32.xlu0 %v2254
        %v2256 = vpop.xlane.xlu0 %2255
        %v2257 = vmax.f32 %v1783, %v1832
        %2258 = vmax.xlane.f32.xlu0 %v2257
        %v2259 = vpop.xlane.xlu0 %2258
        %v2260 = vmax.f32 %v1785, %v1834
        %2261 = vmax.xlane.f32.xlu0 %v2260
        %v2262 = vpop.xlane.xlu0 %2261
        %v2263 = vmax.f32 %v1788, %v1837
        %2264 = vmax.xlane.f32.xlu0 %v2263
        %v2265 = vpop.xlane.xlu0 %2264
        %v2266 = vmax.f32 %v1790, %v1839
        %2267 = vmax.xlane.f32.xlu0 %v2266
        %v2268 = vpop.xlane.xlu0 %2267
        %v2269 = vmax.f32 %v1793, %v1842
        %2270 = vmax.xlane.f32.xlu0 %v2269
        %v2271 = vpop.xlane.xlu0 %2270
        %v2272 = vmax.f32 %v1795, %v1844
        %2273 = vmax.xlane.f32.xlu0 %v2272
        %v2274 = vpop.xlane.xlu0 %2273
        %v2275 = vmax.f32 %v1798, %v1847
        %2276 = vmax.xlane.f32.xlu0 %v2275
        %v2277 = vpop.xlane.xlu0 %2276
        %v2278 = vmax.f32 %v1800, %v1849
        %2279 = vmax.xlane.f32.xlu0 %v2278
        %v2280 = vpop.xlane.xlu0 %2279
        %v2281 = vmax.f32 %v1803, %v1852
        %2282 = vmax.xlane.f32.xlu0 %v2281
        %v2283 = vpop.xlane.xlu0 %2282
        %v2284 = vmax.f32 %v1805, %v1854
        %2285 = vmax.xlane.f32.xlu0 %v2284
        %v2286 = vpop.xlane.xlu0 %2285
        %v2287 = vmax.f32 %v1808, %v1857
        %2288 = vmax.xlane.f32.xlu0 %v2287
        %v2289 = vpop.xlane.xlu0 %2288
        %v2290 = vmax.f32 %v1810, %v1859
        %2291 = vmax.xlane.f32.xlu0 %v2290
        %v2292 = vpop.xlane.xlu0 %2291
        %v2293 = vmax.f32 %v1813, %v1862
        %2294 = vmax.xlane.f32.xlu0 %v2293
        %v2295 = vpop.xlane.xlu0 %2294
        %v2296 = vmax.f32 %v1815, %v1864
        %2297 = vmax.xlane.f32.xlu0 %v2296
        %v2298 = vpop.xlane.xlu0 %2297
        %v2299 = vmax.f32 %v1818, %v1867
        %2300 = vmax.xlane.f32.xlu0 %v2299
        %v2301 = vpop.xlane.xlu0 %2300
        %v2302 = vmax.f32 %v1820, %v1869
        %2303 = vmax.xlane.f32.xlu0 %v2302
        %v2304 = vpop.xlane.xlu0 %2303
        %v2305 = vmax.f32 %v2073, %v2122
        %2306 = vmax.xlane.f32.xlu0 %v2305
        %v2307 = vpop.xlane.xlu0 %2306
        %v2308 = vmax.f32 %v2075, %v2124
        %2309 = vmax.xlane.f32.xlu0 %v2308
        %v2310 = vpop.xlane.xlu0 %2309
        %v2311 = vmax.f32 %v2078, %v2127
        %2312 = vmax.xlane.f32.xlu0 %v2311
        %v2313 = vpop.xlane.xlu0 %2312
        %v2314 = vmax.f32 %v2080, %v2129
        %2315 = vmax.xlane.f32.xlu0 %v2314
        %v2316 = vpop.xlane.xlu0 %2315
        %v2317 = vmax.f32 %v2083, %v2132
        %2318 = vmax.xlane.f32.xlu0 %v2317
        %v2319 = vpop.xlane.xlu0 %2318
        %v2320 = vmax.f32 %v2085, %v2134
        %2321 = vmax.xlane.f32.xlu0 %v2320
        %v2322 = vpop.xlane.xlu0 %2321
        %v2323 = vmax.f32 %v2088, %v2137
        %2324 = vmax.xlane.f32.xlu0 %v2323
        %v2325 = vpop.xlane.xlu0 %2324
        %v2326 = vmax.f32 %v2090, %v2139
        %2327 = vmax.xlane.f32.xlu0 %v2326
        %v2328 = vpop.xlane.xlu0 %2327
        %v2329 = vmax.f32 %v2093, %v2142
        %2330 = vmax.xlane.f32.xlu0 %v2329
        %v2331 = vpop.xlane.xlu0 %2330
        %v2332 = vmax.f32 %v2095, %v2144
        %2333 = vmax.xlane.f32.xlu0 %v2332
        %v2334 = vpop.xlane.xlu0 %2333
        %v2335 = vmax.f32 %v2098, %v2147
        %2336 = vmax.xlane.f32.xlu0 %v2335
        %v2337 = vpop.xlane.xlu0 %2336
        %v2338 = vmax.f32 %v2100, %v2149
        %2339 = vmax.xlane.f32.xlu0 %v2338
        %v2340 = vpop.xlane.xlu0 %2339
        %v2341 = vmax.f32 %v2103, %v2152
        %2342 = vmax.xlane.f32.xlu0 %v2341
        %v2343 = vpop.xlane.xlu0 %2342
        %v2344 = vmax.f32 %v2105, %v2154
        %2345 = vmax.xlane.f32.xlu0 %v2344
        %v2346 = vpop.xlane.xlu0 %2345
        %v2347 = vmax.f32 %v2108, %v2157
        %2348 = vmax.xlane.f32.xlu0 %v2347
        %v2349 = vpop.xlane.xlu0 %2348
        %v2350 = vmax.f32 %v2110, %v2159
        %2351 = vmax.xlane.f32.xlu0 %v2350
        %v2352 = vpop.xlane.xlu0 %2351
        %v2353 = vsub.f32 %v1203, %v2163
        %v2354 = vsub.f32 %v1252, %v2163
        %v2355 = vsub.f32 %v1205, %v2166
        %v2356 = vsub.f32 %v1254, %v2166
        %v2357 = vsub.f32 %v1208, %v2169
        %v2358 = vsub.f32 %v1257, %v2169
        %v2359 = vsub.f32 %v1210, %v2172
        %v2360 = vsub.f32 %v1259, %v2172
        %v2361 = vsub.f32 %v1213, %v2175
        %v2362 = vsub.f32 %v1262, %v2175
        %v2363 = vsub.f32 %v1215, %v2178
        %v2364 = vsub.f32 %v1264, %v2178
        %v2365 = vsub.f32 %v1218, %v2181
        %v2366 = vsub.f32 %v1267, %v2181
        %v2367 = vsub.f32 %v1220, %v2184
        %v2368 = vsub.f32 %v1269, %v2184
        %v2369 = vsub.f32 %v1223, %v2187
        %v2370 = vsub.f32 %v1272, %v2187
        %v2371 = vsub.f32 %v1225, %v2190
        %v2372 = vsub.f32 %v1274, %v2190
        %v2373 = vsub.f32 %v1228, %v2193
        %v2374 = vsub.f32 %v1277, %v2193
        %v2375 = vsub.f32 %v1230, %v2196
        %v2376 = vsub.f32 %v1279, %v2196
        %v2377 = vsub.f32 %v1233, %v2199
        %v2378 = vsub.f32 %v1282, %v2199
        %v2379 = vsub.f32 %v1235, %v2202
        %v2380 = vsub.f32 %v1284, %v2202
        %v2381 = vsub.f32 %v1238, %v2205
        %v2382 = vsub.f32 %v1287, %v2205
        %v2383 = vsub.f32 %v1240, %v2208
        %v2384 = vsub.f32 %v1289, %v2208
        %v2385 = vsub.f32 %v1493, %v2211
        %v2386 = vsub.f32 %v1542, %v2211
        %v2387 = vsub.f32 %v1495, %v2214
        %v2388 = vsub.f32 %v1544, %v2214
        %v2389 = vsub.f32 %v1498, %v2217
        %v2390 = vsub.f32 %v1547, %v2217
        %v2391 = vsub.f32 %v1500, %v2220
        %v2392 = vsub.f32 %v1549, %v2220
        %v2393 = vsub.f32 %v1503, %v2223
        %v2394 = vsub.f32 %v1552, %v2223
        %v2395 = vsub.f32 %v1505, %v2226
        %v2396 = vsub.f32 %v1554, %v2226
        %v2397 = vsub.f32 %v1508, %v2229
        %v2398 = vsub.f32 %v1557, %v2229
        %v2399 = vsub.f32 %v1510, %v2232
        %v2400 = vsub.f32 %v1559, %v2232
        %v2401 = vsub.f32 %v1513, %v2235
        %v2402 = vsub.f32 %v1562, %v2235
        %v2403 = vsub.f32 %v1515, %v2238
        %v2404 = vsub.f32 %v1564, %v2238
        %v2405 = vsub.f32 %v1518, %v2241
        %v2406 = vsub.f32 %v1567, %v2241
        %v2407 = vsub.f32 %v1520, %v2244
        %v2408 = vsub.f32 %v1569, %v2244
        %v2409 = vsub.f32 %v1523, %v2247
        %v2410 = vsub.f32 %v1572, %v2247
        %v2411 = vsub.f32 %v1525, %v2250
        %v2412 = vsub.f32 %v1574, %v2250
        %v2413 = vsub.f32 %v1528, %v2253
        %v2414 = vsub.f32 %v1577, %v2253
        %v2415 = vsub.f32 %v1530, %v2256
        %v2416 = vsub.f32 %v1579, %v2256
        %v2417 = vsub.f32 %v1783, %v2259
        %v2418 = vsub.f32 %v1832, %v2259
        %v2419 = vsub.f32 %v1785, %v2262
        %v2420 = vsub.f32 %v1834, %v2262
        %v2421 = vsub.f32 %v1788, %v2265
        %v2422 = vsub.f32 %v1837, %v2265
        %v2423 = vsub.f32 %v1790, %v2268
        %v2424 = vsub.f32 %v1839, %v2268
        %v2425 = vsub.f32 %v1793, %v2271
        %v2426 = vsub.f32 %v1842, %v2271
        %v2427 = vsub.f32 %v1795, %v2274
        %v2428 = vsub.f32 %v1844, %v2274
        %v2429 = vsub.f32 %v1798, %v2277
        %v2430 = vsub.f32 %v1847, %v2277
        %v2431 = vsub.f32 %v1800, %v2280
        %v2432 = vsub.f32 %v1849, %v2280
        %v2433 = vsub.f32 %v1803, %v2283
        %v2434 = vsub.f32 %v1852, %v2283
        %v2435 = vsub.f32 %v1805, %v2286
        %v2436 = vsub.f32 %v1854, %v2286
        %v2437 = vsub.f32 %v1808, %v2289
        %v2438 = vsub.f32 %v1857, %v2289
        %v2439 = vsub.f32 %v1810, %v2292
        %v2440 = vsub.f32 %v1859, %v2292
        %v2441 = vsub.f32 %v1813, %v2295
        %v2442 = vsub.f32 %v1862, %v2295
        %v2443 = vsub.f32 %v1815, %v2298
        %v2444 = vsub.f32 %v1864, %v2298
        %v2445 = vsub.f32 %v1818, %v2301
        %v2446 = vsub.f32 %v1867, %v2301
        %v2447 = vsub.f32 %v1820, %v2304
        %v2448 = vsub.f32 %v1869, %v2304
        %v2449 = vsub.f32 %v2073, %v2307
        %v2450 = vsub.f32 %v2122, %v2307
        %v2451 = vsub.f32 %v2075, %v2310
        %v2452 = vsub.f32 %v2124, %v2310
        %v2453 = vsub.f32 %v2078, %v2313
        %v2454 = vsub.f32 %v2127, %v2313
        %v2455 = vsub.f32 %v2080, %v2316
        %v2456 = vsub.f32 %v2129, %v2316
        %v2457 = vsub.f32 %v2083, %v2319
        %v2458 = vsub.f32 %v2132, %v2319
        %v2459 = vsub.f32 %v2085, %v2322
        %v2460 = vsub.f32 %v2134, %v2322
        %v2461 = vsub.f32 %v2088, %v2325
        %v2462 = vsub.f32 %v2137, %v2325
        %v2463 = vsub.f32 %v2090, %v2328
        %v2464 = vsub.f32 %v2139, %v2328
        %v2465 = vsub.f32 %v2093, %v2331
        %v2466 = vsub.f32 %v2142, %v2331
        %v2467 = vsub.f32 %v2095, %v2334
        %v2468 = vsub.f32 %v2144, %v2334
        %v2469 = vsub.f32 %v2098, %v2337
        %v2470 = vsub.f32 %v2147, %v2337
        %v2471 = vsub.f32 %v2100, %v2340
        %v2472 = vsub.f32 %v2149, %v2340
        %v2473 = vsub.f32 %v2103, %v2343
        %v2474 = vsub.f32 %v2152, %v2343
        %v2475 = vsub.f32 %v2105, %v2346
        %v2476 = vsub.f32 %v2154, %v2346
        %v2477 = vsub.f32 %v2108, %v2349
        %v2478 = vsub.f32 %v2157, %v2349
        %v2479 = vsub.f32 %v2110, %v2352
        %v2480 = vsub.f32 %v2159, %v2352
        %v2481 = vmul.f32 %v2353, 1.442695
        %v2482 = vpow.pop %v2481
        %v2483 = vmul.f32 %v2354, 1.442695
        %v2484 = vpow.pop %v2483
        %v2485 = vmul.f32 %v2355, 1.442695
        %v2486 = vpow.pop %v2485
        %v2487 = vmul.f32 %v2356, 1.442695
        %v2488 = vpow.pop %v2487
        %v2489 = vmul.f32 %v2357, 1.442695
        %v2490 = vpow.pop %v2489
        %v2491 = vmul.f32 %v2358, 1.442695
        %v2492 = vpow.pop %v2491
        %v2493 = vmul.f32 %v2359, 1.442695
        %v2494 = vpow.pop %v2493
        %v2495 = vmul.f32 %v2360, 1.442695
        %v2496 = vpow.pop %v2495
        %v2497 = vmul.f32 %v2361, 1.442695
        %v2498 = vpow.pop %v2497
        %v2499 = vmul.f32 %v2362, 1.442695
        %v2500 = vpow.pop %v2499
        %v2501 = vmul.f32 %v2363, 1.442695
        %v2502 = vpow.pop %v2501
        %v2503 = vmul.f32 %v2364, 1.442695
        %v2504 = vpow.pop %v2503
        %v2505 = vmul.f32 %v2365, 1.442695
        %v2506 = vpow.pop %v2505
        %v2507 = vmul.f32 %v2366, 1.442695
        %v2508 = vpow.pop %v2507
        %v2509 = vmul.f32 %v2367, 1.442695
        %v2510 = vpow.pop %v2509
        %v2511 = vmul.f32 %v2368, 1.442695
        %v2512 = vpow.pop %v2511
        %v2513 = vmul.f32 %v2369, 1.442695
        %v2514 = vpow.pop %v2513
        %v2515 = vmul.f32 %v2370, 1.442695
        %v2516 = vpow.pop %v2515
        %v2517 = vmul.f32 %v2371, 1.442695
        %v2518 = vpow.pop %v2517
        %v2519 = vmul.f32 %v2372, 1.442695
        %v2520 = vpow.pop %v2519
        %v2521 = vmul.f32 %v2373, 1.442695
        %v2522 = vpow.pop %v2521
        %v2523 = vmul.f32 %v2374, 1.442695
        %v2524 = vpow.pop %v2523
        %v2525 = vmul.f32 %v2375, 1.442695
        %v2526 = vpow.pop %v2525
        %v2527 = vmul.f32 %v2376, 1.442695
        %v2528 = vpow.pop %v2527
        %v2529 = vmul.f32 %v2377, 1.442695
        %v2530 = vpow.pop %v2529
        %v2531 = vmul.f32 %v2378, 1.442695
        %v2532 = vpow.pop %v2531
        %v2533 = vmul.f32 %v2379, 1.442695
        %v2534 = vpow.pop %v2533
        %v2535 = vmul.f32 %v2380, 1.442695
        %v2536 = vpow.pop %v2535
        %v2537 = vmul.f32 %v2381, 1.442695
        %v2538 = vpow.pop %v2537
        %v2539 = vmul.f32 %v2382, 1.442695
        %v2540 = vpow.pop %v2539
        %v2541 = vmul.f32 %v2383, 1.442695
        %v2542 = vpow.pop %v2541
        %v2543 = vmul.f32 %v2384, 1.442695
        %v2544 = vpow.pop %v2543
        %v2545 = vmul.f32 %v2385, 1.442695
        %v2546 = vpow.pop %v2545
        %v2547 = vmul.f32 %v2386, 1.442695
        %v2548 = vpow.pop %v2547
        %v2549 = vmul.f32 %v2387, 1.442695
        %v2550 = vpow.pop %v2549
        %v2551 = vmul.f32 %v2388, 1.442695
        %v2552 = vpow.pop %v2551
        %v2553 = vmul.f32 %v2389, 1.442695
        %v2554 = vpow.pop %v2553
        %v2555 = vmul.f32 %v2390, 1.442695
        %v2556 = vpow.pop %v2555
        %v2557 = vmul.f32 %v2391, 1.442695
        %v2558 = vpow.pop %v2557
        %v2559 = vmul.f32 %v2392, 1.442695
        %v2560 = vpow.pop %v2559
        %v2561 = vmul.f32 %v2393, 1.442695
        %v2562 = vpow.pop %v2561
        %v2563 = vmul.f32 %v2394, 1.442695
        %v2564 = vpow.pop %v2563
        %v2565 = vmul.f32 %v2395, 1.442695
        %v2566 = vpow.pop %v2565
        %v2567 = vmul.f32 %v2396, 1.442695
        %v2568 = vpow.pop %v2567
        %v2569 = vmul.f32 %v2397, 1.442695
        %v2570 = vpow.pop %v2569
        %v2571 = vmul.f32 %v2398, 1.442695
        %v2572 = vpow.pop %v2571
        %v2573 = vmul.f32 %v2399, 1.442695
        %v2574 = vpow.pop %v2573
        %v2575 = vmul.f32 %v2400, 1.442695
        %v2576 = vpow.pop %v2575
        %v2577 = vmul.f32 %v2401, 1.442695
        %v2578 = vpow.pop %v2577
        %v2579 = vmul.f32 %v2402, 1.442695
        %v2580 = vpow.pop %v2579
        %v2581 = vmul.f32 %v2403, 1.442695
        %v2582 = vpow.pop %v2581
        %v2583 = vmul.f32 %v2404, 1.442695
        %v2584 = vpow.pop %v2583
        %v2585 = vmul.f32 %v2405, 1.442695
        %v2586 = vpow.pop %v2585
        %v2587 = vmul.f32 %v2406, 1.442695
        %v2588 = vpow.pop %v2587
        %v2589 = vmul.f32 %v2407, 1.442695
        %v2590 = vpow.pop %v2589
        %v2591 = vmul.f32 %v2408, 1.442695
        %v2592 = vpow.pop %v2591
        %v2593 = vmul.f32 %v2409, 1.442695
        %v2594 = vpow.pop %v2593
        %v2595 = vmul.f32 %v2410, 1.442695
        %v2596 = vpow.pop %v2595
        %v2597 = vmul.f32 %v2411, 1.442695
        %v2598 = vpow.pop %v2597
        %v2599 = vmul.f32 %v2412, 1.442695
        %v2600 = vpow.pop %v2599
        %v2601 = vmul.f32 %v2413, 1.442695
        %v2602 = vpow.pop %v2601
        %v2603 = vmul.f32 %v2414, 1.442695
        %v2604 = vpow.pop %v2603
        %v2605 = vmul.f32 %v2415, 1.442695
        %v2606 = vpow.pop %v2605
        %v2607 = vmul.f32 %v2416, 1.442695
        %v2608 = vpow.pop %v2607
        %v2609 = vmul.f32 %v2417, 1.442695
        %v2610 = vpow.pop %v2609
        %v2611 = vmul.f32 %v2418, 1.442695
        %v2612 = vpow.pop %v2611
        %v2613 = vmul.f32 %v2419, 1.442695
        %v2614 = vpow.pop %v2613
        %v2615 = vmul.f32 %v2420, 1.442695
        %v2616 = vpow.pop %v2615
        %v2617 = vmul.f32 %v2421, 1.442695
        %v2618 = vpow.pop %v2617
        %v2619 = vmul.f32 %v2422, 1.442695
        %v2620 = vpow.pop %v2619
        %v2621 = vmul.f32 %v2423, 1.442695
        %v2622 = vpow.pop %v2621
        %v2623 = vmul.f32 %v2424, 1.442695
        %v2624 = vpow.pop %v2623
        %v2625 = vmul.f32 %v2425, 1.442695
        %v2626 = vpow.pop %v2625
        %v2627 = vmul.f32 %v2426, 1.442695
        %v2628 = vpow.pop %v2627
        %v2629 = vmul.f32 %v2427, 1.442695
        %v2630 = vpow.pop %v2629
        %v2631 = vmul.f32 %v2428, 1.442695
        %v2632 = vpow.pop %v2631
        %v2633 = vmul.f32 %v2429, 1.442695
        %v2634 = vpow.pop %v2633
        %v2635 = vmul.f32 %v2430, 1.442695
        %v2636 = vpow.pop %v2635
        %v2637 = vmul.f32 %v2431, 1.442695
        %v2638 = vpow.pop %v2637
        %v2639 = vmul.f32 %v2432, 1.442695
        %v2640 = vpow.pop %v2639
        %v2641 = vmul.f32 %v2433, 1.442695
        %v2642 = vpow.pop %v2641
        %v2643 = vmul.f32 %v2434, 1.442695
        %v2644 = vpow.pop %v2643
        %v2645 = vmul.f32 %v2435, 1.442695
        %v2646 = vpow.pop %v2645
        %v2647 = vmul.f32 %v2436, 1.442695
        %v2648 = vpow.pop %v2647
        %v2649 = vmul.f32 %v2437, 1.442695
        %v2650 = vpow.pop %v2649
        %v2651 = vmul.f32 %v2438, 1.442695
        %v2652 = vpow.pop %v2651
        %v2653 = vmul.f32 %v2439, 1.442695
        %v2654 = vpow.pop %v2653
        %v2655 = vmul.f32 %v2440, 1.442695
        %v2656 = vpow.pop %v2655
        %v2657 = vmul.f32 %v2441, 1.442695
        %v2658 = vpow.pop %v2657
        %v2659 = vmul.f32 %v2442, 1.442695
        %v2660 = vpow.pop %v2659
        %v2661 = vmul.f32 %v2443, 1.442695
        %v2662 = vpow.pop %v2661
        %v2663 = vmul.f32 %v2444, 1.442695
        %v2664 = vpow.pop %v2663
        %v2665 = vmul.f32 %v2445, 1.442695
        %v2666 = vpow.pop %v2665
        %v2667 = vmul.f32 %v2446, 1.442695
        %v2668 = vpow.pop %v2667
        %v2669 = vmul.f32 %v2447, 1.442695
        %v2670 = vpow.pop %v2669
        %v2671 = vmul.f32 %v2448, 1.442695
        %v2672 = vpow.pop %v2671
        %v2673 = vmul.f32 %v2449, 1.442695
        %v2674 = vpow.pop %v2673
        %v2675 = vmul.f32 %v2450, 1.442695
        %v2676 = vpow.pop %v2675
        %v2677 = vmul.f32 %v2451, 1.442695
        %v2678 = vpow.pop %v2677
        %v2679 = vmul.f32 %v2452, 1.442695
        %v2680 = vpow.pop %v2679
        %v2681 = vmul.f32 %v2453, 1.442695
        %v2682 = vpow.pop %v2681
        %v2683 = vmul.f32 %v2454, 1.442695
        %v2684 = vpow.pop %v2683
        %v2685 = vmul.f32 %v2455, 1.442695
        %v2686 = vpow.pop %v2685
        %v2687 = vmul.f32 %v2456, 1.442695
        %v2688 = vpow.pop %v2687
        %v2689 = vmul.f32 %v2457, 1.442695
        %v2690 = vpow.pop %v2689
        %v2691 = vmul.f32 %v2458, 1.442695
        %v2692 = vpow.pop %v2691
        %v2693 = vmul.f32 %v2459, 1.442695
        %v2694 = vpow.pop %v2693
        %v2695 = vmul.f32 %v2460, 1.442695
        %v2696 = vpow.pop %v2695
        %v2697 = vmul.f32 %v2461, 1.442695
        %v2698 = vpow.pop %v2697
        %v2699 = vmul.f32 %v2462, 1.442695
        %v2700 = vpow.pop %v2699
        %v2701 = vmul.f32 %v2463, 1.442695
        %v2702 = vpow.pop %v2701
        %v2703 = vmul.f32 %v2464, 1.442695
        %v2704 = vpow.pop %v2703
        %v2705 = vmul.f32 %v2465, 1.442695
        %v2706 = vpow.pop %v2705
        %v2707 = vmul.f32 %v2466, 1.442695
        %v2708 = vpow.pop %v2707
        %v2709 = vmul.f32 %v2467, 1.442695
        %v2710 = vpow.pop %v2709
        %v2711 = vmul.f32 %v2468, 1.442695
        %v2712 = vpow.pop %v2711
        %v2713 = vmul.f32 %v2469, 1.442695
        %v2714 = vpow.pop %v2713
        %v2715 = vmul.f32 %v2470, 1.442695
        %v2716 = vpow.pop %v2715
        %v2717 = vmul.f32 %v2471, 1.442695
        %v2718 = vpow.pop %v2717
        %v2719 = vmul.f32 %v2472, 1.442695
        %v2720 = vpow.pop %v2719
        %v2721 = vmul.f32 %v2473, 1.442695
        %v2722 = vpow.pop %v2721
        %v2723 = vmul.f32 %v2474, 1.442695
        %v2724 = vpow.pop %v2723
        %v2725 = vmul.f32 %v2475, 1.442695
        %v2726 = vpow.pop %v2725
        %v2727 = vmul.f32 %v2476, 1.442695
        %v2728 = vpow.pop %v2727
        %v2729 = vmul.f32 %v2477, 1.442695
        %v2730 = vpow.pop %v2729
        %v2731 = vmul.f32 %v2478, 1.442695
        %v2732 = vpow.pop %v2731
        %v2733 = vmul.f32 %v2479, 1.442695
        %v2734 = vpow.pop %v2733
        %v2735 = vmul.f32 %v2480, 1.442695
        %v2736 = vpow.pop %v2735
        %v2737 = vadd.f32 %v2482, %v2484
        %2738 = vadd.xlane.f32.xlu0 %v2737
        %v2739 = vpop.xlane.xlu0 %2738
        %v2740 = vadd.f32 %v2486, %v2488
        %2741 = vadd.xlane.f32.xlu0 %v2740
        %v2742 = vpop.xlane.xlu0 %2741
        %v2743 = vadd.f32 %v2490, %v2492
        %2744 = vadd.xlane.f32.xlu0 %v2743
        %v2745 = vpop.xlane.xlu0 %2744
        %v2746 = vadd.f32 %v2494, %v2496
        %2747 = vadd.xlane.f32.xlu0 %v2746
        %v2748 = vpop.xlane.xlu0 %2747
        %v2749 = vadd.f32 %v2498, %v2500
        %2750 = vadd.xlane.f32.xlu0 %v2749
        %v2751 = vpop.xlane.xlu0 %2750
        %v2752 = vadd.f32 %v2502, %v2504
        %2753 = vadd.xlane.f32.xlu0 %v2752
        %v2754 = vpop.xlane.xlu0 %2753
        %v2755 = vadd.f32 %v2506, %v2508
        %2756 = vadd.xlane.f32.xlu0 %v2755
        %v2757 = vpop.xlane.xlu0 %2756
        %v2758 = vadd.f32 %v2510, %v2512
        %2759 = vadd.xlane.f32.xlu0 %v2758
        %v2760 = vpop.xlane.xlu0 %2759
        %v2761 = vadd.f32 %v2514, %v2516
        %2762 = vadd.xlane.f32.xlu0 %v2761
        %v2763 = vpop.xlane.xlu0 %2762
        %v2764 = vadd.f32 %v2518, %v2520
        %2765 = vadd.xlane.f32.xlu0 %v2764
        %v2766 = vpop.xlane.xlu0 %2765
        %v2767 = vadd.f32 %v2522, %v2524
        %2768 = vadd.xlane.f32.xlu0 %v2767
        %v2769 = vpop.xlane.xlu0 %2768
        %v2770 = vadd.f32 %v2526, %v2528
        %2771 = vadd.xlane.f32.xlu0 %v2770
        %v2772 = vpop.xlane.xlu0 %2771
        %v2773 = vadd.f32 %v2530, %v2532
        %2774 = vadd.xlane.f32.xlu0 %v2773
        %v2775 = vpop.xlane.xlu0 %2774
        %v2776 = vadd.f32 %v2534, %v2536
        %2777 = vadd.xlane.f32.xlu0 %v2776
        %v2778 = vpop.xlane.xlu0 %2777
        %v2779 = vadd.f32 %v2538, %v2540
        %2780 = vadd.xlane.f32.xlu0 %v2779
        %v2781 = vpop.xlane.xlu0 %2780
        %v2782 = vadd.f32 %v2542, %v2544
        %2783 = vadd.xlane.f32.xlu0 %v2782
        %v2784 = vpop.xlane.xlu0 %2783
        %v2785 = vadd.f32 %v2546, %v2548
        %2786 = vadd.xlane.f32.xlu0 %v2785
        %v2787 = vpop.xlane.xlu0 %2786
        %v2788 = vadd.f32 %v2550, %v2552
        %2789 = vadd.xlane.f32.xlu0 %v2788
        %v2790 = vpop.xlane.xlu0 %2789
        %v2791 = vadd.f32 %v2554, %v2556
        %2792 = vadd.xlane.f32.xlu0 %v2791
        %v2793 = vpop.xlane.xlu0 %2792
        %v2794 = vadd.f32 %v2558, %v2560
        %2795 = vadd.xlane.f32.xlu0 %v2794
        %v2796 = vpop.xlane.xlu0 %2795
        %v2797 = vadd.f32 %v2562, %v2564
        %2798 = vadd.xlane.f32.xlu0 %v2797
        %v2799 = vpop.xlane.xlu0 %2798
        %v2800 = vadd.f32 %v2566, %v2568
        %2801 = vadd.xlane.f32.xlu0 %v2800
        %v2802 = vpop.xlane.xlu0 %2801
        %v2803 = vadd.f32 %v2570, %v2572
        %2804 = vadd.xlane.f32.xlu0 %v2803
        %v2805 = vpop.xlane.xlu0 %2804
        %v2806 = vadd.f32 %v2574, %v2576
        %2807 = vadd.xlane.f32.xlu0 %v2806
        %v2808 = vpop.xlane.xlu0 %2807
        %v2809 = vadd.f32 %v2578, %v2580
        %2810 = vadd.xlane.f32.xlu0 %v2809
        %v2811 = vpop.xlane.xlu0 %2810
        %v2812 = vadd.f32 %v2582, %v2584
        %2813 = vadd.xlane.f32.xlu0 %v2812
        %v2814 = vpop.xlane.xlu0 %2813
        %v2815 = vadd.f32 %v2586, %v2588
        %2816 = vadd.xlane.f32.xlu0 %v2815
        %v2817 = vpop.xlane.xlu0 %2816
        %v2818 = vadd.f32 %v2590, %v2592
        %2819 = vadd.xlane.f32.xlu0 %v2818
        %v2820 = vpop.xlane.xlu0 %2819
        %v2821 = vadd.f32 %v2594, %v2596
        %2822 = vadd.xlane.f32.xlu0 %v2821
        %v2823 = vpop.xlane.xlu0 %2822
        %v2824 = vadd.f32 %v2598, %v2600
        %2825 = vadd.xlane.f32.xlu0 %v2824
        %v2826 = vpop.xlane.xlu0 %2825
        %v2827 = vadd.f32 %v2602, %v2604
        %2828 = vadd.xlane.f32.xlu0 %v2827
        %v2829 = vpop.xlane.xlu0 %2828
        %v2830 = vadd.f32 %v2606, %v2608
        %2831 = vadd.xlane.f32.xlu0 %v2830
        %v2832 = vpop.xlane.xlu0 %2831
        %v2833 = vadd.f32 %v2610, %v2612
        %2834 = vadd.xlane.f32.xlu0 %v2833
        %v2835 = vpop.xlane.xlu0 %2834
        %v2836 = vadd.f32 %v2614, %v2616
        %2837 = vadd.xlane.f32.xlu0 %v2836
        %v2838 = vpop.xlane.xlu0 %2837
        %v2839 = vadd.f32 %v2618, %v2620
        %2840 = vadd.xlane.f32.xlu0 %v2839
        %v2841 = vpop.xlane.xlu0 %2840
        %v2842 = vadd.f32 %v2622, %v2624
        %2843 = vadd.xlane.f32.xlu0 %v2842
        %v2844 = vpop.xlane.xlu0 %2843
        %v2845 = vadd.f32 %v2626, %v2628
        %2846 = vadd.xlane.f32.xlu0 %v2845
        %v2847 = vpop.xlane.xlu0 %2846
        %v2848 = vadd.f32 %v2630, %v2632
        %2849 = vadd.xlane.f32.xlu0 %v2848
        %v2850 = vpop.xlane.xlu0 %2849
        %v2851 = vadd.f32 %v2634, %v2636
        %2852 = vadd.xlane.f32.xlu0 %v2851
        %v2853 = vpop.xlane.xlu0 %2852
        %v2854 = vadd.f32 %v2638, %v2640
        %2855 = vadd.xlane.f32.xlu0 %v2854
        %v2856 = vpop.xlane.xlu0 %2855
        %v2857 = vadd.f32 %v2642, %v2644
        %2858 = vadd.xlane.f32.xlu0 %v2857
        %v2859 = vpop.xlane.xlu0 %2858
        %v2860 = vadd.f32 %v2646, %v2648
        %2861 = vadd.xlane.f32.xlu0 %v2860
        %v2862 = vpop.xlane.xlu0 %2861
        %v2863 = vadd.f32 %v2650, %v2652
        %2864 = vadd.xlane.f32.xlu0 %v2863
        %v2865 = vpop.xlane.xlu0 %2864
        %v2866 = vadd.f32 %v2654, %v2656
        %2867 = vadd.xlane.f32.xlu0 %v2866
        %v2868 = vpop.xlane.xlu0 %2867
        %v2869 = vadd.f32 %v2658, %v2660
        %2870 = vadd.xlane.f32.xlu0 %v2869
        %v2871 = vpop.xlane.xlu0 %2870
        %v2872 = vadd.f32 %v2662, %v2664
        %2873 = vadd.xlane.f32.xlu0 %v2872
        %v2874 = vpop.xlane.xlu0 %2873
        %v2875 = vadd.f32 %v2666, %v2668
        %2876 = vadd.xlane.f32.xlu0 %v2875
        %v2877 = vpop.xlane.xlu0 %2876
        %v2878 = vadd.f32 %v2670, %v2672
        %2879 = vadd.xlane.f32.xlu0 %v2878
        %v2880 = vpop.xlane.xlu0 %2879
        %v2881 = vadd.f32 %v2674, %v2676
        %2882 = vadd.xlane.f32.xlu0 %v2881
        %v2883 = vpop.xlane.xlu0 %2882
        %v2884 = vadd.f32 %v2678, %v2680
        %2885 = vadd.xlane.f32.xlu0 %v2884
        %v2886 = vpop.xlane.xlu0 %2885
        %v2887 = vadd.f32 %v2682, %v2684
        %2888 = vadd.xlane.f32.xlu0 %v2887
        %v2889 = vpop.xlane.xlu0 %2888
        %v2890 = vadd.f32 %v2686, %v2688
        %2891 = vadd.xlane.f32.xlu0 %v2890
        %v2892 = vpop.xlane.xlu0 %2891
        %v2893 = vadd.f32 %v2690, %v2692
        %2894 = vadd.xlane.f32.xlu0 %v2893
        %v2895 = vpop.xlane.xlu0 %2894
        %v2896 = vadd.f32 %v2694, %v2696
        %2897 = vadd.xlane.f32.xlu0 %v2896
        %v2898 = vpop.xlane.xlu0 %2897
        %v2899 = vadd.f32 %v2698, %v2700
        %2900 = vadd.xlane.f32.xlu0 %v2899
        %v2901 = vpop.xlane.xlu0 %2900
        %v2902 = vadd.f32 %v2702, %v2704
        %2903 = vadd.xlane.f32.xlu0 %v2902
        %v2904 = vpop.xlane.xlu0 %2903
        %v2905 = vadd.f32 %v2706, %v2708
        %2906 = vadd.xlane.f32.xlu0 %v2905
        %v2907 = vpop.xlane.xlu0 %2906
        %v2908 = vadd.f32 %v2710, %v2712
        %2909 = vadd.xlane.f32.xlu0 %v2908
        %v2910 = vpop.xlane.xlu0 %2909
        %v2911 = vadd.f32 %v2714, %v2716
        %2912 = vadd.xlane.f32.xlu0 %v2911
        %v2913 = vpop.xlane.xlu0 %2912
        %v2914 = vadd.f32 %v2718, %v2720
        %2915 = vadd.xlane.f32.xlu0 %v2914
        %v2916 = vpop.xlane.xlu0 %2915
        %v2917 = vadd.f32 %v2722, %v2724
        %2918 = vadd.xlane.f32.xlu0 %v2917
        %v2919 = vpop.xlane.xlu0 %2918
        %v2920 = vadd.f32 %v2726, %v2728
        %2921 = vadd.xlane.f32.xlu0 %v2920
        %v2922 = vpop.xlane.xlu0 %2921
        %v2923 = vadd.f32 %v2730, %v2732
        %2924 = vadd.xlane.f32.xlu0 %v2923
        %v2925 = vpop.xlane.xlu0 %2924
        %v2926 = vadd.f32 %v2734, %v2736
        %2927 = vadd.xlane.f32.xlu0 %v2926
        %v2928 = vpop.xlane.xlu0 %2927
        %v2929 = vrcp.pop %v2739
        %v2930 = vrcp.pop %v2742
        %v2931 = vrcp.pop %v2745
        %v2932 = vrcp.pop %v2748
        %v2933 = vrcp.pop %v2751
        %v2934 = vrcp.pop %v2754
        %v2935 = vrcp.pop %v2757
        %v2936 = vrcp.pop %v2760
        %v2937 = vrcp.pop %v2763
        %v2938 = vrcp.pop %v2766
        %v2939 = vrcp.pop %v2769
        %v2940 = vrcp.pop %v2772
        %v2941 = vrcp.pop %v2775
        %v2942 = vrcp.pop %v2778
        %v2943 = vrcp.pop %v2781
        %v2944 = vrcp.pop %v2784
        %v2945 = vrcp.pop %v2787
        %v2946 = vrcp.pop %v2790
        %v2947 = vrcp.pop %v2793
        %v2948 = vrcp.pop %v2796
        %v2949 = vrcp.pop %v2799
        %v2950 = vrcp.pop %v2802
        %v2951 = vrcp.pop %v2805
        %v2952 = vrcp.pop %v2808
        %v2953 = vrcp.pop %v2811
        %v2954 = vrcp.pop %v2814
        %v2955 = vrcp.pop %v2817
        %v2956 = vrcp.pop %v2820
        %v2957 = vrcp.pop %v2823
        %v2958 = vrcp.pop %v2826
        %v2959 = vrcp.pop %v2829
        %v2960 = vrcp.pop %v2832
        %v2961 = vrcp.pop %v2835
        %v2962 = vrcp.pop %v2838
        %v2963 = vrcp.pop %v2841
        %v2964 = vrcp.pop %v2844
        %v2965 = vrcp.pop %v2847
        %v2966 = vrcp.pop %v2850
        %v2967 = vrcp.pop %v2853
        %v2968 = vrcp.pop %v2856
        %v2969 = vrcp.pop %v2859
        %v2970 = vrcp.pop %v2862
        %v2971 = vrcp.pop %v2865
        %v2972 = vrcp.pop %v2868
        %v2973 = vrcp.pop %v2871
        %v2974 = vrcp.pop %v2874
        %v2975 = vrcp.pop %v2877
        %v2976 = vrcp.pop %v2880
        %v2977 = vrcp.pop %v2883
        %v2978 = vrcp.pop %v2886
        %v2979 = vrcp.pop %v2889
        %v2980 = vrcp.pop %v2892
        %v2981 = vrcp.pop %v2895
        %v2982 = vrcp.pop %v2898
        %v2983 = vrcp.pop %v2901
        %v2984 = vrcp.pop %v2904
        %v2985 = vrcp.pop %v2907
        %v2986 = vrcp.pop %v2910
        %v2987 = vrcp.pop %v2913
        %v2988 = vrcp.pop %v2916
        %v2989 = vrcp.pop %v2919
        %v2990 = vrcp.pop %v2922
        %v2991 = vrcp.pop %v2925
        %v2992 = vrcp.pop %v2928
        %v2993 = vmul.f32 %v2482, %v2929
        %v2994 = vmul.f32 %v2484, %v2929
        %v2995 = vmul.f32 %v2486, %v2930
        %v2996 = vmul.f32 %v2488, %v2930
        %v2997 = vmul.f32 %v2490, %v2931
        %v2998 = vmul.f32 %v2492, %v2931
        %v2999 = vmul.f32 %v2494, %v2932
        %v3000 = vmul.f32 %v2496, %v2932
        %v3001 = vmul.f32 %v2498, %v2933
        %v3002 = vmul.f32 %v2500, %v2933
        %v3003 = vmul.f32 %v2502, %v2934
        %v3004 = vmul.f32 %v2504, %v2934
        %v3005 = vmul.f32 %v2506, %v2935
        %v3006 = vmul.f32 %v2508, %v2935
        %v3007 = vmul.f32 %v2510, %v2936
        %v3008 = vmul.f32 %v2512, %v2936
        %v3009 = vmul.f32 %v2514, %v2937
        %v3010 = vmul.f32 %v2516, %v2937
        %v3011 = vmul.f32 %v2518, %v2938
        %v3012 = vmul.f32 %v2520, %v2938
        %v3013 = vmul.f32 %v2522, %v2939
        %v3014 = vmul.f32 %v2524, %v2939
        %v3015 = vmul.f32 %v2526, %v2940
        %v3016 = vmul.f32 %v2528, %v2940
        %v3017 = vmul.f32 %v2530, %v2941
        %v3018 = vmul.f32 %v2532, %v2941
        %v3019 = vmul.f32 %v2534, %v2942
        %v3020 = vmul.f32 %v2536, %v2942
        %v3021 = vmul.f32 %v2538, %v2943
        %v3022 = vmul.f32 %v2540, %v2943
        %v3023 = vmul.f32 %v2542, %v2944
        %v3024 = vmul.f32 %v2544, %v2944
        %v3025 = vmul.f32 %v2546, %v2945
        %v3026 = vmul.f32 %v2548, %v2945
        %v3027 = vmul.f32 %v2550, %v2946
        %v3028 = vmul.f32 %v2552, %v2946
        %v3029 = vmul.f32 %v2554, %v2947
        %v3030 = vmul.f32 %v2556, %v2947
        %v3031 = vmul.f32 %v2558, %v2948
        %v3032 = vmul.f32 %v2560, %v2948
        %v3033 = vmul.f32 %v2562, %v2949
        %v3034 = vmul.f32 %v2564, %v2949
        %v3035 = vmul.f32 %v2566, %v2950
        %v3036 = vmul.f32 %v2568, %v2950
        %v3037 = vmul.f32 %v2570, %v2951
        %v3038 = vmul.f32 %v2572, %v2951
        %v3039 = vmul.f32 %v2574, %v2952
        %v3040 = vmul.f32 %v2576, %v2952
        %v3041 = vmul.f32 %v2578, %v2953
        %v3042 = vmul.f32 %v2580, %v2953
        %v3043 = vmul.f32 %v2582, %v2954
        %v3044 = vmul.f32 %v2584, %v2954
        %v3045 = vmul.f32 %v2586, %v2955
        %v3046 = vmul.f32 %v2588, %v2955
        %v3047 = vmul.f32 %v2590, %v2956
        %v3048 = vmul.f32 %v2592, %v2956
        %v3049 = vmul.f32 %v2594, %v2957
        %v3050 = vmul.f32 %v2596, %v2957
        %v3051 = vmul.f32 %v2598, %v2958
        %v3052 = vmul.f32 %v2600, %v2958
        %v3053 = vmul.f32 %v2602, %v2959
        %v3054 = vmul.f32 %v2604, %v2959
        %v3055 = vmul.f32 %v2606, %v2960
        %v3056 = vmul.f32 %v2608, %v2960
        %v3057 = vmul.f32 %v2610, %v2961
        %v3058 = vmul.f32 %v2612, %v2961
        %v3059 = vmul.f32 %v2614, %v2962
        %v3060 = vmul.f32 %v2616, %v2962
        %v3061 = vmul.f32 %v2618, %v2963
        %v3062 = vmul.f32 %v2620, %v2963
        %v3063 = vmul.f32 %v2622, %v2964
        %v3064 = vmul.f32 %v2624, %v2964
        %v3065 = vmul.f32 %v2626, %v2965
        %v3066 = vmul.f32 %v2628, %v2965
        %v3067 = vmul.f32 %v2630, %v2966
        %v3068 = vmul.f32 %v2632, %v2966
        %v3069 = vmul.f32 %v2634, %v2967
        %v3070 = vmul.f32 %v2636, %v2967
        %v3071 = vmul.f32 %v2638, %v2968
        %v3072 = vmul.f32 %v2640, %v2968
        %v3073 = vmul.f32 %v2642, %v2969
        %v3074 = vmul.f32 %v2644, %v2969
        %v3075 = vmul.f32 %v2646, %v2970
        %v3076 = vmul.f32 %v2648, %v2970
        %v3077 = vmul.f32 %v2650, %v2971
        %v3078 = vmul.f32 %v2652, %v2971
        %v3079 = vmul.f32 %v2654, %v2972
        %v3080 = vmul.f32 %v2656, %v2972
        %v3081 = vmul.f32 %v2658, %v2973
        %v3082 = vmul.f32 %v2660, %v2973
        %v3083 = vmul.f32 %v2662, %v2974
        %v3084 = vmul.f32 %v2664, %v2974
        %v3085 = vmul.f32 %v2666, %v2975
        %v3086 = vmul.f32 %v2668, %v2975
        %v3087 = vmul.f32 %v2670, %v2976
        %v3088 = vmul.f32 %v2672, %v2976
        %v3089 = vmul.f32 %v2674, %v2977
        %v3090 = vmul.f32 %v2676, %v2977
        %v3091 = vmul.f32 %v2678, %v2978
        %v3092 = vmul.f32 %v2680, %v2978
        %v3093 = vmul.f32 %v2682, %v2979
        %v3094 = vmul.f32 %v2684, %v2979
        %v3095 = vmul.f32 %v2686, %v2980
        %v3096 = vmul.f32 %v2688, %v2980
        %v3097 = vmul.f32 %v2690, %v2981
        %v3098 = vmul.f32 %v2692, %v2981
        %v3099 = vmul.f32 %v2694, %v2982
        %v3100 = vmul.f32 %v2696, %v2982
        %v3101 = vmul.f32 %v2698, %v2983
        %v3102 = vmul.f32 %v2700, %v2983
        %v3103 = vmul.f32 %v2702, %v2984
        %v3104 = vmul.f32 %v2704, %v2984
        %v3105 = vmul.f32 %v2706, %v2985
        %v3106 = vmul.f32 %v2708, %v2985
        %v3107 = vmul.f32 %v2710, %v2986
        %v3108 = vmul.f32 %v2712, %v2986
        %v3109 = vmul.f32 %v2714, %v2987
        %v3110 = vmul.f32 %v2716, %v2987
        %v3111 = vmul.f32 %v2718, %v2988
        %v3112 = vmul.f32 %v2720, %v2988
        %v3113 = vmul.f32 %v2722, %v2989
        %v3114 = vmul.f32 %v2724, %v2989
        %v3115 = vmul.f32 %v2726, %v2990
        %v3116 = vmul.f32 %v2728, %v2990
        %v3117 = vmul.f32 %v2730, %v2991
        %v3118 = vmul.f32 %v2732, %v2991
        %v3119 = vmul.f32 %v2734, %v2992
        %v3120 = vmul.f32 %v2736, %v2992
        %v3121 = vpack.c.bf16 %v2994, %v2993
        %v3122 = vpack.c.bf16 %v2996, %v2995
        %v3123 = vpack.c.bf16 %v2998, %v2997
        %v3124 = vpack.c.bf16 %v3000, %v2999
        %v3125 = vpack.c.bf16 %v3002, %v3001
        %v3126 = vpack.c.bf16 %v3004, %v3003
        %v3127 = vpack.c.bf16 %v3006, %v3005
        %v3128 = vpack.c.bf16 %v3008, %v3007
        %v3129 = vpack.c.bf16 %v3010, %v3009
        %v3130 = vpack.c.bf16 %v3012, %v3011
        %v3131 = vpack.c.bf16 %v3014, %v3013
        %v3132 = vpack.c.bf16 %v3016, %v3015
        %v3133 = vpack.c.bf16 %v3018, %v3017
        %v3134 = vpack.c.bf16 %v3020, %v3019
        %v3135 = vpack.c.bf16 %v3022, %v3021
        %v3136 = vpack.c.bf16 %v3024, %v3023
        %v3137 = vpack.c.bf16 %v3026, %v3025
        %v3138 = vpack.c.bf16 %v3028, %v3027
        %v3139 = vpack.c.bf16 %v3030, %v3029
        %v3140 = vpack.c.bf16 %v3032, %v3031
        %v3141 = vpack.c.bf16 %v3034, %v3033
        %v3142 = vpack.c.bf16 %v3036, %v3035
        %v3143 = vpack.c.bf16 %v3038, %v3037
        %v3144 = vpack.c.bf16 %v3040, %v3039
        %v3145 = vpack.c.bf16 %v3042, %v3041
        %v3146 = vpack.c.bf16 %v3044, %v3043
        %v3147 = vpack.c.bf16 %v3046, %v3045
        %v3148 = vpack.c.bf16 %v3048, %v3047
        %v3149 = vpack.c.bf16 %v3050, %v3049
        %v3150 = vpack.c.bf16 %v3052, %v3051
        %v3151 = vpack.c.bf16 %v3054, %v3053
        %v3152 = vpack.c.bf16 %v3056, %v3055
        %v3153 = vpack.c.bf16 %v3058, %v3057
        %v3154 = vpack.c.bf16 %v3060, %v3059
        %v3155 = vpack.c.bf16 %v3062, %v3061
        %v3156 = vpack.c.bf16 %v3064, %v3063
        %v3157 = vpack.c.bf16 %v3066, %v3065
        %v3158 = vpack.c.bf16 %v3068, %v3067
        %v3159 = vpack.c.bf16 %v3070, %v3069
        %v3160 = vpack.c.bf16 %v3072, %v3071
        %v3161 = vpack.c.bf16 %v3074, %v3073
        %v3162 = vpack.c.bf16 %v3076, %v3075
        %v3163 = vpack.c.bf16 %v3078, %v3077
        %v3164 = vpack.c.bf16 %v3080, %v3079
        %v3165 = vpack.c.bf16 %v3082, %v3081
        %v3166 = vpack.c.bf16 %v3084, %v3083
        %v3167 = vpack.c.bf16 %v3086, %v3085
        %v3168 = vpack.c.bf16 %v3088, %v3087
        %v3169 = vpack.c.bf16 %v3090, %v3089
        %v3170 = vpack.c.bf16 %v3092, %v3091
        %v3171 = vpack.c.bf16 %v3094, %v3093
        %v3172 = vpack.c.bf16 %v3096, %v3095
        %v3173 = vpack.c.bf16 %v3098, %v3097
        %v3174 = vpack.c.bf16 %v3100, %v3099
        %v3175 = vpack.c.bf16 %v3102, %v3101
        %v3176 = vpack.c.bf16 %v3104, %v3103
        %v3177 = vpack.c.bf16 %v3106, %v3105
        %v3178 = vpack.c.bf16 %v3108, %v3107
        %v3179 = vpack.c.bf16 %v3110, %v3109
        %v3180 = vpack.c.bf16 %v3112, %v3111
        %v3181 = vpack.c.bf16 %v3114, %v3113
        %v3182 = vpack.c.bf16 %v3116, %v3115
        %v3183 = vpack.c.bf16 %v3118, %v3117
        %v3184 = vpack.c.bf16 %v3120, %v3119
        %v3201 = vunpack.c.l.b16 %v3121
        %v3202 = vunpack.c.h.b16 %v3121
        %v3203 = vunpack.c.l.b16 %v3122
        %v3204 = vunpack.c.h.b16 %v3122
        %v3205 = vunpack.c.l.b16 %v3123
        %v3206 = vunpack.c.h.b16 %v3123
        %v3207 = vunpack.c.l.b16 %v3124
        %v3208 = vunpack.c.h.b16 %v3124
        %v3209 = vunpack.c.l.b16 %v3125
        %v3210 = vunpack.c.h.b16 %v3125
        %v3211 = vunpack.c.l.b16 %v3126
        %v3212 = vunpack.c.h.b16 %v3126
        %v3213 = vunpack.c.l.b16 %v3127
        %v3214 = vunpack.c.h.b16 %v3127
        %v3215 = vunpack.c.l.b16 %v3128
        %v3216 = vunpack.c.h.b16 %v3128
        %v3217 = vunpack.c.l.b16 %v3129
        %v3218 = vunpack.c.h.b16 %v3129
        %v3219 = vunpack.c.l.b16 %v3130
        %v3220 = vunpack.c.h.b16 %v3130
        %v3221 = vunpack.c.l.b16 %v3131
        %v3222 = vunpack.c.h.b16 %v3131
        %v3223 = vunpack.c.l.b16 %v3132
        %v3224 = vunpack.c.h.b16 %v3132
        %v3225 = vunpack.c.l.b16 %v3133
        %v3226 = vunpack.c.h.b16 %v3133
        %v3227 = vunpack.c.l.b16 %v3134
        %v3228 = vunpack.c.h.b16 %v3134
        %v3229 = vunpack.c.l.b16 %v3135
        %v3230 = vunpack.c.h.b16 %v3135
        %v3231 = vunpack.c.l.b16 %v3136
        %v3232 = vunpack.c.h.b16 %v3136
        %v3233 = vpack.c.b16 %v3203, %v3201
        %v3234 = vpack.c.b16 %v3204, %v3202
        %v3235 = vpack.c.b16 %v3207, %v3205
        %v3236 = vpack.c.b16 %v3208, %v3206
        %v3237 = vpack.c.b16 %v3211, %v3209
        %v3238 = vpack.c.b16 %v3212, %v3210
        %v3239 = vpack.c.b16 %v3215, %v3213
        %v3240 = vpack.c.b16 %v3216, %v3214
        %v3241 = vpack.c.b16 %v3219, %v3217
        %v3242 = vpack.c.b16 %v3220, %v3218
        %v3243 = vpack.c.b16 %v3223, %v3221
        %v3244 = vpack.c.b16 %v3224, %v3222
        %v3245 = vpack.c.b16 %v3227, %v3225
        %v3246 = vpack.c.b16 %v3228, %v3226
        %v3247 = vpack.c.b16 %v3231, %v3229
        %v3248 = vpack.c.b16 %v3232, %v3230
        %v3297 = vunpack.c.l.b16 %v872
        %v3298 = vunpack.c.l.b16 %v873
        %v3299 = vunpack.c.l.b16 %v874
        %v3300 = vunpack.c.l.b16 %v875
        %v3301 = vunpack.c.l.b16 %v876
        %v3302 = vunpack.c.l.b16 %v877
        %v3303 = vunpack.c.l.b16 %v878
        %v3304 = vunpack.c.l.b16 %v879
        %v3305 = vunpack.c.l.b16 %v880
        %v3306 = vunpack.c.l.b16 %v881
        %v3307 = vunpack.c.l.b16 %v882
        %v3308 = vunpack.c.l.b16 %v883
        %v3309 = vunpack.c.l.b16 %v884
        %v3310 = vunpack.c.l.b16 %v885
        %v3311 = vunpack.c.l.b16 %v886
        %v3312 = vunpack.c.l.b16 %v887
        %v3313 = vunpack.c.l.b16 %v888
        %v3314 = vunpack.c.l.b16 %v889
        %v3315 = vunpack.c.l.b16 %v890
        %v3316 = vunpack.c.l.b16 %v891
        %v3317 = vunpack.c.l.b16 %v892
        %v3318 = vunpack.c.l.b16 %v893
        %v3319 = vunpack.c.l.b16 %v894
        %v3320 = vunpack.c.l.b16 %v895
        %v3321 = vunpack.c.l.b16 %v896
        %v3322 = vunpack.c.l.b16 %v897
        %v3323 = vunpack.c.l.b16 %v898
        %v3324 = vunpack.c.l.b16 %v899
        %v3325 = vunpack.c.l.b16 %v900
        %v3326 = vunpack.c.l.b16 %v901
        %v3327 = vunpack.c.l.b16 %v902
        %v3328 = vunpack.c.l.b16 %v903
        %v3329 = vpack.c.b16 %v3298, %v3297
        %v3330 = vpack.c.b16 %v3300, %v3299
        %v3331 = vpack.c.b16 %v3302, %v3301
        %v3332 = vpack.c.b16 %v3304, %v3303
        %v3333 = vpack.c.b16 %v3306, %v3305
        %v3334 = vpack.c.b16 %v3308, %v3307
        %v3335 = vpack.c.b16 %v3310, %v3309
        %v3336 = vpack.c.b16 %v3312, %v3311
        %v3337 = vpack.c.b16 %v3314, %v3313
        %v3338 = vpack.c.b16 %v3316, %v3315
        %v3339 = vpack.c.b16 %v3318, %v3317
        %v3340 = vpack.c.b16 %v3320, %v3319
        %v3341 = vpack.c.b16 %v3322, %v3321
        %v3342 = vpack.c.b16 %v3324, %v3323
        %v3343 = vpack.c.b16 %v3326, %v3325
        %v3344 = vpack.c.b16 %v3328, %v3327
        %3361 = vmatpush.bf16.msra.mxu0 %v3336
        %3362 = vmatpush.bf16.msra.mxu0 %v3335
        %3363 = vmatpush.bf16.msra.mxu0 %v3334
        %3364 = vmatpush.bf16.msra.mxu0 %v3333
        %3365 = vmatpush.bf16.msra.mxu0 %v3332
        %3366 = vmatpush.bf16.msra.mxu0 %v3331
        %3367 = vmatpush.bf16.msra.mxu0 %v3330
        %3368 = vmatpush.bf16.msra.mxu0 %v3329
        %3369 = vmatmul.bf16.gmra.mxu0 %v3233
        %v3370 = vpop.f32.mrf.mxu0
        %v3371 = vadd.f32 0.0, %v3370
        %v3372 = vpop.f32.mrf.mxu0
        %v3373 = vadd.f32 0.0, %v3372
        %3374 = vmatmul.bf16.gmra.mxu0 %v3235
        %v3375 = vpop.f32.mrf.mxu0
        %v3376 = vadd.f32 0.0, %v3375
        %v3377 = vpop.f32.mrf.mxu0
        %v3378 = vadd.f32 0.0, %v3377
        %3379 = vmatmul.bf16.gmra.mxu0 %v3237
        %v3380 = vpop.f32.mrf.mxu0
        %v3381 = vadd.f32 0.0, %v3380
        %v3382 = vpop.f32.mrf.mxu0
        %v3383 = vadd.f32 0.0, %v3382
        %3384 = vmatmul.bf16.gmra.mxu0 %v3239
        %v3385 = vpop.f32.mrf.mxu0
        %v3386 = vadd.f32 0.0, %v3385
        %v3387 = vpop.f32.mrf.mxu0
        %v3388 = vadd.f32 0.0, %v3387
        %3389 = vmatmul.bf16.gmra.mxu0 %v3241
        %v3390 = vpop.f32.mrf.mxu0
        %v3391 = vadd.f32 0.0, %v3390
        %v3392 = vpop.f32.mrf.mxu0
        %v3393 = vadd.f32 0.0, %v3392
        %3394 = vmatmul.bf16.gmra.mxu0 %v3243
        %v3395 = vpop.f32.mrf.mxu0
        %v3396 = vadd.f32 0.0, %v3395
        %v3397 = vpop.f32.mrf.mxu0
        %v3398 = vadd.f32 0.0, %v3397
        %3399 = vmatmul.bf16.gmra.mxu0 %v3245
        %v3400 = vpop.f32.mrf.mxu0
        %v3401 = vadd.f32 0.0, %v3400
        %v3402 = vpop.f32.mrf.mxu0
        %v3403 = vadd.f32 0.0, %v3402
        %3404 = vmatmul.bf16.gmra.mxu0 %v3247
        %v3405 = vpop.f32.mrf.mxu0
        %v3406 = vadd.f32 0.0, %v3405
        %v3407 = vpop.f32.mrf.mxu0
        %v3408 = vadd.f32 0.0, %v3407
        %3409 = vdwg.mxu0
        %3410 = vmatpush.bf16.msra.mxu0 %v3344
        %3411 = vmatpush.bf16.msra.mxu0 %v3343
        %3412 = vmatpush.bf16.msra.mxu0 %v3342
        %3413 = vmatpush.bf16.msra.mxu0 %v3341
        %3414 = vmatpush.bf16.msra.mxu0 %v3340
        %3415 = vmatpush.bf16.msra.mxu0 %v3339
        %3416 = vmatpush.bf16.msra.mxu0 %v3338
        %3417 = vmatpush.bf16.msra.mxu0 %v3337
        %3418 = vmatmul.bf16.gmra.mxu0 %v3234
        %v3419 = vpop.f32.mrf.mxu0
        %v3420 = vadd.f32 %v3371, %v3419
        %v3421 = vpop.f32.mrf.mxu0
        %v3422 = vadd.f32 %v3373, %v3421
        %3423 = vmatmul.bf16.gmra.mxu0 %v3236
        %v3424 = vpop.f32.mrf.mxu0
        %v3425 = vadd.f32 %v3376, %v3424
        %v3426 = vpop.f32.mrf.mxu0
        %v3427 = vadd.f32 %v3378, %v3426
        %3428 = vmatmul.bf16.gmra.mxu0 %v3238
        %v3429 = vpop.f32.mrf.mxu0
        %v3430 = vadd.f32 %v3381, %v3429
        %v3431 = vpop.f32.mrf.mxu0
        %v3432 = vadd.f32 %v3383, %v3431
        %3433 = vmatmul.bf16.gmra.mxu0 %v3240
        %v3434 = vpop.f32.mrf.mxu0
        %v3435 = vadd.f32 %v3386, %v3434
        %v3436 = vpop.f32.mrf.mxu0
        %v3437 = vadd.f32 %v3388, %v3436
        %3438 = vmatmul.bf16.gmra.mxu0 %v3242
        %v3439 = vpop.f32.mrf.mxu0
        %v3440 = vadd.f32 %v3391, %v3439
        %v3441 = vpop.f32.mrf.mxu0
        %v3442 = vadd.f32 %v3393, %v3441
        %3443 = vmatmul.bf16.gmra.mxu0 %v3244
        %v3444 = vpop.f32.mrf.mxu0
        %v3445 = vadd.f32 %v3396, %v3444
        %v3446 = vpop.f32.mrf.mxu0
        %v3447 = vadd.f32 %v3398, %v3446
        %3448 = vmatmul.bf16.gmra.mxu0 %v3246
        %v3449 = vpop.f32.mrf.mxu0
        %v3450 = vadd.f32 %v3401, %v3449
        %v3451 = vpop.f32.mrf.mxu0
        %v3452 = vadd.f32 %v3403, %v3451
        %3453 = vmatmul.bf16.gmra.mxu0 %v3248
        %v3454 = vpop.f32.mrf.mxu0
        %v3455 = vadd.f32 %v3406, %v3454
        %v3456 = vpop.f32.mrf.mxu0
        %v3457 = vadd.f32 %v3408, %v3456
        %3458 = vdwg.mxu0
        %v3475 = vunpack.c.l.b16 %v3137
        %v3476 = vunpack.c.h.b16 %v3137
        %v3477 = vunpack.c.l.b16 %v3138
        %v3478 = vunpack.c.h.b16 %v3138
        %v3479 = vunpack.c.l.b16 %v3139
        %v3480 = vunpack.c.h.b16 %v3139
        %v3481 = vunpack.c.l.b16 %v3140
        %v3482 = vunpack.c.h.b16 %v3140
        %v3483 = vunpack.c.l.b16 %v3141
        %v3484 = vunpack.c.h.b16 %v3141
        %v3485 = vunpack.c.l.b16 %v3142
        %v3486 = vunpack.c.h.b16 %v3142
        %v3487 = vunpack.c.l.b16 %v3143
        %v3488 = vunpack.c.h.b16 %v3143
        %v3489 = vunpack.c.l.b16 %v3144
        %v3490 = vunpack.c.h.b16 %v3144
        %v3491 = vunpack.c.l.b16 %v3145
        %v3492 = vunpack.c.h.b16 %v3145
        %v3493 = vunpack.c.l.b16 %v3146
        %v3494 = vunpack.c.h.b16 %v3146
        %v3495 = vunpack.c.l.b16 %v3147
        %v3496 = vunpack.c.h.b16 %v3147
        %v3497 = vunpack.c.l.b16 %v3148
        %v3498 = vunpack.c.h.b16 %v3148
        %v3499 = vunpack.c.l.b16 %v3149
        %v3500 = vunpack.c.h.b16 %v3149
        %v3501 = vunpack.c.l.b16 %v3150
        %v3502 = vunpack.c.h.b16 %v3150
        %v3503 = vunpack.c.l.b16 %v3151
        %v3504 = vunpack.c.h.b16 %v3151
        %v3505 = vunpack.c.l.b16 %v3152
        %v3506 = vunpack.c.h.b16 %v3152
        %v3507 = vpack.c.b16 %v3477, %v3475
        %v3508 = vpack.c.b16 %v3478, %v3476
        %v3509 = vpack.c.b16 %v3481, %v3479
        %v3510 = vpack.c.b16 %v3482, %v3480
        %v3511 = vpack.c.b16 %v3485, %v3483
        %v3512 = vpack.c.b16 %v3486, %v3484
        %v3513 = vpack.c.b16 %v3489, %v3487
        %v3514 = vpack.c.b16 %v3490, %v3488
        %v3515 = vpack.c.b16 %v3493, %v3491
        %v3516 = vpack.c.b16 %v3494, %v3492
        %v3517 = vpack.c.b16 %v3497, %v3495
        %v3518 = vpack.c.b16 %v3498, %v3496
        %v3519 = vpack.c.b16 %v3501, %v3499
        %v3520 = vpack.c.b16 %v3502, %v3500
        %v3521 = vpack.c.b16 %v3505, %v3503
        %v3522 = vpack.c.b16 %v3506, %v3504
        %v3571 = vunpack.c.l.b16 %v904
        %v3572 = vunpack.c.l.b16 %v905
        %v3573 = vunpack.c.l.b16 %v906
        %v3574 = vunpack.c.l.b16 %v907
        %v3575 = vunpack.c.l.b16 %v908
        %v3576 = vunpack.c.l.b16 %v909
        %v3577 = vunpack.c.l.b16 %v910
        %v3578 = vunpack.c.l.b16 %v911
        %v3579 = vunpack.c.l.b16 %v912
        %v3580 = vunpack.c.l.b16 %v913
        %v3581 = vunpack.c.l.b16 %v914
        %v3582 = vunpack.c.l.b16 %v915
        %v3583 = vunpack.c.l.b16 %v916
        %v3584 = vunpack.c.l.b16 %v917
        %v3585 = vunpack.c.l.b16 %v918
        %v3586 = vunpack.c.l.b16 %v919
        %v3587 = vunpack.c.l.b16 %v920
        %v3588 = vunpack.c.l.b16 %v921
        %v3589 = vunpack.c.l.b16 %v922
        %v3590 = vunpack.c.l.b16 %v923
        %v3591 = vunpack.c.l.b16 %v924
        %v3592 = vunpack.c.l.b16 %v925
        %v3593 = vunpack.c.l.b16 %v926
        %v3594 = vunpack.c.l.b16 %v927
        %v3595 = vunpack.c.l.b16 %v928
        %v3596 = vunpack.c.l.b16 %v929
        %v3597 = vunpack.c.l.b16 %v930
        %v3598 = vunpack.c.l.b16 %v931
        %v3599 = vunpack.c.l.b16 %v932
        %v3600 = vunpack.c.l.b16 %v933
        %v3601 = vunpack.c.l.b16 %v934
        %v3602 = vunpack.c.l.b16 %v935
        %v3603 = vpack.c.b16 %v3572, %v3571
        %v3604 = vpack.c.b16 %v3574, %v3573
        %v3605 = vpack.c.b16 %v3576, %v3575
        %v3606 = vpack.c.b16 %v3578, %v3577
        %v3607 = vpack.c.b16 %v3580, %v3579
        %v3608 = vpack.c.b16 %v3582, %v3581
        %v3609 = vpack.c.b16 %v3584, %v3583
        %v3610 = vpack.c.b16 %v3586, %v3585
        %v3611 = vpack.c.b16 %v3588, %v3587
        %v3612 = vpack.c.b16 %v3590, %v3589
        %v3613 = vpack.c.b16 %v3592, %v3591
        %v3614 = vpack.c.b16 %v3594, %v3593
        %v3615 = vpack.c.b16 %v3596, %v3595
        %v3616 = vpack.c.b16 %v3598, %v3597
        %v3617 = vpack.c.b16 %v3600, %v3599
        %v3618 = vpack.c.b16 %v3602, %v3601
        %3635 = vmatpush.bf16.msra.mxu0 %v3610
        %3636 = vmatpush.bf16.msra.mxu0 %v3609
        %3637 = vmatpush.bf16.msra.mxu0 %v3608
        %3638 = vmatpush.bf16.msra.mxu0 %v3607
        %3639 = vmatpush.bf16.msra.mxu0 %v3606
        %3640 = vmatpush.bf16.msra.mxu0 %v3605
        %3641 = vmatpush.bf16.msra.mxu0 %v3604
        %3642 = vmatpush.bf16.msra.mxu0 %v3603
        %3643 = vmatmul.bf16.gmra.mxu0 %v3507
        %v3644 = vpop.f32.mrf.mxu0
        %v3645 = vadd.f32 0.0, %v3644
        %v3646 = vpop.f32.mrf.mxu0
        %v3647 = vadd.f32 0.0, %v3646
        %3648 = vmatmul.bf16.gmra.mxu0 %v3509
        %v3649 = vpop.f32.mrf.mxu0
        %v3650 = vadd.f32 0.0, %v3649
        %v3651 = vpop.f32.mrf.mxu0
        %v3652 = vadd.f32 0.0, %v3651
        %3653 = vmatmul.bf16.gmra.mxu0 %v3511
        %v3654 = vpop.f32.mrf.mxu0
        %v3655 = vadd.f32 0.0, %v3654
        %v3656 = vpop.f32.mrf.mxu0
        %v3657 = vadd.f32 0.0, %v3656
        %3658 = vmatmul.bf16.gmra.mxu0 %v3513
        %v3659 = vpop.f32.mrf.mxu0
        %v3660 = vadd.f32 0.0, %v3659
        %v3661 = vpop.f32.mrf.mxu0
        %v3662 = vadd.f32 0.0, %v3661
        %3663 = vmatmul.bf16.gmra.mxu0 %v3515
        %v3664 = vpop.f32.mrf.mxu0
        %v3665 = vadd.f32 0.0, %v3664
        %v3666 = vpop.f32.mrf.mxu0
        %v3667 = vadd.f32 0.0, %v3666
        %3668 = vmatmul.bf16.gmra.mxu0 %v3517
        %v3669 = vpop.f32.mrf.mxu0
        %v3670 = vadd.f32 0.0, %v3669
        %v3671 = vpop.f32.mrf.mxu0
        %v3672 = vadd.f32 0.0, %v3671
        %3673 = vmatmul.bf16.gmra.mxu0 %v3519
        %v3674 = vpop.f32.mrf.mxu0
        %v3675 = vadd.f32 0.0, %v3674
        %v3676 = vpop.f32.mrf.mxu0
        %v3677 = vadd.f32 0.0, %v3676
        %3678 = vmatmul.bf16.gmra.mxu0 %v3521
        %v3679 = vpop.f32.mrf.mxu0
        %v3680 = vadd.f32 0.0, %v3679
        %v3681 = vpop.f32.mrf.mxu0
        %v3682 = vadd.f32 0.0, %v3681
        %3683 = vdwg.mxu0
        %3684 = vmatpush.bf16.msra.mxu0 %v3618
        %3685 = vmatpush.bf16.msra.mxu0 %v3617
        %3686 = vmatpush.bf16.msra.mxu0 %v3616
        %3687 = vmatpush.bf16.msra.mxu0 %v3615
        %3688 = vmatpush.bf16.msra.mxu0 %v3614
        %3689 = vmatpush.bf16.msra.mxu0 %v3613
        %3690 = vmatpush.bf16.msra.mxu0 %v3612
        %3691 = vmatpush.bf16.msra.mxu0 %v3611
        %3692 = vmatmul.bf16.gmra.mxu0 %v3508
        %v3693 = vpop.f32.mrf.mxu0
        %v3694 = vadd.f32 %v3645, %v3693
        %v3695 = vpop.f32.mrf.mxu0
        %v3696 = vadd.f32 %v3647, %v3695
        %3697 = vmatmul.bf16.gmra.mxu0 %v3510
        %v3698 = vpop.f32.mrf.mxu0
        %v3699 = vadd.f32 %v3650, %v3698
        %v3700 = vpop.f32.mrf.mxu0
        %v3701 = vadd.f32 %v3652, %v3700
        %3702 = vmatmul.bf16.gmra.mxu0 %v3512
        %v3703 = vpop.f32.mrf.mxu0
        %v3704 = vadd.f32 %v3655, %v3703
        %v3705 = vpop.f32.mrf.mxu0
        %v3706 = vadd.f32 %v3657, %v3705
        %3707 = vmatmul.bf16.gmra.mxu0 %v3514
        %v3708 = vpop.f32.mrf.mxu0
        %v3709 = vadd.f32 %v3660, %v3708
        %v3710 = vpop.f32.mrf.mxu0
        %v3711 = vadd.f32 %v3662, %v3710
        %3712 = vmatmul.bf16.gmra.mxu0 %v3516
        %v3713 = vpop.f32.mrf.mxu0
        %v3714 = vadd.f32 %v3665, %v3713
        %v3715 = vpop.f32.mrf.mxu0
        %v3716 = vadd.f32 %v3667, %v3715
        %3717 = vmatmul.bf16.gmra.mxu0 %v3518
        %v3718 = vpop.f32.mrf.mxu0
        %v3719 = vadd.f32 %v3670, %v3718
        %v3720 = vpop.f32.mrf.mxu0
        %v3721 = vadd.f32 %v3672, %v3720
        %3722 = vmatmul.bf16.gmra.mxu0 %v3520
        %v3723 = vpop.f32.mrf.mxu0
        %v3724 = vadd.f32 %v3675, %v3723
        %v3725 = vpop.f32.mrf.mxu0
        %v3726 = vadd.f32 %v3677, %v3725
        %3727 = vmatmul.bf16.gmra.mxu0 %v3522
        %v3728 = vpop.f32.mrf.mxu0
        %v3729 = vadd.f32 %v3680, %v3728
        %v3730 = vpop.f32.mrf.mxu0
        %v3731 = vadd.f32 %v3682, %v3730
        %3732 = vdwg.mxu0
        %v3749 = vunpack.c.l.b16 %v3153
        %v3750 = vunpack.c.h.b16 %v3153
        %v3751 = vunpack.c.l.b16 %v3154
        %v3752 = vunpack.c.h.b16 %v3154
        %v3753 = vunpack.c.l.b16 %v3155
        %v3754 = vunpack.c.h.b16 %v3155
        %v3755 = vunpack.c.l.b16 %v3156
        %v3756 = vunpack.c.h.b16 %v3156
        %v3757 = vunpack.c.l.b16 %v3157
        %v3758 = vunpack.c.h.b16 %v3157
        %v3759 = vunpack.c.l.b16 %v3158
        %v3760 = vunpack.c.h.b16 %v3158
        %v3761 = vunpack.c.l.b16 %v3159
        %v3762 = vunpack.c.h.b16 %v3159
        %v3763 = vunpack.c.l.b16 %v3160
        %v3764 = vunpack.c.h.b16 %v3160
        %v3765 = vunpack.c.l.b16 %v3161
        %v3766 = vunpack.c.h.b16 %v3161
        %v3767 = vunpack.c.l.b16 %v3162
        %v3768 = vunpack.c.h.b16 %v3162
        %v3769 = vunpack.c.l.b16 %v3163
        %v3770 = vunpack.c.h.b16 %v3163
        %v3771 = vunpack.c.l.b16 %v3164
        %v3772 = vunpack.c.h.b16 %v3164
        %v3773 = vunpack.c.l.b16 %v3165
        %v3774 = vunpack.c.h.b16 %v3165
        %v3775 = vunpack.c.l.b16 %v3166
        %v3776 = vunpack.c.h.b16 %v3166
        %v3777 = vunpack.c.l.b16 %v3167
        %v3778 = vunpack.c.h.b16 %v3167
        %v3779 = vunpack.c.l.b16 %v3168
        %v3780 = vunpack.c.h.b16 %v3168
        %v3781 = vpack.c.b16 %v3751, %v3749
        %v3782 = vpack.c.b16 %v3752, %v3750
        %v3783 = vpack.c.b16 %v3755, %v3753
        %v3784 = vpack.c.b16 %v3756, %v3754
        %v3785 = vpack.c.b16 %v3759, %v3757
        %v3786 = vpack.c.b16 %v3760, %v3758
        %v3787 = vpack.c.b16 %v3763, %v3761
        %v3788 = vpack.c.b16 %v3764, %v3762
        %v3789 = vpack.c.b16 %v3767, %v3765
        %v3790 = vpack.c.b16 %v3768, %v3766
        %v3791 = vpack.c.b16 %v3771, %v3769
        %v3792 = vpack.c.b16 %v3772, %v3770
        %v3793 = vpack.c.b16 %v3775, %v3773
        %v3794 = vpack.c.b16 %v3776, %v3774
        %v3795 = vpack.c.b16 %v3779, %v3777
        %v3796 = vpack.c.b16 %v3780, %v3778
        %v3845 = vunpack.c.l.b16 %v936
        %v3846 = vunpack.c.l.b16 %v937
        %v3847 = vunpack.c.l.b16 %v938
        %v3848 = vunpack.c.l.b16 %v939
        %v3849 = vunpack.c.l.b16 %v940
        %v3850 = vunpack.c.l.b16 %v941
        %v3851 = vunpack.c.l.b16 %v942
        %v3852 = vunpack.c.l.b16 %v943
        %v3853 = vunpack.c.l.b16 %v944
        %v3854 = vunpack.c.l.b16 %v945
        %v3855 = vunpack.c.l.b16 %v946
        %v3856 = vunpack.c.l.b16 %v947
        %v3857 = vunpack.c.l.b16 %v948
        %v3858 = vunpack.c.l.b16 %v949
        %v3859 = vunpack.c.l.b16 %v950
        %v3860 = vunpack.c.l.b16 %v951
        %v3861 = vunpack.c.l.b16 %v952
        %v3862 = vunpack.c.l.b16 %v953
        %v3863 = vunpack.c.l.b16 %v954
        %v3864 = vunpack.c.l.b16 %v955
        %v3865 = vunpack.c.l.b16 %v956
        %v3866 = vunpack.c.l.b16 %v957
        %v3867 = vunpack.c.l.b16 %v958
        %v3868 = vunpack.c.l.b16 %v959
        %v3869 = vunpack.c.l.b16 %v960
        %v3870 = vunpack.c.l.b16 %v961
        %v3871 = vunpack.c.l.b16 %v962
        %v3872 = vunpack.c.l.b16 %v963
        %v3873 = vunpack.c.l.b16 %v964
        %v3874 = vunpack.c.l.b16 %v965
        %v3875 = vunpack.c.l.b16 %v966
        %v3876 = vunpack.c.l.b16 %v967
        %v3877 = vpack.c.b16 %v3846, %v3845
        %v3878 = vpack.c.b16 %v3848, %v3847
        %v3879 = vpack.c.b16 %v3850, %v3849
        %v3880 = vpack.c.b16 %v3852, %v3851
        %v3881 = vpack.c.b16 %v3854, %v3853
        %v3882 = vpack.c.b16 %v3856, %v3855
        %v3883 = vpack.c.b16 %v3858, %v3857
        %v3884 = vpack.c.b16 %v3860, %v3859
        %v3885 = vpack.c.b16 %v3862, %v3861
        %v3886 = vpack.c.b16 %v3864, %v3863
        %v3887 = vpack.c.b16 %v3866, %v3865
        %v3888 = vpack.c.b16 %v3868, %v3867
        %v3889 = vpack.c.b16 %v3870, %v3869
        %v3890 = vpack.c.b16 %v3872, %v3871
        %v3891 = vpack.c.b16 %v3874, %v3873
        %v3892 = vpack.c.b16 %v3876, %v3875
        %3909 = vmatpush.bf16.msra.mxu0 %v3884
        %3910 = vmatpush.bf16.msra.mxu0 %v3883
        %3911 = vmatpush.bf16.msra.mxu0 %v3882
        %3912 = vmatpush.bf16.msra.mxu0 %v3881
        %3913 = vmatpush.bf16.msra.mxu0 %v3880
        %3914 = vmatpush.bf16.msra.mxu0 %v3879
        %3915 = vmatpush.bf16.msra.mxu0 %v3878
        %3916 = vmatpush.bf16.msra.mxu0 %v3877
        %3917 = vmatmul.bf16.gmra.mxu0 %v3781
        %v3918 = vpop.f32.mrf.mxu0
        %v3919 = vadd.f32 0.0, %v3918
        %v3920 = vpop.f32.mrf.mxu0
        %v3921 = vadd.f32 0.0, %v3920
        %3922 = vmatmul.bf16.gmra.mxu0 %v3783
        %v3923 = vpop.f32.mrf.mxu0
        %v3924 = vadd.f32 0.0, %v3923
        %v3925 = vpop.f32.mrf.mxu0
        %v3926 = vadd.f32 0.0, %v3925
        %3927 = vmatmul.bf16.gmra.mxu0 %v3785
        %v3928 = vpop.f32.mrf.mxu0
        %v3929 = vadd.f32 0.0, %v3928
        %v3930 = vpop.f32.mrf.mxu0
        %v3931 = vadd.f32 0.0, %v3930
        %3932 = vmatmul.bf16.gmra.mxu0 %v3787
        %v3933 = vpop.f32.mrf.mxu0
        %v3934 = vadd.f32 0.0, %v3933
        %v3935 = vpop.f32.mrf.mxu0
        %v3936 = vadd.f32 0.0, %v3935
        %3937 = vmatmul.bf16.gmra.mxu0 %v3789
        %v3938 = vpop.f32.mrf.mxu0
        %v3939 = vadd.f32 0.0, %v3938
        %v3940 = vpop.f32.mrf.mxu0
        %v3941 = vadd.f32 0.0, %v3940
        %3942 = vmatmul.bf16.gmra.mxu0 %v3791
        %v3943 = vpop.f32.mrf.mxu0
        %v3944 = vadd.f32 0.0, %v3943
        %v3945 = vpop.f32.mrf.mxu0
        %v3946 = vadd.f32 0.0, %v3945
        %3947 = vmatmul.bf16.gmra.mxu0 %v3793
        %v3948 = vpop.f32.mrf.mxu0
        %v3949 = vadd.f32 0.0, %v3948
        %v3950 = vpop.f32.mrf.mxu0
        %v3951 = vadd.f32 0.0, %v3950
        %3952 = vmatmul.bf16.gmra.mxu0 %v3795
        %v3953 = vpop.f32.mrf.mxu0
        %v3954 = vadd.f32 0.0, %v3953
        %v3955 = vpop.f32.mrf.mxu0
        %v3956 = vadd.f32 0.0, %v3955
        %3957 = vdwg.mxu0
        %3958 = vmatpush.bf16.msra.mxu0 %v3892
        %3959 = vmatpush.bf16.msra.mxu0 %v3891
        %3960 = vmatpush.bf16.msra.mxu0 %v3890
        %3961 = vmatpush.bf16.msra.mxu0 %v3889
        %3962 = vmatpush.bf16.msra.mxu0 %v3888
        %3963 = vmatpush.bf16.msra.mxu0 %v3887
        %3964 = vmatpush.bf16.msra.mxu0 %v3886
        %3965 = vmatpush.bf16.msra.mxu0 %v3885
        %3966 = vmatmul.bf16.gmra.mxu0 %v3782
        %v3967 = vpop.f32.mrf.mxu0
        %v3968 = vadd.f32 %v3919, %v3967
        %v3969 = vpop.f32.mrf.mxu0
        %v3970 = vadd.f32 %v3921, %v3969
        %3971 = vmatmul.bf16.gmra.mxu0 %v3784
        %v3972 = vpop.f32.mrf.mxu0
        %v3973 = vadd.f32 %v3924, %v3972
        %v3974 = vpop.f32.mrf.mxu0
        %v3975 = vadd.f32 %v3926, %v3974
        %3976 = vmatmul.bf16.gmra.mxu0 %v3786
        %v3977 = vpop.f32.mrf.mxu0
        %v3978 = vadd.f32 %v3929, %v3977
        %v3979 = vpop.f32.mrf.mxu0
        %v3980 = vadd.f32 %v3931, %v3979
        %3981 = vmatmul.bf16.gmra.mxu0 %v3788
        %v3982 = vpop.f32.mrf.mxu0
        %v3983 = vadd.f32 %v3934, %v3982
        %v3984 = vpop.f32.mrf.mxu0
        %v3985 = vadd.f32 %v3936, %v3984
        %3986 = vmatmul.bf16.gmra.mxu0 %v3790
        %v3987 = vpop.f32.mrf.mxu0
        %v3988 = vadd.f32 %v3939, %v3987
        %v3989 = vpop.f32.mrf.mxu0
        %v3990 = vadd.f32 %v3941, %v3989
        %3991 = vmatmul.bf16.gmra.mxu0 %v3792
        %v3992 = vpop.f32.mrf.mxu0
        %v3993 = vadd.f32 %v3944, %v3992
        %v3994 = vpop.f32.mrf.mxu0
        %v3995 = vadd.f32 %v3946, %v3994
        %3996 = vmatmul.bf16.gmra.mxu0 %v3794
        %v3997 = vpop.f32.mrf.mxu0
        %v3998 = vadd.f32 %v3949, %v3997
        %v3999 = vpop.f32.mrf.mxu0
        %v4000 = vadd.f32 %v3951, %v3999
        %4001 = vmatmul.bf16.gmra.mxu0 %v3796
        %v4002 = vpop.f32.mrf.mxu0
        %v4003 = vadd.f32 %v3954, %v4002
        %v4004 = vpop.f32.mrf.mxu0
        %v4005 = vadd.f32 %v3956, %v4004
        %4006 = vdwg.mxu0
        %v4023 = vunpack.c.l.b16 %v3169
        %v4024 = vunpack.c.h.b16 %v3169
        %v4025 = vunpack.c.l.b16 %v3170
        %v4026 = vunpack.c.h.b16 %v3170
        %v4027 = vunpack.c.l.b16 %v3171
        %v4028 = vunpack.c.h.b16 %v3171
        %v4029 = vunpack.c.l.b16 %v3172
        %v4030 = vunpack.c.h.b16 %v3172
        %v4031 = vunpack.c.l.b16 %v3173
        %v4032 = vunpack.c.h.b16 %v3173
        %v4033 = vunpack.c.l.b16 %v3174
        %v4034 = vunpack.c.h.b16 %v3174
        %v4035 = vunpack.c.l.b16 %v3175
        %v4036 = vunpack.c.h.b16 %v3175
        %v4037 = vunpack.c.l.b16 %v3176
        %v4038 = vunpack.c.h.b16 %v3176
        %v4039 = vunpack.c.l.b16 %v3177
        %v4040 = vunpack.c.h.b16 %v3177
        %v4041 = vunpack.c.l.b16 %v3178
        %v4042 = vunpack.c.h.b16 %v3178
        %v4043 = vunpack.c.l.b16 %v3179
        %v4044 = vunpack.c.h.b16 %v3179
        %v4045 = vunpack.c.l.b16 %v3180
        %v4046 = vunpack.c.h.b16 %v3180
        %v4047 = vunpack.c.l.b16 %v3181
        %v4048 = vunpack.c.h.b16 %v3181
        %v4049 = vunpack.c.l.b16 %v3182
        %v4050 = vunpack.c.h.b16 %v3182
        %v4051 = vunpack.c.l.b16 %v3183
        %v4052 = vunpack.c.h.b16 %v3183
        %v4053 = vunpack.c.l.b16 %v3184
        %v4054 = vunpack.c.h.b16 %v3184
        %v4055 = vpack.c.b16 %v4025, %v4023
        %v4056 = vpack.c.b16 %v4026, %v4024
        %v4057 = vpack.c.b16 %v4029, %v4027
        %v4058 = vpack.c.b16 %v4030, %v4028
        %v4059 = vpack.c.b16 %v4033, %v4031
        %v4060 = vpack.c.b16 %v4034, %v4032
        %v4061 = vpack.c.b16 %v4037, %v4035
        %v4062 = vpack.c.b16 %v4038, %v4036
        %v4063 = vpack.c.b16 %v4041, %v4039
        %v4064 = vpack.c.b16 %v4042, %v4040
        %v4065 = vpack.c.b16 %v4045, %v4043
        %v4066 = vpack.c.b16 %v4046, %v4044
        %v4067 = vpack.c.b16 %v4049, %v4047
        %v4068 = vpack.c.b16 %v4050, %v4048
        %v4069 = vpack.c.b16 %v4053, %v4051
        %v4070 = vpack.c.b16 %v4054, %v4052
        %v4119 = vunpack.c.l.b16 %v968
        %v4120 = vunpack.c.l.b16 %v969
        %v4121 = vunpack.c.l.b16 %v970
        %v4122 = vunpack.c.l.b16 %v971
        %v4123 = vunpack.c.l.b16 %v972
        %v4124 = vunpack.c.l.b16 %v973
        %v4125 = vunpack.c.l.b16 %v974
        %v4126 = vunpack.c.l.b16 %v975
        %v4127 = vunpack.c.l.b16 %v976
        %v4128 = vunpack.c.l.b16 %v977
        %v4129 = vunpack.c.l.b16 %v978
        %v4130 = vunpack.c.l.b16 %v979
        %v4131 = vunpack.c.l.b16 %v980
        %v4132 = vunpack.c.l.b16 %v981
        %v4133 = vunpack.c.l.b16 %v982
        %v4134 = vunpack.c.l.b16 %v983
        %v4135 = vunpack.c.l.b16 %v984
        %v4136 = vunpack.c.l.b16 %v985
        %v4137 = vunpack.c.l.b16 %v986
        %v4138 = vunpack.c.l.b16 %v987
        %v4139 = vunpack.c.l.b16 %v988
        %v4140 = vunpack.c.l.b16 %v989
        %v4141 = vunpack.c.l.b16 %v990
        %v4142 = vunpack.c.l.b16 %v991
        %v4143 = vunpack.c.l.b16 %v992
        %v4144 = vunpack.c.l.b16 %v993
        %v4145 = vunpack.c.l.b16 %v994
        %v4146 = vunpack.c.l.b16 %v995
        %v4147 = vunpack.c.l.b16 %v996
        %v4148 = vunpack.c.l.b16 %v997
        %v4149 = vunpack.c.l.b16 %v998
        %v4150 = vunpack.c.l.b16 %v999
        %v4151 = vpack.c.b16 %v4120, %v4119
        %v4152 = vpack.c.b16 %v4122, %v4121
        %v4153 = vpack.c.b16 %v4124, %v4123
        %v4154 = vpack.c.b16 %v4126, %v4125
        %v4155 = vpack.c.b16 %v4128, %v4127
        %v4156 = vpack.c.b16 %v4130, %v4129
        %v4157 = vpack.c.b16 %v4132, %v4131
        %v4158 = vpack.c.b16 %v4134, %v4133
        %v4159 = vpack.c.b16 %v4136, %v4135
        %v4160 = vpack.c.b16 %v4138, %v4137
        %v4161 = vpack.c.b16 %v4140, %v4139
        %v4162 = vpack.c.b16 %v4142, %v4141
        %v4163 = vpack.c.b16 %v4144, %v4143
        %v4164 = vpack.c.b16 %v4146, %v4145
        %v4165 = vpack.c.b16 %v4148, %v4147
        %v4166 = vpack.c.b16 %v4150, %v4149
        %4183 = vmatpush.bf16.msra.mxu0 %v4158
        %4184 = vmatpush.bf16.msra.mxu0 %v4157
        %4185 = vmatpush.bf16.msra.mxu0 %v4156
        %4186 = vmatpush.bf16.msra.mxu0 %v4155
        %4187 = vmatpush.bf16.msra.mxu0 %v4154
        %4188 = vmatpush.bf16.msra.mxu0 %v4153
        %4189 = vmatpush.bf16.msra.mxu0 %v4152
        %4190 = vmatpush.bf16.msra.mxu0 %v4151
        %4191 = vmatmul.bf16.gmra.mxu0 %v4055
        %v4192 = vpop.f32.mrf.mxu0
        %v4193 = vadd.f32 0.0, %v4192
        %v4194 = vpop.f32.mrf.mxu0
        %v4195 = vadd.f32 0.0, %v4194
        %4196 = vmatmul.bf16.gmra.mxu0 %v4057
        %v4197 = vpop.f32.mrf.mxu0
        %v4198 = vadd.f32 0.0, %v4197
        %v4199 = vpop.f32.mrf.mxu0
        %v4200 = vadd.f32 0.0, %v4199
        %4201 = vmatmul.bf16.gmra.mxu0 %v4059
        %v4202 = vpop.f32.mrf.mxu0
        %v4203 = vadd.f32 0.0, %v4202
        %v4204 = vpop.f32.mrf.mxu0
        %v4205 = vadd.f32 0.0, %v4204
        %4206 = vmatmul.bf16.gmra.mxu0 %v4061
        %v4207 = vpop.f32.mrf.mxu0
        %v4208 = vadd.f32 0.0, %v4207
        %v4209 = vpop.f32.mrf.mxu0
        %v4210 = vadd.f32 0.0, %v4209
        %4211 = vmatmul.bf16.gmra.mxu0 %v4063
        %v4212 = vpop.f32.mrf.mxu0
        %v4213 = vadd.f32 0.0, %v4212
        %v4214 = vpop.f32.mrf.mxu0
        %v4215 = vadd.f32 0.0, %v4214
        %4216 = vmatmul.bf16.gmra.mxu0 %v4065
        %v4217 = vpop.f32.mrf.mxu0
        %v4218 = vadd.f32 0.0, %v4217
        %v4219 = vpop.f32.mrf.mxu0
        %v4220 = vadd.f32 0.0, %v4219
        %4221 = vmatmul.bf16.gmra.mxu0 %v4067
        %v4222 = vpop.f32.mrf.mxu0
        %v4223 = vadd.f32 0.0, %v4222
        %v4224 = vpop.f32.mrf.mxu0
        %v4225 = vadd.f32 0.0, %v4224
        %4226 = vmatmul.bf16.gmra.mxu0 %v4069
        %v4227 = vpop.f32.mrf.mxu0
        %v4228 = vadd.f32 0.0, %v4227
        %v4229 = vpop.f32.mrf.mxu0
        %v4230 = vadd.f32 0.0, %v4229
        %4231 = vdwg.mxu0
        %4232 = vmatpush.bf16.msra.mxu0 %v4166
        %4233 = vmatpush.bf16.msra.mxu0 %v4165
        %4234 = vmatpush.bf16.msra.mxu0 %v4164
        %4235 = vmatpush.bf16.msra.mxu0 %v4163
        %4236 = vmatpush.bf16.msra.mxu0 %v4162
        %4237 = vmatpush.bf16.msra.mxu0 %v4161
        %4238 = vmatpush.bf16.msra.mxu0 %v4160
        %4239 = vmatpush.bf16.msra.mxu0 %v4159
        %4240 = vmatmul.bf16.gmra.mxu0 %v4056
        %v4241 = vpop.f32.mrf.mxu0
        %v4242 = vadd.f32 %v4193, %v4241
        %v4243 = vpop.f32.mrf.mxu0
        %v4244 = vadd.f32 %v4195, %v4243
        %4245 = vmatmul.bf16.gmra.mxu0 %v4058
        %v4246 = vpop.f32.mrf.mxu0
        %v4247 = vadd.f32 %v4198, %v4246
        %v4248 = vpop.f32.mrf.mxu0
        %v4249 = vadd.f32 %v4200, %v4248
        %4250 = vmatmul.bf16.gmra.mxu0 %v4060
        %v4251 = vpop.f32.mrf.mxu0
        %v4252 = vadd.f32 %v4203, %v4251
        %v4253 = vpop.f32.mrf.mxu0
        %v4254 = vadd.f32 %v4205, %v4253
        %4255 = vmatmul.bf16.gmra.mxu0 %v4062
        %v4256 = vpop.f32.mrf.mxu0
        %v4257 = vadd.f32 %v4208, %v4256
        %v4258 = vpop.f32.mrf.mxu0
        %v4259 = vadd.f32 %v4210, %v4258
        %4260 = vmatmul.bf16.gmra.mxu0 %v4064
        %v4261 = vpop.f32.mrf.mxu0
        %v4262 = vadd.f32 %v4213, %v4261
        %v4263 = vpop.f32.mrf.mxu0
        %v4264 = vadd.f32 %v4215, %v4263
        %4265 = vmatmul.bf16.gmra.mxu0 %v4066
        %v4266 = vpop.f32.mrf.mxu0
        %v4267 = vadd.f32 %v4218, %v4266
        %v4268 = vpop.f32.mrf.mxu0
        %v4269 = vadd.f32 %v4220, %v4268
        %4270 = vmatmul.bf16.gmra.mxu0 %v4068
        %v4271 = vpop.f32.mrf.mxu0
        %v4272 = vadd.f32 %v4223, %v4271
        %v4273 = vpop.f32.mrf.mxu0
        %v4274 = vadd.f32 %v4225, %v4273
        %4275 = vmatmul.bf16.gmra.mxu0 %v4070
        %v4276 = vpop.f32.mrf.mxu0
        %v4277 = vadd.f32 %v4228, %v4276
        %v4278 = vpop.f32.mrf.mxu0
        %v4279 = vadd.f32 %v4230, %v4278
        %4280 = vdwg.mxu0
        %v4281 = vpack.c.bf16 %v3420, %v3420
        %v4282 = vpack.c.bf16 %v3422, %v3422
        %v4283 = vpack.c.bf16 %v3425, %v3425
        %v4284 = vpack.c.bf16 %v3427, %v3427
        %v4285 = vpack.c.bf16 %v3430, %v3430
        %v4286 = vpack.c.bf16 %v3432, %v3432
        %v4287 = vpack.c.bf16 %v3435, %v3435
        %v4288 = vpack.c.bf16 %v3437, %v3437
        %v4289 = vpack.c.bf16 %v3440, %v3440
        %v4290 = vpack.c.bf16 %v3442, %v3442
        %v4291 = vpack.c.bf16 %v3445, %v3445
        %v4292 = vpack.c.bf16 %v3447, %v3447
        %v4293 = vpack.c.bf16 %v3450, %v3450
        %v4294 = vpack.c.bf16 %v3452, %v3452
        %v4295 = vpack.c.bf16 %v3455, %v3455
        %v4296 = vpack.c.bf16 %v3457, %v3457
        %v4297 = vpack.c.bf16 %v3694, %v3694
        %v4298 = vpack.c.bf16 %v3696, %v3696
        %v4299 = vpack.c.bf16 %v3699, %v3699
        %v4300 = vpack.c.bf16 %v3701, %v3701
        %v4301 = vpack.c.bf16 %v3704, %v3704
        %v4302 = vpack.c.bf16 %v3706, %v3706
        %v4303 = vpack.c.bf16 %v3709, %v3709
        %v4304 = vpack.c.bf16 %v3711, %v3711
        %v4305 = vpack.c.bf16 %v3714, %v3714
        %v4306 = vpack.c.bf16 %v3716, %v3716
        %v4307 = vpack.c.bf16 %v3719, %v3719
        %v4308 = vpack.c.bf16 %v3721, %v3721
        %v4309 = vpack.c.bf16 %v3724, %v3724
        %v4310 = vpack.c.bf16 %v3726, %v3726
        %v4311 = vpack.c.bf16 %v3729, %v3729
        %v4312 = vpack.c.bf16 %v3731, %v3731
        %v4313 = vpack.c.bf16 %v3968, %v3968
        %v4314 = vpack.c.bf16 %v3970, %v3970
        %v4315 = vpack.c.bf16 %v3973, %v3973
        %v4316 = vpack.c.bf16 %v3975, %v3975
        %v4317 = vpack.c.bf16 %v3978, %v3978
        %v4318 = vpack.c.bf16 %v3980, %v3980
        %v4319 = vpack.c.bf16 %v3983, %v3983
        %v4320 = vpack.c.bf16 %v3985, %v3985
        %v4321 = vpack.c.bf16 %v3988, %v3988
        %v4322 = vpack.c.bf16 %v3990, %v3990
        %v4323 = vpack.c.bf16 %v3993, %v3993
        %v4324 = vpack.c.bf16 %v3995, %v3995
        %v4325 = vpack.c.bf16 %v3998, %v3998
        %v4326 = vpack.c.bf16 %v4000, %v4000
        %v4327 = vpack.c.bf16 %v4003, %v4003
        %v4328 = vpack.c.bf16 %v4005, %v4005
        %v4329 = vpack.c.bf16 %v4242, %v4242
        %v4330 = vpack.c.bf16 %v4244, %v4244
        %v4331 = vpack.c.bf16 %v4247, %v4247
        %v4332 = vpack.c.bf16 %v4249, %v4249
        %v4333 = vpack.c.bf16 %v4252, %v4252
        %v4334 = vpack.c.bf16 %v4254, %v4254
        %v4335 = vpack.c.bf16 %v4257, %v4257
        %v4336 = vpack.c.bf16 %v4259, %v4259
        %v4337 = vpack.c.bf16 %v4262, %v4262
        %v4338 = vpack.c.bf16 %v4264, %v4264
        %v4339 = vpack.c.bf16 %v4267, %v4267
        %v4340 = vpack.c.bf16 %v4269, %v4269
        %v4341 = vpack.c.bf16 %v4272, %v4272
        %v4342 = vpack.c.bf16 %v4274, %v4274
        %v4343 = vpack.c.bf16 %v4277, %v4277
        %v4344 = vpack.c.bf16 %v4279, %v4279
        %v4345 = vld [vmem:[%s4] sm:$0xf]
        %v4346 = vld [vmem:[%s4 + $0x4] sm:$0xf]
        %v4347 = vld [vmem:[%s4 + $0x8] sm:$0xf]
        %v4348 = vld [vmem:[%s4 + $0xc] sm:$0xf]
        %v4349 = vld [vmem:[%s4 + $0x10] sm:$0xf]
        %v4350 = vld [vmem:[%s4 + $0x14] sm:$0xf]
        %v4351 = vld [vmem:[%s4 + $0x18] sm:$0xf]
        %v4352 = vld [vmem:[%s4 + $0x1c] sm:$0xf]
        %v4353 = vld [vmem:[%s4 + $0x20] sm:$0xf]
        %v4354 = vld [vmem:[%s4 + $0x24] sm:$0xf]
        %v4355 = vld [vmem:[%s4 + $0x28] sm:$0xf]
        %v4356 = vld [vmem:[%s4 + $0x2c] sm:$0xf]
        %v4357 = vld [vmem:[%s4 + $0x30] sm:$0xf]
        %v4358 = vld [vmem:[%s4 + $0x34] sm:$0xf]
        %v4359 = vld [vmem:[%s4 + $0x38] sm:$0xf]
        %v4360 = vld [vmem:[%s4 + $0x3c] sm:$0xf]
        %v4377 = vunpack.c.l.b16 %v4297
        %v4378 = vunpack.c.l.b16 %v4298
        %v4379 = vunpack.c.l.b16 %v4299
        %v4380 = vunpack.c.l.b16 %v4300
        %v4381 = vunpack.c.l.b16 %v4301
        %v4382 = vunpack.c.l.b16 %v4302
        %v4383 = vunpack.c.l.b16 %v4303
        %v4384 = vunpack.c.l.b16 %v4304
        %v4385 = vunpack.c.l.b16 %v4305
        %v4386 = vunpack.c.l.b16 %v4306
        %v4387 = vunpack.c.l.b16 %v4307
        %v4388 = vunpack.c.l.b16 %v4308
        %v4389 = vunpack.c.l.b16 %v4309
        %v4390 = vunpack.c.l.b16 %v4310
        %v4391 = vunpack.c.l.b16 %v4311
        %v4392 = vunpack.c.l.b16 %v4312
        %v4393 = vpack.c.b16 %v4378, %v4377
        %v4394 = vpack.c.b16 %v4380, %v4379
        %v4395 = vpack.c.b16 %v4382, %v4381
        %v4396 = vpack.c.b16 %v4384, %v4383
        %v4397 = vpack.c.b16 %v4386, %v4385
        %v4398 = vpack.c.b16 %v4388, %v4387
        %v4399 = vpack.c.b16 %v4390, %v4389
        %v4400 = vpack.c.b16 %v4392, %v4391
        %v4405 = vunpack.c.l.b16 %v4349
        %v4406 = vunpack.c.l.b16 %v4350
        %v4407 = vunpack.c.l.b16 %v4351
        %v4408 = vunpack.c.l.b16 %v4352
        %v4409 = vpack.c.b16 %v4406, %v4405
        %v4410 = vpack.c.b16 %v4408, %v4407
        %v4414 = vsel %vm1120, %v4393, 0
        %v4417 = vsel %vm1120, %v4394, 0
        %v4420 = vsel %vm1120, %v4395, 0
        %v4423 = vsel %vm1120, %v4396, 0
        %v4426 = vsel %vm1120, %v4397, 0
        %v4429 = vsel %vm1120, %v4398, 0
        %v4432 = vsel %vm1120, %v4399, 0
        %v4435 = vsel %vm1120, %v4400, 0
        %4437 = vmatpush.bf16.msra.mxu0 0
        %4438 = vmatpush.bf16.msra.mxu0 0
        %4439 = vmatpush.bf16.msra.mxu0 0
        %4440 = vmatpush.bf16.msra.mxu0 0
        %4441 = vmatpush.bf16.msra.mxu0 0
        %4442 = vmatpush.bf16.msra.mxu0 0
        %4443 = vmatpush.bf16.msra.mxu0 %v4410
        %4444 = vmatpush.bf16.msra.mxu0 %v4409
        %4445 = vmatmul.bf16.gmra.mxu0 %v4414
        %v4446 = vpop.f32.mrf.mxu0
        %v4447 = vadd.f32 0.0, %v4446
        %v4448 = vpop.f32.mrf.mxu0
        %v4449 = vadd.f32 0.0, %v4448
        %4450 = vmatmul.bf16.gmra.mxu0 %v4417
        %v4451 = vpop.f32.mrf.mxu0
        %v4452 = vadd.f32 0.0, %v4451
        %v4453 = vpop.f32.mrf.mxu0
        %v4454 = vadd.f32 0.0, %v4453
        %4455 = vmatmul.bf16.gmra.mxu0 %v4420
        %v4456 = vpop.f32.mrf.mxu0
        %v4457 = vadd.f32 0.0, %v4456
        %v4458 = vpop.f32.mrf.mxu0
        %v4459 = vadd.f32 0.0, %v4458
        %4460 = vmatmul.bf16.gmra.mxu0 %v4423
        %v4461 = vpop.f32.mrf.mxu0
        %v4462 = vadd.f32 0.0, %v4461
        %v4463 = vpop.f32.mrf.mxu0
        %v4464 = vadd.f32 0.0, %v4463
        %4465 = vmatmul.bf16.gmra.mxu0 %v4426
        %v4466 = vpop.f32.mrf.mxu0
        %v4467 = vadd.f32 0.0, %v4466
        %v4468 = vpop.f32.mrf.mxu0
        %v4469 = vadd.f32 0.0, %v4468
        %4470 = vmatmul.bf16.gmra.mxu0 %v4429
        %v4471 = vpop.f32.mrf.mxu0
        %v4472 = vadd.f32 0.0, %v4471
        %v4473 = vpop.f32.mrf.mxu0
        %v4474 = vadd.f32 0.0, %v4473
        %4475 = vmatmul.bf16.gmra.mxu0 %v4432
        %v4476 = vpop.f32.mrf.mxu0
        %v4477 = vadd.f32 0.0, %v4476
        %v4478 = vpop.f32.mrf.mxu0
        %v4479 = vadd.f32 0.0, %v4478
        %4480 = vmatmul.bf16.gmra.mxu0 %v4435
        %v4481 = vpop.f32.mrf.mxu0
        %v4482 = vadd.f32 0.0, %v4481
        %v4483 = vpop.f32.mrf.mxu0
        %v4484 = vadd.f32 0.0, %v4483
        %4485 = vdwg.mxu0
        %v4502 = vunpack.c.l.b16 %v4281
        %v4503 = vunpack.c.l.b16 %v4282
        %v4504 = vunpack.c.l.b16 %v4283
        %v4505 = vunpack.c.l.b16 %v4284
        %v4506 = vunpack.c.l.b16 %v4285
        %v4507 = vunpack.c.l.b16 %v4286
        %v4508 = vunpack.c.l.b16 %v4287
        %v4509 = vunpack.c.l.b16 %v4288
        %v4510 = vunpack.c.l.b16 %v4289
        %v4511 = vunpack.c.l.b16 %v4290
        %v4512 = vunpack.c.l.b16 %v4291
        %v4513 = vunpack.c.l.b16 %v4292
        %v4514 = vunpack.c.l.b16 %v4293
        %v4515 = vunpack.c.l.b16 %v4294
        %v4516 = vunpack.c.l.b16 %v4295
        %v4517 = vunpack.c.l.b16 %v4296
        %v4518 = vpack.c.b16 %v4503, %v4502
        %v4519 = vpack.c.b16 %v4505, %v4504
        %v4520 = vpack.c.b16 %v4507, %v4506
        %v4521 = vpack.c.b16 %v4509, %v4508
        %v4522 = vpack.c.b16 %v4511, %v4510
        %v4523 = vpack.c.b16 %v4513, %v4512
        %v4524 = vpack.c.b16 %v4515, %v4514
        %v4525 = vpack.c.b16 %v4517, %v4516
        %v4530 = vunpack.c.l.b16 %v4345
        %v4531 = vunpack.c.l.b16 %v4346
        %v4532 = vunpack.c.l.b16 %v4347
        %v4533 = vunpack.c.l.b16 %v4348
        %v4534 = vpack.c.b16 %v4531, %v4530
        %v4535 = vpack.c.b16 %v4533, %v4532
        %v4539 = vsel %vm1120, %v4518, 0
        %v4542 = vsel %vm1120, %v4519, 0
        %v4545 = vsel %vm1120, %v4520, 0
        %v4548 = vsel %vm1120, %v4521, 0
        %v4551 = vsel %vm1120, %v4522, 0
        %v4554 = vsel %vm1120, %v4523, 0
        %v4557 = vsel %vm1120, %v4524, 0
        %v4560 = vsel %vm1120, %v4525, 0
        %4562 = vmatpush.bf16.msra.mxu0 0
        %4563 = vmatpush.bf16.msra.mxu0 0
        %4564 = vmatpush.bf16.msra.mxu0 0
        %4565 = vmatpush.bf16.msra.mxu0 0
        %4566 = vmatpush.bf16.msra.mxu0 0
        %4567 = vmatpush.bf16.msra.mxu0 0
        %4568 = vmatpush.bf16.msra.mxu0 %v4535
        %4569 = vmatpush.bf16.msra.mxu0 %v4534
        %4570 = vmatmul.bf16.gmra.mxu0 %v4539
        %v4571 = vpop.f32.mrf.mxu0
        %v4572 = vadd.f32 %v4447, %v4571
        %v4573 = vpop.f32.mrf.mxu0
        %v4574 = vadd.f32 %v4449, %v4573
        %4575 = vmatmul.bf16.gmra.mxu0 %v4542
        %v4576 = vpop.f32.mrf.mxu0
        %v4577 = vadd.f32 %v4452, %v4576
        %v4578 = vpop.f32.mrf.mxu0
        %v4579 = vadd.f32 %v4454, %v4578
        %4580 = vmatmul.bf16.gmra.mxu0 %v4545
        %v4581 = vpop.f32.mrf.mxu0
        %v4582 = vadd.f32 %v4457, %v4581
        %v4583 = vpop.f32.mrf.mxu0
        %v4584 = vadd.f32 %v4459, %v4583
        %4585 = vmatmul.bf16.gmra.mxu0 %v4548
        %v4586 = vpop.f32.mrf.mxu0
        %v4587 = vadd.f32 %v4462, %v4586
        %v4588 = vpop.f32.mrf.mxu0
        %v4589 = vadd.f32 %v4464, %v4588
        %4590 = vmatmul.bf16.gmra.mxu0 %v4551
        %v4591 = vpop.f32.mrf.mxu0
        %v4592 = vadd.f32 %v4467, %v4591
        %v4593 = vpop.f32.mrf.mxu0
        %v4594 = vadd.f32 %v4469, %v4593
        %4595 = vmatmul.bf16.gmra.mxu0 %v4554
        %v4596 = vpop.f32.mrf.mxu0
        %v4597 = vadd.f32 %v4472, %v4596
        %v4598 = vpop.f32.mrf.mxu0
        %v4599 = vadd.f32 %v4474, %v4598
        %4600 = vmatmul.bf16.gmra.mxu0 %v4557
        %v4601 = vpop.f32.mrf.mxu0
        %v4602 = vadd.f32 %v4477, %v4601
        %v4603 = vpop.f32.mrf.mxu0
        %v4604 = vadd.f32 %v4479, %v4603
        %4605 = vmatmul.bf16.gmra.mxu0 %v4560
        %v4606 = vpop.f32.mrf.mxu0
        %v4607 = vadd.f32 %v4482, %v4606
        %v4608 = vpop.f32.mrf.mxu0
        %v4609 = vadd.f32 %v4484, %v4608
        %4610 = vdwg.mxu0
        %v4627 = vunpack.c.l.b16 %v4313
        %v4628 = vunpack.c.l.b16 %v4314
        %v4629 = vunpack.c.l.b16 %v4315
        %v4630 = vunpack.c.l.b16 %v4316
        %v4631 = vunpack.c.l.b16 %v4317
        %v4632 = vunpack.c.l.b16 %v4318
        %v4633 = vunpack.c.l.b16 %v4319
        %v4634 = vunpack.c.l.b16 %v4320
        %v4635 = vunpack.c.l.b16 %v4321
        %v4636 = vunpack.c.l.b16 %v4322
        %v4637 = vunpack.c.l.b16 %v4323
        %v4638 = vunpack.c.l.b16 %v4324
        %v4639 = vunpack.c.l.b16 %v4325
        %v4640 = vunpack.c.l.b16 %v4326
        %v4641 = vunpack.c.l.b16 %v4327
        %v4642 = vunpack.c.l.b16 %v4328
        %v4643 = vpack.c.b16 %v4628, %v4627
        %v4644 = vpack.c.b16 %v4630, %v4629
        %v4645 = vpack.c.b16 %v4632, %v4631
        %v4646 = vpack.c.b16 %v4634, %v4633
        %v4647 = vpack.c.b16 %v4636, %v4635
        %v4648 = vpack.c.b16 %v4638, %v4637
        %v4649 = vpack.c.b16 %v4640, %v4639
        %v4650 = vpack.c.b16 %v4642, %v4641
        %v4655 = vunpack.c.l.b16 %v4353
        %v4656 = vunpack.c.l.b16 %v4354
        %v4657 = vunpack.c.l.b16 %v4355
        %v4658 = vunpack.c.l.b16 %v4356
        %v4659 = vpack.c.b16 %v4656, %v4655
        %v4660 = vpack.c.b16 %v4658, %v4657
        %v4664 = vsel %vm1120, %v4643, 0
        %v4667 = vsel %vm1120, %v4644, 0
        %v4670 = vsel %vm1120, %v4645, 0
        %v4673 = vsel %vm1120, %v4646, 0
        %v4676 = vsel %vm1120, %v4647, 0
        %v4679 = vsel %vm1120, %v4648, 0
        %v4682 = vsel %vm1120, %v4649, 0
        %v4685 = vsel %vm1120, %v4650, 0
        %4687 = vmatpush.bf16.msra.mxu0 0
        %4688 = vmatpush.bf16.msra.mxu0 0
        %4689 = vmatpush.bf16.msra.mxu0 0
        %4690 = vmatpush.bf16.msra.mxu0 0
        %4691 = vmatpush.bf16.msra.mxu0 0
        %4692 = vmatpush.bf16.msra.mxu0 0
        %4693 = vmatpush.bf16.msra.mxu0 %v4660
        %4694 = vmatpush.bf16.msra.mxu0 %v4659
        %4695 = vmatmul.bf16.gmra.mxu0 %v4664
        %v4696 = vpop.f32.mrf.mxu0
        %v4697 = vadd.f32 0.0, %v4696
        %v4698 = vpop.f32.mrf.mxu0
        %v4699 = vadd.f32 0.0, %v4698
        %4700 = vmatmul.bf16.gmra.mxu0 %v4667
        %v4701 = vpop.f32.mrf.mxu0
        %v4702 = vadd.f32 0.0, %v4701
        %v4703 = vpop.f32.mrf.mxu0
        %v4704 = vadd.f32 0.0, %v4703
        %4705 = vmatmul.bf16.gmra.mxu0 %v4670
        %v4706 = vpop.f32.mrf.mxu0
        %v4707 = vadd.f32 0.0, %v4706
        %v4708 = vpop.f32.mrf.mxu0
        %v4709 = vadd.f32 0.0, %v4708
        %4710 = vmatmul.bf16.gmra.mxu0 %v4673
        %v4711 = vpop.f32.mrf.mxu0
        %v4712 = vadd.f32 0.0, %v4711
        %v4713 = vpop.f32.mrf.mxu0
        %v4714 = vadd.f32 0.0, %v4713
        %4715 = vmatmul.bf16.gmra.mxu0 %v4676
        %v4716 = vpop.f32.mrf.mxu0
        %v4717 = vadd.f32 0.0, %v4716
        %v4718 = vpop.f32.mrf.mxu0
        %v4719 = vadd.f32 0.0, %v4718
        %4720 = vmatmul.bf16.gmra.mxu0 %v4679
        %v4721 = vpop.f32.mrf.mxu0
        %v4722 = vadd.f32 0.0, %v4721
        %v4723 = vpop.f32.mrf.mxu0
        %v4724 = vadd.f32 0.0, %v4723
        %4725 = vmatmul.bf16.gmra.mxu0 %v4682
        %v4726 = vpop.f32.mrf.mxu0
        %v4727 = vadd.f32 0.0, %v4726
        %v4728 = vpop.f32.mrf.mxu0
        %v4729 = vadd.f32 0.0, %v4728
        %4730 = vmatmul.bf16.gmra.mxu0 %v4685
        %v4731 = vpop.f32.mrf.mxu0
        %v4732 = vadd.f32 0.0, %v4731
        %v4733 = vpop.f32.mrf.mxu0
        %v4734 = vadd.f32 0.0, %v4733
        %4735 = vdwg.mxu0
        %v4736 = vadd.f32 %v4572, %v4697
        %v4737 = vadd.f32 %v4574, %v4699
        %v4738 = vadd.f32 %v4577, %v4702
        %v4739 = vadd.f32 %v4579, %v4704
        %v4740 = vadd.f32 %v4582, %v4707
        %v4741 = vadd.f32 %v4584, %v4709
        %v4742 = vadd.f32 %v4587, %v4712
        %v4743 = vadd.f32 %v4589, %v4714
        %v4744 = vadd.f32 %v4592, %v4717
        %v4745 = vadd.f32 %v4594, %v4719
        %v4746 = vadd.f32 %v4597, %v4722
        %v4747 = vadd.f32 %v4599, %v4724
        %v4748 = vadd.f32 %v4602, %v4727
        %v4749 = vadd.f32 %v4604, %v4729
        %v4750 = vadd.f32 %v4607, %v4732
        %v4751 = vadd.f32 %v4609, %v4734
        %v4768 = vunpack.c.l.b16 %v4329
        %v4769 = vunpack.c.l.b16 %v4330
        %v4770 = vunpack.c.l.b16 %v4331
        %v4771 = vunpack.c.l.b16 %v4332
        %v4772 = vunpack.c.l.b16 %v4333
        %v4773 = vunpack.c.l.b16 %v4334
        %v4774 = vunpack.c.l.b16 %v4335
        %v4775 = vunpack.c.l.b16 %v4336
        %v4776 = vunpack.c.l.b16 %v4337
        %v4777 = vunpack.c.l.b16 %v4338
        %v4778 = vunpack.c.l.b16 %v4339
        %v4779 = vunpack.c.l.b16 %v4340
        %v4780 = vunpack.c.l.b16 %v4341
        %v4781 = vunpack.c.l.b16 %v4342
        %v4782 = vunpack.c.l.b16 %v4343
        %v4783 = vunpack.c.l.b16 %v4344
        %v4784 = vpack.c.b16 %v4769, %v4768
        %v4785 = vpack.c.b16 %v4771, %v4770
        %v4786 = vpack.c.b16 %v4773, %v4772
        %v4787 = vpack.c.b16 %v4775, %v4774
        %v4788 = vpack.c.b16 %v4777, %v4776
        %v4789 = vpack.c.b16 %v4779, %v4778
        %v4790 = vpack.c.b16 %v4781, %v4780
        %v4791 = vpack.c.b16 %v4783, %v4782
        %v4796 = vunpack.c.l.b16 %v4357
        %v4797 = vunpack.c.l.b16 %v4358
        %v4798 = vunpack.c.l.b16 %v4359
        %v4799 = vunpack.c.l.b16 %v4360
        %v4800 = vpack.c.b16 %v4797, %v4796
        %v4801 = vpack.c.b16 %v4799, %v4798
        %v4805 = vsel %vm1120, %v4784, 0
        %v4808 = vsel %vm1120, %v4785, 0
        %v4811 = vsel %vm1120, %v4786, 0
        %v4814 = vsel %vm1120, %v4787, 0
        %v4817 = vsel %vm1120, %v4788, 0
        %v4820 = vsel %vm1120, %v4789, 0
        %v4823 = vsel %vm1120, %v4790, 0
        %v4826 = vsel %vm1120, %v4791, 0
        %4828 = vmatpush.bf16.msra.mxu0 0
        %4829 = vmatpush.bf16.msra.mxu0 0
        %4830 = vmatpush.bf16.msra.mxu0 0
        %4831 = vmatpush.bf16.msra.mxu0 0
        %4832 = vmatpush.bf16.msra.mxu0 0
        %4833 = vmatpush.bf16.msra.mxu0 0
        %4834 = vmatpush.bf16.msra.mxu0 %v4801
        %4835 = vmatpush.bf16.msra.mxu0 %v4800
        %4836 = vmatmul.bf16.gmra.mxu0 %v4805
        %v4837 = vpop.f32.mrf.mxu0
        %v4838 = vadd.f32 0.0, %v4837
        %v4839 = vpop.f32.mrf.mxu0
        %v4840 = vadd.f32 0.0, %v4839
        %4841 = vmatmul.bf16.gmra.mxu0 %v4808
        %v4842 = vpop.f32.mrf.mxu0
        %v4843 = vadd.f32 0.0, %v4842
        %v4844 = vpop.f32.mrf.mxu0
        %v4845 = vadd.f32 0.0, %v4844
        %4846 = vmatmul.bf16.gmra.mxu0 %v4811
        %v4847 = vpop.f32.mrf.mxu0
        %v4848 = vadd.f32 0.0, %v4847
        %v4849 = vpop.f32.mrf.mxu0
        %v4850 = vadd.f32 0.0, %v4849
        %4851 = vmatmul.bf16.gmra.mxu0 %v4814
        %v4852 = vpop.f32.mrf.mxu0
        %v4853 = vadd.f32 0.0, %v4852
        %v4854 = vpop.f32.mrf.mxu0
        %v4855 = vadd.f32 0.0, %v4854
        %4856 = vmatmul.bf16.gmra.mxu0 %v4817
        %v4857 = vpop.f32.mrf.mxu0
        %v4858 = vadd.f32 0.0, %v4857
        %v4859 = vpop.f32.mrf.mxu0
        %v4860 = vadd.f32 0.0, %v4859
        %4861 = vmatmul.bf16.gmra.mxu0 %v4820
        %v4862 = vpop.f32.mrf.mxu0
        %v4863 = vadd.f32 0.0, %v4862
        %v4864 = vpop.f32.mrf.mxu0
        %v4865 = vadd.f32 0.0, %v4864
        %4866 = vmatmul.bf16.gmra.mxu0 %v4823
        %v4867 = vpop.f32.mrf.mxu0
        %v4868 = vadd.f32 0.0, %v4867
        %v4869 = vpop.f32.mrf.mxu0
        %v4870 = vadd.f32 0.0, %v4869
        %4871 = vmatmul.bf16.gmra.mxu0 %v4826
        %v4872 = vpop.f32.mrf.mxu0
        %v4873 = vadd.f32 0.0, %v4872
        %v4874 = vpop.f32.mrf.mxu0
        %v4875 = vadd.f32 0.0, %v4874
        %4876 = vdwg.mxu0
        %v4877 = vadd.f32 %v4736, %v4838
        %v4878 = vadd.f32 %v4737, %v4840
        %v4879 = vadd.f32 %v4738, %v4843
        %v4880 = vadd.f32 %v4739, %v4845
        %v4881 = vadd.f32 %v4740, %v4848
        %v4882 = vadd.f32 %v4741, %v4850
        %v4883 = vadd.f32 %v4742, %v4853
        %v4884 = vadd.f32 %v4743, %v4855
        %v4885 = vadd.f32 %v4744, %v4858
        %v4886 = vadd.f32 %v4745, %v4860
        %v4887 = vadd.f32 %v4746, %v4863
        %v4888 = vadd.f32 %v4747, %v4865
        %v4889 = vadd.f32 %v4748, %v4868
        %v4890 = vadd.f32 %v4749, %v4870
        %v4891 = vadd.f32 %v4750, %v4873
        %v4892 = vadd.f32 %v4751, %v4875
        %v4893 = vld [vmem:[%s5] sm:$0x1]
        %v4895 = vperm.slane %v4893, 0
        %v4897 = vadd.f32 %v4877, %v4895
        %v4898 = vadd.f32 %v4878, %v4895
        %v4899 = vadd.f32 %v4879, %v4895
        %v4900 = vadd.f32 %v4880, %v4895
        %v4901 = vadd.f32 %v4881, %v4895
        %v4902 = vadd.f32 %v4882, %v4895
        %v4903 = vadd.f32 %v4883, %v4895
        %v4904 = vadd.f32 %v4884, %v4895
        %v4905 = vadd.f32 %v4885, %v4895
        %v4906 = vadd.f32 %v4886, %v4895
        %v4907 = vadd.f32 %v4887, %v4895
        %v4908 = vadd.f32 %v4888, %v4895
        %v4909 = vadd.f32 %v4889, %v4895
        %v4910 = vadd.f32 %v4890, %v4895
        %v4911 = vadd.f32 %v4891, %v4895
        %v4912 = vadd.f32 %v4892, %v4895
        %v4913 = vld [vmem:[%s667] sm:$0xf]
        %v4914 = vld [vmem:[%s667 + $0x4] sm:$0xf]
        %v4915 = vld [vmem:[%s667 + $0x8] sm:$0xf]
        %v4916 = vld [vmem:[%s667 + $0xc] sm:$0xf]
        %v4917 = vld [vmem:[%s667 + $0x10] sm:$0xf]
        %v4918 = vld [vmem:[%s667 + $0x14] sm:$0xf]
        %v4919 = vld [vmem:[%s667 + $0x18] sm:$0xf]
        %v4920 = vld [vmem:[%s667 + $0x1c] sm:$0xf]
        %v4921 = vld [vmem:[%s667 + $0x20] sm:$0xf]
        %v4922 = vld [vmem:[%s667 + $0x24] sm:$0xf]
        %v4923 = vld [vmem:[%s667 + $0x28] sm:$0xf]
        %v4924 = vld [vmem:[%s667 + $0x2c] sm:$0xf]
        %v4925 = vld [vmem:[%s667 + $0x30] sm:$0xf]
        %v4926 = vld [vmem:[%s667 + $0x34] sm:$0xf]
        %v4927 = vld [vmem:[%s667 + $0x38] sm:$0xf]
        %v4928 = vld [vmem:[%s667 + $0x3c] sm:$0xf]
        %v4929 = vunpack.c.l.bf16 %v4913
        %v4930 = vunpack.c.l.bf16 %v4914
        %v4931 = vunpack.c.l.bf16 %v4915
        %v4932 = vunpack.c.l.bf16 %v4916
        %v4933 = vunpack.c.l.bf16 %v4917
        %v4934 = vunpack.c.l.bf16 %v4918
        %v4935 = vunpack.c.l.bf16 %v4919
        %v4936 = vunpack.c.l.bf16 %v4920
        %v4937 = vunpack.c.l.bf16 %v4921
        %v4938 = vunpack.c.l.bf16 %v4922
        %v4939 = vunpack.c.l.bf16 %v4923
        %v4940 = vunpack.c.l.bf16 %v4924
        %v4941 = vunpack.c.l.bf16 %v4925
        %v4942 = vunpack.c.l.bf16 %v4926
        %v4943 = vunpack.c.l.bf16 %v4927
        %v4944 = vunpack.c.l.bf16 %v4928
        %v4945 = vadd.f32 %v4897, %v4929
        %v4946 = vadd.f32 %v4898, %v4930
        %v4947 = vadd.f32 %v4899, %v4931
        %v4948 = vadd.f32 %v4900, %v4932
        %v4949 = vadd.f32 %v4901, %v4933
        %v4950 = vadd.f32 %v4902, %v4934
        %v4951 = vadd.f32 %v4903, %v4935
        %v4952 = vadd.f32 %v4904, %v4936
        %v4953 = vadd.f32 %v4905, %v4937
        %v4954 = vadd.f32 %v4906, %v4938
        %v4955 = vadd.f32 %v4907, %v4939
        %v4956 = vadd.f32 %v4908, %v4940
        %v4957 = vadd.f32 %v4909, %v4941
        %v4958 = vadd.f32 %v4910, %v4942
        %v4959 = vadd.f32 %v4911, %v4943
        %v4960 = vadd.f32 %v4912, %v4944
        %v4961 = vpack.c.bf16 %v4946, %v4945
        %v4962 = vpack.c.bf16 %v4948, %v4947
        %v4963 = vpack.c.bf16 %v4950, %v4949
        %v4964 = vpack.c.bf16 %v4952, %v4951
        %v4965 = vpack.c.bf16 %v4954, %v4953
        %v4966 = vpack.c.bf16 %v4956, %v4955
        %v4967 = vpack.c.bf16 %v4958, %v4957
        %v4968 = vpack.c.bf16 %v4960, %v4959
        %v4969 = vld [vmem:[%s6] sm:$0xf]
        %v4970 = vld [vmem:[%s6 + $0x4] sm:$0xf]
        %v4971 = vld [vmem:[%s6 + $0x8] sm:$0xf]
        %v4972 = vld [vmem:[%s6 + $0xc] sm:$0xf]
        %v4973 = vld [vmem:[%s6 + $0x10] sm:$0xf]
        %v4974 = vld [vmem:[%s6 + $0x14] sm:$0xf]
        %v4975 = vld [vmem:[%s6 + $0x18] sm:$0xf]
        %v4976 = vld [vmem:[%s6 + $0x1c] sm:$0xf]
        %v4977 = vld [vmem:[%s6 + $0x20] sm:$0xf]
        %v4978 = vld [vmem:[%s6 + $0x24] sm:$0xf]
        %v4979 = vld [vmem:[%s6 + $0x28] sm:$0xf]
        %v4980 = vld [vmem:[%s6 + $0x2c] sm:$0xf]
        %v4981 = vld [vmem:[%s6 + $0x30] sm:$0xf]
        %v4982 = vld [vmem:[%s6 + $0x34] sm:$0xf]
        %v4983 = vld [vmem:[%s6 + $0x38] sm:$0xf]
        %v4984 = vld [vmem:[%s6 + $0x3c] sm:$0xf]
        %v5001 = vunpack.c.l.b16 %v4969
        %v5002 = vunpack.c.l.b16 %v4970
        %v5003 = vunpack.c.l.b16 %v4971
        %v5004 = vunpack.c.l.b16 %v4972
        %v5005 = vunpack.c.l.b16 %v4973
        %v5006 = vunpack.c.l.b16 %v4974
        %v5007 = vunpack.c.l.b16 %v4975
        %v5008 = vunpack.c.l.b16 %v4976
        %v5009 = vunpack.c.l.b16 %v4977
        %v5010 = vunpack.c.l.b16 %v4978
        %v5011 = vunpack.c.l.b16 %v4979
        %v5012 = vunpack.c.l.b16 %v4980
        %v5013 = vunpack.c.l.b16 %v4981
        %v5014 = vunpack.c.l.b16 %v4982
        %v5015 = vunpack.c.l.b16 %v4983
        %v5016 = vunpack.c.l.b16 %v4984
        %v5017 = vpack.c.b16 %v5002, %v5001
        %v5018 = vpack.c.b16 %v5004, %v5003
        %v5019 = vpack.c.b16 %v5006, %v5005
        %v5020 = vpack.c.b16 %v5008, %v5007
        %v5021 = vpack.c.b16 %v5010, %v5009
        %v5022 = vpack.c.b16 %v5012, %v5011
        %v5023 = vpack.c.b16 %v5014, %v5013
        %v5024 = vpack.c.b16 %v5016, %v5015
        %5033 = vmatpush.bf16.msra.mxu0 %v5024
        %5034 = vmatpush.bf16.msra.mxu0 %v5023
        %5035 = vmatpush.bf16.msra.mxu0 %v5022
        %5036 = vmatpush.bf16.msra.mxu0 %v5021
        %5037 = vmatpush.bf16.msra.mxu0 %v5020
        %5038 = vmatpush.bf16.msra.mxu0 %v5019
        %5039 = vmatpush.bf16.msra.mxu0 %v5018
        %5040 = vmatpush.bf16.msra.mxu0 %v5017
        %5041 = vmatmul.bf16.gmra.mxu0 %v4961
        %v5042 = vpop.f32.mrf.mxu0
        %v5043 = vadd.f32 0.0, %v5042
        %v5044 = vpop.f32.mrf.mxu0
        %v5045 = vadd.f32 0.0, %v5044
        %5046 = vmatmul.bf16.gmra.mxu0 %v4962
        %v5047 = vpop.f32.mrf.mxu0
        %v5048 = vadd.f32 0.0, %v5047
        %v5049 = vpop.f32.mrf.mxu0
        %v5050 = vadd.f32 0.0, %v5049
        %5051 = vmatmul.bf16.gmra.mxu0 %v4963
        %v5052 = vpop.f32.mrf.mxu0
        %v5053 = vadd.f32 0.0, %v5052
        %v5054 = vpop.f32.mrf.mxu0
        %v5055 = vadd.f32 0.0, %v5054
        %5056 = vmatmul.bf16.gmra.mxu0 %v4964
        %v5057 = vpop.f32.mrf.mxu0
        %v5058 = vadd.f32 0.0, %v5057
        %v5059 = vpop.f32.mrf.mxu0
        %v5060 = vadd.f32 0.0, %v5059
        %5061 = vmatmul.bf16.gmra.mxu0 %v4965
        %v5062 = vpop.f32.mrf.mxu0
        %v5063 = vadd.f32 0.0, %v5062
        %v5064 = vpop.f32.mrf.mxu0
        %v5065 = vadd.f32 0.0, %v5064
        %5066 = vmatmul.bf16.gmra.mxu0 %v4966
        %v5067 = vpop.f32.mrf.mxu0
        %v5068 = vadd.f32 0.0, %v5067
        %v5069 = vpop.f32.mrf.mxu0
        %v5070 = vadd.f32 0.0, %v5069
        %5071 = vmatmul.bf16.gmra.mxu0 %v4967
        %v5072 = vpop.f32.mrf.mxu0
        %v5073 = vadd.f32 0.0, %v5072
        %v5074 = vpop.f32.mrf.mxu0
        %v5075 = vadd.f32 0.0, %v5074
        %5076 = vmatmul.bf16.gmra.mxu0 %v4968
        %v5077 = vpop.f32.mrf.mxu0
        %v5078 = vadd.f32 0.0, %v5077
        %v5079 = vpop.f32.mrf.mxu0
        %v5080 = vadd.f32 0.0, %v5079
        %5081 = vdwg.mxu0
        %v5082 = vadd.f32 %v4945, %v5043
        %v5083 = vadd.f32 %v4946, %v5045
        %v5084 = vadd.f32 %v4947, %v5048
        %v5085 = vadd.f32 %v4948, %v5050
        %v5086 = vadd.f32 %v4949, %v5053
        %v5087 = vadd.f32 %v4950, %v5055
        %v5088 = vadd.f32 %v4951, %v5058
        %v5089 = vadd.f32 %v4952, %v5060
        %v5090 = vadd.f32 %v4953, %v5063
        %v5091 = vadd.f32 %v4954, %v5065
        %v5092 = vadd.f32 %v4955, %v5068
        %v5093 = vadd.f32 %v4956, %v5070
        %v5094 = vadd.f32 %v4957, %v5073
        %v5095 = vadd.f32 %v4958, %v5075
        %v5096 = vadd.f32 %v4959, %v5078
        %v5097 = vadd.f32 %v4960, %v5080
        %v5098 = vpack.c.bf16 %v5082, %v5082
        %v5099 = vpack.c.bf16 %v5083, %v5083
        %v5100 = vpack.c.bf16 %v5084, %v5084
        %v5101 = vpack.c.bf16 %v5085, %v5085
        %v5102 = vpack.c.bf16 %v5086, %v5086
        %v5103 = vpack.c.bf16 %v5087, %v5087
        %v5104 = vpack.c.bf16 %v5088, %v5088
        %v5105 = vpack.c.bf16 %v5089, %v5089
        %v5106 = vpack.c.bf16 %v5090, %v5090
        %v5107 = vpack.c.bf16 %v5091, %v5091
        %v5108 = vpack.c.bf16 %v5092, %v5092
        %v5109 = vpack.c.bf16 %v5093, %v5093
        %v5110 = vpack.c.bf16 %v5094, %v5094
        %v5111 = vpack.c.bf16 %v5095, %v5095
        %v5112 = vpack.c.bf16 %v5096, %v5096
        %v5113 = vpack.c.bf16 %v5097, %v5097
        %5114 = vst [vmem:[%s677] sm:$0xf] %v5098
        %5115 = vst [vmem:[%s677 + $0x4] sm:$0xf] %v5099
        %5116 = vst [vmem:[%s677 + $0x8] sm:$0xf] %v5100
        %5117 = vst [vmem:[%s677 + $0xc] sm:$0xf] %v5101
        %5118 = vst [vmem:[%s677 + $0x10] sm:$0xf] %v5102
        %5119 = vst [vmem:[%s677 + $0x14] sm:$0xf] %v5103
        %5120 = vst [vmem:[%s677 + $0x18] sm:$0xf] %v5104
        %5121 = vst [vmem:[%s677 + $0x1c] sm:$0xf] %v5105
        %5122 = vst [vmem:[%s677 + $0x20] sm:$0xf] %v5106
        %5123 = vst [vmem:[%s677 + $0x24] sm:$0xf] %v5107
        %5124 = vst [vmem:[%s677 + $0x28] sm:$0xf] %v5108
        %5125 = vst [vmem:[%s677 + $0x2c] sm:$0xf] %v5109
        %5126 = vst [vmem:[%s677 + $0x30] sm:$0xf] %v5110
        %5127 = vst [vmem:[%s677 + $0x34] sm:$0xf] %v5111
        %5128 = vst [vmem:[%s677 + $0x38] sm:$0xf] %v5112
        %5129 = vst [vmem:[%s677 + $0x3c] sm:$0xf] %v5113
        %s5130 = smul.u32 16, %s23
        %p5131 = scmp.lt.s32.totalorder %s22, 1
        %s5132 = scalar_select %p5131, %s22, 1
        %p5133 = scmp.lt.s32.totalorder %s5130, 31
        %s5134 = scalar_select %p5133, %s5130, 31
        %s5135 = smul.addr %s5132, 32
        %s5136 = sadd.s32 %s5134, %s5135
        %s5137 = smul.addr %s5136, 4
        %s5138 = scalar_lea.vmem %s7, %s5137
        // Predicated region
        $region90: #{transformer_block.7} parent=84 // pred_check
          %p5139 = pneg %p221
        $region91: #{transformer_block.7} parent=84 // pred_check_branch
          %5141 = sbr.rel (%p5139) target = $region93
        $region92: #{transformer_block.7} parent=84 // pred_region
          %s5142 = smul.u32 16, %s23
        $region93: #{transformer_block.7} parent=84 // pred_fallthru
          _
      $region85: #{transformer_block.7} parent=5 // pred_fallthru
        _
      %p5143 = scmp.le.s32.totalorder 2, %s13
      // Predicated region
      $region94: #{transformer_block.7} parent=5 // pred_check
        %p5144 = pneg %p5143
      $region95: #{transformer_block.7} parent=5 // pred_check_branch
        %5146 = sbr.rel (%p5144) target = $region97
      $region96: #{transformer_block.7} parent=5 // pred_region
        %s5147 = ssub.s32 %s13, 2
        // Predicated region
        $region98: #{transformer_block.7} parent=96 // pred_check
          %p5148 = pneg %p227
        $region99: #{transformer_block.7} parent=96 // pred_check_branch
          %5150 = sbr.rel (%p5148) target = $region101
        $region100: #{transformer_block.7} parent=96 // pred_region
          %s5151 = smul.u32 16, %s25
          %p5152 = scmp.lt.s32.totalorder %s24, 1
          %s5153 = scalar_select %p5152, %s24, 1
          %p5154 = scmp.lt.s32.totalorder %s5151, 31
          %s5155 = scalar_select %p5154, %s5151, 31
          %s5156 = smul.addr %s5153, 32
          %s5157 = sadd.s32 %s5155, %s5156
          %s5158 = smul.addr %s5157, 4
          %s5159 = scalar_lea.vmem %s7, %s5158
        $region101: #{transformer_block.7} parent=96 // pred_fallthru
          _
      $region97: #{transformer_block.7} parent=5 // pred_fallthru
        _
    $region6: #{transformer_block.7} parent=1 // loop_footer
      %s17 = sadd.s32 1, %s13
    $region7: #{transformer_block.7} parent=1 // loop_footer_branch
      %12 = sbr.rel target = $region3
    $region8: #{transformer_block.7} parent=1 // loop_exit
      _

</llo_original>
